<compile_context>
chip_gen: v7x
topology: tpu7x:2x2x1
jax: 0.10.0
libtpu: 0.0.40
codegen_flags: <defaults>
</compile_context>

<pallas_src>
import functools

import jax
import jax.numpy as jnp
import numpy as np
from jax.experimental import pallas as pl
from jax.experimental.pallas import tpu as pltpu

LRELU_SLOPE = 0.2
BN_EPS = 1e-5
KW = 4
C_PAD = 128          # lane width of GEMM outputs / padded activation buffers


# ------------------------------ fused Pallas kernel ------------------------------

def _fused_disc_kernel(p0_ref, w1_ref, b1_ref, m0_ref,
                       w2_ref, g2_ref, bt2_ref, m1_ref,
                       w3_ref, b3_ref,
                       o_ref,
                       p1_ref, im1_ref, p2_ref, im2_ref, *,
                       lead, cont1, wrow, ra1, ra2, delta2, bn_count,
                       p1_rows, p2_rows, c1, c2):
    f32 = jnp.float32
    bf16 = jnp.bfloat16

    # ---------- layer 0: Conv(stride=2) + bias + LeakyReLU (one bf16 GEMM) ----------
    y0 = jnp.dot(p0_ref[...], w1_ref[...], preferred_element_type=f32)
    y0 = y0 + b1_ref[...]
    a1 = jnp.where(y0 > 0.0, y0, LRELU_SLOPE * y0)
    a1 = a1 * m0_ref[...]                       # zero halo / pitch-padding rows

    # p0 already carries the padded-row geometry, so this aligned store IS the scatter.
    p1_ref[0:lead, :] = jnp.zeros((lead, C_PAD), f32)
    p1_ref[lead:lead + cont1, :] = a1
    if p1_rows > lead + cont1:
        p1_ref[lead + cont1:p1_rows, :] = jnp.zeros((p1_rows - lead - cont1, C_PAD), f32)

    # ---------- layer 1 im2col: pack 16 taps x c1 channels into K = 16*c1 ----------
    # Channels are replicated across lane groups of P1, so source/dest lane ranges match:
    # each tap is a lane-aligned constant-sublane-shift slice copy (+ f32 -> bf16 cast).
    for i in range(KW):
        for j in range(KW):
            t = i * KW + j
            s = i * wrow + j + (lead - 1)       # left halo folded into the read offset
            lo = t * c1
            src = lo % C_PAD
            im1_ref[:, lo:lo + c1] = p1_ref[s:s + ra1, src:src + c1].astype(bf16)

    # ---------- layer 1: ONE K=128 GEMM + BatchNorm (batch stats) + LeakyReLU ----------
    acc1 = jnp.dot(im1_ref[...], w2_ref[...], preferred_element_type=f32)
    m1 = m1_ref[...]                            # (ra1, 1) validity mask in {0, 1}
    mean = jnp.sum(acc1 * m1, axis=0, keepdims=True) / bn_count
    d = acc1 - mean
    var = jnp.sum(d * d * m1, axis=0, keepdims=True) / bn_count
    a2 = d * jax.lax.rsqrt(var + BN_EPS) * g2_ref[...] + bt2_ref[...]
    a2 = jnp.where(a2 > 0.0, a2, LRELU_SLOPE * a2)
    a2 = a2 * m1                                # zero non-activation rows (=> P2 halo)

    # P2 uses the same row pitch as P1, so the scatter into the padded layout is one
    # constant-shift, aligned, full-lane store.
    p2_ref[0:delta2, :] = jnp.zeros((delta2, C_PAD), f32)
    p2_ref[delta2:delta2 + ra1, :] = a2
    if p2_rows > delta2 + ra1:
        p2_ref[delta2 + ra1:p2_rows, :] = jnp.zeros((p2_rows - delta2 - ra1, C_PAD), f32)

    # ---------- layer 2 im2col: pack 16 taps x c2 channels into K = 16*c2 ----------
    for i in range(KW):
        for j in range(KW):
            t = i * KW + j
            s = i * wrow + j + (lead - 1)       # delta2 == wrow + lead => same shift
            lo = t * c2
            src = lo % C_PAD
            im2_ref[:, lo:lo + c2] = p2_ref[s:s + ra2, src:src + c2].astype(bf16)

    # ---------- layer 2: ONE K=256 GEMM + bias ----------
    acc2 = jnp.dot(im2_ref[...], w3_ref[...], preferred_element_type=f32)
    o_ref[...] = acc2 + b3_ref[...]


# ---------------------------------- JAX glue ----------------------------------

def _round_up(x, m):
    return (x + m - 1) // m * m


def _im2col(x_nhwc, k, stride, pad):
    """Conv patches -> (N*Ho*Wo, k*k*C) with (kh, kw, Cin) column order."""
    x = jnp.pad(x_nhwc, ((0, 0), (pad, pad), (pad, pad), (0, 0)))
    N, H, W, C = x.shape
    Ho = (H - k) // stride + 1
    Wo = (W - k) // stride + 1
    cols = []
    for i in range(k):
        for j in range(k):
            cols.append(x[:, i:i + stride * Ho:stride, j:j + stride * Wo:stride, :])
    p = jnp.stack(cols, axis=3)                   # (N, Ho, Wo, k*k, C)
    return p.reshape(N * Ho * Wo, k * k * C)


def _tap_major_weight(w_oihw):
    """PyTorch (Cout, Cin, kh, kw) -> (kh*kw*Cin, Cout), rows ordered (kh, kw, cin)."""
    return jnp.transpose(w_oihw, (2, 3, 1, 0)).reshape(-1, w_oihw.shape[0])


def _row_mask(n_img, n_rows, n_cols, block, wrow, total_rows, offset):
    """1.0 at rows `n*block + r*wrow + offset + [0, n_cols)`, else 0.0 (static)."""
    m = np.zeros((total_rows, 1), np.float32)
    for n in range(n_img):
        for r in range(n_rows):
            base = n * block + r * wrow + offset
            m[base:base + n_cols, 0] = 1.0
    return jnp.asarray(m)


@jax.jit
def nlayer_discriminator_forward(x_nchw, params):
    x = jnp.transpose(x_nchw, (0, 2, 3, 1)).astype(jnp.float32)   # NCHW -> NHWC
    N, H, W, CIN = x.shape
    C1 = params["w1"].shape[0]            # ndf            (8)
    C2 = params["w2"].shape[0]            # 2 * ndf        (16)
    assert C_PAD % C1 == 0 and C_PAD % C2 == 0

    # Conv output spatial sizes (kw=4, pad=1; strides 2, 1, 1).
    H1, W1 = (H + 2 - KW) // 2 + 1, (W + 2 - KW) // 2 + 1
    H2, W2 = H1 - 1, W1 - 1
    H3, W3 = H2 - 1, W2 - 1

    # Padded-row geometry (shared by P1 and P2): 8-aligned row pitch, no stored left halo.
    WROW = _round_up(W1 + 2, 8)
    HP1 = H1 + 2
    BLOCK = HP1 * WROW
    LEAD = 8                               # zero rows at the buffer head
    DELTA2 = WROW + LEAD                   # constant shift of the layer-1 -> P2 store
    CONT1 = N * BLOCK                      # rows written by the layer-0 GEMM
    RA1 = _round_up((N - 1) * BLOCK + (H2 - 1) * WROW + W2, 8)   # layer-1 GEMM rows
    RA2 = _round_up((N - 1) * BLOCK + (H3 - 1) * WROW + W3, 8)   # layer-2 GEMM rows
    MAX_SHIFT = (KW - 1) * WROW + (KW - 1) + LEAD - 1
    P1_ROWS = _round_up(max(LEAD + CONT1, MAX_SHIFT + RA1), 8)
    P2_ROWS = _round_up(max(DELTA2 + RA1, MAX_SHIFT + RA2), 8)
    K0, K1, K2 = KW * KW * CIN, KW * KW * C1, KW * KW * C2

    # Layer-0 patches, laid out in the padded-row geometry (wrapper-side layout glue only).
    patches = _im2col(x, KW, 2, 1).reshape(N, H1, W1, K0)
    p0 = jnp.pad(patches, ((0, 0), (1, 1), (0, WROW - W1), (0, 0)))
    p0 = p0.reshape(CONT1, K0).astype(jnp.bfloat16)

    # Packed weights (no contraction-dim zero padding; output channels replicated so the
    # im2col tap copies are lane-aligned).
    w1p = jnp.tile(_tap_major_weight(params["w1"]), (1, C_PAD // C1)).astype(jnp.bfloat16)
    b1p = jnp.tile(params["b1"].reshape(1, C1), (1, C_PAD // C1)).astype(jnp.float32)
    w2p = jnp.tile(_tap_major_weight(params["w2"]), (1, C_PAD // C2)).astype(jnp.bfloat16)
    g2p = jnp.tile(params["gamma2"].reshape(1, C2), (1, C_PAD // C2)).astype(jnp.float32)
    bt2p = jnp.tile(params["beta2"].reshape(1, C2), (1, C_PAD // C2)).astype(jnp.float32)
    w3p = jnp.pad(_tap_major_weight(params["w3"]), ((0, 0), (0, C_PAD - 1))).astype(jnp.bfloat16)
    b3p = jnp.pad(params["b3"].reshape(1, 1), ((0, 0), (0, C_PAD - 1))).astype(jnp.float32)

    mask0 = _row_mask(N, H1, W1, BLOCK, WROW, CONT1, offset=WROW)   # valid layer-0 rows
    mask1 = _row_mask(N, H2, W2, BLOCK, WROW, RA1, offset=0)        # valid layer-1 rows

    kernel = functools.partial(
        _fused_disc_kernel,
        lead=LEAD, cont1=CONT1, wrow=WROW, ra1=RA1, ra2=RA2, delta2=DELTA2,
        bn_count=float(N * H2 * W2), p1_rows=P1_ROWS, p2_rows=P2_ROWS, c1=C1, c2=C2)

    vmem = pl.BlockSpec(memory_space=pltpu.MemorySpace.VMEM)
    out2d = pl.pallas_call(
        kernel,
        out_shape=jax.ShapeDtypeStruct((RA2, C_PAD), jnp.float32),
        in_specs=[vmem] * 10,
        out_specs=vmem,
        scratch_shapes=[
            pltpu.VMEM((P1_ROWS, C_PAD), jnp.float32),    # padded layer-0 activations
            pltpu.VMEM((RA1, K1), jnp.bfloat16),          # K-packed im2col, layer 1
            pltpu.VMEM((P2_ROWS, C_PAD), jnp.float32),    # padded layer-1 activations
            pltpu.VMEM((RA2, K2), jnp.bfloat16),          # K-packed im2col, layer 2
        ],
        compiler_params=pltpu.CompilerParams(vmem_limit_bytes=32 * 1024 * 1024),
    )(p0, w1p, b1p, mask0, w2p, g2p, bt2p, mask1, w3p, b3p)

    # Valid output rows live at n*BLOCK + ho*WROW + wo; slice them out (layout glue).
    out_full = jnp.pad(out2d, ((0, N * BLOCK - RA2), (0, 0)))
    y = out_full.reshape(N, HP1, WROW, C_PAD)[:, :H3, :W3, 0:1]
    return jnp.transpose(y, (0, 3, 1, 2))                          # NHWC -> NCHW


# ------------------------------ parameter init ------------------------------

def init_params(key, input_nc, ndf):
    ks = jax.random.split(key, 5)

    def conv_w(k, cout, cin):
        return jax.random.normal(k, (cout, cin, KW, KW), jnp.float32) * 0.05

    return {
        # layer 0: Conv2d(input_nc, ndf, 4, stride=2, pad=1, bias=True) + LeakyReLU
        "w1": conv_w(ks[0], ndf, input_nc),
        "b1": jax.random.normal(ks[1], (ndf,), jnp.float32) * 0.05,
        # layer 1: Conv2d(ndf, 2*ndf, 4, stride=1, pad=1, bias=False) + BN + LeakyReLU
        "w2": conv_w(ks[2], 2 * ndf, ndf),
        "gamma2": jnp.ones((2 * ndf,), jnp.float32),
        "beta2": jnp.zeros((2 * ndf,), jnp.float32),
        # layer 2: Conv2d(2*ndf, 1, 4, stride=1, pad=1, bias=True)
        "w3": conv_w(ks[3], 1, 2 * ndf),
        "b3": jax.random.normal(ks[4], (1,), jnp.float32) * 0.05,
    }


# ----------------------- pure-JAX reference (for check) -----------------------

def _conv_ref(x, w, b, stride):
    y = jax.lax.conv_general_dilated(
        x, w, (stride, stride), [(1, 1), (1, 1)],
        dimension_numbers=("NCHW", "OIHW", "NCHW"))
    if b is not None:
        y = y + b.reshape(1, -1, 1, 1)
    return y


def _ref_forward(x, params):
    y = _conv_ref(x, params["w1"], params["b1"], 2)
    y = jnp.where(y > 0, y, LRELU_SLOPE * y)
    y = _conv_ref(y, params["w2"], None, 1)
    mean = jnp.mean(y, axis=(0, 2, 3), keepdims=True)
    var = jnp.mean((y - mean) ** 2, axis=(0, 2, 3), keepdims=True)
    y = (y - mean) * jax.lax.rsqrt(var + BN_EPS)
    y = y * params["gamma2"].reshape(1, -1, 1, 1) + params["beta2"].reshape(1, -1, 1, 1)
    y = jnp.where(y > 0, y, LRELU_SLOPE * y)
    y = _conv_ref(y, params["w3"], params["b3"], 1)
    return y


# ------------------------------------ main ------------------------------------

if __name__ == "__main__":
    key = jax.random.PRNGKey(0)
    k_x, k_p = jax.random.split(key)

    INPUT_NC, NDF = 4, 8
    x = jax.random.normal(k_x, (2, INPUT_NC, 16, 16), jnp.float32)  # NCHW
    params = init_params(k_p, INPUT_NC, NDF)

    out = nlayer_discriminator_forward(x, params)
    out = jax.block_until_ready(out)

    ref = jax.block_until_ready(_ref_forward(x, params))
    assert out.shape == (2, 1, 6, 6), out.shape
    # Tolerance loosened vs. the all-f32 version: GEMM operands are bf16 (f32 accumulate),
    # and BatchNorm's normalization amplifies the operand-rounding error.
    np.testing.assert_allclose(np.asarray(out), np.asarray(ref), rtol=1e-1, atol=1e-1)

    print("KERNEL_OK")
</pallas_src>

<mosaic_0001>
module attributes {stable_mosaic.version = 11 : i64} {
  func.func @_fused_disc_kernel(%arg0: memref<320x64xbf16, #tpu.memory_space<vmem>>, %arg1: memref<64x128xbf16, #tpu.memory_space<vmem>>, %arg2: memref<1x128xf32, #tpu.memory_space<vmem>>, %arg3: memref<320x1xf32, #tpu.memory_space<vmem>>, %arg4: memref<128x128xbf16, #tpu.memory_space<vmem>>, %arg5: memref<1x128xf32, #tpu.memory_space<vmem>>, %arg6: memref<1x128xf32, #tpu.memory_space<vmem>>, %arg7: memref<264x1xf32, #tpu.memory_space<vmem>>, %arg8: memref<256x128xbf16, #tpu.memory_space<vmem>>, %arg9: memref<1x128xf32, #tpu.memory_space<vmem>>, %arg10: memref<248x128xf32, #tpu.memory_space<vmem>>, %arg11: memref<328x128xf32, #tpu.memory_space<vmem>>, %arg12: memref<264x128xbf16, #tpu.memory_space<vmem>>, %arg13: memref<312x128xf32, #tpu.memory_space<vmem>>, %arg14: memref<248x256xbf16, #tpu.memory_space<vmem>>) attributes {dimension_semantics = [], scalar_prefetch = 0 : i64, scratch_operands = 4 : i64, tpu.core_type = #tpu.core_type<tc>} {
    %c0 = arith.constant 0 : index
    %c0_0 = arith.constant 0 : index
    %0 = vector.load %arg0[%c0, %c0_0] : memref<320x64xbf16, #tpu.memory_space<vmem>>, vector<320x64xbf16>
    %c0_1 = arith.constant 0 : index
    %c0_2 = arith.constant 0 : index
    %1 = vector.load %arg1[%c0_1, %c0_2] : memref<64x128xbf16, #tpu.memory_space<vmem>>, vector<64x128xbf16>
    %cst = arith.constant dense<0.000000e+00> : vector<320x128xf32>
    %2 = tpu.matmul %0, %1, %cst {dimension_numbers = #tpu.dot_dimension_numbers<[1], [0], [0], [1], [0, 0, 1, 1], [], []>} : vector<320x64xbf16>, vector<64x128xbf16>, vector<320x128xf32> -> vector<320x128xf32>
    %c0_3 = arith.constant 0 : index
    %c0_4 = arith.constant 0 : index
    %3 = vector.load %arg2[%c0_3, %c0_4] : memref<1x128xf32, #tpu.memory_space<vmem>>, vector<1x128xf32>
    %4 = vector.broadcast %3 : vector<1x128xf32> to vector<320x128xf32>
    %5 = arith.addf %2, %4 : vector<320x128xf32>
    %cst_5 = arith.constant 0.000000e+00 : f32
    %6 = vector.broadcast %cst_5 : f32 to vector<320x128xf32>
    %7 = arith.cmpf ogt, %5, %6 : vector<320x128xf32>
    %cst_6 = arith.constant 2.000000e-01 : f32
    %8 = vector.broadcast %cst_6 : f32 to vector<320x128xf32>
    %9 = arith.mulf %8, %5 : vector<320x128xf32>
    %10 = arith.select %7, %5, %9 : vector<320x128xi1>, vector<320x128xf32>
    %c0_7 = arith.constant 0 : index
    %c0_8 = arith.constant 0 : index
    %11 = vector.load %arg3[%c0_7, %c0_8] : memref<320x1xf32, #tpu.memory_space<vmem>>, vector<320x1xf32>
    %12 = vector.broadcast %11 : vector<320x1xf32> to vector<320x128xf32>
    %13 = arith.mulf %10, %12 : vector<320x128xf32>
    %cst_9 = arith.constant 0.000000e+00 : f32
    %14 = vector.broadcast %cst_9 : f32 to vector<8x128xf32>
    %c0_10 = arith.constant 0 : index
    %c0_11 = arith.constant 0 : index
    %15 = vector.load %arg11[%c0_10, %c0_11] : memref<328x128xf32, #tpu.memory_space<vmem>>, vector<8x128xf32>
    tpu.vector_store %arg11[%c0_10, %c0_11], %14 {strides = array<i32>} : memref<328x128xf32, #tpu.memory_space<vmem>>, vector<8x128xf32>,
    %c8 = arith.constant 8 : index
    %c0_12 = arith.constant 0 : index
    %16 = vector.load %arg11[%c8, %c0_12] : memref<328x128xf32, #tpu.memory_space<vmem>>, vector<320x128xf32>
    tpu.vector_store %arg11[%c8, %c0_12], %13 {strides = array<i32>} : memref<328x128xf32, #tpu.memory_space<vmem>>, vector<320x128xf32>,
    %c7 = arith.constant 7 : index
    %c0_13 = arith.constant 0 : index
    %17 = vector.load %arg11[%c7, %c0_13] : memref<328x128xf32, #tpu.memory_space<vmem>>, vector<264x8xf32>
    %18 = arith.truncf %17 : vector<264x8xf32> to vector<264x8xbf16>
    %c0_14 = arith.constant 0 : index
    %c0_15 = arith.constant 0 : index
    %19 = vector.load %arg12[%c0_14, %c0_15] : memref<264x128xbf16, #tpu.memory_space<vmem>>, vector<264x8xbf16>
    tpu.vector_store %arg12[%c0_14, %c0_15], %18 {strides = array<i32>} : memref<264x128xbf16, #tpu.memory_space<vmem>>, vector<264x8xbf16>,
    %c8_16 = arith.constant 8 : index
    %c8_17 = arith.constant 8 : index
    %20 = vector.load %arg11[%c8_16, %c8_17] : memref<328x128xf32, #tpu.memory_space<vmem>>, vector<264x8xf32>
    %21 = arith.truncf %20 : vector<264x8xf32> to vector<264x8xbf16>
    %c0_18 = arith.constant 0 : index
    %c8_19 = arith.constant 8 : index
    %22 = vector.load %arg12[%c0_18, %c8_19] : memref<264x128xbf16, #tpu.memory_space<vmem>>, vector<264x8xbf16>
    tpu.vector_store %arg12[%c0_18, %c8_19], %21 {strides = array<i32>} : memref<264x128xbf16, #tpu.memory_space<vmem>>, vector<264x8xbf16>,
    %c9 = arith.constant 9 : index
    %c16 = arith.constant 16 : index
    %23 = vector.load %arg11[%c9, %c16] : memref<328x128xf32, #tpu.memory_space<vmem>>, vector<264x8xf32>
    %24 = arith.truncf %23 : vector<264x8xf32> to vector<264x8xbf16>
    %c0_20 = arith.constant 0 : index
    %c16_21 = arith.constant 16 : index
    %25 = vector.load %arg12[%c0_20, %c16_21] : memref<264x128xbf16, #tpu.memory_space<vmem>>, vector<264x8xbf16>
    tpu.vector_store %arg12[%c0_20, %c16_21], %24 {strides = array<i32>} : memref<264x128xbf16, #tpu.memory_space<vmem>>, vector<264x8xbf16>,
    %c10 = arith.constant 10 : index
    %c24 = arith.constant 24 : index
    %26 = vector.load %arg11[%c10, %c24] : memref<328x128xf32, #tpu.memory_space<vmem>>, vector<264x8xf32>
    %27 = arith.truncf %26 : vector<264x8xf32> to vector<264x8xbf16>
    %c0_22 = arith.constant 0 : index
    %c24_23 = arith.constant 24 : index
    %28 = vector.load %arg12[%c0_22, %c24_23] : memref<264x128xbf16, #tpu.memory_space<vmem>>, vector<264x8xbf16>
    tpu.vector_store %arg12[%c0_22, %c24_23], %27 {strides = array<i32>} : memref<264x128xbf16, #tpu.memory_space<vmem>>, vector<264x8xbf16>,
    %c23 = arith.constant 23 : index
    %c32 = arith.constant 32 : index
    %29 = vector.load %arg11[%c23, %c32] : memref<328x128xf32, #tpu.memory_space<vmem>>, vector<264x8xf32>
    %30 = arith.truncf %29 : vector<264x8xf32> to vector<264x8xbf16>
    %c0_24 = arith.constant 0 : index
    %c32_25 = arith.constant 32 : index
    %31 = vector.load %arg12[%c0_24, %c32_25] : memref<264x128xbf16, #tpu.memory_space<vmem>>, vector<264x8xbf16>
    tpu.vector_store %arg12[%c0_24, %c32_25], %30 {strides = array<i32>} : memref<264x128xbf16, #tpu.memory_space<vmem>>, vector<264x8xbf16>,
    %c24_26 = arith.constant 24 : index
    %c40 = arith.constant 40 : index
    %32 = vector.load %arg11[%c24_26, %c40] : memref<328x128xf32, #tpu.memory_space<vmem>>, vector<264x8xf32>
    %33 = arith.truncf %32 : vector<264x8xf32> to vector<264x8xbf16>
    %c0_27 = arith.constant 0 : index
    %c40_28 = arith.constant 40 : index
    %34 = vector.load %arg12[%c0_27, %c40_28] : memref<264x128xbf16, #tpu.memory_space<vmem>>, vector<264x8xbf16>
    tpu.vector_store %arg12[%c0_27, %c40_28], %33 {strides = array<i32>} : memref<264x128xbf16, #tpu.memory_space<vmem>>, vector<264x8xbf16>,
    %c25 = arith.constant 25 : index
    %c48 = arith.constant 48 : index
    %35 = vector.load %arg11[%c25, %c48] : memref<328x128xf32, #tpu.memory_space<vmem>>, vector<264x8xf32>
    %36 = arith.truncf %35 : vector<264x8xf32> to vector<264x8xbf16>
    %c0_29 = arith.constant 0 : index
    %c48_30 = arith.constant 48 : index
    %37 = vector.load %arg12[%c0_29, %c48_30] : memref<264x128xbf16, #tpu.memory_space<vmem>>, vector<264x8xbf16>
    tpu.vector_store %arg12[%c0_29, %c48_30], %36 {strides = array<i32>} : memref<264x128xbf16, #tpu.memory_space<vmem>>, vector<264x8xbf16>,
    %c26 = arith.constant 26 : index
    %c56 = arith.constant 56 : index
    %38 = vector.load %arg11[%c26, %c56] : memref<328x128xf32, #tpu.memory_space<vmem>>, vector<264x8xf32>
    %39 = arith.truncf %38 : vector<264x8xf32> to vector<264x8xbf16>
    %c0_31 = arith.constant 0 : index
    %c56_32 = arith.constant 56 : index
    %40 = vector.load %arg12[%c0_31, %c56_32] : memref<264x128xbf16, #tpu.memory_space<vmem>>, vector<264x8xbf16>
    tpu.vector_store %arg12[%c0_31, %c56_32], %39 {strides = array<i32>} : memref<264x128xbf16, #tpu.memory_space<vmem>>, vector<264x8xbf16>,
    %c39 = arith.constant 39 : index
    %c64 = arith.constant 64 : index
    %41 = vector.load %arg11[%c39, %c64] : memref<328x128xf32, #tpu.memory_space<vmem>>, vector<264x8xf32>
    %42 = arith.truncf %41 : vector<264x8xf32> to vector<264x8xbf16>
    %c0_33 = arith.constant 0 : index
    %c64_34 = arith.constant 64 : index
    %43 = vector.load %arg12[%c0_33, %c64_34] : memref<264x128xbf16, #tpu.memory_space<vmem>>, vector<264x8xbf16>
    tpu.vector_store %arg12[%c0_33, %c64_34], %42 {strides = array<i32>} : memref<264x128xbf16, #tpu.memory_space<vmem>>, vector<264x8xbf16>,
    %c40_35 = arith.constant 40 : index
    %c72 = arith.constant 72 : index
    %44 = vector.load %arg11[%c40_35, %c72] : memref<328x128xf32, #tpu.memory_space<vmem>>, vector<264x8xf32>
    %45 = arith.truncf %44 : vector<264x8xf32> to vector<264x8xbf16>
    %c0_36 = arith.constant 0 : index
    %c72_37 = arith.constant 72 : index
    %46 = vector.load %arg12[%c0_36, %c72_37] : memref<264x128xbf16, #tpu.memory_space<vmem>>, vector<264x8xbf16>
    tpu.vector_store %arg12[%c0_36, %c72_37], %45 {strides = array<i32>} : memref<264x128xbf16, #tpu.memory_space<vmem>>, vector<264x8xbf16>,
    %c41 = arith.constant 41 : index
    %c80 = arith.constant 80 : index
    %47 = vector.load %arg11[%c41, %c80] : memref<328x128xf32, #tpu.memory_space<vmem>>, vector<264x8xf32>
    %48 = arith.truncf %47 : vector<264x8xf32> to vector<264x8xbf16>
    %c0_38 = arith.constant 0 : index
    %c80_39 = arith.constant 80 : index
    %49 = vector.load %arg12[%c0_38, %c80_39] : memref<264x128xbf16, #tpu.memory_space<vmem>>, vector<264x8xbf16>
    tpu.vector_store %arg12[%c0_38, %c80_39], %48 {strides = array<i32>} : memref<264x128xbf16, #tpu.memory_space<vmem>>, vector<264x8xbf16>,
    %c42 = arith.constant 42 : index
    %c88 = arith.constant 88 : index
    %50 = vector.load %arg11[%c42, %c88] : memref<328x128xf32, #tpu.memory_space<vmem>>, vector<264x8xf32>
    %51 = arith.truncf %50 : vector<264x8xf32> to vector<264x8xbf16>
    %c0_40 = arith.constant 0 : index
    %c88_41 = arith.constant 88 : index
    %52 = vector.load %arg12[%c0_40, %c88_41] : memref<264x128xbf16, #tpu.memory_space<vmem>>, vector<264x8xbf16>
    tpu.vector_store %arg12[%c0_40, %c88_41], %51 {strides = array<i32>} : memref<264x128xbf16, #tpu.memory_space<vmem>>, vector<264x8xbf16>,
    %c55 = arith.constant 55 : index
    %c96 = arith.constant 96 : index
    %53 = vector.load %arg11[%c55, %c96] : memref<328x128xf32, #tpu.memory_space<vmem>>, vector<264x8xf32>
    %54 = arith.truncf %53 : vector<264x8xf32> to vector<264x8xbf16>
    %c0_42 = arith.constant 0 : index
    %c96_43 = arith.constant 96 : index
    %55 = vector.load %arg12[%c0_42, %c96_43] : memref<264x128xbf16, #tpu.memory_space<vmem>>, vector<264x8xbf16>
    tpu.vector_store %arg12[%c0_42, %c96_43], %54 {strides = array<i32>} : memref<264x128xbf16, #tpu.memory_space<vmem>>, vector<264x8xbf16>,
    %c56_44 = arith.constant 56 : index
    %c104 = arith.constant 104 : index
    %56 = vector.load %arg11[%c56_44, %c104] : memref<328x128xf32, #tpu.memory_space<vmem>>, vector<264x8xf32>
    %57 = arith.truncf %56 : vector<264x8xf32> to vector<264x8xbf16>
    %c0_45 = arith.constant 0 : index
    %c104_46 = arith.constant 104 : index
    %58 = vector.load %arg12[%c0_45, %c104_46] : memref<264x128xbf16, #tpu.memory_space<vmem>>, vector<264x8xbf16>
    tpu.vector_store %arg12[%c0_45, %c104_46], %57 {strides = array<i32>} : memref<264x128xbf16, #tpu.memory_space<vmem>>, vector<264x8xbf16>,
    %c57 = arith.constant 57 : index
    %c112 = arith.constant 112 : index
    %59 = vector.load %arg11[%c57, %c112] : memref<328x128xf32, #tpu.memory_space<vmem>>, vector<264x8xf32>
    %60 = arith.truncf %59 : vector<264x8xf32> to vector<264x8xbf16>
    %c0_47 = arith.constant 0 : index
    %c112_48 = arith.constant 112 : index
    %61 = vector.load %arg12[%c0_47, %c112_48] : memref<264x128xbf16, #tpu.memory_space<vmem>>, vector<264x8xbf16>
    tpu.vector_store %arg12[%c0_47, %c112_48], %60 {strides = array<i32>} : memref<264x128xbf16, #tpu.memory_space<vmem>>, vector<264x8xbf16>,
    %c58 = arith.constant 58 : index
    %c120 = arith.constant 120 : index
    %62 = vector.load %arg11[%c58, %c120] : memref<328x128xf32, #tpu.memory_space<vmem>>, vector<264x8xf32>
    %63 = arith.truncf %62 : vector<264x8xf32> to vector<264x8xbf16>
    %c0_49 = arith.constant 0 : index
    %c120_50 = arith.constant 120 : index
    %64 = vector.load %arg12[%c0_49, %c120_50] : memref<264x128xbf16, #tpu.memory_space<vmem>>, vector<264x8xbf16>
    tpu.vector_store %arg12[%c0_49, %c120_50], %63 {strides = array<i32>} : memref<264x128xbf16, #tpu.memory_space<vmem>>, vector<264x8xbf16>,
    %c0_51 = arith.constant 0 : index
    %c0_52 = arith.constant 0 : index
    %65 = vector.load %arg12[%c0_51, %c0_52] : memref<264x128xbf16, #tpu.memory_space<vmem>>, vector<264x128xbf16>
    %c0_53 = arith.constant 0 : index
    %c0_54 = arith.constant 0 : index
    %66 = vector.load %arg4[%c0_53, %c0_54] : memref<128x128xbf16, #tpu.memory_space<vmem>>, vector<128x128xbf16>
    %cst_55 = arith.constant dense<0.000000e+00> : vector<264x128xf32>
    %67 = tpu.matmul %65, %66, %cst_55 {dimension_numbers = #tpu.dot_dimension_numbers<[1], [0], [0], [1], [0, 0, 1, 1], [], []>} : vector<264x128xbf16>, vector<128x128xbf16>, vector<264x128xf32> -> vector<264x128xf32>
    %c0_56 = arith.constant 0 : index
    %c0_57 = arith.constant 0 : index
    %68 = vector.load %arg7[%c0_56, %c0_57] : memref<264x1xf32, #tpu.memory_space<vmem>>, vector<264x1xf32>
    %69 = vector.broadcast %68 : vector<264x1xf32> to vector<264x128xf32>
    %70 = arith.mulf %67, %69 : vector<264x128xf32>
    %cst_58 = arith.constant dense<0.000000e+00> : vector<128xf32>
    %71 = vector.multi_reduction <add>, %70, %cst_58 [0] : vector<264x128xf32> to vector<128xf32>
    %72 = vector.shape_cast %71 : vector<128xf32> to vector<1x128xf32>
    %cst_59 = arith.constant 9.800000e+01 : f32
    %73 = vector.broadcast %cst_59 : f32 to vector<1x128xf32>
    %74 = arith.divf %72, %73 : vector<1x128xf32>
    %75 = vector.broadcast %74 : vector<1x128xf32> to vector<264x128xf32>
    %76 = arith.subf %67, %75 : vector<264x128xf32>
    %77 = arith.mulf %76, %76 : vector<264x128xf32>
    %78 = vector.broadcast %68 : vector<264x1xf32> to vector<264x128xf32>
    %79 = arith.mulf %77, %78 : vector<264x128xf32>
    %cst_60 = arith.constant dense<0.000000e+00> : vector<128xf32>
    %80 = vector.multi_reduction <add>, %79, %cst_60 [0] : vector<264x128xf32> to vector<128xf32>
    %81 = vector.shape_cast %80 : vector<128xf32> to vector<1x128xf32>
    %cst_61 = arith.constant 9.800000e+01 : f32
    %82 = vector.broadcast %cst_61 : f32 to vector<1x128xf32>
    %83 = arith.divf %81, %82 : vector<1x128xf32>
    %cst_62 = arith.constant 9.99999974E-6 : f32
    %84 = vector.broadcast %cst_62 : f32 to vector<1x128xf32>
    %85 = arith.addf %83, %84 : vector<1x128xf32>
    %86 = math.rsqrt %85 : vector<1x128xf32>
    %87 = vector.broadcast %86 : vector<1x128xf32> to vector<264x128xf32>
    %88 = arith.mulf %76, %87 : vector<264x128xf32>
    %c0_63 = arith.constant 0 : index
    %c0_64 = arith.constant 0 : index
    %89 = vector.load %arg5[%c0_63, %c0_64] : memref<1x128xf32, #tpu.memory_space<vmem>>, vector<1x128xf32>
    %90 = vector.broadcast %89 : vector<1x128xf32> to vector<264x128xf32>
    %91 = arith.mulf %88, %90 : vector<264x128xf32>
    %c0_65 = arith.constant 0 : index
    %c0_66 = arith.constant 0 : index
    %92 = vector.load %arg6[%c0_65, %c0_66] : memref<1x128xf32, #tpu.memory_space<vmem>>, vector<1x128xf32>
    %93 = vector.broadcast %92 : vector<1x128xf32> to vector<264x128xf32>
    %94 = arith.addf %91, %93 : vector<264x128xf32>
    %cst_67 = arith.constant 0.000000e+00 : f32
    %95 = vector.broadcast %cst_67 : f32 to vector<264x128xf32>
    %96 = arith.cmpf ogt, %94, %95 : vector<264x128xf32>
    %cst_68 = arith.constant 2.000000e-01 : f32
    %97 = vector.broadcast %cst_68 : f32 to vector<264x128xf32>
    %98 = arith.mulf %97, %94 : vector<264x128xf32>
    %99 = arith.select %96, %94, %98 : vector<264x128xi1>, vector<264x128xf32>
    %100 = vector.broadcast %68 : vector<264x1xf32> to vector<264x128xf32>
    %101 = arith.mulf %99, %100 : vector<264x128xf32>
    %cst_69 = arith.constant 0.000000e+00 : f32
    %102 = vector.broadcast %cst_69 : f32 to vector<24x128xf32>
    %c0_70 = arith.constant 0 : index
    %c0_71 = arith.constant 0 : index
    %103 = vector.load %arg13[%c0_70, %c0_71] : memref<312x128xf32, #tpu.memory_space<vmem>>, vector<24x128xf32>
    tpu.vector_store %arg13[%c0_70, %c0_71], %102 {strides = array<i32>} : memref<312x128xf32, #tpu.memory_space<vmem>>, vector<24x128xf32>,
    %c24_72 = arith.constant 24 : index
    %c0_73 = arith.constant 0 : index
    %104 = vector.load %arg13[%c24_72, %c0_73] : memref<312x128xf32, #tpu.memory_space<vmem>>, vector<264x128xf32>
    tpu.vector_store %arg13[%c24_72, %c0_73], %101 {strides = array<i32>} : memref<312x128xf32, #tpu.memory_space<vmem>>, vector<264x128xf32>,
    %cst_74 = arith.constant 0.000000e+00 : f32
    %105 = vector.broadcast %cst_74 : f32 to vector<24x128xf32>
    %c288 = arith.constant 288 : index
    %c0_75 = arith.constant 0 : index
    %106 = vector.load %arg13[%c288, %c0_75] : memref<312x128xf32, #tpu.memory_space<vmem>>, vector<24x128xf32>
    tpu.vector_store %arg13[%c288, %c0_75], %105 {strides = array<i32>} : memref<312x128xf32, #tpu.memory_space<vmem>>, vector<24x128xf32>,
    %c7_76 = arith.constant 7 : index
    %c0_77 = arith.constant 0 : index
    %107 = vector.load %arg13[%c7_76, %c0_77] : memref<312x128xf32, #tpu.memory_space<vmem>>, vector<248x16xf32>
    %108 = arith.truncf %107 : vector<248x16xf32> to vector<248x16xbf16>
    %c0_78 = arith.constant 0 : index
    %c0_79 = arith.constant 0 : index
    %109 = vector.load %arg14[%c0_78, %c0_79] : memref<248x256xbf16, #tpu.memory_space<vmem>>, vector<248x16xbf16>
    tpu.vector_store %arg14[%c0_78, %c0_79], %108 {strides = array<i32>} : memref<248x256xbf16, #tpu.memory_space<vmem>>, vector<248x16xbf16>,
    %c8_80 = arith.constant 8 : index
    %c16_81 = arith.constant 16 : index
    %110 = vector.load %arg13[%c8_80, %c16_81] : memref<312x128xf32, #tpu.memory_space<vmem>>, vector<248x16xf32>
    %111 = arith.truncf %110 : vector<248x16xf32> to vector<248x16xbf16>
    %c0_82 = arith.constant 0 : index
    %c16_83 = arith.constant 16 : index
    %112 = vector.load %arg14[%c0_82, %c16_83] : memref<248x256xbf16, #tpu.memory_space<vmem>>, vector<248x16xbf16>
    tpu.vector_store %arg14[%c0_82, %c16_83], %111 {strides = array<i32>} : memref<248x256xbf16, #tpu.memory_space<vmem>>, vector<248x16xbf16>,
    %c9_84 = arith.constant 9 : index
    %c32_85 = arith.constant 32 : index
    %113 = vector.load %arg13[%c9_84, %c32_85] : memref<312x128xf32, #tpu.memory_space<vmem>>, vector<248x16xf32>
    %114 = arith.truncf %113 : vector<248x16xf32> to vector<248x16xbf16>
    %c0_86 = arith.constant 0 : index
    %c32_87 = arith.constant 32 : index
    %115 = vector.load %arg14[%c0_86, %c32_87] : memref<248x256xbf16, #tpu.memory_space<vmem>>, vector<248x16xbf16>
    tpu.vector_store %arg14[%c0_86, %c32_87], %114 {strides = array<i32>} : memref<248x256xbf16, #tpu.memory_space<vmem>>, vector<248x16xbf16>,
    %c10_88 = arith.constant 10 : index
    %c48_89 = arith.constant 48 : index
    %116 = vector.load %arg13[%c10_88, %c48_89] : memref<312x128xf32, #tpu.memory_space<vmem>>, vector<248x16xf32>
    %117 = arith.truncf %116 : vector<248x16xf32> to vector<248x16xbf16>
    %c0_90 = arith.constant 0 : index
    %c48_91 = arith.constant 48 : index
    %118 = vector.load %arg14[%c0_90, %c48_91] : memref<248x256xbf16, #tpu.memory_space<vmem>>, vector<248x16xbf16>
    tpu.vector_store %arg14[%c0_90, %c48_91], %117 {strides = array<i32>} : memref<248x256xbf16, #tpu.memory_space<vmem>>, vector<248x16xbf16>,
    %c23_92 = arith.constant 23 : index
    %c64_93 = arith.constant 64 : index
    %119 = vector.load %arg13[%c23_92, %c64_93] : memref<312x128xf32, #tpu.memory_space<vmem>>, vector<248x16xf32>
    %120 = arith.truncf %119 : vector<248x16xf32> to vector<248x16xbf16>
    %c0_94 = arith.constant 0 : index
    %c64_95 = arith.constant 64 : index
    %121 = vector.load %arg14[%c0_94, %c64_95] : memref<248x256xbf16, #tpu.memory_space<vmem>>, vector<248x16xbf16>
    tpu.vector_store %arg14[%c0_94, %c64_95], %120 {strides = array<i32>} : memref<248x256xbf16, #tpu.memory_space<vmem>>, vector<248x16xbf16>,
    %c24_96 = arith.constant 24 : index
    %c80_97 = arith.constant 80 : index
    %122 = vector.load %arg13[%c24_96, %c80_97] : memref<312x128xf32, #tpu.memory_space<vmem>>, vector<248x16xf32>
    %123 = arith.truncf %122 : vector<248x16xf32> to vector<248x16xbf16>
    %c0_98 = arith.constant 0 : index
    %c80_99 = arith.constant 80 : index
    %124 = vector.load %arg14[%c0_98, %c80_99] : memref<248x256xbf16, #tpu.memory_space<vmem>>, vector<248x16xbf16>
    tpu.vector_store %arg14[%c0_98, %c80_99], %123 {strides = array<i32>} : memref<248x256xbf16, #tpu.memory_space<vmem>>, vector<248x16xbf16>,
    %c25_100 = arith.constant 25 : index
    %c96_101 = arith.constant 96 : index
    %125 = vector.load %arg13[%c25_100, %c96_101] : memref<312x128xf32, #tpu.memory_space<vmem>>, vector<248x16xf32>
    %126 = arith.truncf %125 : vector<248x16xf32> to vector<248x16xbf16>
    %c0_102 = arith.constant 0 : index
    %c96_103 = arith.constant 96 : index
    %127 = vector.load %arg14[%c0_102, %c96_103] : memref<248x256xbf16, #tpu.memory_space<vmem>>, vector<248x16xbf16>
    tpu.vector_store %arg14[%c0_102, %c96_103], %126 {strides = array<i32>} : memref<248x256xbf16, #tpu.memory_space<vmem>>, vector<248x16xbf16>,
    %c26_104 = arith.constant 26 : index
    %c112_105 = arith.constant 112 : index
    %128 = vector.load %arg13[%c26_104, %c112_105] : memref<312x128xf32, #tpu.memory_space<vmem>>, vector<248x16xf32>
    %129 = arith.truncf %128 : vector<248x16xf32> to vector<248x16xbf16>
    %c0_106 = arith.constant 0 : index
    %c112_107 = arith.constant 112 : index
    %130 = vector.load %arg14[%c0_106, %c112_107] : memref<248x256xbf16, #tpu.memory_space<vmem>>, vector<248x16xbf16>
    tpu.vector_store %arg14[%c0_106, %c112_107], %129 {strides = array<i32>} : memref<248x256xbf16, #tpu.memory_space<vmem>>, vector<248x16xbf16>,
    %c39_108 = arith.constant 39 : index
    %c0_109 = arith.constant 0 : index
    %131 = vector.load %arg13[%c39_108, %c0_109] : memref<312x128xf32, #tpu.memory_space<vmem>>, vector<248x16xf32>
    %132 = arith.truncf %131 : vector<248x16xf32> to vector<248x16xbf16>
    %c0_110 = arith.constant 0 : index
    %c128 = arith.constant 128 : index
    %133 = vector.load %arg14[%c0_110, %c128] : memref<248x256xbf16, #tpu.memory_space<vmem>>, vector<248x16xbf16>
    tpu.vector_store %arg14[%c0_110, %c128], %132 {strides = array<i32>} : memref<248x256xbf16, #tpu.memory_space<vmem>>, vector<248x16xbf16>,
    %c40_111 = arith.constant 40 : index
    %c16_112 = arith.constant 16 : index
    %134 = vector.load %arg13[%c40_111, %c16_112] : memref<312x128xf32, #tpu.memory_space<vmem>>, vector<248x16xf32>
    %135 = arith.truncf %134 : vector<248x16xf32> to vector<248x16xbf16>
    %c0_113 = arith.constant 0 : index
    %c144 = arith.constant 144 : index
    %136 = vector.load %arg14[%c0_113, %c144] : memref<248x256xbf16, #tpu.memory_space<vmem>>, vector<248x16xbf16>
    tpu.vector_store %arg14[%c0_113, %c144], %135 {strides = array<i32>} : memref<248x256xbf16, #tpu.memory_space<vmem>>, vector<248x16xbf16>,
    %c41_114 = arith.constant 41 : index
    %c32_115 = arith.constant 32 : index
    %137 = vector.load %arg13[%c41_114, %c32_115] : memref<312x128xf32, #tpu.memory_space<vmem>>, vector<248x16xf32>
    %138 = arith.truncf %137 : vector<248x16xf32> to vector<248x16xbf16>
    %c0_116 = arith.constant 0 : index
    %c160 = arith.constant 160 : index
    %139 = vector.load %arg14[%c0_116, %c160] : memref<248x256xbf16, #tpu.memory_space<vmem>>, vector<248x16xbf16>
    tpu.vector_store %arg14[%c0_116, %c160], %138 {strides = array<i32>} : memref<248x256xbf16, #tpu.memory_space<vmem>>, vector<248x16xbf16>,
    %c42_117 = arith.constant 42 : index
    %c48_118 = arith.constant 48 : index
    %140 = vector.load %arg13[%c42_117, %c48_118] : memref<312x128xf32, #tpu.memory_space<vmem>>, vector<248x16xf32>
    %141 = arith.truncf %140 : vector<248x16xf32> to vector<248x16xbf16>
    %c0_119 = arith.constant 0 : index
    %c176 = arith.constant 176 : index
    %142 = vector.load %arg14[%c0_119, %c176] : memref<248x256xbf16, #tpu.memory_space<vmem>>, vector<248x16xbf16>
    tpu.vector_store %arg14[%c0_119, %c176], %141 {strides = array<i32>} : memref<248x256xbf16, #tpu.memory_space<vmem>>, vector<248x16xbf16>,
    %c55_120 = arith.constant 55 : index
    %c64_121 = arith.constant 64 : index
    %143 = vector.load %arg13[%c55_120, %c64_121] : memref<312x128xf32, #tpu.memory_space<vmem>>, vector<248x16xf32>
    %144 = arith.truncf %143 : vector<248x16xf32> to vector<248x16xbf16>
    %c0_122 = arith.constant 0 : index
    %c192 = arith.constant 192 : index
    %145 = vector.load %arg14[%c0_122, %c192] : memref<248x256xbf16, #tpu.memory_space<vmem>>, vector<248x16xbf16>
    tpu.vector_store %arg14[%c0_122, %c192], %144 {strides = array<i32>} : memref<248x256xbf16, #tpu.memory_space<vmem>>, vector<248x16xbf16>,
    %c56_123 = arith.constant 56 : index
    %c80_124 = arith.constant 80 : index
    %146 = vector.load %arg13[%c56_123, %c80_124] : memref<312x128xf32, #tpu.memory_space<vmem>>, vector<248x16xf32>
    %147 = arith.truncf %146 : vector<248x16xf32> to vector<248x16xbf16>
    %c0_125 = arith.constant 0 : index
    %c208 = arith.constant 208 : index
    %148 = vector.load %arg14[%c0_125, %c208] : memref<248x256xbf16, #tpu.memory_space<vmem>>, vector<248x16xbf16>
    tpu.vector_store %arg14[%c0_125, %c208], %147 {strides = array<i32>} : memref<248x256xbf16, #tpu.memory_space<vmem>>, vector<248x16xbf16>,
    %c57_126 = arith.constant 57 : index
    %c96_127 = arith.constant 96 : index
    %149 = vector.load %arg13[%c57_126, %c96_127] : memref<312x128xf32, #tpu.memory_space<vmem>>, vector<248x16xf32>
    %150 = arith.truncf %149 : vector<248x16xf32> to vector<248x16xbf16>
    %c0_128 = arith.constant 0 : index
    %c224 = arith.constant 224 : index
    %151 = vector.load %arg14[%c0_128, %c224] : memref<248x256xbf16, #tpu.memory_space<vmem>>, vector<248x16xbf16>
    tpu.vector_store %arg14[%c0_128, %c224], %150 {strides = array<i32>} : memref<248x256xbf16, #tpu.memory_space<vmem>>, vector<248x16xbf16>,
    %c58_129 = arith.constant 58 : index
    %c112_130 = arith.constant 112 : index
    %152 = vector.load %arg13[%c58_129, %c112_130] : memref<312x128xf32, #tpu.memory_space<vmem>>, vector<248x16xf32>
    %153 = arith.truncf %152 : vector<248x16xf32> to vector<248x16xbf16>
    %c0_131 = arith.constant 0 : index
    %c240 = arith.constant 240 : index
    %154 = vector.load %arg14[%c0_131, %c240] : memref<248x256xbf16, #tpu.memory_space<vmem>>, vector<248x16xbf16>
    tpu.vector_store %arg14[%c0_131, %c240], %153 {strides = array<i32>} : memref<248x256xbf16, #tpu.memory_space<vmem>>, vector<248x16xbf16>,
    %c0_132 = arith.constant 0 : index
    %c0_133 = arith.constant 0 : index
    %155 = vector.load %arg14[%c0_132, %c0_133] : memref<248x256xbf16, #tpu.memory_space<vmem>>, vector<248x256xbf16>
    %c0_134 = arith.constant 0 : index
    %c0_135 = arith.constant 0 : index
    %156 = vector.load %arg8[%c0_134, %c0_135] : memref<256x128xbf16, #tpu.memory_space<vmem>>, vector<256x128xbf16>
    %cst_136 = arith.constant dense<0.000000e+00> : vector<248x128xf32>
    %157 = tpu.matmul %155, %156, %cst_136 {dimension_numbers = #tpu.dot_dimension_numbers<[1], [0], [0], [1], [0, 0, 1, 1], [], []>} : vector<248x256xbf16>, vector<256x128xbf16>, vector<248x128xf32> -> vector<248x128xf32>
    %c0_137 = arith.constant 0 : index
    %c0_138 = arith.constant 0 : index
    %158 = vector.load %arg9[%c0_137, %c0_138] : memref<1x128xf32, #tpu.memory_space<vmem>>, vector<1x128xf32>
    %159 = vector.broadcast %158 : vector<1x128xf32> to vector<248x128xf32>
    %160 = arith.addf %157, %159 : vector<248x128xf32>
    %c0_139 = arith.constant 0 : index
    %c0_140 = arith.constant 0 : index
    %161 = vector.load %arg10[%c0_139, %c0_140] : memref<248x128xf32, #tpu.memory_space<vmem>>, vector<248x128xf32>
    tpu.vector_store %arg10[%c0_139, %c0_140], %160 {strides = array<i32>} : memref<248x128xf32, #tpu.memory_space<vmem>>, vector<248x128xf32>,
    return
  }
}

</mosaic_0001>

<llo_original>
// kernel: nlayer_discriminator_forward.1
$region0: #{nlayer_discriminator_forward.1}
  #allocation0 [shape = 'u32[]', space=smem, size = 0x4, offset = 0x4, fixed_abs, tag = 'smem constant byte address 0x4 - core index']
  #allocation1 [shape = 'u32[144,128]{1,0:T(1,128)}', space=vmem, size = 0x12000, scoped, tag = 'internal scratch']
  #allocation2 [shape = 'f32[328,128]{1,0:T(8,128)}', space=vmem, size = 0x29000, scoped, tag = 'scratch operand']
  #allocation3 [shape = 'bf16[264,128]{1,0:T(8,128)(2,1)}', space=vmem, size = 0x10800, scoped, tag = 'scratch operand']
  #allocation4 [shape = 'f32[312,128]{1,0:T(8,128)}', space=vmem, size = 0x27000, scoped, tag = 'scratch operand']
  #allocation5 [shape = 'bf16[248,256]{1,0:T(8,128)(2,1)}', space=vmem, size = 0x1f000, scoped, tag = 'scratch operand']
  %s0 = inlined_call_operand.vmem [shape: bf16[320,64], index: 0, kind: input, shape index: {}]
  %s1 = inlined_call_operand.vmem [shape: bf16[64,128], index: 1, kind: input, shape index: {}]
  %s2 = inlined_call_operand.vmem [shape: f32[1,128], index: 2, kind: input, shape index: {}]
  %s3 = inlined_call_operand.vmem [shape: f32[320,1], index: 3, kind: input, shape index: {}]
  %s4 = inlined_call_operand.vmem [shape: bf16[128,128], index: 4, kind: input, shape index: {}]
  %s5 = inlined_call_operand.vmem [shape: f32[1,128], index: 5, kind: input, shape index: {}]
  %s6 = inlined_call_operand.vmem [shape: f32[1,128], index: 6, kind: input, shape index: {}]
  %s7 = inlined_call_operand.vmem [shape: f32[264,1], index: 7, kind: input, shape index: {}]
  %s8 = inlined_call_operand.vmem [shape: bf16[256,128], index: 8, kind: input, shape index: {}]
  %s9 = inlined_call_operand.vmem [shape: f32[1,128], index: 9, kind: input, shape index: {}]
  %s10 = inlined_call_operand.vmem [shape: f32[248,128], index: 10, kind: output, shape index: {}]
  %s11 = sld [smem:[#allocation0]]
  $region50: #{nlayer_discriminator_forward.1} parent=0
    _
  %s13 = ssub.s32 1, %s11
  %s14 = scalar_select 0, %s13, %s11
  // Predicated region
  $region2: #{nlayer_discriminator_forward.1} parent=0 // pred_check
    _
  $region3: #{nlayer_discriminator_forward.1} parent=0 // pred_check_branch
    %16 = sbr.rel (0) target = $region5
  $region4: #{nlayer_discriminator_forward.1} parent=0 // pred_region
    _
  $region5: #{nlayer_discriminator_forward.1} parent=0 // pred_fallthru
    _
  // Predicated region
  $region6: #{nlayer_discriminator_forward.1} parent=0 // pred_check
    _
  $region7: #{nlayer_discriminator_forward.1} parent=0 // pred_check_branch
    %18 = sbr.rel (0) target = $region9
  $region8: #{nlayer_discriminator_forward.1} parent=0 // pred_region
    _
  $region9: #{nlayer_discriminator_forward.1} parent=0 // pred_fallthru
    _
  // Predicated region
  $region10: #{nlayer_discriminator_forward.1} parent=0 // pred_check
    _
  $region11: #{nlayer_discriminator_forward.1} parent=0 // pred_check_branch
    %20 = sbr.rel (0) target = $region13
  $region12: #{nlayer_discriminator_forward.1} parent=0 // pred_region
    _
  $region13: #{nlayer_discriminator_forward.1} parent=0 // pred_fallthru
    _
  // Predicated region
  $region14: #{nlayer_discriminator_forward.1} parent=0 // pred_check
    _
  $region15: #{nlayer_discriminator_forward.1} parent=0 // pred_check_branch
    %22 = sbr.rel (0) target = $region17
  $region16: #{nlayer_discriminator_forward.1} parent=0 // pred_region
    _
  $region17: #{nlayer_discriminator_forward.1} parent=0 // pred_fallthru
    _
  // Predicated region
  $region18: #{nlayer_discriminator_forward.1} parent=0 // pred_check
    _
  $region19: #{nlayer_discriminator_forward.1} parent=0 // pred_check_branch
    %24 = sbr.rel (0) target = $region21
  $region20: #{nlayer_discriminator_forward.1} parent=0 // pred_region
    _
  $region21: #{nlayer_discriminator_forward.1} parent=0 // pred_fallthru
    _
  // Predicated region
  $region22: #{nlayer_discriminator_forward.1} parent=0 // pred_check
    _
  $region23: #{nlayer_discriminator_forward.1} parent=0 // pred_check_branch
    %26 = sbr.rel (0) target = $region25
  $region24: #{nlayer_discriminator_forward.1} parent=0 // pred_region
    _
  $region25: #{nlayer_discriminator_forward.1} parent=0 // pred_fallthru
    _
  // Predicated region
  $region26: #{nlayer_discriminator_forward.1} parent=0 // pred_check
    _
  $region27: #{nlayer_discriminator_forward.1} parent=0 // pred_check_branch
    %28 = sbr.rel (0) target = $region29
  $region28: #{nlayer_discriminator_forward.1} parent=0 // pred_region
    _
  $region29: #{nlayer_discriminator_forward.1} parent=0 // pred_fallthru
    _
  // Predicated region
  $region30: #{nlayer_discriminator_forward.1} parent=0 // pred_check
    _
  $region31: #{nlayer_discriminator_forward.1} parent=0 // pred_check_branch
    %30 = sbr.rel (0) target = $region33
  $region32: #{nlayer_discriminator_forward.1} parent=0 // pred_region
    _
  $region33: #{nlayer_discriminator_forward.1} parent=0 // pred_fallthru
    _
  // Predicated region
  $region34: #{nlayer_discriminator_forward.1} parent=0 // pred_check
    _
  $region35: #{nlayer_discriminator_forward.1} parent=0 // pred_check_branch
    %32 = sbr.rel (0) target = $region37
  $region36: #{nlayer_discriminator_forward.1} parent=0 // pred_region
    _
  $region37: #{nlayer_discriminator_forward.1} parent=0 // pred_fallthru
    _
  // Predicated region
  $region38: #{nlayer_discriminator_forward.1} parent=0 // pred_check
    _
  $region39: #{nlayer_discriminator_forward.1} parent=0 // pred_check_branch
    %34 = sbr.rel (0) target = $region41
  $region40: #{nlayer_discriminator_forward.1} parent=0 // pred_region
    _
  $region41: #{nlayer_discriminator_forward.1} parent=0 // pred_fallthru
    _
  %v36 = vld [vmem:[%s0] sm:$0xf]
  %v37 = vld [vmem:[%s0 + $0x4] sm:$0xf]
  %v38 = vld [vmem:[%s0 + $0x8] sm:$0xf]
  %v39 = vld [vmem:[%s0 + $0xc] sm:$0xf]
  %v40 = vld [vmem:[%s0 + $0x10] sm:$0xf]
  %v41 = vld [vmem:[%s0 + $0x14] sm:$0xf]
  %v42 = vld [vmem:[%s0 + $0x18] sm:$0xf]
  %v43 = vld [vmem:[%s0 + $0x1c] sm:$0xf]
  %v44 = vld [vmem:[%s0 + $0x20] sm:$0xf]
  %v45 = vld [vmem:[%s0 + $0x24] sm:$0xf]
  %v46 = vld [vmem:[%s0 + $0x28] sm:$0xf]
  %v47 = vld [vmem:[%s0 + $0x2c] sm:$0xf]
  %v48 = vld [vmem:[%s0 + $0x30] sm:$0xf]
  %v49 = vld [vmem:[%s0 + $0x34] sm:$0xf]
  %v50 = vld [vmem:[%s0 + $0x38] sm:$0xf]
  %v51 = vld [vmem:[%s0 + $0x3c] sm:$0xf]
  %v52 = vld [vmem:[%s0 + $0x40] sm:$0xf]
  %v53 = vld [vmem:[%s0 + $0x44] sm:$0xf]
  %v54 = vld [vmem:[%s0 + $0x48] sm:$0xf]
  %v55 = vld [vmem:[%s0 + $0x4c] sm:$0xf]
  %v56 = vld [vmem:[%s0 + $0x50] sm:$0xf]
  %v57 = vld [vmem:[%s0 + $0x54] sm:$0xf]
  %v58 = vld [vmem:[%s0 + $0x58] sm:$0xf]
  %v59 = vld [vmem:[%s0 + $0x5c] sm:$0xf]
  %v60 = vld [vmem:[%s0 + $0x60] sm:$0xf]
  %v61 = vld [vmem:[%s0 + $0x64] sm:$0xf]
  %v62 = vld [vmem:[%s0 + $0x68] sm:$0xf]
  %v63 = vld [vmem:[%s0 + $0x6c] sm:$0xf]
  %v64 = vld [vmem:[%s0 + $0x70] sm:$0xf]
  %v65 = vld [vmem:[%s0 + $0x74] sm:$0xf]
  %v66 = vld [vmem:[%s0 + $0x78] sm:$0xf]
  %v67 = vld [vmem:[%s0 + $0x7c] sm:$0xf]
  %v68 = vld [vmem:[%s0 + $0x80] sm:$0xf]
  %v69 = vld [vmem:[%s0 + $0x84] sm:$0xf]
  %v70 = vld [vmem:[%s0 + $0x88] sm:$0xf]
  %v71 = vld [vmem:[%s0 + $0x8c] sm:$0xf]
  %v72 = vld [vmem:[%s0 + $0x90] sm:$0xf]
  %v73 = vld [vmem:[%s0 + $0x94] sm:$0xf]
  %v74 = vld [vmem:[%s0 + $0x98] sm:$0xf]
  %v75 = vld [vmem:[%s0 + $0x9c] sm:$0xf]
  %v76 = vld [vmem:[%s1] sm:$0xf]
  %v77 = vld [vmem:[%s1 + $0x4] sm:$0xf]
  %v78 = vld [vmem:[%s1 + $0x8] sm:$0xf]
  %v79 = vld [vmem:[%s1 + $0xc] sm:$0xf]
  %v80 = vld [vmem:[%s1 + $0x10] sm:$0xf]
  %v81 = vld [vmem:[%s1 + $0x14] sm:$0xf]
  %v82 = vld [vmem:[%s1 + $0x18] sm:$0xf]
  %v83 = vld [vmem:[%s1 + $0x1c] sm:$0xf]
  %v84 = vld [vmem:[%s2] sm:$0x1]
  %v86 = vlaneseq
  %v87 = vshrl.u32 %v86, 7
  %v88 = vsub.s32 0, %v87
  %v89 = vrot.slane %v84, %v88
  %v131 = vunpack.c.l.b16 %v36
  %v132 = vunpack.c.l.b16 %v37
  %v133 = vunpack.c.l.b16 %v38
  %v134 = vunpack.c.l.b16 %v39
  %v135 = vunpack.c.l.b16 %v40
  %v136 = vunpack.c.l.b16 %v41
  %v137 = vunpack.c.l.b16 %v42
  %v138 = vunpack.c.l.b16 %v43
  %v139 = vunpack.c.l.b16 %v44
  %v140 = vunpack.c.l.b16 %v45
  %v141 = vunpack.c.l.b16 %v46
  %v142 = vunpack.c.l.b16 %v47
  %v143 = vunpack.c.l.b16 %v48
  %v144 = vunpack.c.l.b16 %v49
  %v145 = vunpack.c.l.b16 %v50
  %v146 = vunpack.c.l.b16 %v51
  %v147 = vunpack.c.l.b16 %v52
  %v148 = vunpack.c.l.b16 %v53
  %v149 = vunpack.c.l.b16 %v54
  %v150 = vunpack.c.l.b16 %v55
  %v151 = vunpack.c.l.b16 %v56
  %v152 = vunpack.c.l.b16 %v57
  %v153 = vunpack.c.l.b16 %v58
  %v154 = vunpack.c.l.b16 %v59
  %v155 = vunpack.c.l.b16 %v60
  %v156 = vunpack.c.l.b16 %v61
  %v157 = vunpack.c.l.b16 %v62
  %v158 = vunpack.c.l.b16 %v63
  %v159 = vunpack.c.l.b16 %v64
  %v160 = vunpack.c.l.b16 %v65
  %v161 = vunpack.c.l.b16 %v66
  %v162 = vunpack.c.l.b16 %v67
  %v163 = vunpack.c.l.b16 %v68
  %v164 = vunpack.c.l.b16 %v69
  %v165 = vunpack.c.l.b16 %v70
  %v166 = vunpack.c.l.b16 %v71
  %v167 = vunpack.c.l.b16 %v72
  %v168 = vunpack.c.l.b16 %v73
  %v169 = vunpack.c.l.b16 %v74
  %v170 = vunpack.c.l.b16 %v75
  %v171 = vpack.c.b16 %v132, %v131
  %v172 = vpack.c.b16 %v134, %v133
  %v173 = vpack.c.b16 %v136, %v135
  %v174 = vpack.c.b16 %v138, %v137
  %v175 = vpack.c.b16 %v140, %v139
  %v176 = vpack.c.b16 %v142, %v141
  %v177 = vpack.c.b16 %v144, %v143
  %v178 = vpack.c.b16 %v146, %v145
  %v179 = vpack.c.b16 %v148, %v147
  %v180 = vpack.c.b16 %v150, %v149
  %v181 = vpack.c.b16 %v152, %v151
  %v182 = vpack.c.b16 %v154, %v153
  %v183 = vpack.c.b16 %v156, %v155
  %v184 = vpack.c.b16 %v158, %v157
  %v185 = vpack.c.b16 %v160, %v159
  %v186 = vpack.c.b16 %v162, %v161
  %v187 = vpack.c.b16 %v164, %v163
  %v188 = vpack.c.b16 %v166, %v165
  %v189 = vpack.c.b16 %v168, %v167
  %v190 = vpack.c.b16 %v170, %v169
  %v199 = vunpack.c.l.b16 %v76
  %v200 = vunpack.c.l.b16 %v77
  %v201 = vunpack.c.l.b16 %v78
  %v202 = vunpack.c.l.b16 %v79
  %v203 = vunpack.c.l.b16 %v80
  %v204 = vunpack.c.l.b16 %v81
  %v205 = vunpack.c.l.b16 %v82
  %v206 = vunpack.c.l.b16 %v83
  %v207 = vpack.c.b16 %v200, %v199
  %v208 = vpack.c.b16 %v202, %v201
  %v209 = vpack.c.b16 %v204, %v203
  %v210 = vpack.c.b16 %v206, %v205
  %vm215 = vcmask 523264
  %v217 = vsel %vm215, %v171, 0
  %v220 = vsel %vm215, %v172, 0
  %v223 = vsel %vm215, %v173, 0
  %v226 = vsel %vm215, %v174, 0
  %v229 = vsel %vm215, %v175, 0
  %v232 = vsel %vm215, %v176, 0
  %v235 = vsel %vm215, %v177, 0
  %v238 = vsel %vm215, %v178, 0
  %v241 = vsel %vm215, %v179, 0
  %v244 = vsel %vm215, %v180, 0
  %v247 = vsel %vm215, %v181, 0
  %v250 = vsel %vm215, %v182, 0
  %v253 = vsel %vm215, %v183, 0
  %v256 = vsel %vm215, %v184, 0
  %v259 = vsel %vm215, %v185, 0
  %v262 = vsel %vm215, %v186, 0
  %v265 = vsel %vm215, %v187, 0
  %v268 = vsel %vm215, %v188, 0
  %v271 = vsel %vm215, %v189, 0
  %v274 = vsel %vm215, %v190, 0
  %276 = vmatprep.subr.bf16.mxu0 0
  %277 = vmatpush1.bf16.msra.mxu0 %v207
  %278 = vmatprep.subr.bf16.mxu0 0
  %279 = vmatpush1.bf16.msra.mxu0 %v208
  %280 = vmatprep.subr.bf16.mxu0 0
  %281 = vmatpush1.bf16.msra.mxu0 %v209
  %282 = vmatprep.subr.bf16.mxu0 0
  %283 = vmatpush1.bf16.msra.mxu0 %v210
  %284 = vmatprep.subr.bf16.mxu0 0
  %285 = vmatpush1.bf16.msra.mxu0 0
  %286 = vmatprep.subr.bf16.mxu0 0
  %287 = vmatpush1.bf16.msra.mxu0 0
  %288 = vmatprep.subr.bf16.mxu0 0
  %289 = vmatpush1.bf16.msra.mxu0 0
  %290 = vmatprep.subr.bf16.mxu0 0
  %291 = vmatpush1.bf16.msra.mxu0 0
  %292 = vmatprep.subr.bf16.mxu0 0
  %293 = vmatpush1.bf16.msra.mxu0 0
  %294 = vmatprep.subr.bf16.mxu0 0
  %295 = vmatpush1.bf16.msra.mxu0 0
  %296 = vmatprep.subr.bf16.mxu0 0
  %297 = vmatpush1.bf16.msra.mxu0 0
  %298 = vmatprep.subr.bf16.mxu0 0
  %299 = vmatpush1.bf16.msra.mxu0 0
  %300 = vmatprep.subr.bf16.mxu0 0
  %301 = vmatpush1.bf16.msra.mxu0 0
  %302 = vmatprep.subr.bf16.mxu0 0
  %303 = vmatpush1.bf16.msra.mxu0 0
  %304 = vmatprep.subr.bf16.mxu0 0
  %305 = vmatpush1.bf16.msra.mxu0 0
  %306 = vmatprep.subr.bf16.mxu0 0
  %307 = vmatpush1.bf16.msra.mxu0 0
  %308 = vmatprep.mubr.bf16.mxu0 0
  %309 = vmatmul.mubr.bf16.gmra.mrb[0].mxu0 %v217
  %v310 = vpop.f32.mrb[0].mxu0
  %v311 = vadd.f32 %v89, %v310
  %v312 = vpop.f32.mrb[0].mxu0
  %v313 = vpop.f32.mrb[0].mxu0
  %v314 = vadd.f32 %v89, %v313
  %v315 = vpop.f32.mrb[0].mxu0
  %316 = vmatprep.mubr.bf16.mxu0 0
  %317 = vmatmul.mubr.bf16.gmra.mrb[0].mxu0 %v220
  %v318 = vpop.f32.mrb[0].mxu0
  %v319 = vadd.f32 %v89, %v318
  %v320 = vpop.f32.mrb[0].mxu0
  %v321 = vpop.f32.mrb[0].mxu0
  %v322 = vadd.f32 %v89, %v321
  %v323 = vpop.f32.mrb[0].mxu0
  %324 = vmatprep.mubr.bf16.mxu0 0
  %325 = vmatmul.mubr.bf16.gmra.mrb[0].mxu0 %v223
  %v326 = vpop.f32.mrb[0].mxu0
  %v327 = vadd.f32 %v89, %v326
  %v328 = vpop.f32.mrb[0].mxu0
  %v329 = vpop.f32.mrb[0].mxu0
  %v330 = vadd.f32 %v89, %v329
  %v331 = vpop.f32.mrb[0].mxu0
  %332 = vmatprep.mubr.bf16.mxu0 0
  %333 = vmatmul.mubr.bf16.gmra.mrb[0].mxu0 %v226
  %v334 = vpop.f32.mrb[0].mxu0
  %v335 = vadd.f32 %v89, %v334
  %v336 = vpop.f32.mrb[0].mxu0
  %v337 = vpop.f32.mrb[0].mxu0
  %v338 = vadd.f32 %v89, %v337
  %v339 = vpop.f32.mrb[0].mxu0
  %340 = vmatprep.mubr.bf16.mxu0 0
  %341 = vmatmul.mubr.bf16.gmra.mrb[0].mxu0 %v229
  %v342 = vpop.f32.mrb[0].mxu0
  %v343 = vadd.f32 %v89, %v342
  %v344 = vpop.f32.mrb[0].mxu0
  %v345 = vpop.f32.mrb[0].mxu0
  %v346 = vadd.f32 %v89, %v345
  %v347 = vpop.f32.mrb[0].mxu0
  %348 = vmatprep.mubr.bf16.mxu0 0
  %349 = vmatmul.mubr.bf16.gmra.mrb[0].mxu0 %v232
  %v350 = vpop.f32.mrb[0].mxu0
  %v351 = vadd.f32 %v89, %v350
  %v352 = vpop.f32.mrb[0].mxu0
  %v353 = vpop.f32.mrb[0].mxu0
  %v354 = vadd.f32 %v89, %v353
  %v355 = vpop.f32.mrb[0].mxu0
  %356 = vmatprep.mubr.bf16.mxu0 0
  %357 = vmatmul.mubr.bf16.gmra.mrb[0].mxu0 %v235
  %v358 = vpop.f32.mrb[0].mxu0
  %v359 = vadd.f32 %v89, %v358
  %v360 = vpop.f32.mrb[0].mxu0
  %v361 = vpop.f32.mrb[0].mxu0
  %v362 = vadd.f32 %v89, %v361
  %v363 = vpop.f32.mrb[0].mxu0
  %364 = vmatprep.mubr.bf16.mxu0 0
  %365 = vmatmul.mubr.bf16.gmra.mrb[0].mxu0 %v238
  %v366 = vpop.f32.mrb[0].mxu0
  %v367 = vadd.f32 %v89, %v366
  %v368 = vpop.f32.mrb[0].mxu0
  %v369 = vpop.f32.mrb[0].mxu0
  %v370 = vadd.f32 %v89, %v369
  %v371 = vpop.f32.mrb[0].mxu0
  %372 = vmatprep.mubr.bf16.mxu0 0
  %373 = vmatmul.mubr.bf16.gmra.mrb[0].mxu0 %v241
  %v374 = vpop.f32.mrb[0].mxu0
  %v375 = vadd.f32 %v89, %v374
  %v376 = vpop.f32.mrb[0].mxu0
  %v377 = vpop.f32.mrb[0].mxu0
  %v378 = vadd.f32 %v89, %v377
  %v379 = vpop.f32.mrb[0].mxu0
  %380 = vmatprep.mubr.bf16.mxu0 0
  %381 = vmatmul.mubr.bf16.gmra.mrb[0].mxu0 %v244
  %v382 = vpop.f32.mrb[0].mxu0
  %v383 = vadd.f32 %v89, %v382
  %v384 = vpop.f32.mrb[0].mxu0
  %v385 = vpop.f32.mrb[0].mxu0
  %v386 = vadd.f32 %v89, %v385
  %v387 = vpop.f32.mrb[0].mxu0
  %388 = vmatprep.mubr.bf16.mxu0 0
  %389 = vmatmul.mubr.bf16.gmra.mrb[0].mxu0 %v247
  %v390 = vpop.f32.mrb[0].mxu0
  %v391 = vadd.f32 %v89, %v390
  %v392 = vpop.f32.mrb[0].mxu0
  %v393 = vpop.f32.mrb[0].mxu0
  %v394 = vadd.f32 %v89, %v393
  %v395 = vpop.f32.mrb[0].mxu0
  %396 = vmatprep.mubr.bf16.mxu0 0
  %397 = vmatmul.mubr.bf16.gmra.mrb[0].mxu0 %v250
  %v398 = vpop.f32.mrb[0].mxu0
  %v399 = vadd.f32 %v89, %v398
  %v400 = vpop.f32.mrb[0].mxu0
  %v401 = vpop.f32.mrb[0].mxu0
  %v402 = vadd.f32 %v89, %v401
  %v403 = vpop.f32.mrb[0].mxu0
  %404 = vmatprep.mubr.bf16.mxu0 0
  %405 = vmatmul.mubr.bf16.gmra.mrb[0].mxu0 %v253
  %v406 = vpop.f32.mrb[0].mxu0
  %v407 = vadd.f32 %v89, %v406
  %v408 = vpop.f32.mrb[0].mxu0
  %v409 = vpop.f32.mrb[0].mxu0
  %v410 = vadd.f32 %v89, %v409
  %v411 = vpop.f32.mrb[0].mxu0
  %412 = vmatprep.mubr.bf16.mxu0 0
  %413 = vmatmul.mubr.bf16.gmra.mrb[0].mxu0 %v256
  %v414 = vpop.f32.mrb[0].mxu0
  %v415 = vadd.f32 %v89, %v414
  %v416 = vpop.f32.mrb[0].mxu0
  %v417 = vpop.f32.mrb[0].mxu0
  %v418 = vadd.f32 %v89, %v417
  %v419 = vpop.f32.mrb[0].mxu0
  %420 = vmatprep.mubr.bf16.mxu0 0
  %421 = vmatmul.mubr.bf16.gmra.mrb[0].mxu0 %v259
  %v422 = vpop.f32.mrb[0].mxu0
  %v423 = vadd.f32 %v89, %v422
  %v424 = vpop.f32.mrb[0].mxu0
  %v425 = vpop.f32.mrb[0].mxu0
  %v426 = vadd.f32 %v89, %v425
  %v427 = vpop.f32.mrb[0].mxu0
  %428 = vmatprep.mubr.bf16.mxu0 0
  %429 = vmatmul.mubr.bf16.gmra.mrb[0].mxu0 %v262
  %v430 = vpop.f32.mrb[0].mxu0
  %v431 = vadd.f32 %v89, %v430
  %v432 = vpop.f32.mrb[0].mxu0
  %v433 = vpop.f32.mrb[0].mxu0
  %v434 = vadd.f32 %v89, %v433
  %v435 = vpop.f32.mrb[0].mxu0
  %436 = vmatprep.mubr.bf16.mxu0 0
  %437 = vmatmul.mubr.bf16.gmra.mrb[0].mxu0 %v265
  %v438 = vpop.f32.mrb[0].mxu0
  %v439 = vadd.f32 %v89, %v438
  %v440 = vpop.f32.mrb[0].mxu0
  %v441 = vpop.f32.mrb[0].mxu0
  %v442 = vadd.f32 %v89, %v441
  %v443 = vpop.f32.mrb[0].mxu0
  %444 = vmatprep.mubr.bf16.mxu0 0
  %445 = vmatmul.mubr.bf16.gmra.mrb[0].mxu0 %v268
  %v446 = vpop.f32.mrb[0].mxu0
  %v447 = vadd.f32 %v89, %v446
  %v448 = vpop.f32.mrb[0].mxu0
  %v449 = vpop.f32.mrb[0].mxu0
  %v450 = vadd.f32 %v89, %v449
  %v451 = vpop.f32.mrb[0].mxu0
  %452 = vmatprep.mubr.bf16.mxu0 0
  %453 = vmatmul.mubr.bf16.gmra.mrb[0].mxu0 %v271
  %v454 = vpop.f32.mrb[0].mxu0
  %v455 = vadd.f32 %v89, %v454
  %v456 = vpop.f32.mrb[0].mxu0
  %v457 = vpop.f32.mrb[0].mxu0
  %v458 = vadd.f32 %v89, %v457
  %v459 = vpop.f32.mrb[0].mxu0
  %460 = vmatprep.mubr.bf16.mxu0 0
  %461 = vmatmul.mubr.bf16.gmra.mrb[0].mxu0 %v274
  %v462 = vpop.f32.mrb[0].mxu0
  %v463 = vadd.f32 %v89, %v462
  %v464 = vpop.f32.mrb[0].mxu0
  %v465 = vpop.f32.mrb[0].mxu0
  %v466 = vadd.f32 %v89, %v465
  %v467 = vpop.f32.mrb[0].mxu0
  %468 = vdwg.mxu0
  %vm469 = vcmp.gt.f32.partialorder %v311, 0.0
  %vm470 = vcmp.gt.f32.partialorder %v314, 0.0
  %vm471 = vcmp.gt.f32.partialorder %v319, 0.0
  %vm472 = vcmp.gt.f32.partialorder %v322, 0.0
  %vm473 = vcmp.gt.f32.partialorder %v327, 0.0
  %vm474 = vcmp.gt.f32.partialorder %v330, 0.0
  %vm475 = vcmp.gt.f32.partialorder %v335, 0.0
  %vm476 = vcmp.gt.f32.partialorder %v338, 0.0
  %vm477 = vcmp.gt.f32.partialorder %v343, 0.0
  %vm478 = vcmp.gt.f32.partialorder %v346, 0.0
  %vm479 = vcmp.gt.f32.partialorder %v351, 0.0
  %vm480 = vcmp.gt.f32.partialorder %v354, 0.0
  %vm481 = vcmp.gt.f32.partialorder %v359, 0.0
  %vm482 = vcmp.gt.f32.partialorder %v362, 0.0
  %vm483 = vcmp.gt.f32.partialorder %v367, 0.0
  %vm484 = vcmp.gt.f32.partialorder %v370, 0.0
  %vm485 = vcmp.gt.f32.partialorder %v375, 0.0
  %vm486 = vcmp.gt.f32.partialorder %v378, 0.0
  %vm487 = vcmp.gt.f32.partialorder %v383, 0.0
  %vm488 = vcmp.gt.f32.partialorder %v386, 0.0
  %vm489 = vcmp.gt.f32.partialorder %v391, 0.0
  %vm490 = vcmp.gt.f32.partialorder %v394, 0.0
  %vm491 = vcmp.gt.f32.partialorder %v399, 0.0
  %vm492 = vcmp.gt.f32.partialorder %v402, 0.0
  %vm493 = vcmp.gt.f32.partialorder %v407, 0.0
  %vm494 = vcmp.gt.f32.partialorder %v410, 0.0
  %vm495 = vcmp.gt.f32.partialorder %v415, 0.0
  %vm496 = vcmp.gt.f32.partialorder %v418, 0.0
  %vm497 = vcmp.gt.f32.partialorder %v423, 0.0
  %vm498 = vcmp.gt.f32.partialorder %v426, 0.0
  %vm499 = vcmp.gt.f32.partialorder %v431, 0.0
  %vm500 = vcmp.gt.f32.partialorder %v434, 0.0
  %vm501 = vcmp.gt.f32.partialorder %v439, 0.0
  %vm502 = vcmp.gt.f32.partialorder %v442, 0.0
  %vm503 = vcmp.gt.f32.partialorder %v447, 0.0
  %vm504 = vcmp.gt.f32.partialorder %v450, 0.0
  %vm505 = vcmp.gt.f32.partialorder %v455, 0.0
  %vm506 = vcmp.gt.f32.partialorder %v458, 0.0
  %vm507 = vcmp.gt.f32.partialorder %v463, 0.0
  %vm508 = vcmp.gt.f32.partialorder %v466, 0.0
  %v509 = vmul.f32 %v311, 0.2
  %v510 = vmul.f32 %v314, 0.2
  %v511 = vmul.f32 %v319, 0.2
  %v512 = vmul.f32 %v322, 0.2
  %v513 = vmul.f32 %v327, 0.2
  %v514 = vmul.f32 %v330, 0.2
  %v515 = vmul.f32 %v335, 0.2
  %v516 = vmul.f32 %v338, 0.2
  %v517 = vmul.f32 %v343, 0.2
  %v518 = vmul.f32 %v346, 0.2
  %v519 = vmul.f32 %v351, 0.2
  %v520 = vmul.f32 %v354, 0.2
  %v521 = vmul.f32 %v359, 0.2
  %v522 = vmul.f32 %v362, 0.2
  %v523 = vmul.f32 %v367, 0.2
  %v524 = vmul.f32 %v370, 0.2
  %v525 = vmul.f32 %v375, 0.2
  %v526 = vmul.f32 %v378, 0.2
  %v527 = vmul.f32 %v383, 0.2
  %v528 = vmul.f32 %v386, 0.2
  %v529 = vmul.f32 %v391, 0.2
  %v530 = vmul.f32 %v394, 0.2
  %v531 = vmul.f32 %v399, 0.2
  %v532 = vmul.f32 %v402, 0.2
  %v533 = vmul.f32 %v407, 0.2
  %v534 = vmul.f32 %v410, 0.2
  %v535 = vmul.f32 %v415, 0.2
  %v536 = vmul.f32 %v418, 0.2
  %v537 = vmul.f32 %v423, 0.2
  %v538 = vmul.f32 %v426, 0.2
  %v539 = vmul.f32 %v431, 0.2
  %v540 = vmul.f32 %v434, 0.2
  %v541 = vmul.f32 %v439, 0.2
  %v542 = vmul.f32 %v442, 0.2
  %v543 = vmul.f32 %v447, 0.2
  %v544 = vmul.f32 %v450, 0.2
  %v545 = vmul.f32 %v455, 0.2
  %v546 = vmul.f32 %v458, 0.2
  %v547 = vmul.f32 %v463, 0.2
  %v548 = vmul.f32 %v466, 0.2
  %v549 = vsel %vm469, %v311, %v509
  %v550 = vsel %vm470, %v314, %v510
  %v551 = vsel %vm471, %v319, %v511
  %v552 = vsel %vm472, %v322, %v512
  %v553 = vsel %vm473, %v327, %v513
  %v554 = vsel %vm474, %v330, %v514
  %v555 = vsel %vm475, %v335, %v515
  %v556 = vsel %vm476, %v338, %v516
  %v557 = vsel %vm477, %v343, %v517
  %v558 = vsel %vm478, %v346, %v518
  %v559 = vsel %vm479, %v351, %v519
  %v560 = vsel %vm480, %v354, %v520
  %v561 = vsel %vm481, %v359, %v521
  %v562 = vsel %vm482, %v362, %v522
  %v563 = vsel %vm483, %v367, %v523
  %v564 = vsel %vm484, %v370, %v524
  %v565 = vsel %vm485, %v375, %v525
  %v566 = vsel %vm486, %v378, %v526
  %v567 = vsel %vm487, %v383, %v527
  %v568 = vsel %vm488, %v386, %v528
  %v569 = vsel %vm489, %v391, %v529
  %v570 = vsel %vm490, %v394, %v530
  %v571 = vsel %vm491, %v399, %v531
  %v572 = vsel %vm492, %v402, %v532
  %v573 = vsel %vm493, %v407, %v533
  %v574 = vsel %vm494, %v410, %v534
  %v575 = vsel %vm495, %v415, %v535
  %v576 = vsel %vm496, %v418, %v536
  %v577 = vsel %vm497, %v423, %v537
  %v578 = vsel %vm498, %v426, %v538
  %v579 = vsel %vm499, %v431, %v539
  %v580 = vsel %vm500, %v434, %v540
  %v581 = vsel %vm501, %v439, %v541
  %v582 = vsel %vm502, %v442, %v542
  %v583 = vsel %vm503, %v447, %v543
  %v584 = vsel %vm504, %v450, %v544
  %v585 = vsel %vm505, %v455, %v545
  %v586 = vsel %vm506, %v458, %v546
  %v587 = vsel %vm507, %v463, %v547
  %v588 = vsel %vm508, %v466, %v548
  %v589 = vld [vmem:[%s3] sm:$0xff]
  %v590 = vld [vmem:[%s3 + $0x8] sm:$0xff]
  %v591 = vld [vmem:[%s3 + $0x10] sm:$0xff]
  %v592 = vld [vmem:[%s3 + $0x18] sm:$0xff]
  %v593 = vld [vmem:[%s3 + $0x20] sm:$0xff]
  %v594 = vld [vmem:[%s3 + $0x28] sm:$0xff]
  %v595 = vld [vmem:[%s3 + $0x30] sm:$0xff]
  %v596 = vld [vmem:[%s3 + $0x38] sm:$0xff]
  %v597 = vld [vmem:[%s3 + $0x40] sm:$0xff]
  %v598 = vld [vmem:[%s3 + $0x48] sm:$0xff]
  %v599 = vld [vmem:[%s3 + $0x50] sm:$0xff]
  %v600 = vld [vmem:[%s3 + $0x58] sm:$0xff]
  %v601 = vld [vmem:[%s3 + $0x60] sm:$0xff]
  %v602 = vld [vmem:[%s3 + $0x68] sm:$0xff]
  %v603 = vld [vmem:[%s3 + $0x70] sm:$0xff]
  %v604 = vld [vmem:[%s3 + $0x78] sm:$0xff]
  %v605 = vld [vmem:[%s3 + $0x80] sm:$0xff]
  %v606 = vld [vmem:[%s3 + $0x88] sm:$0xff]
  %v607 = vld [vmem:[%s3 + $0x90] sm:$0xff]
  %v608 = vld [vmem:[%s3 + $0x98] sm:$0xff]
  %v609 = vld [vmem:[%s3 + $0xa0] sm:$0xff]
  %v610 = vld [vmem:[%s3 + $0xa8] sm:$0xff]
  %v611 = vld [vmem:[%s3 + $0xb0] sm:$0xff]
  %v612 = vld [vmem:[%s3 + $0xb8] sm:$0xff]
  %v613 = vld [vmem:[%s3 + $0xc0] sm:$0xff]
  %v614 = vld [vmem:[%s3 + $0xc8] sm:$0xff]
  %v615 = vld [vmem:[%s3 + $0xd0] sm:$0xff]
  %v616 = vld [vmem:[%s3 + $0xd8] sm:$0xff]
  %v617 = vld [vmem:[%s3 + $0xe0] sm:$0xff]
  %v618 = vld [vmem:[%s3 + $0xe8] sm:$0xff]
  %v619 = vld [vmem:[%s3 + $0xf0] sm:$0xff]
  %v620 = vld [vmem:[%s3 + $0xf8] sm:$0xff]
  %v621 = vld [vmem:[%s3 + $0x100] sm:$0xff]
  %v622 = vld [vmem:[%s3 + $0x108] sm:$0xff]
  %v623 = vld [vmem:[%s3 + $0x110] sm:$0xff]
  %v624 = vld [vmem:[%s3 + $0x118] sm:$0xff]
  %v625 = vld [vmem:[%s3 + $0x120] sm:$0xff]
  %v626 = vld [vmem:[%s3 + $0x128] sm:$0xff]
  %v627 = vld [vmem:[%s3 + $0x130] sm:$0xff]
  %v628 = vld [vmem:[%s3 + $0x138] sm:$0xff]
  %630 = vset.pattern.permute.xlu0 0
  %631 = vperm.xlu0 %630, %v589
  %v632 = vpop.permute.xlu0 %631
  %635 = vset.pattern.permute.xlu0 0
  %636 = vperm.xlu0 %635, %v590
  %v637 = vpop.permute.xlu0 %636
  %640 = vset.pattern.permute.xlu0 0
  %641 = vperm.xlu0 %640, %v591
  %v642 = vpop.permute.xlu0 %641
  %645 = vset.pattern.permute.xlu0 0
  %646 = vperm.xlu0 %645, %v592
  %v647 = vpop.permute.xlu0 %646
  %650 = vset.pattern.permute.xlu0 0
  %651 = vperm.xlu0 %650, %v593
  %v652 = vpop.permute.xlu0 %651
  %655 = vset.pattern.permute.xlu0 0
  %656 = vperm.xlu0 %655, %v594
  %v657 = vpop.permute.xlu0 %656
  %660 = vset.pattern.permute.xlu0 0
  %661 = vperm.xlu0 %660, %v595
  %v662 = vpop.permute.xlu0 %661
  %665 = vset.pattern.permute.xlu0 0
  %666 = vperm.xlu0 %665, %v596
  %v667 = vpop.permute.xlu0 %666
  %670 = vset.pattern.permute.xlu0 0
  %671 = vperm.xlu0 %670, %v597
  %v672 = vpop.permute.xlu0 %671
  %675 = vset.pattern.permute.xlu0 0
  %676 = vperm.xlu0 %675, %v598
  %v677 = vpop.permute.xlu0 %676
  %680 = vset.pattern.permute.xlu0 0
  %681 = vperm.xlu0 %680, %v599
  %v682 = vpop.permute.xlu0 %681
  %685 = vset.pattern.permute.xlu0 0
  %686 = vperm.xlu0 %685, %v600
  %v687 = vpop.permute.xlu0 %686
  %690 = vset.pattern.permute.xlu0 0
  %691 = vperm.xlu0 %690, %v601
  %v692 = vpop.permute.xlu0 %691
  %695 = vset.pattern.permute.xlu0 0
  %696 = vperm.xlu0 %695, %v602
  %v697 = vpop.permute.xlu0 %696
  %700 = vset.pattern.permute.xlu0 0
  %701 = vperm.xlu0 %700, %v603
  %v702 = vpop.permute.xlu0 %701
  %705 = vset.pattern.permute.xlu0 0
  %706 = vperm.xlu0 %705, %v604
  %v707 = vpop.permute.xlu0 %706
  %710 = vset.pattern.permute.xlu0 0
  %711 = vperm.xlu0 %710, %v605
  %v712 = vpop.permute.xlu0 %711
  %715 = vset.pattern.permute.xlu0 0
  %716 = vperm.xlu0 %715, %v606
  %v717 = vpop.permute.xlu0 %716
  %720 = vset.pattern.permute.xlu0 0
  %721 = vperm.xlu0 %720, %v607
  %v722 = vpop.permute.xlu0 %721
  %725 = vset.pattern.permute.xlu0 0
  %726 = vperm.xlu0 %725, %v608
  %v727 = vpop.permute.xlu0 %726
  %730 = vset.pattern.permute.xlu0 0
  %731 = vperm.xlu0 %730, %v609
  %v732 = vpop.permute.xlu0 %731
  %735 = vset.pattern.permute.xlu0 0
  %736 = vperm.xlu0 %735, %v610
  %v737 = vpop.permute.xlu0 %736
  %740 = vset.pattern.permute.xlu0 0
  %741 = vperm.xlu0 %740, %v611
  %v742 = vpop.permute.xlu0 %741
  %745 = vset.pattern.permute.xlu0 0
  %746 = vperm.xlu0 %745, %v612
  %v747 = vpop.permute.xlu0 %746
  %750 = vset.pattern.permute.xlu0 0
  %751 = vperm.xlu0 %750, %v613
  %v752 = vpop.permute.xlu0 %751
  %755 = vset.pattern.permute.xlu0 0
  %756 = vperm.xlu0 %755, %v614
  %v757 = vpop.permute.xlu0 %756
  %760 = vset.pattern.permute.xlu0 0
  %761 = vperm.xlu0 %760, %v615
  %v762 = vpop.permute.xlu0 %761
  %765 = vset.pattern.permute.xlu0 0
  %766 = vperm.xlu0 %765, %v616
  %v767 = vpop.permute.xlu0 %766
  %770 = vset.pattern.permute.xlu0 0
  %771 = vperm.xlu0 %770, %v617
  %v772 = vpop.permute.xlu0 %771
  %775 = vset.pattern.permute.xlu0 0
  %776 = vperm.xlu0 %775, %v618
  %v777 = vpop.permute.xlu0 %776
  %780 = vset.pattern.permute.xlu0 0
  %781 = vperm.xlu0 %780, %v619
  %v782 = vpop.permute.xlu0 %781
  %785 = vset.pattern.permute.xlu0 0
  %786 = vperm.xlu0 %785, %v620
  %v787 = vpop.permute.xlu0 %786
  %790 = vset.pattern.permute.xlu0 0
  %791 = vperm.xlu0 %790, %v621
  %v792 = vpop.permute.xlu0 %791
  %795 = vset.pattern.permute.xlu0 0
  %796 = vperm.xlu0 %795, %v622
  %v797 = vpop.permute.xlu0 %796
  %800 = vset.pattern.permute.xlu0 0
  %801 = vperm.xlu0 %800, %v623
  %v802 = vpop.permute.xlu0 %801
  %805 = vset.pattern.permute.xlu0 0
  %806 = vperm.xlu0 %805, %v624
  %v807 = vpop.permute.xlu0 %806
  %810 = vset.pattern.permute.xlu0 0
  %811 = vperm.xlu0 %810, %v625
  %v812 = vpop.permute.xlu0 %811
  %815 = vset.pattern.permute.xlu0 0
  %816 = vperm.xlu0 %815, %v626
  %v817 = vpop.permute.xlu0 %816
  %820 = vset.pattern.permute.xlu0 0
  %821 = vperm.xlu0 %820, %v627
  %v822 = vpop.permute.xlu0 %821
  %825 = vset.pattern.permute.xlu0 0
  %826 = vperm.xlu0 %825, %v628
  %v827 = vpop.permute.xlu0 %826
  %v829 = vmul.f32 %v549, %v632
  %v830 = vmul.f32 %v550, %v637
  %v831 = vmul.f32 %v551, %v642
  %v832 = vmul.f32 %v552, %v647
  %v833 = vmul.f32 %v553, %v652
  %v834 = vmul.f32 %v554, %v657
  %v835 = vmul.f32 %v555, %v662
  %v836 = vmul.f32 %v556, %v667
  %v837 = vmul.f32 %v557, %v672
  %v838 = vmul.f32 %v558, %v677
  %v839 = vmul.f32 %v559, %v682
  %v840 = vmul.f32 %v560, %v687
  %v841 = vmul.f32 %v561, %v692
  %v842 = vmul.f32 %v562, %v697
  %v843 = vmul.f32 %v563, %v702
  %v844 = vmul.f32 %v564, %v707
  %v845 = vmul.f32 %v565, %v712
  %v846 = vmul.f32 %v566, %v717
  %v847 = vmul.f32 %v567, %v722
  %v848 = vmul.f32 %v568, %v727
  %v849 = vmul.f32 %v569, %v732
  %v850 = vmul.f32 %v570, %v737
  %v851 = vmul.f32 %v571, %v742
  %v852 = vmul.f32 %v572, %v747
  %v853 = vmul.f32 %v573, %v752
  %v854 = vmul.f32 %v574, %v757
  %v855 = vmul.f32 %v575, %v762
  %v856 = vmul.f32 %v576, %v767
  %v857 = vmul.f32 %v577, %v772
  %v858 = vmul.f32 %v578, %v777
  %v859 = vmul.f32 %v579, %v782
  %v860 = vmul.f32 %v580, %v787
  %v861 = vmul.f32 %v581, %v792
  %v862 = vmul.f32 %v582, %v797
  %v863 = vmul.f32 %v583, %v802
  %v864 = vmul.f32 %v584, %v807
  %v865 = vmul.f32 %v585, %v812
  %v866 = vmul.f32 %v586, %v817
  %v867 = vmul.f32 %v587, %v822
  %v868 = vmul.f32 %v588, %v827
  %869 = vst [vmem:[#allocation2] sm:$0xff] 0.0
  %870 = vst [vmem:[#allocation2 + $0x8] sm:$0xff] %v829
  %871 = vst [vmem:[#allocation2 + $0x10] sm:$0xff] %v830
  %872 = vst [vmem:[#allocation2 + $0x18] sm:$0xff] %v831
  %873 = vst [vmem:[#allocation2 + $0x20] sm:$0xff] %v832
  %874 = vst [vmem:[#allocation2 + $0x28] sm:$0xff] %v833
  %875 = vst [vmem:[#allocation2 + $0x30] sm:$0xff] %v834
  %876 = vst [vmem:[#allocation2 + $0x38] sm:$0xff] %v835
  %877 = vst [vmem:[#allocation2 + $0x40] sm:$0xff] %v836
  %878 = vst [vmem:[#allocation2 + $0x48] sm:$0xff] %v837
  %879 = vst [vmem:[#allocation2 + $0x50] sm:$0xff] %v838
  %880 = vst [vmem:[#allocation2 + $0x58] sm:$0xff] %v839
  %881 = vst [vmem:[#allocation2 + $0x60] sm:$0xff] %v840
  %882 = vst [vmem:[#allocation2 + $0x68] sm:$0xff] %v841
  %883 = vst [vmem:[#allocation2 + $0x70] sm:$0xff] %v842
  %884 = vst [vmem:[#allocation2 + $0x78] sm:$0xff] %v843
  %885 = vst [vmem:[#allocation2 + $0x80] sm:$0xff] %v844
  %886 = vst [vmem:[#allocation2 + $0x88] sm:$0xff] %v845
  %887 = vst [vmem:[#allocation2 + $0x90] sm:$0xff] %v846
  %888 = vst [vmem:[#allocation2 + $0x98] sm:$0xff] %v847
  %889 = vst [vmem:[#allocation2 + $0xa0] sm:$0xff] %v848
  %890 = vst [vmem:[#allocation2 + $0xa8] sm:$0xff] %v849
  %891 = vst [vmem:[#allocation2 + $0xb0] sm:$0xff] %v850
  %892 = vst [vmem:[#allocation2 + $0xb8] sm:$0xff] %v851
  %893 = vst [vmem:[#allocation2 + $0xc0] sm:$0xff] %v852
  %894 = vst [vmem:[#allocation2 + $0xc8] sm:$0xff] %v853
  %895 = vst [vmem:[#allocation2 + $0xd0] sm:$0xff] %v854
  %896 = vst [vmem:[#allocation2 + $0xd8] sm:$0xff] %v855
  %897 = vst [vmem:[#allocation2 + $0xe0] sm:$0xff] %v856
  %898 = vst [vmem:[#allocation2 + $0xe8] sm:$0xff] %v857
  %899 = vst [vmem:[#allocation2 + $0xf0] sm:$0xff] %v858
  %900 = vst [vmem:[#allocation2 + $0xf8] sm:$0xff] %v859
  %901 = vst [vmem:[#allocation2 + $0x100] sm:$0xff] %v860
  %902 = vst [vmem:[#allocation2 + $0x108] sm:$0xff] %v861
  %903 = vst [vmem:[#allocation2 + $0x110] sm:$0xff] %v862
  %904 = vst [vmem:[#allocation2 + $0x118] sm:$0xff] %v863
  %905 = vst [vmem:[#allocation2 + $0x120] sm:$0xff] %v864
  %906 = vst [vmem:[#allocation2 + $0x128] sm:$0xff] %v865
  %907 = vst [vmem:[#allocation2 + $0x130] sm:$0xff] %v866
  %908 = vst [vmem:[#allocation2 + $0x138] sm:$0xff] %v867
  %909 = vst [vmem:[#allocation2 + $0x140] sm:$0xff] %v868
  %v910 = vld [vmem:[#allocation2 + $0x7] sm:$0xff]
  %v911 = vld [vmem:[#allocation2 + $0xf] sm:$0xff]
  %v912 = vld [vmem:[#allocation2 + $0x17] sm:$0xff]
  %v913 = vld [vmem:[#allocation2 + $0x1f] sm:$0xff]
  %v914 = vld [vmem:[#allocation2 + $0x27] sm:$0xff]
  %v915 = vld [vmem:[#allocation2 + $0x2f] sm:$0xff]
  %v916 = vld [vmem:[#allocation2 + $0x37] sm:$0xff]
  %v917 = vld [vmem:[#allocation2 + $0x3f] sm:$0xff]
  %v918 = vld [vmem:[#allocation2 + $0x47] sm:$0xff]
  %v919 = vld [vmem:[#allocation2 + $0x4f] sm:$0xff]
  %v920 = vld [vmem:[#allocation2 + $0x57] sm:$0xff]
  %v921 = vld [vmem:[#allocation2 + $0x5f] sm:$0xff]
  %v922 = vld [vmem:[#allocation2 + $0x67] sm:$0xff]
  %v923 = vld [vmem:[#allocation2 + $0x6f] sm:$0xff]
  %v924 = vld [vmem:[#allocation2 + $0x77] sm:$0xff]
  %v925 = vld [vmem:[#allocation2 + $0x7f] sm:$0xff]
  %v926 = vld [vmem:[#allocation2 + $0x87] sm:$0xff]
  %v927 = vld [vmem:[#allocation2 + $0x8f] sm:$0xff]
  %v928 = vld [vmem:[#allocation2 + $0x97] sm:$0xff]
  %v929 = vld [vmem:[#allocation2 + $0x9f] sm:$0xff]
  %v930 = vld [vmem:[#allocation2 + $0xa7] sm:$0xff]
  %v931 = vld [vmem:[#allocation2 + $0xaf] sm:$0xff]
  %v932 = vld [vmem:[#allocation2 + $0xb7] sm:$0xff]
  %v933 = vld [vmem:[#allocation2 + $0xbf] sm:$0xff]
  %v934 = vld [vmem:[#allocation2 + $0xc7] sm:$0xff]
  %v935 = vld [vmem:[#allocation2 + $0xcf] sm:$0xff]
  %v936 = vld [vmem:[#allocation2 + $0xd7] sm:$0xff]
  %v937 = vld [vmem:[#allocation2 + $0xdf] sm:$0xff]
  %v938 = vld [vmem:[#allocation2 + $0xe7] sm:$0xff]
  %v939 = vld [vmem:[#allocation2 + $0xef] sm:$0xff]
  %v940 = vld [vmem:[#allocation2 + $0xf7] sm:$0xff]
  %v941 = vld [vmem:[#allocation2 + $0xff] sm:$0xff]
  %v942 = vld [vmem:[#allocation2 + $0x107] sm:$0xff]
  %v943 = vpack.c.bf16 %v911, %v910
  %v944 = vpack.c.bf16 %v913, %v912
  %v945 = vpack.c.bf16 %v915, %v914
  %v946 = vpack.c.bf16 %v917, %v916
  %v947 = vpack.c.bf16 %v919, %v918
  %v948 = vpack.c.bf16 %v921, %v920
  %v949 = vpack.c.bf16 %v923, %v922
  %v950 = vpack.c.bf16 %v925, %v924
  %v951 = vpack.c.bf16 %v927, %v926
  %v952 = vpack.c.bf16 %v929, %v928
  %v953 = vpack.c.bf16 %v931, %v930
  %v954 = vpack.c.bf16 %v933, %v932
  %v955 = vpack.c.bf16 %v935, %v934
  %v956 = vpack.c.bf16 %v937, %v936
  %v957 = vpack.c.bf16 %v939, %v938
  %v958 = vpack.c.bf16 %v941, %v940
  %v959 = vpack.c.bf16 %v942, %v942
  %v977 = vunpack.c.l.b16 %v943
  %v978 = vunpack.c.h.b16 %v943
  %v979 = vunpack.c.l.b16 %v944
  %v980 = vunpack.c.h.b16 %v944
  %v981 = vunpack.c.l.b16 %v945
  %v982 = vunpack.c.h.b16 %v945
  %v983 = vunpack.c.l.b16 %v946
  %v984 = vunpack.c.h.b16 %v946
  %v985 = vunpack.c.l.b16 %v947
  %v986 = vunpack.c.h.b16 %v947
  %v987 = vunpack.c.l.b16 %v948
  %v988 = vunpack.c.h.b16 %v948
  %v989 = vunpack.c.l.b16 %v949
  %v990 = vunpack.c.h.b16 %v949
  %v991 = vunpack.c.l.b16 %v950
  %v992 = vunpack.c.h.b16 %v950
  %v993 = vunpack.c.l.b16 %v951
  %v994 = vunpack.c.h.b16 %v951
  %v995 = vunpack.c.l.b16 %v952
  %v996 = vunpack.c.h.b16 %v952
  %v997 = vunpack.c.l.b16 %v953
  %v998 = vunpack.c.h.b16 %v953
  %v999 = vunpack.c.l.b16 %v954
  %v1000 = vunpack.c.h.b16 %v954
  %v1001 = vunpack.c.l.b16 %v955
  %v1002 = vunpack.c.h.b16 %v955
  %v1003 = vunpack.c.l.b16 %v956
  %v1004 = vunpack.c.h.b16 %v956
  %v1005 = vunpack.c.l.b16 %v957
  %v1006 = vunpack.c.h.b16 %v957
  %v1007 = vunpack.c.l.b16 %v958
  %v1008 = vunpack.c.h.b16 %v958
  %v1009 = vunpack.c.l.b16 %v959
  %v1010 = vpack.c.b16 %v977, %v977
  %v1011 = vpack.c.b16 %v978, %v978
  %v1012 = vpack.c.b16 %v979, %v979
  %v1013 = vpack.c.b16 %v980, %v980
  %v1014 = vpack.c.b16 %v981, %v981
  %v1015 = vpack.c.b16 %v982, %v982
  %v1016 = vpack.c.b16 %v983, %v983
  %v1017 = vpack.c.b16 %v984, %v984
  %v1018 = vpack.c.b16 %v985, %v985
  %v1019 = vpack.c.b16 %v986, %v986
  %v1020 = vpack.c.b16 %v987, %v987
  %v1021 = vpack.c.b16 %v988, %v988
  %v1022 = vpack.c.b16 %v989, %v989
  %v1023 = vpack.c.b16 %v990, %v990
  %v1024 = vpack.c.b16 %v991, %v991
  %v1025 = vpack.c.b16 %v992, %v992
  %v1026 = vpack.c.b16 %v993, %v993
  %v1027 = vpack.c.b16 %v994, %v994
  %v1028 = vpack.c.b16 %v995, %v995
  %v1029 = vpack.c.b16 %v996, %v996
  %v1030 = vpack.c.b16 %v997, %v997
  %v1031 = vpack.c.b16 %v998, %v998
  %v1032 = vpack.c.b16 %v999, %v999
  %v1033 = vpack.c.b16 %v1000, %v1000
  %v1034 = vpack.c.b16 %v1001, %v1001
  %v1035 = vpack.c.b16 %v1002, %v1002
  %v1036 = vpack.c.b16 %v1003, %v1003
  %v1037 = vpack.c.b16 %v1004, %v1004
  %v1038 = vpack.c.b16 %v1005, %v1005
  %v1039 = vpack.c.b16 %v1006, %v1006
  %v1040 = vpack.c.b16 %v1007, %v1007
  %v1041 = vpack.c.b16 %v1008, %v1008
  %v1042 = vpack.c.b16 %v1009, %v1009
  %vm1076 = vcmask 60416
  %1077 = vst.msk [vmem:[#allocation3] sm:$0xf] %vm1076, %v1010
  %1078 = vst.msk [vmem:[#allocation3 + $0x4] sm:$0xf] %vm1076, %v1011
  %1079 = vst.msk [vmem:[#allocation3 + $0x8] sm:$0xf] %vm1076, %v1012
  %1080 = vst.msk [vmem:[#allocation3 + $0xc] sm:$0xf] %vm1076, %v1013
  %1081 = vst.msk [vmem:[#allocation3 + $0x10] sm:$0xf] %vm1076, %v1014
  %1082 = vst.msk [vmem:[#allocation3 + $0x14] sm:$0xf] %vm1076, %v1015
  %1083 = vst.msk [vmem:[#allocation3 + $0x18] sm:$0xf] %vm1076, %v1016
  %1084 = vst.msk [vmem:[#allocation3 + $0x1c] sm:$0xf] %vm1076, %v1017
  %1085 = vst.msk [vmem:[#allocation3 + $0x20] sm:$0xf] %vm1076, %v1018
  %1086 = vst.msk [vmem:[#allocation3 + $0x24] sm:$0xf] %vm1076, %v1019
  %1087 = vst.msk [vmem:[#allocation3 + $0x28] sm:$0xf] %vm1076, %v1020
  %1088 = vst.msk [vmem:[#allocation3 + $0x2c] sm:$0xf] %vm1076, %v1021
  %1089 = vst.msk [vmem:[#allocation3 + $0x30] sm:$0xf] %vm1076, %v1022
  %1090 = vst.msk [vmem:[#allocation3 + $0x34] sm:$0xf] %vm1076, %v1023
  %1091 = vst.msk [vmem:[#allocation3 + $0x38] sm:$0xf] %vm1076, %v1024
  %1092 = vst.msk [vmem:[#allocation3 + $0x3c] sm:$0xf] %vm1076, %v1025
  %1093 = vst.msk [vmem:[#allocation3 + $0x40] sm:$0xf] %vm1076, %v1026
  %1094 = vst.msk [vmem:[#allocation3 + $0x44] sm:$0xf] %vm1076, %v1027
  %1095 = vst.msk [vmem:[#allocation3 + $0x48] sm:$0xf] %vm1076, %v1028
  %1096 = vst.msk [vmem:[#allocation3 + $0x4c] sm:$0xf] %vm1076, %v1029
  %1097 = vst.msk [vmem:[#allocation3 + $0x50] sm:$0xf] %vm1076, %v1030
  %1098 = vst.msk [vmem:[#allocation3 + $0x54] sm:$0xf] %vm1076, %v1031
  %1099 = vst.msk [vmem:[#allocation3 + $0x58] sm:$0xf] %vm1076, %v1032
  %1100 = vst.msk [vmem:[#allocation3 + $0x5c] sm:$0xf] %vm1076, %v1033
  %1101 = vst.msk [vmem:[#allocation3 + $0x60] sm:$0xf] %vm1076, %v1034
  %1102 = vst.msk [vmem:[#allocation3 + $0x64] sm:$0xf] %vm1076, %v1035
  %1103 = vst.msk [vmem:[#allocation3 + $0x68] sm:$0xf] %vm1076, %v1036
  %1104 = vst.msk [vmem:[#allocation3 + $0x6c] sm:$0xf] %vm1076, %v1037
  %1105 = vst.msk [vmem:[#allocation3 + $0x70] sm:$0xf] %vm1076, %v1038
  %1106 = vst.msk [vmem:[#allocation3 + $0x74] sm:$0xf] %vm1076, %v1039
  %1107 = vst.msk [vmem:[#allocation3 + $0x78] sm:$0xf] %vm1076, %v1040
  %1108 = vst.msk [vmem:[#allocation3 + $0x7c] sm:$0xf] %vm1076, %v1041
  %1109 = vst.msk [vmem:[#allocation3 + $0x80] sm:$0xf] %vm1076, %v1042
  %v1110 = vld [vmem:[#allocation2 + $0x8] sm:$0xff]
  %v1111 = vld [vmem:[#allocation2 + $0x10] sm:$0xff]
  %v1112 = vld [vmem:[#allocation2 + $0x18] sm:$0xff]
  %v1113 = vld [vmem:[#allocation2 + $0x20] sm:$0xff]
  %v1114 = vld [vmem:[#allocation2 + $0x28] sm:$0xff]
  %v1115 = vld [vmem:[#allocation2 + $0x30] sm:$0xff]
  %v1116 = vld [vmem:[#allocation2 + $0x38] sm:$0xff]
  %v1117 = vld [vmem:[#allocation2 + $0x40] sm:$0xff]
  %v1118 = vld [vmem:[#allocation2 + $0x48] sm:$0xff]
  %v1119 = vld [vmem:[#allocation2 + $0x50] sm:$0xff]
  %v1120 = vld [vmem:[#allocation2 + $0x58] sm:$0xff]
  %v1121 = vld [vmem:[#allocation2 + $0x60] sm:$0xff]
  %v1122 = vld [vmem:[#allocation2 + $0x68] sm:$0xff]
  %v1123 = vld [vmem:[#allocation2 + $0x70] sm:$0xff]
  %v1124 = vld [vmem:[#allocation2 + $0x78] sm:$0xff]
  %v1125 = vld [vmem:[#allocation2 + $0x80] sm:$0xff]
  %v1126 = vld [vmem:[#allocation2 + $0x88] sm:$0xff]
  %v1127 = vld [vmem:[#allocation2 + $0x90] sm:$0xff]
  %v1128 = vld [vmem:[#allocation2 + $0x98] sm:$0xff]
  %v1129 = vld [vmem:[#allocation2 + $0xa0] sm:$0xff]
  %v1130 = vld [vmem:[#allocation2 + $0xa8] sm:$0xff]
  %v1131 = vld [vmem:[#allocation2 + $0xb0] sm:$0xff]
  %v1132 = vld [vmem:[#allocation2 + $0xb8] sm:$0xff]
  %v1133 = vld [vmem:[#allocation2 + $0xc0] sm:$0xff]
  %v1134 = vld [vmem:[#allocation2 + $0xc8] sm:$0xff]
  %v1135 = vld [vmem:[#allocation2 + $0xd0] sm:$0xff]
  %v1136 = vld [vmem:[#allocation2 + $0xd8] sm:$0xff]
  %v1137 = vld [vmem:[#allocation2 + $0xe0] sm:$0xff]
  %v1138 = vld [vmem:[#allocation2 + $0xe8] sm:$0xff]
  %v1139 = vld [vmem:[#allocation2 + $0xf0] sm:$0xff]
  %v1140 = vld [vmem:[#allocation2 + $0xf8] sm:$0xff]
  %v1141 = vld [vmem:[#allocation2 + $0x100] sm:$0xff]
  %v1142 = vld [vmem:[#allocation2 + $0x108] sm:$0xff]
  %v1143 = vpack.c.bf16 %v1111, %v1110
  %v1144 = vpack.c.bf16 %v1113, %v1112
  %v1145 = vpack.c.bf16 %v1115, %v1114
  %v1146 = vpack.c.bf16 %v1117, %v1116
  %v1147 = vpack.c.bf16 %v1119, %v1118
  %v1148 = vpack.c.bf16 %v1121, %v1120
  %v1149 = vpack.c.bf16 %v1123, %v1122
  %v1150 = vpack.c.bf16 %v1125, %v1124
  %v1151 = vpack.c.bf16 %v1127, %v1126
  %v1152 = vpack.c.bf16 %v1129, %v1128
  %v1153 = vpack.c.bf16 %v1131, %v1130
  %v1154 = vpack.c.bf16 %v1133, %v1132
  %v1155 = vpack.c.bf16 %v1135, %v1134
  %v1156 = vpack.c.bf16 %v1137, %v1136
  %v1157 = vpack.c.bf16 %v1139, %v1138
  %v1158 = vpack.c.bf16 %v1141, %v1140
  %v1159 = vpack.c.bf16 %v1142, %v1142
  %v1177 = vunpack.c.l.b16 %v1143
  %v1178 = vunpack.c.h.b16 %v1143
  %v1179 = vunpack.c.l.b16 %v1144
  %v1180 = vunpack.c.h.b16 %v1144
  %v1181 = vunpack.c.l.b16 %v1145
  %v1182 = vunpack.c.h.b16 %v1145
  %v1183 = vunpack.c.l.b16 %v1146
  %v1184 = vunpack.c.h.b16 %v1146
  %v1185 = vunpack.c.l.b16 %v1147
  %v1186 = vunpack.c.h.b16 %v1147
  %v1187 = vunpack.c.l.b16 %v1148
  %v1188 = vunpack.c.h.b16 %v1148
  %v1189 = vunpack.c.l.b16 %v1149
  %v1190 = vunpack.c.h.b16 %v1149
  %v1191 = vunpack.c.l.b16 %v1150
  %v1192 = vunpack.c.h.b16 %v1150
  %v1193 = vunpack.c.l.b16 %v1151
  %v1194 = vunpack.c.h.b16 %v1151
  %v1195 = vunpack.c.l.b16 %v1152
  %v1196 = vunpack.c.h.b16 %v1152
  %v1197 = vunpack.c.l.b16 %v1153
  %v1198 = vunpack.c.h.b16 %v1153
  %v1199 = vunpack.c.l.b16 %v1154
  %v1200 = vunpack.c.h.b16 %v1154
  %v1201 = vunpack.c.l.b16 %v1155
  %v1202 = vunpack.c.h.b16 %v1155
  %v1203 = vunpack.c.l.b16 %v1156
  %v1204 = vunpack.c.h.b16 %v1156
  %v1205 = vunpack.c.l.b16 %v1157
  %v1206 = vunpack.c.h.b16 %v1157
  %v1207 = vunpack.c.l.b16 %v1158
  %v1208 = vunpack.c.h.b16 %v1158
  %v1209 = vunpack.c.l.b16 %v1159
  %v1210 = vpack.c.b16 %v1177, %v1177
  %v1211 = vpack.c.b16 %v1178, %v1178
  %v1212 = vpack.c.b16 %v1179, %v1179
  %v1213 = vpack.c.b16 %v1180, %v1180
  %v1214 = vpack.c.b16 %v1181, %v1181
  %v1215 = vpack.c.b16 %v1182, %v1182
  %v1216 = vpack.c.b16 %v1183, %v1183
  %v1217 = vpack.c.b16 %v1184, %v1184
  %v1218 = vpack.c.b16 %v1185, %v1185
  %v1219 = vpack.c.b16 %v1186, %v1186
  %v1220 = vpack.c.b16 %v1187, %v1187
  %v1221 = vpack.c.b16 %v1188, %v1188
  %v1222 = vpack.c.b16 %v1189, %v1189
  %v1223 = vpack.c.b16 %v1190, %v1190
  %v1224 = vpack.c.b16 %v1191, %v1191
  %v1225 = vpack.c.b16 %v1192, %v1192
  %v1226 = vpack.c.b16 %v1193, %v1193
  %v1227 = vpack.c.b16 %v1194, %v1194
  %v1228 = vpack.c.b16 %v1195, %v1195
  %v1229 = vpack.c.b16 %v1196, %v1196
  %v1230 = vpack.c.b16 %v1197, %v1197
  %v1231 = vpack.c.b16 %v1198, %v1198
  %v1232 = vpack.c.b16 %v1199, %v1199
  %v1233 = vpack.c.b16 %v1200, %v1200
  %v1234 = vpack.c.b16 %v1201, %v1201
  %v1235 = vpack.c.b16 %v1202, %v1202
  %v1236 = vpack.c.b16 %v1203, %v1203
  %v1237 = vpack.c.b16 %v1204, %v1204
  %v1238 = vpack.c.b16 %v1205, %v1205
  %v1239 = vpack.c.b16 %v1206, %v1206
  %v1240 = vpack.c.b16 %v1207, %v1207
  %v1241 = vpack.c.b16 %v1208, %v1208
  %v1242 = vpack.c.b16 %v1209, %v1209
  %vm1276 = vcmask 126016
  %1277 = vst.msk [vmem:[#allocation3] sm:$0xf] %vm1276, %v1210
  %1278 = vst.msk [vmem:[#allocation3 + $0x4] sm:$0xf] %vm1276, %v1211
  %1279 = vst.msk [vmem:[#allocation3 + $0x8] sm:$0xf] %vm1276, %v1212
  %1280 = vst.msk [vmem:[#allocation3 + $0xc] sm:$0xf] %vm1276, %v1213
  %1281 = vst.msk [vmem:[#allocation3 + $0x10] sm:$0xf] %vm1276, %v1214
  %1282 = vst.msk [vmem:[#allocation3 + $0x14] sm:$0xf] %vm1276, %v1215
  %1283 = vst.msk [vmem:[#allocation3 + $0x18] sm:$0xf] %vm1276, %v1216
  %1284 = vst.msk [vmem:[#allocation3 + $0x1c] sm:$0xf] %vm1276, %v1217
  %1285 = vst.msk [vmem:[#allocation3 + $0x20] sm:$0xf] %vm1276, %v1218
  %1286 = vst.msk [vmem:[#allocation3 + $0x24] sm:$0xf] %vm1276, %v1219
  %1287 = vst.msk [vmem:[#allocation3 + $0x28] sm:$0xf] %vm1276, %v1220
  %1288 = vst.msk [vmem:[#allocation3 + $0x2c] sm:$0xf] %vm1276, %v1221
  %1289 = vst.msk [vmem:[#allocation3 + $0x30] sm:$0xf] %vm1276, %v1222
  %1290 = vst.msk [vmem:[#allocation3 + $0x34] sm:$0xf] %vm1276, %v1223
  %1291 = vst.msk [vmem:[#allocation3 + $0x38] sm:$0xf] %vm1276, %v1224
  %1292 = vst.msk [vmem:[#allocation3 + $0x3c] sm:$0xf] %vm1276, %v1225
  %1293 = vst.msk [vmem:[#allocation3 + $0x40] sm:$0xf] %vm1276, %v1226
  %1294 = vst.msk [vmem:[#allocation3 + $0x44] sm:$0xf] %vm1276, %v1227
  %1295 = vst.msk [vmem:[#allocation3 + $0x48] sm:$0xf] %vm1276, %v1228
  %1296 = vst.msk [vmem:[#allocation3 + $0x4c] sm:$0xf] %vm1276, %v1229
  %1297 = vst.msk [vmem:[#allocation3 + $0x50] sm:$0xf] %vm1276, %v1230
  %1298 = vst.msk [vmem:[#allocation3 + $0x54] sm:$0xf] %vm1276, %v1231
  %1299 = vst.msk [vmem:[#allocation3 + $0x58] sm:$0xf] %vm1276, %v1232
  %1300 = vst.msk [vmem:[#allocation3 + $0x5c] sm:$0xf] %vm1276, %v1233
  %1301 = vst.msk [vmem:[#allocation3 + $0x60] sm:$0xf] %vm1276, %v1234
  %1302 = vst.msk [vmem:[#allocation3 + $0x64] sm:$0xf] %vm1276, %v1235
  %1303 = vst.msk [vmem:[#allocation3 + $0x68] sm:$0xf] %vm1276, %v1236
  %1304 = vst.msk [vmem:[#allocation3 + $0x6c] sm:$0xf] %vm1276, %v1237
  %1305 = vst.msk [vmem:[#allocation3 + $0x70] sm:$0xf] %vm1276, %v1238
  %1306 = vst.msk [vmem:[#allocation3 + $0x74] sm:$0xf] %vm1276, %v1239
  %1307 = vst.msk [vmem:[#allocation3 + $0x78] sm:$0xf] %vm1276, %v1240
  %1308 = vst.msk [vmem:[#allocation3 + $0x7c] sm:$0xf] %vm1276, %v1241
  %1309 = vst.msk [vmem:[#allocation3 + $0x80] sm:$0xf] %vm1276, %v1242
  %v1310 = vld [vmem:[#allocation2 + $0x9] sm:$0xff]
  %v1311 = vld [vmem:[#allocation2 + $0x11] sm:$0xff]
  %v1312 = vld [vmem:[#allocation2 + $0x19] sm:$0xff]
  %v1313 = vld [vmem:[#allocation2 + $0x21] sm:$0xff]
  %v1314 = vld [vmem:[#allocation2 + $0x29] sm:$0xff]
  %v1315 = vld [vmem:[#allocation2 + $0x31] sm:$0xff]
  %v1316 = vld [vmem:[#allocation2 + $0x39] sm:$0xff]
  %v1317 = vld [vmem:[#allocation2 + $0x41] sm:$0xff]
  %v1318 = vld [vmem:[#allocation2 + $0x49] sm:$0xff]
  %v1319 = vld [vmem:[#allocation2 + $0x51] sm:$0xff]
  %v1320 = vld [vmem:[#allocation2 + $0x59] sm:$0xff]
  %v1321 = vld [vmem:[#allocation2 + $0x61] sm:$0xff]
  %v1322 = vld [vmem:[#allocation2 + $0x69] sm:$0xff]
  %v1323 = vld [vmem:[#allocation2 + $0x71] sm:$0xff]
  %v1324 = vld [vmem:[#allocation2 + $0x79] sm:$0xff]
  %v1325 = vld [vmem:[#allocation2 + $0x81] sm:$0xff]
  %v1326 = vld [vmem:[#allocation2 + $0x89] sm:$0xff]
  %v1327 = vld [vmem:[#allocation2 + $0x91] sm:$0xff]
  %v1328 = vld [vmem:[#allocation2 + $0x99] sm:$0xff]
  %v1329 = vld [vmem:[#allocation2 + $0xa1] sm:$0xff]
  %v1330 = vld [vmem:[#allocation2 + $0xa9] sm:$0xff]
  %v1331 = vld [vmem:[#allocation2 + $0xb1] sm:$0xff]
  %v1332 = vld [vmem:[#allocation2 + $0xb9] sm:$0xff]
  %v1333 = vld [vmem:[#allocation2 + $0xc1] sm:$0xff]
  %v1334 = vld [vmem:[#allocation2 + $0xc9] sm:$0xff]
  %v1335 = vld [vmem:[#allocation2 + $0xd1] sm:$0xff]
  %v1336 = vld [vmem:[#allocation2 + $0xd9] sm:$0xff]
  %v1337 = vld [vmem:[#allocation2 + $0xe1] sm:$0xff]
  %v1338 = vld [vmem:[#allocation2 + $0xe9] sm:$0xff]
  %v1339 = vld [vmem:[#allocation2 + $0xf1] sm:$0xff]
  %v1340 = vld [vmem:[#allocation2 + $0xf9] sm:$0xff]
  %v1341 = vld [vmem:[#allocation2 + $0x101] sm:$0xff]
  %v1342 = vld [vmem:[#allocation2 + $0x109] sm:$0xff]
  %v1343 = vpack.c.bf16 %v1311, %v1310
  %v1344 = vpack.c.bf16 %v1313, %v1312
  %v1345 = vpack.c.bf16 %v1315, %v1314
  %v1346 = vpack.c.bf16 %v1317, %v1316
  %v1347 = vpack.c.bf16 %v1319, %v1318
  %v1348 = vpack.c.bf16 %v1321, %v1320
  %v1349 = vpack.c.bf16 %v1323, %v1322
  %v1350 = vpack.c.bf16 %v1325, %v1324
  %v1351 = vpack.c.bf16 %v1327, %v1326
  %v1352 = vpack.c.bf16 %v1329, %v1328
  %v1353 = vpack.c.bf16 %v1331, %v1330
  %v1354 = vpack.c.bf16 %v1333, %v1332
  %v1355 = vpack.c.bf16 %v1335, %v1334
  %v1356 = vpack.c.bf16 %v1337, %v1336
  %v1357 = vpack.c.bf16 %v1339, %v1338
  %v1358 = vpack.c.bf16 %v1341, %v1340
  %v1359 = vpack.c.bf16 %v1342, %v1342
  %v1377 = vunpack.c.l.b16 %v1343
  %v1378 = vunpack.c.h.b16 %v1343
  %v1379 = vunpack.c.l.b16 %v1344
  %v1380 = vunpack.c.h.b16 %v1344
  %v1381 = vunpack.c.l.b16 %v1345
  %v1382 = vunpack.c.h.b16 %v1345
  %v1383 = vunpack.c.l.b16 %v1346
  %v1384 = vunpack.c.h.b16 %v1346
  %v1385 = vunpack.c.l.b16 %v1347
  %v1386 = vunpack.c.h.b16 %v1347
  %v1387 = vunpack.c.l.b16 %v1348
  %v1388 = vunpack.c.h.b16 %v1348
  %v1389 = vunpack.c.l.b16 %v1349
  %v1390 = vunpack.c.h.b16 %v1349
  %v1391 = vunpack.c.l.b16 %v1350
  %v1392 = vunpack.c.h.b16 %v1350
  %v1393 = vunpack.c.l.b16 %v1351
  %v1394 = vunpack.c.h.b16 %v1351
  %v1395 = vunpack.c.l.b16 %v1352
  %v1396 = vunpack.c.h.b16 %v1352
  %v1397 = vunpack.c.l.b16 %v1353
  %v1398 = vunpack.c.h.b16 %v1353
  %v1399 = vunpack.c.l.b16 %v1354
  %v1400 = vunpack.c.h.b16 %v1354
  %v1401 = vunpack.c.l.b16 %v1355
  %v1402 = vunpack.c.h.b16 %v1355
  %v1403 = vunpack.c.l.b16 %v1356
  %v1404 = vunpack.c.h.b16 %v1356
  %v1405 = vunpack.c.l.b16 %v1357
  %v1406 = vunpack.c.h.b16 %v1357
  %v1407 = vunpack.c.l.b16 %v1358
  %v1408 = vunpack.c.h.b16 %v1358
  %v1409 = vunpack.c.l.b16 %v1359
  %v1410 = vpack.c.b16 %v1377, %v1377
  %v1411 = vpack.c.b16 %v1378, %v1378
  %v1412 = vpack.c.b16 %v1379, %v1379
  %v1413 = vpack.c.b16 %v1380, %v1380
  %v1414 = vpack.c.b16 %v1381, %v1381
  %v1415 = vpack.c.b16 %v1382, %v1382
  %v1416 = vpack.c.b16 %v1383, %v1383
  %v1417 = vpack.c.b16 %v1384, %v1384
  %v1418 = vpack.c.b16 %v1385, %v1385
  %v1419 = vpack.c.b16 %v1386, %v1386
  %v1420 = vpack.c.b16 %v1387, %v1387
  %v1421 = vpack.c.b16 %v1388, %v1388
  %v1422 = vpack.c.b16 %v1389, %v1389
  %v1423 = vpack.c.b16 %v1390, %v1390
  %v1424 = vpack.c.b16 %v1391, %v1391
  %v1425 = vpack.c.b16 %v1392, %v1392
  %v1426 = vpack.c.b16 %v1393, %v1393
  %v1427 = vpack.c.b16 %v1394, %v1394
  %v1428 = vpack.c.b16 %v1395, %v1395
  %v1429 = vpack.c.b16 %v1396, %v1396
  %v1430 = vpack.c.b16 %v1397, %v1397
  %v1431 = vpack.c.b16 %v1398, %v1398
  %v1432 = vpack.c.b16 %v1399, %v1399
  %v1433 = vpack.c.b16 %v1400, %v1400
  %v1434 = vpack.c.b16 %v1401, %v1401
  %v1435 = vpack.c.b16 %v1402, %v1402
  %v1436 = vpack.c.b16 %v1403, %v1403
  %v1437 = vpack.c.b16 %v1404, %v1404
  %v1438 = vpack.c.b16 %v1405, %v1405
  %v1439 = vpack.c.b16 %v1406, %v1406
  %v1440 = vpack.c.b16 %v1407, %v1407
  %v1441 = vpack.c.b16 %v1408, %v1408
  %v1442 = vpack.c.b16 %v1409, %v1409
  %vm1476 = vcmask 191616
  %1477 = vst.msk [vmem:[#allocation3] sm:$0xf] %vm1476, %v1410
  %1478 = vst.msk [vmem:[#allocation3 + $0x4] sm:$0xf] %vm1476, %v1411
  %1479 = vst.msk [vmem:[#allocation3 + $0x8] sm:$0xf] %vm1476, %v1412
  %1480 = vst.msk [vmem:[#allocation3 + $0xc] sm:$0xf] %vm1476, %v1413
  %1481 = vst.msk [vmem:[#allocation3 + $0x10] sm:$0xf] %vm1476, %v1414
  %1482 = vst.msk [vmem:[#allocation3 + $0x14] sm:$0xf] %vm1476, %v1415
  %1483 = vst.msk [vmem:[#allocation3 + $0x18] sm:$0xf] %vm1476, %v1416
  %1484 = vst.msk [vmem:[#allocation3 + $0x1c] sm:$0xf] %vm1476, %v1417
  %1485 = vst.msk [vmem:[#allocation3 + $0x20] sm:$0xf] %vm1476, %v1418
  %1486 = vst.msk [vmem:[#allocation3 + $0x24] sm:$0xf] %vm1476, %v1419
  %1487 = vst.msk [vmem:[#allocation3 + $0x28] sm:$0xf] %vm1476, %v1420
  %1488 = vst.msk [vmem:[#allocation3 + $0x2c] sm:$0xf] %vm1476, %v1421
  %1489 = vst.msk [vmem:[#allocation3 + $0x30] sm:$0xf] %vm1476, %v1422
  %1490 = vst.msk [vmem:[#allocation3 + $0x34] sm:$0xf] %vm1476, %v1423
  %1491 = vst.msk [vmem:[#allocation3 + $0x38] sm:$0xf] %vm1476, %v1424
  %1492 = vst.msk [vmem:[#allocation3 + $0x3c] sm:$0xf] %vm1476, %v1425
  %1493 = vst.msk [vmem:[#allocation3 + $0x40] sm:$0xf] %vm1476, %v1426
  %1494 = vst.msk [vmem:[#allocation3 + $0x44] sm:$0xf] %vm1476, %v1427
  %1495 = vst.msk [vmem:[#allocation3 + $0x48] sm:$0xf] %vm1476, %v1428
  %1496 = vst.msk [vmem:[#allocation3 + $0x4c] sm:$0xf] %vm1476, %v1429
  %1497 = vst.msk [vmem:[#allocation3 + $0x50] sm:$0xf] %vm1476, %v1430
  %1498 = vst.msk [vmem:[#allocation3 + $0x54] sm:$0xf] %vm1476, %v1431
  %1499 = vst.msk [vmem:[#allocation3 + $0x58] sm:$0xf] %vm1476, %v1432
  %1500 = vst.msk [vmem:[#allocation3 + $0x5c] sm:$0xf] %vm1476, %v1433
  %1501 = vst.msk [vmem:[#allocation3 + $0x60] sm:$0xf] %vm1476, %v1434
  %1502 = vst.msk [vmem:[#allocation3 + $0x64] sm:$0xf] %vm1476, %v1435
  %1503 = vst.msk [vmem:[#allocation3 + $0x68] sm:$0xf] %vm1476, %v1436
  %1504 = vst.msk [vmem:[#allocation3 + $0x6c] sm:$0xf] %vm1476, %v1437
  %1505 = vst.msk [vmem:[#allocation3 + $0x70] sm:$0xf] %vm1476, %v1438
  %1506 = vst.msk [vmem:[#allocation3 + $0x74] sm:$0xf] %vm1476, %v1439
  %1507 = vst.msk [vmem:[#allocation3 + $0x78] sm:$0xf] %vm1476, %v1440
  %1508 = vst.msk [vmem:[#allocation3 + $0x7c] sm:$0xf] %vm1476, %v1441
  %1509 = vst.msk [vmem:[#allocation3 + $0x80] sm:$0xf] %vm1476, %v1442
  %v1510 = vld [vmem:[#allocation2 + $0xa] sm:$0xff]
  %v1511 = vld [vmem:[#allocation2 + $0x12] sm:$0xff]
  %v1512 = vld [vmem:[#allocation2 + $0x1a] sm:$0xff]
  %v1513 = vld [vmem:[#allocation2 + $0x22] sm:$0xff]
  %v1514 = vld [vmem:[#allocation2 + $0x2a] sm:$0xff]
  %v1515 = vld [vmem:[#allocation2 + $0x32] sm:$0xff]
  %v1516 = vld [vmem:[#allocation2 + $0x3a] sm:$0xff]
  %v1517 = vld [vmem:[#allocation2 + $0x42] sm:$0xff]
  %v1518 = vld [vmem:[#allocation2 + $0x4a] sm:$0xff]
  %v1519 = vld [vmem:[#allocation2 + $0x52] sm:$0xff]
  %v1520 = vld [vmem:[#allocation2 + $0x5a] sm:$0xff]
  %v1521 = vld [vmem:[#allocation2 + $0x62] sm:$0xff]
  %v1522 = vld [vmem:[#allocation2 + $0x6a] sm:$0xff]
  %v1523 = vld [vmem:[#allocation2 + $0x72] sm:$0xff]
  %v1524 = vld [vmem:[#allocation2 + $0x7a] sm:$0xff]
  %v1525 = vld [vmem:[#allocation2 + $0x82] sm:$0xff]
  %v1526 = vld [vmem:[#allocation2 + $0x8a] sm:$0xff]
  %v1527 = vld [vmem:[#allocation2 + $0x92] sm:$0xff]
  %v1528 = vld [vmem:[#allocation2 + $0x9a] sm:$0xff]
  %v1529 = vld [vmem:[#allocation2 + $0xa2] sm:$0xff]
  %v1530 = vld [vmem:[#allocation2 + $0xaa] sm:$0xff]
  %v1531 = vld [vmem:[#allocation2 + $0xb2] sm:$0xff]
  %v1532 = vld [vmem:[#allocation2 + $0xba] sm:$0xff]
  %v1533 = vld [vmem:[#allocation2 + $0xc2] sm:$0xff]
  %v1534 = vld [vmem:[#allocation2 + $0xca] sm:$0xff]
  %v1535 = vld [vmem:[#allocation2 + $0xd2] sm:$0xff]
  %v1536 = vld [vmem:[#allocation2 + $0xda] sm:$0xff]
  %v1537 = vld [vmem:[#allocation2 + $0xe2] sm:$0xff]
  %v1538 = vld [vmem:[#allocation2 + $0xea] sm:$0xff]
  %v1539 = vld [vmem:[#allocation2 + $0xf2] sm:$0xff]
  %v1540 = vld [vmem:[#allocation2 + $0xfa] sm:$0xff]
  %v1541 = vld [vmem:[#allocation2 + $0x102] sm:$0xff]
  %v1542 = vld [vmem:[#allocation2 + $0x10a] sm:$0xff]
  %v1543 = vpack.c.bf16 %v1511, %v1510
  %v1544 = vpack.c.bf16 %v1513, %v1512
  %v1545 = vpack.c.bf16 %v1515, %v1514
  %v1546 = vpack.c.bf16 %v1517, %v1516
  %v1547 = vpack.c.bf16 %v1519, %v1518
  %v1548 = vpack.c.bf16 %v1521, %v1520
  %v1549 = vpack.c.bf16 %v1523, %v1522
  %v1550 = vpack.c.bf16 %v1525, %v1524
  %v1551 = vpack.c.bf16 %v1527, %v1526
  %v1552 = vpack.c.bf16 %v1529, %v1528
  %v1553 = vpack.c.bf16 %v1531, %v1530
  %v1554 = vpack.c.bf16 %v1533, %v1532
  %v1555 = vpack.c.bf16 %v1535, %v1534
  %v1556 = vpack.c.bf16 %v1537, %v1536
  %v1557 = vpack.c.bf16 %v1539, %v1538
  %v1558 = vpack.c.bf16 %v1541, %v1540
  %v1559 = vpack.c.bf16 %v1542, %v1542
  %v1577 = vunpack.c.l.b16 %v1543
  %v1578 = vunpack.c.h.b16 %v1543
  %v1579 = vunpack.c.l.b16 %v1544
  %v1580 = vunpack.c.h.b16 %v1544
  %v1581 = vunpack.c.l.b16 %v1545
  %v1582 = vunpack.c.h.b16 %v1545
  %v1583 = vunpack.c.l.b16 %v1546
  %v1584 = vunpack.c.h.b16 %v1546
  %v1585 = vunpack.c.l.b16 %v1547
  %v1586 = vunpack.c.h.b16 %v1547
  %v1587 = vunpack.c.l.b16 %v1548
  %v1588 = vunpack.c.h.b16 %v1548
  %v1589 = vunpack.c.l.b16 %v1549
  %v1590 = vunpack.c.h.b16 %v1549
  %v1591 = vunpack.c.l.b16 %v1550
  %v1592 = vunpack.c.h.b16 %v1550
  %v1593 = vunpack.c.l.b16 %v1551
  %v1594 = vunpack.c.h.b16 %v1551
  %v1595 = vunpack.c.l.b16 %v1552
  %v1596 = vunpack.c.h.b16 %v1552
  %v1597 = vunpack.c.l.b16 %v1553
  %v1598 = vunpack.c.h.b16 %v1553
  %v1599 = vunpack.c.l.b16 %v1554
  %v1600 = vunpack.c.h.b16 %v1554
  %v1601 = vunpack.c.l.b16 %v1555
  %v1602 = vunpack.c.h.b16 %v1555
  %v1603 = vunpack.c.l.b16 %v1556
  %v1604 = vunpack.c.h.b16 %v1556
  %v1605 = vunpack.c.l.b16 %v1557
  %v1606 = vunpack.c.h.b16 %v1557
  %v1607 = vunpack.c.l.b16 %v1558
  %v1608 = vunpack.c.h.b16 %v1558
  %v1609 = vunpack.c.l.b16 %v1559
  %v1610 = vpack.c.b16 %v1577, %v1577
  %v1611 = vpack.c.b16 %v1578, %v1578
  %v1612 = vpack.c.b16 %v1579, %v1579
  %v1613 = vpack.c.b16 %v1580, %v1580
  %v1614 = vpack.c.b16 %v1581, %v1581
  %v1615 = vpack.c.b16 %v1582, %v1582
  %v1616 = vpack.c.b16 %v1583, %v1583
  %v1617 = vpack.c.b16 %v1584, %v1584
  %v1618 = vpack.c.b16 %v1585, %v1585
  %v1619 = vpack.c.b16 %v1586, %v1586
  %v1620 = vpack.c.b16 %v1587, %v1587
  %v1621 = vpack.c.b16 %v1588, %v1588
  %v1622 = vpack.c.b16 %v1589, %v1589
  %v1623 = vpack.c.b16 %v1590, %v1590
  %v1624 = vpack.c.b16 %v1591, %v1591
  %v1625 = vpack.c.b16 %v1592, %v1592
  %v1626 = vpack.c.b16 %v1593, %v1593
  %v1627 = vpack.c.b16 %v1594, %v1594
  %v1628 = vpack.c.b16 %v1595, %v1595
  %v1629 = vpack.c.b16 %v1596, %v1596
  %v1630 = vpack.c.b16 %v1597, %v1597
  %v1631 = vpack.c.b16 %v1598, %v1598
  %v1632 = vpack.c.b16 %v1599, %v1599
  %v1633 = vpack.c.b16 %v1600, %v1600
  %v1634 = vpack.c.b16 %v1601, %v1601
  %v1635 = vpack.c.b16 %v1602, %v1602
  %v1636 = vpack.c.b16 %v1603, %v1603
  %v1637 = vpack.c.b16 %v1604, %v1604
  %v1638 = vpack.c.b16 %v1605, %v1605
  %v1639 = vpack.c.b16 %v1606, %v1606
  %v1640 = vpack.c.b16 %v1607, %v1607
  %v1641 = vpack.c.b16 %v1608, %v1608
  %v1642 = vpack.c.b16 %v1609, %v1609
  %vm1676 = vcmask 257216
  %1677 = vst.msk [vmem:[#allocation3] sm:$0xf] %vm1676, %v1610
  %1678 = vst.msk [vmem:[#allocation3 + $0x4] sm:$0xf] %vm1676, %v1611
  %1679 = vst.msk [vmem:[#allocation3 + $0x8] sm:$0xf] %vm1676, %v1612
  %1680 = vst.msk [vmem:[#allocation3 + $0xc] sm:$0xf] %vm1676, %v1613
  %1681 = vst.msk [vmem:[#allocation3 + $0x10] sm:$0xf] %vm1676, %v1614
  %1682 = vst.msk [vmem:[#allocation3 + $0x14] sm:$0xf] %vm1676, %v1615
  %1683 = vst.msk [vmem:[#allocation3 + $0x18] sm:$0xf] %vm1676, %v1616
  %1684 = vst.msk [vmem:[#allocation3 + $0x1c] sm:$0xf] %vm1676, %v1617
  %1685 = vst.msk [vmem:[#allocation3 + $0x20] sm:$0xf] %vm1676, %v1618
  %1686 = vst.msk [vmem:[#allocation3 + $0x24] sm:$0xf] %vm1676, %v1619
  %1687 = vst.msk [vmem:[#allocation3 + $0x28] sm:$0xf] %vm1676, %v1620
  %1688 = vst.msk [vmem:[#allocation3 + $0x2c] sm:$0xf] %vm1676, %v1621
  %1689 = vst.msk [vmem:[#allocation3 + $0x30] sm:$0xf] %vm1676, %v1622
  %1690 = vst.msk [vmem:[#allocation3 + $0x34] sm:$0xf] %vm1676, %v1623
  %1691 = vst.msk [vmem:[#allocation3 + $0x38] sm:$0xf] %vm1676, %v1624
  %1692 = vst.msk [vmem:[#allocation3 + $0x3c] sm:$0xf] %vm1676, %v1625
  %1693 = vst.msk [vmem:[#allocation3 + $0x40] sm:$0xf] %vm1676, %v1626
  %1694 = vst.msk [vmem:[#allocation3 + $0x44] sm:$0xf] %vm1676, %v1627
  %1695 = vst.msk [vmem:[#allocation3 + $0x48] sm:$0xf] %vm1676, %v1628
  %1696 = vst.msk [vmem:[#allocation3 + $0x4c] sm:$0xf] %vm1676, %v1629
  %1697 = vst.msk [vmem:[#allocation3 + $0x50] sm:$0xf] %vm1676, %v1630
  %1698 = vst.msk [vmem:[#allocation3 + $0x54] sm:$0xf] %vm1676, %v1631
  %1699 = vst.msk [vmem:[#allocation3 + $0x58] sm:$0xf] %vm1676, %v1632
  %1700 = vst.msk [vmem:[#allocation3 + $0x5c] sm:$0xf] %vm1676, %v1633
  %1701 = vst.msk [vmem:[#allocation3 + $0x60] sm:$0xf] %vm1676, %v1634
  %1702 = vst.msk [vmem:[#allocation3 + $0x64] sm:$0xf] %vm1676, %v1635
  %1703 = vst.msk [vmem:[#allocation3 + $0x68] sm:$0xf] %vm1676, %v1636
  %1704 = vst.msk [vmem:[#allocation3 + $0x6c] sm:$0xf] %vm1676, %v1637
  %1705 = vst.msk [vmem:[#allocation3 + $0x70] sm:$0xf] %vm1676, %v1638
  %1706 = vst.msk [vmem:[#allocation3 + $0x74] sm:$0xf] %vm1676, %v1639
  %1707 = vst.msk [vmem:[#allocation3 + $0x78] sm:$0xf] %vm1676, %v1640
  %1708 = vst.msk [vmem:[#allocation3 + $0x7c] sm:$0xf] %vm1676, %v1641
  %1709 = vst.msk [vmem:[#allocation3 + $0x80] sm:$0xf] %vm1676, %v1642
  %v1710 = vld [vmem:[#allocation2 + $0x17] sm:$0xff]
  %v1711 = vld [vmem:[#allocation2 + $0x1f] sm:$0xff]
  %v1712 = vld [vmem:[#allocation2 + $0x27] sm:$0xff]
  %v1713 = vld [vmem:[#allocation2 + $0x2f] sm:$0xff]
  %v1714 = vld [vmem:[#allocation2 + $0x37] sm:$0xff]
  %v1715 = vld [vmem:[#allocation2 + $0x3f] sm:$0xff]
  %v1716 = vld [vmem:[#allocation2 + $0x47] sm:$0xff]
  %v1717 = vld [vmem:[#allocation2 + $0x4f] sm:$0xff]
  %v1718 = vld [vmem:[#allocation2 + $0x57] sm:$0xff]
  %v1719 = vld [vmem:[#allocation2 + $0x5f] sm:$0xff]
  %v1720 = vld [vmem:[#allocation2 + $0x67] sm:$0xff]
  %v1721 = vld [vmem:[#allocation2 + $0x6f] sm:$0xff]
  %v1722 = vld [vmem:[#allocation2 + $0x77] sm:$0xff]
  %v1723 = vld [vmem:[#allocation2 + $0x7f] sm:$0xff]
  %v1724 = vld [vmem:[#allocation2 + $0x87] sm:$0xff]
  %v1725 = vld [vmem:[#allocation2 + $0x8f] sm:$0xff]
  %v1726 = vld [vmem:[#allocation2 + $0x97] sm:$0xff]
  %v1727 = vld [vmem:[#allocation2 + $0x9f] sm:$0xff]
  %v1728 = vld [vmem:[#allocation2 + $0xa7] sm:$0xff]
  %v1729 = vld [vmem:[#allocation2 + $0xaf] sm:$0xff]
  %v1730 = vld [vmem:[#allocation2 + $0xb7] sm:$0xff]
  %v1731 = vld [vmem:[#allocation2 + $0xbf] sm:$0xff]
  %v1732 = vld [vmem:[#allocation2 + $0xc7] sm:$0xff]
  %v1733 = vld [vmem:[#allocation2 + $0xcf] sm:$0xff]
  %v1734 = vld [vmem:[#allocation2 + $0xd7] sm:$0xff]
  %v1735 = vld [vmem:[#allocation2 + $0xdf] sm:$0xff]
  %v1736 = vld [vmem:[#allocation2 + $0xe7] sm:$0xff]
  %v1737 = vld [vmem:[#allocation2 + $0xef] sm:$0xff]
  %v1738 = vld [vmem:[#allocation2 + $0xf7] sm:$0xff]
  %v1739 = vld [vmem:[#allocation2 + $0xff] sm:$0xff]
  %v1740 = vld [vmem:[#allocation2 + $0x107] sm:$0xff]
  %v1741 = vld [vmem:[#allocation2 + $0x10f] sm:$0xff]
  %v1742 = vld [vmem:[#allocation2 + $0x117] sm:$0xff]
  %v1743 = vpack.c.bf16 %v1711, %v1710
  %v1744 = vpack.c.bf16 %v1713, %v1712
  %v1745 = vpack.c.bf16 %v1715, %v1714
  %v1746 = vpack.c.bf16 %v1717, %v1716
  %v1747 = vpack.c.bf16 %v1719, %v1718
  %v1748 = vpack.c.bf16 %v1721, %v1720
  %v1749 = vpack.c.bf16 %v1723, %v1722
  %v1750 = vpack.c.bf16 %v1725, %v1724
  %v1751 = vpack.c.bf16 %v1727, %v1726
  %v1752 = vpack.c.bf16 %v1729, %v1728
  %v1753 = vpack.c.bf16 %v1731, %v1730
  %v1754 = vpack.c.bf16 %v1733, %v1732
  %v1755 = vpack.c.bf16 %v1735, %v1734
  %v1756 = vpack.c.bf16 %v1737, %v1736
  %v1757 = vpack.c.bf16 %v1739, %v1738
  %v1758 = vpack.c.bf16 %v1741, %v1740
  %v1759 = vpack.c.bf16 %v1742, %v1742
  %v1777 = vunpack.c.l.b16 %v1743
  %v1778 = vunpack.c.h.b16 %v1743
  %v1779 = vunpack.c.l.b16 %v1744
  %v1780 = vunpack.c.h.b16 %v1744
  %v1781 = vunpack.c.l.b16 %v1745
  %v1782 = vunpack.c.h.b16 %v1745
  %v1783 = vunpack.c.l.b16 %v1746
  %v1784 = vunpack.c.h.b16 %v1746
  %v1785 = vunpack.c.l.b16 %v1747
  %v1786 = vunpack.c.h.b16 %v1747
  %v1787 = vunpack.c.l.b16 %v1748
  %v1788 = vunpack.c.h.b16 %v1748
  %v1789 = vunpack.c.l.b16 %v1749
  %v1790 = vunpack.c.h.b16 %v1749
  %v1791 = vunpack.c.l.b16 %v1750
  %v1792 = vunpack.c.h.b16 %v1750
  %v1793 = vunpack.c.l.b16 %v1751
  %v1794 = vunpack.c.h.b16 %v1751
  %v1795 = vunpack.c.l.b16 %v1752
  %v1796 = vunpack.c.h.b16 %v1752
  %v1797 = vunpack.c.l.b16 %v1753
  %v1798 = vunpack.c.h.b16 %v1753
  %v1799 = vunpack.c.l.b16 %v1754
  %v1800 = vunpack.c.h.b16 %v1754
  %v1801 = vunpack.c.l.b16 %v1755
  %v1802 = vunpack.c.h.b16 %v1755
  %v1803 = vunpack.c.l.b16 %v1756
  %v1804 = vunpack.c.h.b16 %v1756
  %v1805 = vunpack.c.l.b16 %v1757
  %v1806 = vunpack.c.h.b16 %v1757
  %v1807 = vunpack.c.l.b16 %v1758
  %v1808 = vunpack.c.h.b16 %v1758
  %v1809 = vunpack.c.l.b16 %v1759
  %v1810 = vpack.c.b16 %v1777, %v1777
  %v1811 = vpack.c.b16 %v1778, %v1778
  %v1812 = vpack.c.b16 %v1779, %v1779
  %v1813 = vpack.c.b16 %v1780, %v1780
  %v1814 = vpack.c.b16 %v1781, %v1781
  %v1815 = vpack.c.b16 %v1782, %v1782
  %v1816 = vpack.c.b16 %v1783, %v1783
  %v1817 = vpack.c.b16 %v1784, %v1784
  %v1818 = vpack.c.b16 %v1785, %v1785
  %v1819 = vpack.c.b16 %v1786, %v1786
  %v1820 = vpack.c.b16 %v1787, %v1787
  %v1821 = vpack.c.b16 %v1788, %v1788
  %v1822 = vpack.c.b16 %v1789, %v1789
  %v1823 = vpack.c.b16 %v1790, %v1790
  %v1824 = vpack.c.b16 %v1791, %v1791
  %v1825 = vpack.c.b16 %v1792, %v1792
  %v1826 = vpack.c.b16 %v1793, %v1793
  %v1827 = vpack.c.b16 %v1794, %v1794
  %v1828 = vpack.c.b16 %v1795, %v1795
  %v1829 = vpack.c.b16 %v1796, %v1796
  %v1830 = vpack.c.b16 %v1797, %v1797
  %v1831 = vpack.c.b16 %v1798, %v1798
  %v1832 = vpack.c.b16 %v1799, %v1799
  %v1833 = vpack.c.b16 %v1800, %v1800
  %v1834 = vpack.c.b16 %v1801, %v1801
  %v1835 = vpack.c.b16 %v1802, %v1802
  %v1836 = vpack.c.b16 %v1803, %v1803
  %v1837 = vpack.c.b16 %v1804, %v1804
  %v1838 = vpack.c.b16 %v1805, %v1805
  %v1839 = vpack.c.b16 %v1806, %v1806
  %v1840 = vpack.c.b16 %v1807, %v1807
  %v1841 = vpack.c.b16 %v1808, %v1808
  %v1842 = vpack.c.b16 %v1809, %v1809
  %vm1876 = vcmask 322816
  %1877 = vst.msk [vmem:[#allocation3] sm:$0xf] %vm1876, %v1810
  %1878 = vst.msk [vmem:[#allocation3 + $0x4] sm:$0xf] %vm1876, %v1811
  %1879 = vst.msk [vmem:[#allocation3 + $0x8] sm:$0xf] %vm1876, %v1812
  %1880 = vst.msk [vmem:[#allocation3 + $0xc] sm:$0xf] %vm1876, %v1813
  %1881 = vst.msk [vmem:[#allocation3 + $0x10] sm:$0xf] %vm1876, %v1814
  %1882 = vst.msk [vmem:[#allocation3 + $0x14] sm:$0xf] %vm1876, %v1815
  %1883 = vst.msk [vmem:[#allocation3 + $0x18] sm:$0xf] %vm1876, %v1816
  %1884 = vst.msk [vmem:[#allocation3 + $0x1c] sm:$0xf] %vm1876, %v1817
  %1885 = vst.msk [vmem:[#allocation3 + $0x20] sm:$0xf] %vm1876, %v1818
  %1886 = vst.msk [vmem:[#allocation3 + $0x24] sm:$0xf] %vm1876, %v1819
  %1887 = vst.msk [vmem:[#allocation3 + $0x28] sm:$0xf] %vm1876, %v1820
  %1888 = vst.msk [vmem:[#allocation3 + $0x2c] sm:$0xf] %vm1876, %v1821
  %1889 = vst.msk [vmem:[#allocation3 + $0x30] sm:$0xf] %vm1876, %v1822
  %1890 = vst.msk [vmem:[#allocation3 + $0x34] sm:$0xf] %vm1876, %v1823
  %1891 = vst.msk [vmem:[#allocation3 + $0x38] sm:$0xf] %vm1876, %v1824
  %1892 = vst.msk [vmem:[#allocation3 + $0x3c] sm:$0xf] %vm1876, %v1825
  %1893 = vst.msk [vmem:[#allocation3 + $0x40] sm:$0xf] %vm1876, %v1826
  %1894 = vst.msk [vmem:[#allocation3 + $0x44] sm:$0xf] %vm1876, %v1827
  %1895 = vst.msk [vmem:[#allocation3 + $0x48] sm:$0xf] %vm1876, %v1828
  %1896 = vst.msk [vmem:[#allocation3 + $0x4c] sm:$0xf] %vm1876, %v1829
  %1897 = vst.msk [vmem:[#allocation3 + $0x50] sm:$0xf] %vm1876, %v1830
  %1898 = vst.msk [vmem:[#allocation3 + $0x54] sm:$0xf] %vm1876, %v1831
  %1899 = vst.msk [vmem:[#allocation3 + $0x58] sm:$0xf] %vm1876, %v1832
  %1900 = vst.msk [vmem:[#allocation3 + $0x5c] sm:$0xf] %vm1876, %v1833
  %1901 = vst.msk [vmem:[#allocation3 + $0x60] sm:$0xf] %vm1876, %v1834
  %1902 = vst.msk [vmem:[#allocation3 + $0x64] sm:$0xf] %vm1876, %v1835
  %1903 = vst.msk [vmem:[#allocation3 + $0x68] sm:$0xf] %vm1876, %v1836
  %1904 = vst.msk [vmem:[#allocation3 + $0x6c] sm:$0xf] %vm1876, %v1837
  %1905 = vst.msk [vmem:[#allocation3 + $0x70] sm:$0xf] %vm1876, %v1838
  %1906 = vst.msk [vmem:[#allocation3 + $0x74] sm:$0xf] %vm1876, %v1839
  %1907 = vst.msk [vmem:[#allocation3 + $0x78] sm:$0xf] %vm1876, %v1840
  %1908 = vst.msk [vmem:[#allocation3 + $0x7c] sm:$0xf] %vm1876, %v1841
  %1909 = vst.msk [vmem:[#allocation3 + $0x80] sm:$0xf] %vm1876, %v1842
  %v1910 = vld [vmem:[#allocation2 + $0x18] sm:$0xff]
  %v1911 = vld [vmem:[#allocation2 + $0x20] sm:$0xff]
  %v1912 = vld [vmem:[#allocation2 + $0x28] sm:$0xff]
  %v1913 = vld [vmem:[#allocation2 + $0x30] sm:$0xff]
  %v1914 = vld [vmem:[#allocation2 + $0x38] sm:$0xff]
  %v1915 = vld [vmem:[#allocation2 + $0x40] sm:$0xff]
  %v1916 = vld [vmem:[#allocation2 + $0x48] sm:$0xff]
  %v1917 = vld [vmem:[#allocation2 + $0x50] sm:$0xff]
  %v1918 = vld [vmem:[#allocation2 + $0x58] sm:$0xff]
  %v1919 = vld [vmem:[#allocation2 + $0x60] sm:$0xff]
  %v1920 = vld [vmem:[#allocation2 + $0x68] sm:$0xff]
  %v1921 = vld [vmem:[#allocation2 + $0x70] sm:$0xff]
  %v1922 = vld [vmem:[#allocation2 + $0x78] sm:$0xff]
  %v1923 = vld [vmem:[#allocation2 + $0x80] sm:$0xff]
  %v1924 = vld [vmem:[#allocation2 + $0x88] sm:$0xff]
  %v1925 = vld [vmem:[#allocation2 + $0x90] sm:$0xff]
  %v1926 = vld [vmem:[#allocation2 + $0x98] sm:$0xff]
  %v1927 = vld [vmem:[#allocation2 + $0xa0] sm:$0xff]
  %v1928 = vld [vmem:[#allocation2 + $0xa8] sm:$0xff]
  %v1929 = vld [vmem:[#allocation2 + $0xb0] sm:$0xff]
  %v1930 = vld [vmem:[#allocation2 + $0xb8] sm:$0xff]
  %v1931 = vld [vmem:[#allocation2 + $0xc0] sm:$0xff]
  %v1932 = vld [vmem:[#allocation2 + $0xc8] sm:$0xff]
  %v1933 = vld [vmem:[#allocation2 + $0xd0] sm:$0xff]
  %v1934 = vld [vmem:[#allocation2 + $0xd8] sm:$0xff]
  %v1935 = vld [vmem:[#allocation2 + $0xe0] sm:$0xff]
  %v1936 = vld [vmem:[#allocation2 + $0xe8] sm:$0xff]
  %v1937 = vld [vmem:[#allocation2 + $0xf0] sm:$0xff]
  %v1938 = vld [vmem:[#allocation2 + $0xf8] sm:$0xff]
  %v1939 = vld [vmem:[#allocation2 + $0x100] sm:$0xff]
  %v1940 = vld [vmem:[#allocation2 + $0x108] sm:$0xff]
  %v1941 = vld [vmem:[#allocation2 + $0x110] sm:$0xff]
  %v1942 = vld [vmem:[#allocation2 + $0x118] sm:$0xff]
  %v1943 = vpack.c.bf16 %v1911, %v1910
  %v1944 = vpack.c.bf16 %v1913, %v1912
  %v1945 = vpack.c.bf16 %v1915, %v1914
  %v1946 = vpack.c.bf16 %v1917, %v1916
  %v1947 = vpack.c.bf16 %v1919, %v1918
  %v1948 = vpack.c.bf16 %v1921, %v1920
  %v1949 = vpack.c.bf16 %v1923, %v1922
  %v1950 = vpack.c.bf16 %v1925, %v1924
  %v1951 = vpack.c.bf16 %v1927, %v1926
  %v1952 = vpack.c.bf16 %v1929, %v1928
  %v1953 = vpack.c.bf16 %v1931, %v1930
  %v1954 = vpack.c.bf16 %v1933, %v1932
  %v1955 = vpack.c.bf16 %v1935, %v1934
  %v1956 = vpack.c.bf16 %v1937, %v1936
  %v1957 = vpack.c.bf16 %v1939, %v1938
  %v1958 = vpack.c.bf16 %v1941, %v1940
  %v1959 = vpack.c.bf16 %v1942, %v1942
  %v1977 = vunpack.c.l.b16 %v1943
  %v1978 = vunpack.c.h.b16 %v1943
  %v1979 = vunpack.c.l.b16 %v1944
  %v1980 = vunpack.c.h.b16 %v1944
  %v1981 = vunpack.c.l.b16 %v1945
  %v1982 = vunpack.c.h.b16 %v1945
  %v1983 = vunpack.c.l.b16 %v1946
  %v1984 = vunpack.c.h.b16 %v1946
  %v1985 = vunpack.c.l.b16 %v1947
  %v1986 = vunpack.c.h.b16 %v1947
  %v1987 = vunpack.c.l.b16 %v1948
  %v1988 = vunpack.c.h.b16 %v1948
  %v1989 = vunpack.c.l.b16 %v1949
  %v1990 = vunpack.c.h.b16 %v1949
  %v1991 = vunpack.c.l.b16 %v1950
  %v1992 = vunpack.c.h.b16 %v1950
  %v1993 = vunpack.c.l.b16 %v1951
  %v1994 = vunpack.c.h.b16 %v1951
  %v1995 = vunpack.c.l.b16 %v1952
  %v1996 = vunpack.c.h.b16 %v1952
  %v1997 = vunpack.c.l.b16 %v1953
  %v1998 = vunpack.c.h.b16 %v1953
  %v1999 = vunpack.c.l.b16 %v1954
  %v2000 = vunpack.c.h.b16 %v1954
  %v2001 = vunpack.c.l.b16 %v1955
  %v2002 = vunpack.c.h.b16 %v1955
  %v2003 = vunpack.c.l.b16 %v1956
  %v2004 = vunpack.c.h.b16 %v1956
  %v2005 = vunpack.c.l.b16 %v1957
  %v2006 = vunpack.c.h.b16 %v1957
  %v2007 = vunpack.c.l.b16 %v1958
  %v2008 = vunpack.c.h.b16 %v1958
  %v2009 = vunpack.c.l.b16 %v1959
  %v2010 = vpack.c.b16 %v1977, %v1977
  %v2011 = vpack.c.b16 %v1978, %v1978
  %v2012 = vpack.c.b16 %v1979, %v1979
  %v2013 = vpack.c.b16 %v1980, %v1980
  %v2014 = vpack.c.b16 %v1981, %v1981
  %v2015 = vpack.c.b16 %v1982, %v1982
  %v2016 = vpack.c.b16 %v1983, %v1983
  %v2017 = vpack.c.b16 %v1984, %v1984
  %v2018 = vpack.c.b16 %v1985, %v1985
  %v2019 = vpack.c.b16 %v1986, %v1986
  %v2020 = vpack.c.b16 %v1987, %v1987
  %v2021 = vpack.c.b16 %v1988, %v1988
  %v2022 = vpack.c.b16 %v1989, %v1989
  %v2023 = vpack.c.b16 %v1990, %v1990
  %v2024 = vpack.c.b16 %v1991, %v1991
  %v2025 = vpack.c.b16 %v1992, %v1992
  %v2026 = vpack.c.b16 %v1993, %v1993
  %v2027 = vpack.c.b16 %v1994, %v1994
  %v2028 = vpack.c.b16 %v1995, %v1995
  %v2029 = vpack.c.b16 %v1996, %v1996
  %v2030 = vpack.c.b16 %v1997, %v1997
  %v2031 = vpack.c.b16 %v1998, %v1998
  %v2032 = vpack.c.b16 %v1999, %v1999
  %v2033 = vpack.c.b16 %v2000, %v2000
  %v2034 = vpack.c.b16 %v2001, %v2001
  %v2035 = vpack.c.b16 %v2002, %v2002
  %v2036 = vpack.c.b16 %v2003, %v2003
  %v2037 = vpack.c.b16 %v2004, %v2004
  %v2038 = vpack.c.b16 %v2005, %v2005
  %v2039 = vpack.c.b16 %v2006, %v2006
  %v2040 = vpack.c.b16 %v2007, %v2007
  %v2041 = vpack.c.b16 %v2008, %v2008
  %v2042 = vpack.c.b16 %v2009, %v2009
  %vm2076 = vcmask 388416
  %2077 = vst.msk [vmem:[#allocation3] sm:$0xf] %vm2076, %v2010
  %2078 = vst.msk [vmem:[#allocation3 + $0x4] sm:$0xf] %vm2076, %v2011
  %2079 = vst.msk [vmem:[#allocation3 + $0x8] sm:$0xf] %vm2076, %v2012
  %2080 = vst.msk [vmem:[#allocation3 + $0xc] sm:$0xf] %vm2076, %v2013
  %2081 = vst.msk [vmem:[#allocation3 + $0x10] sm:$0xf] %vm2076, %v2014
  %2082 = vst.msk [vmem:[#allocation3 + $0x14] sm:$0xf] %vm2076, %v2015
  %2083 = vst.msk [vmem:[#allocation3 + $0x18] sm:$0xf] %vm2076, %v2016
  %2084 = vst.msk [vmem:[#allocation3 + $0x1c] sm:$0xf] %vm2076, %v2017
  %2085 = vst.msk [vmem:[#allocation3 + $0x20] sm:$0xf] %vm2076, %v2018
  %2086 = vst.msk [vmem:[#allocation3 + $0x24] sm:$0xf] %vm2076, %v2019
  %2087 = vst.msk [vmem:[#allocation3 + $0x28] sm:$0xf] %vm2076, %v2020
  %2088 = vst.msk [vmem:[#allocation3 + $0x2c] sm:$0xf] %vm2076, %v2021
  %2089 = vst.msk [vmem:[#allocation3 + $0x30] sm:$0xf] %vm2076, %v2022
  %2090 = vst.msk [vmem:[#allocation3 + $0x34] sm:$0xf] %vm2076, %v2023
  %2091 = vst.msk [vmem:[#allocation3 + $0x38] sm:$0xf] %vm2076, %v2024
  %2092 = vst.msk [vmem:[#allocation3 + $0x3c] sm:$0xf] %vm2076, %v2025
  %2093 = vst.msk [vmem:[#allocation3 + $0x40] sm:$0xf] %vm2076, %v2026
  %2094 = vst.msk [vmem:[#allocation3 + $0x44] sm:$0xf] %vm2076, %v2027
  %2095 = vst.msk [vmem:[#allocation3 + $0x48] sm:$0xf] %vm2076, %v2028
  %2096 = vst.msk [vmem:[#allocation3 + $0x4c] sm:$0xf] %vm2076, %v2029
  %2097 = vst.msk [vmem:[#allocation3 + $0x50] sm:$0xf] %vm2076, %v2030
  %2098 = vst.msk [vmem:[#allocation3 + $0x54] sm:$0xf] %vm2076, %v2031
  %2099 = vst.msk [vmem:[#allocation3 + $0x58] sm:$0xf] %vm2076, %v2032
  %2100 = vst.msk [vmem:[#allocation3 + $0x5c] sm:$0xf] %vm2076, %v2033
  %2101 = vst.msk [vmem:[#allocation3 + $0x60] sm:$0xf] %vm2076, %v2034
  %2102 = vst.msk [vmem:[#allocation3 + $0x64] sm:$0xf] %vm2076, %v2035
  %2103 = vst.msk [vmem:[#allocation3 + $0x68] sm:$0xf] %vm2076, %v2036
  %2104 = vst.msk [vmem:[#allocation3 + $0x6c] sm:$0xf] %vm2076, %v2037
  %2105 = vst.msk [vmem:[#allocation3 + $0x70] sm:$0xf] %vm2076, %v2038
  %2106 = vst.msk [vmem:[#allocation3 + $0x74] sm:$0xf] %vm2076, %v2039
  %2107 = vst.msk [vmem:[#allocation3 + $0x78] sm:$0xf] %vm2076, %v2040
  %2108 = vst.msk [vmem:[#allocation3 + $0x7c] sm:$0xf] %vm2076, %v2041
  %2109 = vst.msk [vmem:[#allocation3 + $0x80] sm:$0xf] %vm2076, %v2042
  %v2110 = vld [vmem:[#allocation2 + $0x19] sm:$0xff]
  %v2111 = vld [vmem:[#allocation2 + $0x21] sm:$0xff]
  %v2112 = vld [vmem:[#allocation2 + $0x29] sm:$0xff]
  %v2113 = vld [vmem:[#allocation2 + $0x31] sm:$0xff]
  %v2114 = vld [vmem:[#allocation2 + $0x39] sm:$0xff]
  %v2115 = vld [vmem:[#allocation2 + $0x41] sm:$0xff]
  %v2116 = vld [vmem:[#allocation2 + $0x49] sm:$0xff]
  %v2117 = vld [vmem:[#allocation2 + $0x51] sm:$0xff]
  %v2118 = vld [vmem:[#allocation2 + $0x59] sm:$0xff]
  %v2119 = vld [vmem:[#allocation2 + $0x61] sm:$0xff]
  %v2120 = vld [vmem:[#allocation2 + $0x69] sm:$0xff]
  %v2121 = vld [vmem:[#allocation2 + $0x71] sm:$0xff]
  %v2122 = vld [vmem:[#allocation2 + $0x79] sm:$0xff]
  %v2123 = vld [vmem:[#allocation2 + $0x81] sm:$0xff]
  %v2124 = vld [vmem:[#allocation2 + $0x89] sm:$0xff]
  %v2125 = vld [vmem:[#allocation2 + $0x91] sm:$0xff]
  %v2126 = vld [vmem:[#allocation2 + $0x99] sm:$0xff]
  %v2127 = vld [vmem:[#allocation2 + $0xa1] sm:$0xff]
  %v2128 = vld [vmem:[#allocation2 + $0xa9] sm:$0xff]
  %v2129 = vld [vmem:[#allocation2 + $0xb1] sm:$0xff]
  %v2130 = vld [vmem:[#allocation2 + $0xb9] sm:$0xff]
  %v2131 = vld [vmem:[#allocation2 + $0xc1] sm:$0xff]
  %v2132 = vld [vmem:[#allocation2 + $0xc9] sm:$0xff]
  %v2133 = vld [vmem:[#allocation2 + $0xd1] sm:$0xff]
  %v2134 = vld [vmem:[#allocation2 + $0xd9] sm:$0xff]
  %v2135 = vld [vmem:[#allocation2 + $0xe1] sm:$0xff]
  %v2136 = vld [vmem:[#allocation2 + $0xe9] sm:$0xff]
  %v2137 = vld [vmem:[#allocation2 + $0xf1] sm:$0xff]
  %v2138 = vld [vmem:[#allocation2 + $0xf9] sm:$0xff]
  %v2139 = vld [vmem:[#allocation2 + $0x101] sm:$0xff]
  %v2140 = vld [vmem:[#allocation2 + $0x109] sm:$0xff]
  %v2141 = vld [vmem:[#allocation2 + $0x111] sm:$0xff]
  %v2142 = vld [vmem:[#allocation2 + $0x119] sm:$0xff]
  %v2143 = vpack.c.bf16 %v2111, %v2110
  %v2144 = vpack.c.bf16 %v2113, %v2112
  %v2145 = vpack.c.bf16 %v2115, %v2114
  %v2146 = vpack.c.bf16 %v2117, %v2116
  %v2147 = vpack.c.bf16 %v2119, %v2118
  %v2148 = vpack.c.bf16 %v2121, %v2120
  %v2149 = vpack.c.bf16 %v2123, %v2122
  %v2150 = vpack.c.bf16 %v2125, %v2124
  %v2151 = vpack.c.bf16 %v2127, %v2126
  %v2152 = vpack.c.bf16 %v2129, %v2128
  %v2153 = vpack.c.bf16 %v2131, %v2130
  %v2154 = vpack.c.bf16 %v2133, %v2132
  %v2155 = vpack.c.bf16 %v2135, %v2134
  %v2156 = vpack.c.bf16 %v2137, %v2136
  %v2157 = vpack.c.bf16 %v2139, %v2138
  %v2158 = vpack.c.bf16 %v2141, %v2140
  %v2159 = vpack.c.bf16 %v2142, %v2142
  %v2177 = vunpack.c.l.b16 %v2143
  %v2178 = vunpack.c.h.b16 %v2143
  %v2179 = vunpack.c.l.b16 %v2144
  %v2180 = vunpack.c.h.b16 %v2144
  %v2181 = vunpack.c.l.b16 %v2145
  %v2182 = vunpack.c.h.b16 %v2145
  %v2183 = vunpack.c.l.b16 %v2146
  %v2184 = vunpack.c.h.b16 %v2146
  %v2185 = vunpack.c.l.b16 %v2147
  %v2186 = vunpack.c.h.b16 %v2147
  %v2187 = vunpack.c.l.b16 %v2148
  %v2188 = vunpack.c.h.b16 %v2148
  %v2189 = vunpack.c.l.b16 %v2149
  %v2190 = vunpack.c.h.b16 %v2149
  %v2191 = vunpack.c.l.b16 %v2150
  %v2192 = vunpack.c.h.b16 %v2150
  %v2193 = vunpack.c.l.b16 %v2151
  %v2194 = vunpack.c.h.b16 %v2151
  %v2195 = vunpack.c.l.b16 %v2152
  %v2196 = vunpack.c.h.b16 %v2152
  %v2197 = vunpack.c.l.b16 %v2153
  %v2198 = vunpack.c.h.b16 %v2153
  %v2199 = vunpack.c.l.b16 %v2154
  %v2200 = vunpack.c.h.b16 %v2154
  %v2201 = vunpack.c.l.b16 %v2155
  %v2202 = vunpack.c.h.b16 %v2155
  %v2203 = vunpack.c.l.b16 %v2156
  %v2204 = vunpack.c.h.b16 %v2156
  %v2205 = vunpack.c.l.b16 %v2157
  %v2206 = vunpack.c.h.b16 %v2157
  %v2207 = vunpack.c.l.b16 %v2158
  %v2208 = vunpack.c.h.b16 %v2158
  %v2209 = vunpack.c.l.b16 %v2159
  %v2210 = vpack.c.b16 %v2177, %v2177
  %v2211 = vpack.c.b16 %v2178, %v2178
  %v2212 = vpack.c.b16 %v2179, %v2179
  %v2213 = vpack.c.b16 %v2180, %v2180
  %v2214 = vpack.c.b16 %v2181, %v2181
  %v2215 = vpack.c.b16 %v2182, %v2182
  %v2216 = vpack.c.b16 %v2183, %v2183
  %v2217 = vpack.c.b16 %v2184, %v2184
  %v2218 = vpack.c.b16 %v2185, %v2185
  %v2219 = vpack.c.b16 %v2186, %v2186
  %v2220 = vpack.c.b16 %v2187, %v2187
  %v2221 = vpack.c.b16 %v2188, %v2188
  %v2222 = vpack.c.b16 %v2189, %v2189
  %v2223 = vpack.c.b16 %v2190, %v2190
  %v2224 = vpack.c.b16 %v2191, %v2191
  %v2225 = vpack.c.b16 %v2192, %v2192
  %v2226 = vpack.c.b16 %v2193, %v2193
  %v2227 = vpack.c.b16 %v2194, %v2194
  %v2228 = vpack.c.b16 %v2195, %v2195
  %v2229 = vpack.c.b16 %v2196, %v2196
  %v2230 = vpack.c.b16 %v2197, %v2197
  %v2231 = vpack.c.b16 %v2198, %v2198
  %v2232 = vpack.c.b16 %v2199, %v2199
  %v2233 = vpack.c.b16 %v2200, %v2200
  %v2234 = vpack.c.b16 %v2201, %v2201
  %v2235 = vpack.c.b16 %v2202, %v2202
  %v2236 = vpack.c.b16 %v2203, %v2203
  %v2237 = vpack.c.b16 %v2204, %v2204
  %v2238 = vpack.c.b16 %v2205, %v2205
  %v2239 = vpack.c.b16 %v2206, %v2206
  %v2240 = vpack.c.b16 %v2207, %v2207
  %v2241 = vpack.c.b16 %v2208, %v2208
  %v2242 = vpack.c.b16 %v2209, %v2209
  %vm2276 = vcmask 454016
  %2277 = vst.msk [vmem:[#allocation3] sm:$0xf] %vm2276, %v2210
  %2278 = vst.msk [vmem:[#allocation3 + $0x4] sm:$0xf] %vm2276, %v2211
  %2279 = vst.msk [vmem:[#allocation3 + $0x8] sm:$0xf] %vm2276, %v2212
  %2280 = vst.msk [vmem:[#allocation3 + $0xc] sm:$0xf] %vm2276, %v2213
  %2281 = vst.msk [vmem:[#allocation3 + $0x10] sm:$0xf] %vm2276, %v2214
  %2282 = vst.msk [vmem:[#allocation3 + $0x14] sm:$0xf] %vm2276, %v2215
  %2283 = vst.msk [vmem:[#allocation3 + $0x18] sm:$0xf] %vm2276, %v2216
  %2284 = vst.msk [vmem:[#allocation3 + $0x1c] sm:$0xf] %vm2276, %v2217
  %2285 = vst.msk [vmem:[#allocation3 + $0x20] sm:$0xf] %vm2276, %v2218
  %2286 = vst.msk [vmem:[#allocation3 + $0x24] sm:$0xf] %vm2276, %v2219
  %2287 = vst.msk [vmem:[#allocation3 + $0x28] sm:$0xf] %vm2276, %v2220
  %2288 = vst.msk [vmem:[#allocation3 + $0x2c] sm:$0xf] %vm2276, %v2221
  %2289 = vst.msk [vmem:[#allocation3 + $0x30] sm:$0xf] %vm2276, %v2222
  %2290 = vst.msk [vmem:[#allocation3 + $0x34] sm:$0xf] %vm2276, %v2223
  %2291 = vst.msk [vmem:[#allocation3 + $0x38] sm:$0xf] %vm2276, %v2224
  %2292 = vst.msk [vmem:[#allocation3 + $0x3c] sm:$0xf] %vm2276, %v2225
  %2293 = vst.msk [vmem:[#allocation3 + $0x40] sm:$0xf] %vm2276, %v2226
  %2294 = vst.msk [vmem:[#allocation3 + $0x44] sm:$0xf] %vm2276, %v2227
  %2295 = vst.msk [vmem:[#allocation3 + $0x48] sm:$0xf] %vm2276, %v2228
  %2296 = vst.msk [vmem:[#allocation3 + $0x4c] sm:$0xf] %vm2276, %v2229
  %2297 = vst.msk [vmem:[#allocation3 + $0x50] sm:$0xf] %vm2276, %v2230
  %2298 = vst.msk [vmem:[#allocation3 + $0x54] sm:$0xf] %vm2276, %v2231
  %2299 = vst.msk [vmem:[#allocation3 + $0x58] sm:$0xf] %vm2276, %v2232
  %2300 = vst.msk [vmem:[#allocation3 + $0x5c] sm:$0xf] %vm2276, %v2233
  %2301 = vst.msk [vmem:[#allocation3 + $0x60] sm:$0xf] %vm2276, %v2234
  %2302 = vst.msk [vmem:[#allocation3 + $0x64] sm:$0xf] %vm2276, %v2235
  %2303 = vst.msk [vmem:[#allocation3 + $0x68] sm:$0xf] %vm2276, %v2236
  %2304 = vst.msk [vmem:[#allocation3 + $0x6c] sm:$0xf] %vm2276, %v2237
  %2305 = vst.msk [vmem:[#allocation3 + $0x70] sm:$0xf] %vm2276, %v2238
  %2306 = vst.msk [vmem:[#allocation3 + $0x74] sm:$0xf] %vm2276, %v2239
  %2307 = vst.msk [vmem:[#allocation3 + $0x78] sm:$0xf] %vm2276, %v2240
  %2308 = vst.msk [vmem:[#allocation3 + $0x7c] sm:$0xf] %vm2276, %v2241
  %2309 = vst.msk [vmem:[#allocation3 + $0x80] sm:$0xf] %vm2276, %v2242
  %v2310 = vld [vmem:[#allocation2 + $0x1a] sm:$0xff]
  %v2311 = vld [vmem:[#allocation2 + $0x22] sm:$0xff]
  %v2312 = vld [vmem:[#allocation2 + $0x2a] sm:$0xff]
  %v2313 = vld [vmem:[#allocation2 + $0x32] sm:$0xff]
  %v2314 = vld [vmem:[#allocation2 + $0x3a] sm:$0xff]
  %v2315 = vld [vmem:[#allocation2 + $0x42] sm:$0xff]
  %v2316 = vld [vmem:[#allocation2 + $0x4a] sm:$0xff]
  %v2317 = vld [vmem:[#allocation2 + $0x52] sm:$0xff]
  %v2318 = vld [vmem:[#allocation2 + $0x5a] sm:$0xff]
  %v2319 = vld [vmem:[#allocation2 + $0x62] sm:$0xff]
  %v2320 = vld [vmem:[#allocation2 + $0x6a] sm:$0xff]
  %v2321 = vld [vmem:[#allocation2 + $0x72] sm:$0xff]
  %v2322 = vld [vmem:[#allocation2 + $0x7a] sm:$0xff]
  %v2323 = vld [vmem:[#allocation2 + $0x82] sm:$0xff]
  %v2324 = vld [vmem:[#allocation2 + $0x8a] sm:$0xff]
  %v2325 = vld [vmem:[#allocation2 + $0x92] sm:$0xff]
  %v2326 = vld [vmem:[#allocation2 + $0x9a] sm:$0xff]
  %v2327 = vld [vmem:[#allocation2 + $0xa2] sm:$0xff]
  %v2328 = vld [vmem:[#allocation2 + $0xaa] sm:$0xff]
  %v2329 = vld [vmem:[#allocation2 + $0xb2] sm:$0xff]
  %v2330 = vld [vmem:[#allocation2 + $0xba] sm:$0xff]
  %v2331 = vld [vmem:[#allocation2 + $0xc2] sm:$0xff]
  %v2332 = vld [vmem:[#allocation2 + $0xca] sm:$0xff]
  %v2333 = vld [vmem:[#allocation2 + $0xd2] sm:$0xff]
  %v2334 = vld [vmem:[#allocation2 + $0xda] sm:$0xff]
  %v2335 = vld [vmem:[#allocation2 + $0xe2] sm:$0xff]
  %v2336 = vld [vmem:[#allocation2 + $0xea] sm:$0xff]
  %v2337 = vld [vmem:[#allocation2 + $0xf2] sm:$0xff]
  %v2338 = vld [vmem:[#allocation2 + $0xfa] sm:$0xff]
  %v2339 = vld [vmem:[#allocation2 + $0x102] sm:$0xff]
  %v2340 = vld [vmem:[#allocation2 + $0x10a] sm:$0xff]
  %v2341 = vld [vmem:[#allocation2 + $0x112] sm:$0xff]
  %v2342 = vld [vmem:[#allocation2 + $0x11a] sm:$0xff]
  %v2343 = vpack.c.bf16 %v2311, %v2310
  %v2344 = vpack.c.bf16 %v2313, %v2312
  %v2345 = vpack.c.bf16 %v2315, %v2314
  %v2346 = vpack.c.bf16 %v2317, %v2316
  %v2347 = vpack.c.bf16 %v2319, %v2318
  %v2348 = vpack.c.bf16 %v2321, %v2320
  %v2349 = vpack.c.bf16 %v2323, %v2322
  %v2350 = vpack.c.bf16 %v2325, %v2324
  %v2351 = vpack.c.bf16 %v2327, %v2326
  %v2352 = vpack.c.bf16 %v2329, %v2328
  %v2353 = vpack.c.bf16 %v2331, %v2330
  %v2354 = vpack.c.bf16 %v2333, %v2332
  %v2355 = vpack.c.bf16 %v2335, %v2334
  %v2356 = vpack.c.bf16 %v2337, %v2336
  %v2357 = vpack.c.bf16 %v2339, %v2338
  %v2358 = vpack.c.bf16 %v2341, %v2340
  %v2359 = vpack.c.bf16 %v2342, %v2342
  %v2377 = vunpack.c.l.b16 %v2343
  %v2378 = vunpack.c.h.b16 %v2343
  %v2379 = vunpack.c.l.b16 %v2344
  %v2380 = vunpack.c.h.b16 %v2344
  %v2381 = vunpack.c.l.b16 %v2345
  %v2382 = vunpack.c.h.b16 %v2345
  %v2383 = vunpack.c.l.b16 %v2346
  %v2384 = vunpack.c.h.b16 %v2346
  %v2385 = vunpack.c.l.b16 %v2347
  %v2386 = vunpack.c.h.b16 %v2347
  %v2387 = vunpack.c.l.b16 %v2348
  %v2388 = vunpack.c.h.b16 %v2348
  %v2389 = vunpack.c.l.b16 %v2349
  %v2390 = vunpack.c.h.b16 %v2349
  %v2391 = vunpack.c.l.b16 %v2350
  %v2392 = vunpack.c.h.b16 %v2350
  %v2393 = vunpack.c.l.b16 %v2351
  %v2394 = vunpack.c.h.b16 %v2351
  %v2395 = vunpack.c.l.b16 %v2352
  %v2396 = vunpack.c.h.b16 %v2352
  %v2397 = vunpack.c.l.b16 %v2353
  %v2398 = vunpack.c.h.b16 %v2353
  %v2399 = vunpack.c.l.b16 %v2354
  %v2400 = vunpack.c.h.b16 %v2354
  %v2401 = vunpack.c.l.b16 %v2355
  %v2402 = vunpack.c.h.b16 %v2355
  %v2403 = vunpack.c.l.b16 %v2356
  %v2404 = vunpack.c.h.b16 %v2356
  %v2405 = vunpack.c.l.b16 %v2357
  %v2406 = vunpack.c.h.b16 %v2357
  %v2407 = vunpack.c.l.b16 %v2358
  %v2408 = vunpack.c.h.b16 %v2358
  %v2409 = vunpack.c.l.b16 %v2359
  %v2410 = vpack.c.b16 %v2377, %v2377
  %v2411 = vpack.c.b16 %v2378, %v2378
  %v2412 = vpack.c.b16 %v2379, %v2379
  %v2413 = vpack.c.b16 %v2380, %v2380
  %v2414 = vpack.c.b16 %v2381, %v2381
  %v2415 = vpack.c.b16 %v2382, %v2382
  %v2416 = vpack.c.b16 %v2383, %v2383
  %v2417 = vpack.c.b16 %v2384, %v2384
  %v2418 = vpack.c.b16 %v2385, %v2385
  %v2419 = vpack.c.b16 %v2386, %v2386
  %v2420 = vpack.c.b16 %v2387, %v2387
  %v2421 = vpack.c.b16 %v2388, %v2388
  %v2422 = vpack.c.b16 %v2389, %v2389
  %v2423 = vpack.c.b16 %v2390, %v2390
  %v2424 = vpack.c.b16 %v2391, %v2391
  %v2425 = vpack.c.b16 %v2392, %v2392
  %v2426 = vpack.c.b16 %v2393, %v2393
  %v2427 = vpack.c.b16 %v2394, %v2394
  %v2428 = vpack.c.b16 %v2395, %v2395
  %v2429 = vpack.c.b16 %v2396, %v2396
  %v2430 = vpack.c.b16 %v2397, %v2397
  %v2431 = vpack.c.b16 %v2398, %v2398
  %v2432 = vpack.c.b16 %v2399, %v2399
  %v2433 = vpack.c.b16 %v2400, %v2400
  %v2434 = vpack.c.b16 %v2401, %v2401
  %v2435 = vpack.c.b16 %v2402, %v2402
  %v2436 = vpack.c.b16 %v2403, %v2403
  %v2437 = vpack.c.b16 %v2404, %v2404
  %v2438 = vpack.c.b16 %v2405, %v2405
  %v2439 = vpack.c.b16 %v2406, %v2406
  %v2440 = vpack.c.b16 %v2407, %v2407
  %v2441 = vpack.c.b16 %v2408, %v2408
  %v2442 = vpack.c.b16 %v2409, %v2409
  %vm2476 = vcmask 519616
  %2477 = vst.msk [vmem:[#allocation3] sm:$0xf] %vm2476, %v2410
  %2478 = vst.msk [vmem:[#allocation3 + $0x4] sm:$0xf] %vm2476, %v2411
  %2479 = vst.msk [vmem:[#allocation3 + $0x8] sm:$0xf] %vm2476, %v2412
  %2480 = vst.msk [vmem:[#allocation3 + $0xc] sm:$0xf] %vm2476, %v2413
  %2481 = vst.msk [vmem:[#allocation3 + $0x10] sm:$0xf] %vm2476, %v2414
  %2482 = vst.msk [vmem:[#allocation3 + $0x14] sm:$0xf] %vm2476, %v2415
  %2483 = vst.msk [vmem:[#allocation3 + $0x18] sm:$0xf] %vm2476, %v2416
  %2484 = vst.msk [vmem:[#allocation3 + $0x1c] sm:$0xf] %vm2476, %v2417
  %2485 = vst.msk [vmem:[#allocation3 + $0x20] sm:$0xf] %vm2476, %v2418
  %2486 = vst.msk [vmem:[#allocation3 + $0x24] sm:$0xf] %vm2476, %v2419
  %2487 = vst.msk [vmem:[#allocation3 + $0x28] sm:$0xf] %vm2476, %v2420
  %2488 = vst.msk [vmem:[#allocation3 + $0x2c] sm:$0xf] %vm2476, %v2421
  %2489 = vst.msk [vmem:[#allocation3 + $0x30] sm:$0xf] %vm2476, %v2422
  %2490 = vst.msk [vmem:[#allocation3 + $0x34] sm:$0xf] %vm2476, %v2423
  %2491 = vst.msk [vmem:[#allocation3 + $0x38] sm:$0xf] %vm2476, %v2424
  %2492 = vst.msk [vmem:[#allocation3 + $0x3c] sm:$0xf] %vm2476, %v2425
  %2493 = vst.msk [vmem:[#allocation3 + $0x40] sm:$0xf] %vm2476, %v2426
  %2494 = vst.msk [vmem:[#allocation3 + $0x44] sm:$0xf] %vm2476, %v2427
  %2495 = vst.msk [vmem:[#allocation3 + $0x48] sm:$0xf] %vm2476, %v2428
  %2496 = vst.msk [vmem:[#allocation3 + $0x4c] sm:$0xf] %vm2476, %v2429
  %2497 = vst.msk [vmem:[#allocation3 + $0x50] sm:$0xf] %vm2476, %v2430
  %2498 = vst.msk [vmem:[#allocation3 + $0x54] sm:$0xf] %vm2476, %v2431
  %2499 = vst.msk [vmem:[#allocation3 + $0x58] sm:$0xf] %vm2476, %v2432
  %2500 = vst.msk [vmem:[#allocation3 + $0x5c] sm:$0xf] %vm2476, %v2433
  %2501 = vst.msk [vmem:[#allocation3 + $0x60] sm:$0xf] %vm2476, %v2434
  %2502 = vst.msk [vmem:[#allocation3 + $0x64] sm:$0xf] %vm2476, %v2435
  %2503 = vst.msk [vmem:[#allocation3 + $0x68] sm:$0xf] %vm2476, %v2436
  %2504 = vst.msk [vmem:[#allocation3 + $0x6c] sm:$0xf] %vm2476, %v2437
  %2505 = vst.msk [vmem:[#allocation3 + $0x70] sm:$0xf] %vm2476, %v2438
  %2506 = vst.msk [vmem:[#allocation3 + $0x74] sm:$0xf] %vm2476, %v2439
  %2507 = vst.msk [vmem:[#allocation3 + $0x78] sm:$0xf] %vm2476, %v2440
  %2508 = vst.msk [vmem:[#allocation3 + $0x7c] sm:$0xf] %vm2476, %v2441
  %2509 = vst.msk [vmem:[#allocation3 + $0x80] sm:$0xf] %vm2476, %v2442
  %v2510 = vld [vmem:[#allocation2 + $0x27] sm:$0xff]
  %v2511 = vld [vmem:[#allocation2 + $0x2f] sm:$0xff]
  %v2512 = vld [vmem:[#allocation2 + $0x37] sm:$0xff]
  %v2513 = vld [vmem:[#allocation2 + $0x3f] sm:$0xff]
  %v2514 = vld [vmem:[#allocation2 + $0x47] sm:$0xff]
  %v2515 = vld [vmem:[#allocation2 + $0x4f] sm:$0xff]
  %v2516 = vld [vmem:[#allocation2 + $0x57] sm:$0xff]
  %v2517 = vld [vmem:[#allocation2 + $0x5f] sm:$0xff]
  %v2518 = vld [vmem:[#allocation2 + $0x67] sm:$0xff]
  %v2519 = vld [vmem:[#allocation2 + $0x6f] sm:$0xff]
  %v2520 = vld [vmem:[#allocation2 + $0x77] sm:$0xff]
  %v2521 = vld [vmem:[#allocation2 + $0x7f] sm:$0xff]
  %v2522 = vld [vmem:[#allocation2 + $0x87] sm:$0xff]
  %v2523 = vld [vmem:[#allocation2 + $0x8f] sm:$0xff]
  %v2524 = vld [vmem:[#allocation2 + $0x97] sm:$0xff]
  %v2525 = vld [vmem:[#allocation2 + $0x9f] sm:$0xff]
  %v2526 = vld [vmem:[#allocation2 + $0xa7] sm:$0xff]
  %v2527 = vld [vmem:[#allocation2 + $0xaf] sm:$0xff]
  %v2528 = vld [vmem:[#allocation2 + $0xb7] sm:$0xff]
  %v2529 = vld [vmem:[#allocation2 + $0xbf] sm:$0xff]
  %v2530 = vld [vmem:[#allocation2 + $0xc7] sm:$0xff]
  %v2531 = vld [vmem:[#allocation2 + $0xcf] sm:$0xff]
  %v2532 = vld [vmem:[#allocation2 + $0xd7] sm:$0xff]
  %v2533 = vld [vmem:[#allocation2 + $0xdf] sm:$0xff]
  %v2534 = vld [vmem:[#allocation2 + $0xe7] sm:$0xff]
  %v2535 = vld [vmem:[#allocation2 + $0xef] sm:$0xff]
  %v2536 = vld [vmem:[#allocation2 + $0xf7] sm:$0xff]
  %v2537 = vld [vmem:[#allocation2 + $0xff] sm:$0xff]
  %v2538 = vld [vmem:[#allocation2 + $0x107] sm:$0xff]
  %v2539 = vld [vmem:[#allocation2 + $0x10f] sm:$0xff]
  %v2540 = vld [vmem:[#allocation2 + $0x117] sm:$0xff]
  %v2541 = vld [vmem:[#allocation2 + $0x11f] sm:$0xff]
  %v2542 = vld [vmem:[#allocation2 + $0x127] sm:$0xff]
  %v2543 = vpack.c.bf16 %v2511, %v2510
  %v2544 = vpack.c.bf16 %v2513, %v2512
  %v2545 = vpack.c.bf16 %v2515, %v2514
  %v2546 = vpack.c.bf16 %v2517, %v2516
  %v2547 = vpack.c.bf16 %v2519, %v2518
  %v2548 = vpack.c.bf16 %v2521, %v2520
  %v2549 = vpack.c.bf16 %v2523, %v2522
  %v2550 = vpack.c.bf16 %v2525, %v2524
  %v2551 = vpack.c.bf16 %v2527, %v2526
  %v2552 = vpack.c.bf16 %v2529, %v2528
  %v2553 = vpack.c.bf16 %v2531, %v2530
  %v2554 = vpack.c.bf16 %v2533, %v2532
  %v2555 = vpack.c.bf16 %v2535, %v2534
  %v2556 = vpack.c.bf16 %v2537, %v2536
  %v2557 = vpack.c.bf16 %v2539, %v2538
  %v2558 = vpack.c.bf16 %v2541, %v2540
  %v2559 = vpack.c.bf16 %v2542, %v2542
  %v2577 = vunpack.c.l.b16 %v2543
  %v2578 = vunpack.c.h.b16 %v2543
  %v2579 = vunpack.c.l.b16 %v2544
  %v2580 = vunpack.c.h.b16 %v2544
  %v2581 = vunpack.c.l.b16 %v2545
  %v2582 = vunpack.c.h.b16 %v2545
  %v2583 = vunpack.c.l.b16 %v2546
  %v2584 = vunpack.c.h.b16 %v2546
  %v2585 = vunpack.c.l.b16 %v2547
  %v2586 = vunpack.c.h.b16 %v2547
  %v2587 = vunpack.c.l.b16 %v2548
  %v2588 = vunpack.c.h.b16 %v2548
  %v2589 = vunpack.c.l.b16 %v2549
  %v2590 = vunpack.c.h.b16 %v2549
  %v2591 = vunpack.c.l.b16 %v2550
  %v2592 = vunpack.c.h.b16 %v2550
  %v2593 = vunpack.c.l.b16 %v2551
  %v2594 = vunpack.c.h.b16 %v2551
  %v2595 = vunpack.c.l.b16 %v2552
  %v2596 = vunpack.c.h.b16 %v2552
  %v2597 = vunpack.c.l.b16 %v2553
  %v2598 = vunpack.c.h.b16 %v2553
  %v2599 = vunpack.c.l.b16 %v2554
  %v2600 = vunpack.c.h.b16 %v2554
  %v2601 = vunpack.c.l.b16 %v2555
  %v2602 = vunpack.c.h.b16 %v2555
  %v2603 = vunpack.c.l.b16 %v2556
  %v2604 = vunpack.c.h.b16 %v2556
  %v2605 = vunpack.c.l.b16 %v2557
  %v2606 = vunpack.c.h.b16 %v2557
  %v2607 = vunpack.c.l.b16 %v2558
  %v2608 = vunpack.c.h.b16 %v2558
  %v2609 = vunpack.c.l.b16 %v2559
  %v2610 = vpack.c.b16 %v2577, %v2577
  %v2611 = vpack.c.b16 %v2578, %v2578
  %v2612 = vpack.c.b16 %v2579, %v2579
  %v2613 = vpack.c.b16 %v2580, %v2580
  %v2614 = vpack.c.b16 %v2581, %v2581
  %v2615 = vpack.c.b16 %v2582, %v2582
  %v2616 = vpack.c.b16 %v2583, %v2583
  %v2617 = vpack.c.b16 %v2584, %v2584
  %v2618 = vpack.c.b16 %v2585, %v2585
  %v2619 = vpack.c.b16 %v2586, %v2586
  %v2620 = vpack.c.b16 %v2587, %v2587
  %v2621 = vpack.c.b16 %v2588, %v2588
  %v2622 = vpack.c.b16 %v2589, %v2589
  %v2623 = vpack.c.b16 %v2590, %v2590
  %v2624 = vpack.c.b16 %v2591, %v2591
  %v2625 = vpack.c.b16 %v2592, %v2592
  %v2626 = vpack.c.b16 %v2593, %v2593
  %v2627 = vpack.c.b16 %v2594, %v2594
  %v2628 = vpack.c.b16 %v2595, %v2595
  %v2629 = vpack.c.b16 %v2596, %v2596
  %v2630 = vpack.c.b16 %v2597, %v2597
  %v2631 = vpack.c.b16 %v2598, %v2598
  %v2632 = vpack.c.b16 %v2599, %v2599
  %v2633 = vpack.c.b16 %v2600, %v2600
  %v2634 = vpack.c.b16 %v2601, %v2601
  %v2635 = vpack.c.b16 %v2602, %v2602
  %v2636 = vpack.c.b16 %v2603, %v2603
  %v2637 = vpack.c.b16 %v2604, %v2604
  %v2638 = vpack.c.b16 %v2605, %v2605
  %v2639 = vpack.c.b16 %v2606, %v2606
  %v2640 = vpack.c.b16 %v2607, %v2607
  %v2641 = vpack.c.b16 %v2608, %v2608
  %v2642 = vpack.c.b16 %v2609, %v2609
  %vm2676 = vcmask 585216
  %2677 = vst.msk [vmem:[#allocation3] sm:$0xf] %vm2676, %v2610
  %2678 = vst.msk [vmem:[#allocation3 + $0x4] sm:$0xf] %vm2676, %v2611
  %2679 = vst.msk [vmem:[#allocation3 + $0x8] sm:$0xf] %vm2676, %v2612
  %2680 = vst.msk [vmem:[#allocation3 + $0xc] sm:$0xf] %vm2676, %v2613
  %2681 = vst.msk [vmem:[#allocation3 + $0x10] sm:$0xf] %vm2676, %v2614
  %2682 = vst.msk [vmem:[#allocation3 + $0x14] sm:$0xf] %vm2676, %v2615
  %2683 = vst.msk [vmem:[#allocation3 + $0x18] sm:$0xf] %vm2676, %v2616
  %2684 = vst.msk [vmem:[#allocation3 + $0x1c] sm:$0xf] %vm2676, %v2617
  %2685 = vst.msk [vmem:[#allocation3 + $0x20] sm:$0xf] %vm2676, %v2618
  %2686 = vst.msk [vmem:[#allocation3 + $0x24] sm:$0xf] %vm2676, %v2619
  %2687 = vst.msk [vmem:[#allocation3 + $0x28] sm:$0xf] %vm2676, %v2620
  %2688 = vst.msk [vmem:[#allocation3 + $0x2c] sm:$0xf] %vm2676, %v2621
  %2689 = vst.msk [vmem:[#allocation3 + $0x30] sm:$0xf] %vm2676, %v2622
  %2690 = vst.msk [vmem:[#allocation3 + $0x34] sm:$0xf] %vm2676, %v2623
  %2691 = vst.msk [vmem:[#allocation3 + $0x38] sm:$0xf] %vm2676, %v2624
  %2692 = vst.msk [vmem:[#allocation3 + $0x3c] sm:$0xf] %vm2676, %v2625
  %2693 = vst.msk [vmem:[#allocation3 + $0x40] sm:$0xf] %vm2676, %v2626
  %2694 = vst.msk [vmem:[#allocation3 + $0x44] sm:$0xf] %vm2676, %v2627
  %2695 = vst.msk [vmem:[#allocation3 + $0x48] sm:$0xf] %vm2676, %v2628
  %2696 = vst.msk [vmem:[#allocation3 + $0x4c] sm:$0xf] %vm2676, %v2629
  %2697 = vst.msk [vmem:[#allocation3 + $0x50] sm:$0xf] %vm2676, %v2630
  %2698 = vst.msk [vmem:[#allocation3 + $0x54] sm:$0xf] %vm2676, %v2631
  %2699 = vst.msk [vmem:[#allocation3 + $0x58] sm:$0xf] %vm2676, %v2632
  %2700 = vst.msk [vmem:[#allocation3 + $0x5c] sm:$0xf] %vm2676, %v2633
  %2701 = vst.msk [vmem:[#allocation3 + $0x60] sm:$0xf] %vm2676, %v2634
  %2702 = vst.msk [vmem:[#allocation3 + $0x64] sm:$0xf] %vm2676, %v2635
  %2703 = vst.msk [vmem:[#allocation3 + $0x68] sm:$0xf] %vm2676, %v2636
  %2704 = vst.msk [vmem:[#allocation3 + $0x6c] sm:$0xf] %vm2676, %v2637
  %2705 = vst.msk [vmem:[#allocation3 + $0x70] sm:$0xf] %vm2676, %v2638
  %2706 = vst.msk [vmem:[#allocation3 + $0x74] sm:$0xf] %vm2676, %v2639
  %2707 = vst.msk [vmem:[#allocation3 + $0x78] sm:$0xf] %vm2676, %v2640
  %2708 = vst.msk [vmem:[#allocation3 + $0x7c] sm:$0xf] %vm2676, %v2641
  %2709 = vst.msk [vmem:[#allocation3 + $0x80] sm:$0xf] %vm2676, %v2642
  %v2710 = vld [vmem:[#allocation2 + $0x28] sm:$0xff]
  %v2711 = vld [vmem:[#allocation2 + $0x30] sm:$0xff]
  %v2712 = vld [vmem:[#allocation2 + $0x38] sm:$0xff]
  %v2713 = vld [vmem:[#allocation2 + $0x40] sm:$0xff]
  %v2714 = vld [vmem:[#allocation2 + $0x48] sm:$0xff]
  %v2715 = vld [vmem:[#allocation2 + $0x50] sm:$0xff]
  %v2716 = vld [vmem:[#allocation2 + $0x58] sm:$0xff]
  %v2717 = vld [vmem:[#allocation2 + $0x60] sm:$0xff]
  %v2718 = vld [vmem:[#allocation2 + $0x68] sm:$0xff]
  %v2719 = vld [vmem:[#allocation2 + $0x70] sm:$0xff]
  %v2720 = vld [vmem:[#allocation2 + $0x78] sm:$0xff]
  %v2721 = vld [vmem:[#allocation2 + $0x80] sm:$0xff]
  %v2722 = vld [vmem:[#allocation2 + $0x88] sm:$0xff]
  %v2723 = vld [vmem:[#allocation2 + $0x90] sm:$0xff]
  %v2724 = vld [vmem:[#allocation2 + $0x98] sm:$0xff]
  %v2725 = vld [vmem:[#allocation2 + $0xa0] sm:$0xff]
  %v2726 = vld [vmem:[#allocation2 + $0xa8] sm:$0xff]
  %v2727 = vld [vmem:[#allocation2 + $0xb0] sm:$0xff]
  %v2728 = vld [vmem:[#allocation2 + $0xb8] sm:$0xff]
  %v2729 = vld [vmem:[#allocation2 + $0xc0] sm:$0xff]
  %v2730 = vld [vmem:[#allocation2 + $0xc8] sm:$0xff]
  %v2731 = vld [vmem:[#allocation2 + $0xd0] sm:$0xff]
  %v2732 = vld [vmem:[#allocation2 + $0xd8] sm:$0xff]
  %v2733 = vld [vmem:[#allocation2 + $0xe0] sm:$0xff]
  %v2734 = vld [vmem:[#allocation2 + $0xe8] sm:$0xff]
  %v2735 = vld [vmem:[#allocation2 + $0xf0] sm:$0xff]
  %v2736 = vld [vmem:[#allocation2 + $0xf8] sm:$0xff]
  %v2737 = vld [vmem:[#allocation2 + $0x100] sm:$0xff]
  %v2738 = vld [vmem:[#allocation2 + $0x108] sm:$0xff]
  %v2739 = vld [vmem:[#allocation2 + $0x110] sm:$0xff]
  %v2740 = vld [vmem:[#allocation2 + $0x118] sm:$0xff]
  %v2741 = vld [vmem:[#allocation2 + $0x120] sm:$0xff]
  %v2742 = vld [vmem:[#allocation2 + $0x128] sm:$0xff]
  %v2743 = vpack.c.bf16 %v2711, %v2710
  %v2744 = vpack.c.bf16 %v2713, %v2712
  %v2745 = vpack.c.bf16 %v2715, %v2714
  %v2746 = vpack.c.bf16 %v2717, %v2716
  %v2747 = vpack.c.bf16 %v2719, %v2718
  %v2748 = vpack.c.bf16 %v2721, %v2720
  %v2749 = vpack.c.bf16 %v2723, %v2722
  %v2750 = vpack.c.bf16 %v2725, %v2724
  %v2751 = vpack.c.bf16 %v2727, %v2726
  %v2752 = vpack.c.bf16 %v2729, %v2728
  %v2753 = vpack.c.bf16 %v2731, %v2730
  %v2754 = vpack.c.bf16 %v2733, %v2732
  %v2755 = vpack.c.bf16 %v2735, %v2734
  %v2756 = vpack.c.bf16 %v2737, %v2736
  %v2757 = vpack.c.bf16 %v2739, %v2738
  %v2758 = vpack.c.bf16 %v2741, %v2740
  %v2759 = vpack.c.bf16 %v2742, %v2742
  %v2777 = vunpack.c.l.b16 %v2743
  %v2778 = vunpack.c.h.b16 %v2743
  %v2779 = vunpack.c.l.b16 %v2744
  %v2780 = vunpack.c.h.b16 %v2744
  %v2781 = vunpack.c.l.b16 %v2745
  %v2782 = vunpack.c.h.b16 %v2745
  %v2783 = vunpack.c.l.b16 %v2746
  %v2784 = vunpack.c.h.b16 %v2746
  %v2785 = vunpack.c.l.b16 %v2747
  %v2786 = vunpack.c.h.b16 %v2747
  %v2787 = vunpack.c.l.b16 %v2748
  %v2788 = vunpack.c.h.b16 %v2748
  %v2789 = vunpack.c.l.b16 %v2749
  %v2790 = vunpack.c.h.b16 %v2749
  %v2791 = vunpack.c.l.b16 %v2750
  %v2792 = vunpack.c.h.b16 %v2750
  %v2793 = vunpack.c.l.b16 %v2751
  %v2794 = vunpack.c.h.b16 %v2751
  %v2795 = vunpack.c.l.b16 %v2752
  %v2796 = vunpack.c.h.b16 %v2752
  %v2797 = vunpack.c.l.b16 %v2753
  %v2798 = vunpack.c.h.b16 %v2753
  %v2799 = vunpack.c.l.b16 %v2754
  %v2800 = vunpack.c.h.b16 %v2754
  %v2801 = vunpack.c.l.b16 %v2755
  %v2802 = vunpack.c.h.b16 %v2755
  %v2803 = vunpack.c.l.b16 %v2756
  %v2804 = vunpack.c.h.b16 %v2756
  %v2805 = vunpack.c.l.b16 %v2757
  %v2806 = vunpack.c.h.b16 %v2757
  %v2807 = vunpack.c.l.b16 %v2758
  %v2808 = vunpack.c.h.b16 %v2758
  %v2809 = vunpack.c.l.b16 %v2759
  %v2810 = vpack.c.b16 %v2777, %v2777
  %v2811 = vpack.c.b16 %v2778, %v2778
  %v2812 = vpack.c.b16 %v2779, %v2779
  %v2813 = vpack.c.b16 %v2780, %v2780
  %v2814 = vpack.c.b16 %v2781, %v2781
  %v2815 = vpack.c.b16 %v2782, %v2782
  %v2816 = vpack.c.b16 %v2783, %v2783
  %v2817 = vpack.c.b16 %v2784, %v2784
  %v2818 = vpack.c.b16 %v2785, %v2785
  %v2819 = vpack.c.b16 %v2786, %v2786
  %v2820 = vpack.c.b16 %v2787, %v2787
  %v2821 = vpack.c.b16 %v2788, %v2788
  %v2822 = vpack.c.b16 %v2789, %v2789
  %v2823 = vpack.c.b16 %v2790, %v2790
  %v2824 = vpack.c.b16 %v2791, %v2791
  %v2825 = vpack.c.b16 %v2792, %v2792
  %v2826 = vpack.c.b16 %v2793, %v2793
  %v2827 = vpack.c.b16 %v2794, %v2794
  %v2828 = vpack.c.b16 %v2795, %v2795
  %v2829 = vpack.c.b16 %v2796, %v2796
  %v2830 = vpack.c.b16 %v2797, %v2797
  %v2831 = vpack.c.b16 %v2798, %v2798
  %v2832 = vpack.c.b16 %v2799, %v2799
  %v2833 = vpack.c.b16 %v2800, %v2800
  %v2834 = vpack.c.b16 %v2801, %v2801
  %v2835 = vpack.c.b16 %v2802, %v2802
  %v2836 = vpack.c.b16 %v2803, %v2803
  %v2837 = vpack.c.b16 %v2804, %v2804
  %v2838 = vpack.c.b16 %v2805, %v2805
  %v2839 = vpack.c.b16 %v2806, %v2806
  %v2840 = vpack.c.b16 %v2807, %v2807
  %v2841 = vpack.c.b16 %v2808, %v2808
  %v2842 = vpack.c.b16 %v2809, %v2809
  %vm2876 = vcmask 650816
  %2877 = vst.msk [vmem:[#allocation3] sm:$0xf] %vm2876, %v2810
  %2878 = vst.msk [vmem:[#allocation3 + $0x4] sm:$0xf] %vm2876, %v2811
  %2879 = vst.msk [vmem:[#allocation3 + $0x8] sm:$0xf] %vm2876, %v2812
  %2880 = vst.msk [vmem:[#allocation3 + $0xc] sm:$0xf] %vm2876, %v2813
  %2881 = vst.msk [vmem:[#allocation3 + $0x10] sm:$0xf] %vm2876, %v2814
  %2882 = vst.msk [vmem:[#allocation3 + $0x14] sm:$0xf] %vm2876, %v2815
  %2883 = vst.msk [vmem:[#allocation3 + $0x18] sm:$0xf] %vm2876, %v2816
  %2884 = vst.msk [vmem:[#allocation3 + $0x1c] sm:$0xf] %vm2876, %v2817
  %2885 = vst.msk [vmem:[#allocation3 + $0x20] sm:$0xf] %vm2876, %v2818
  %2886 = vst.msk [vmem:[#allocation3 + $0x24] sm:$0xf] %vm2876, %v2819
  %2887 = vst.msk [vmem:[#allocation3 + $0x28] sm:$0xf] %vm2876, %v2820
  %2888 = vst.msk [vmem:[#allocation3 + $0x2c] sm:$0xf] %vm2876, %v2821
  %2889 = vst.msk [vmem:[#allocation3 + $0x30] sm:$0xf] %vm2876, %v2822
  %2890 = vst.msk [vmem:[#allocation3 + $0x34] sm:$0xf] %vm2876, %v2823
  %2891 = vst.msk [vmem:[#allocation3 + $0x38] sm:$0xf] %vm2876, %v2824
  %2892 = vst.msk [vmem:[#allocation3 + $0x3c] sm:$0xf] %vm2876, %v2825
  %2893 = vst.msk [vmem:[#allocation3 + $0x40] sm:$0xf] %vm2876, %v2826
  %2894 = vst.msk [vmem:[#allocation3 + $0x44] sm:$0xf] %vm2876, %v2827
  %2895 = vst.msk [vmem:[#allocation3 + $0x48] sm:$0xf] %vm2876, %v2828
  %2896 = vst.msk [vmem:[#allocation3 + $0x4c] sm:$0xf] %vm2876, %v2829
  %2897 = vst.msk [vmem:[#allocation3 + $0x50] sm:$0xf] %vm2876, %v2830
  %2898 = vst.msk [vmem:[#allocation3 + $0x54] sm:$0xf] %vm2876, %v2831
  %2899 = vst.msk [vmem:[#allocation3 + $0x58] sm:$0xf] %vm2876, %v2832
  %2900 = vst.msk [vmem:[#allocation3 + $0x5c] sm:$0xf] %vm2876, %v2833
  %2901 = vst.msk [vmem:[#allocation3 + $0x60] sm:$0xf] %vm2876, %v2834
  %2902 = vst.msk [vmem:[#allocation3 + $0x64] sm:$0xf] %vm2876, %v2835
  %2903 = vst.msk [vmem:[#allocation3 + $0x68] sm:$0xf] %vm2876, %v2836
  %2904 = vst.msk [vmem:[#allocation3 + $0x6c] sm:$0xf] %vm2876, %v2837
  %2905 = vst.msk [vmem:[#allocation3 + $0x70] sm:$0xf] %vm2876, %v2838
  %2906 = vst.msk [vmem:[#allocation3 + $0x74] sm:$0xf] %vm2876, %v2839
  %2907 = vst.msk [vmem:[#allocation3 + $0x78] sm:$0xf] %vm2876, %v2840
  %2908 = vst.msk [vmem:[#allocation3 + $0x7c] sm:$0xf] %vm2876, %v2841
  %2909 = vst.msk [vmem:[#allocation3 + $0x80] sm:$0xf] %vm2876, %v2842
  %v2910 = vld [vmem:[#allocation2 + $0x29] sm:$0xff]
  %v2911 = vld [vmem:[#allocation2 + $0x31] sm:$0xff]
  %v2912 = vld [vmem:[#allocation2 + $0x39] sm:$0xff]
  %v2913 = vld [vmem:[#allocation2 + $0x41] sm:$0xff]
  %v2914 = vld [vmem:[#allocation2 + $0x49] sm:$0xff]
  %v2915 = vld [vmem:[#allocation2 + $0x51] sm:$0xff]
  %v2916 = vld [vmem:[#allocation2 + $0x59] sm:$0xff]
  %v2917 = vld [vmem:[#allocation2 + $0x61] sm:$0xff]
  %v2918 = vld [vmem:[#allocation2 + $0x69] sm:$0xff]
  %v2919 = vld [vmem:[#allocation2 + $0x71] sm:$0xff]
  %v2920 = vld [vmem:[#allocation2 + $0x79] sm:$0xff]
  %v2921 = vld [vmem:[#allocation2 + $0x81] sm:$0xff]
  %v2922 = vld [vmem:[#allocation2 + $0x89] sm:$0xff]
  %v2923 = vld [vmem:[#allocation2 + $0x91] sm:$0xff]
  %v2924 = vld [vmem:[#allocation2 + $0x99] sm:$0xff]
  %v2925 = vld [vmem:[#allocation2 + $0xa1] sm:$0xff]
  %v2926 = vld [vmem:[#allocation2 + $0xa9] sm:$0xff]
  %v2927 = vld [vmem:[#allocation2 + $0xb1] sm:$0xff]
  %v2928 = vld [vmem:[#allocation2 + $0xb9] sm:$0xff]
  %v2929 = vld [vmem:[#allocation2 + $0xc1] sm:$0xff]
  %v2930 = vld [vmem:[#allocation2 + $0xc9] sm:$0xff]
  %v2931 = vld [vmem:[#allocation2 + $0xd1] sm:$0xff]
  %v2932 = vld [vmem:[#allocation2 + $0xd9] sm:$0xff]
  %v2933 = vld [vmem:[#allocation2 + $0xe1] sm:$0xff]
  %v2934 = vld [vmem:[#allocation2 + $0xe9] sm:$0xff]
  %v2935 = vld [vmem:[#allocation2 + $0xf1] sm:$0xff]
  %v2936 = vld [vmem:[#allocation2 + $0xf9] sm:$0xff]
  %v2937 = vld [vmem:[#allocation2 + $0x101] sm:$0xff]
  %v2938 = vld [vmem:[#allocation2 + $0x109] sm:$0xff]
  %v2939 = vld [vmem:[#allocation2 + $0x111] sm:$0xff]
  %v2940 = vld [vmem:[#allocation2 + $0x119] sm:$0xff]
  %v2941 = vld [vmem:[#allocation2 + $0x121] sm:$0xff]
  %v2942 = vld [vmem:[#allocation2 + $0x129] sm:$0xff]
  %v2943 = vpack.c.bf16 %v2911, %v2910
  %v2944 = vpack.c.bf16 %v2913, %v2912
  %v2945 = vpack.c.bf16 %v2915, %v2914
  %v2946 = vpack.c.bf16 %v2917, %v2916
  %v2947 = vpack.c.bf16 %v2919, %v2918
  %v2948 = vpack.c.bf16 %v2921, %v2920
  %v2949 = vpack.c.bf16 %v2923, %v2922
  %v2950 = vpack.c.bf16 %v2925, %v2924
  %v2951 = vpack.c.bf16 %v2927, %v2926
  %v2952 = vpack.c.bf16 %v2929, %v2928
  %v2953 = vpack.c.bf16 %v2931, %v2930
  %v2954 = vpack.c.bf16 %v2933, %v2932
  %v2955 = vpack.c.bf16 %v2935, %v2934
  %v2956 = vpack.c.bf16 %v2937, %v2936
  %v2957 = vpack.c.bf16 %v2939, %v2938
  %v2958 = vpack.c.bf16 %v2941, %v2940
  %v2959 = vpack.c.bf16 %v2942, %v2942
  %v2977 = vunpack.c.l.b16 %v2943
  %v2978 = vunpack.c.h.b16 %v2943
  %v2979 = vunpack.c.l.b16 %v2944
  %v2980 = vunpack.c.h.b16 %v2944
  %v2981 = vunpack.c.l.b16 %v2945
  %v2982 = vunpack.c.h.b16 %v2945
  %v2983 = vunpack.c.l.b16 %v2946
  %v2984 = vunpack.c.h.b16 %v2946
  %v2985 = vunpack.c.l.b16 %v2947
  %v2986 = vunpack.c.h.b16 %v2947
  %v2987 = vunpack.c.l.b16 %v2948
  %v2988 = vunpack.c.h.b16 %v2948
  %v2989 = vunpack.c.l.b16 %v2949
  %v2990 = vunpack.c.h.b16 %v2949
  %v2991 = vunpack.c.l.b16 %v2950
  %v2992 = vunpack.c.h.b16 %v2950
  %v2993 = vunpack.c.l.b16 %v2951
  %v2994 = vunpack.c.h.b16 %v2951
  %v2995 = vunpack.c.l.b16 %v2952
  %v2996 = vunpack.c.h.b16 %v2952
  %v2997 = vunpack.c.l.b16 %v2953
  %v2998 = vunpack.c.h.b16 %v2953
  %v2999 = vunpack.c.l.b16 %v2954
  %v3000 = vunpack.c.h.b16 %v2954
  %v3001 = vunpack.c.l.b16 %v2955
  %v3002 = vunpack.c.h.b16 %v2955
  %v3003 = vunpack.c.l.b16 %v2956
  %v3004 = vunpack.c.h.b16 %v2956
  %v3005 = vunpack.c.l.b16 %v2957
  %v3006 = vunpack.c.h.b16 %v2957
  %v3007 = vunpack.c.l.b16 %v2958
  %v3008 = vunpack.c.h.b16 %v2958
  %v3009 = vunpack.c.l.b16 %v2959
  %v3010 = vpack.c.b16 %v2977, %v2977
  %v3011 = vpack.c.b16 %v2978, %v2978
  %v3012 = vpack.c.b16 %v2979, %v2979
  %v3013 = vpack.c.b16 %v2980, %v2980
  %v3014 = vpack.c.b16 %v2981, %v2981
  %v3015 = vpack.c.b16 %v2982, %v2982
  %v3016 = vpack.c.b16 %v2983, %v2983
  %v3017 = vpack.c.b16 %v2984, %v2984
  %v3018 = vpack.c.b16 %v2985, %v2985
  %v3019 = vpack.c.b16 %v2986, %v2986
  %v3020 = vpack.c.b16 %v2987, %v2987
  %v3021 = vpack.c.b16 %v2988, %v2988
  %v3022 = vpack.c.b16 %v2989, %v2989
  %v3023 = vpack.c.b16 %v2990, %v2990
  %v3024 = vpack.c.b16 %v2991, %v2991
  %v3025 = vpack.c.b16 %v2992, %v2992
  %v3026 = vpack.c.b16 %v2993, %v2993
  %v3027 = vpack.c.b16 %v2994, %v2994
  %v3028 = vpack.c.b16 %v2995, %v2995
  %v3029 = vpack.c.b16 %v2996, %v2996
  %v3030 = vpack.c.b16 %v2997, %v2997
  %v3031 = vpack.c.b16 %v2998, %v2998
  %v3032 = vpack.c.b16 %v2999, %v2999
  %v3033 = vpack.c.b16 %v3000, %v3000
  %v3034 = vpack.c.b16 %v3001, %v3001
  %v3035 = vpack.c.b16 %v3002, %v3002
  %v3036 = vpack.c.b16 %v3003, %v3003
  %v3037 = vpack.c.b16 %v3004, %v3004
  %v3038 = vpack.c.b16 %v3005, %v3005
  %v3039 = vpack.c.b16 %v3006, %v3006
  %v3040 = vpack.c.b16 %v3007, %v3007
  %v3041 = vpack.c.b16 %v3008, %v3008
  %v3042 = vpack.c.b16 %v3009, %v3009
  %vm3076 = vcmask 716416
  %3077 = vst.msk [vmem:[#allocation3] sm:$0xf] %vm3076, %v3010
  %3078 = vst.msk [vmem:[#allocation3 + $0x4] sm:$0xf] %vm3076, %v3011
  %3079 = vst.msk [vmem:[#allocation3 + $0x8] sm:$0xf] %vm3076, %v3012
  %3080 = vst.msk [vmem:[#allocation3 + $0xc] sm:$0xf] %vm3076, %v3013
  %3081 = vst.msk [vmem:[#allocation3 + $0x10] sm:$0xf] %vm3076, %v3014
  %3082 = vst.msk [vmem:[#allocation3 + $0x14] sm:$0xf] %vm3076, %v3015
  %3083 = vst.msk [vmem:[#allocation3 + $0x18] sm:$0xf] %vm3076, %v3016
  %3084 = vst.msk [vmem:[#allocation3 + $0x1c] sm:$0xf] %vm3076, %v3017
  %3085 = vst.msk [vmem:[#allocation3 + $0x20] sm:$0xf] %vm3076, %v3018
  %3086 = vst.msk [vmem:[#allocation3 + $0x24] sm:$0xf] %vm3076, %v3019
  %3087 = vst.msk [vmem:[#allocation3 + $0x28] sm:$0xf] %vm3076, %v3020
  %3088 = vst.msk [vmem:[#allocation3 + $0x2c] sm:$0xf] %vm3076, %v3021
  %3089 = vst.msk [vmem:[#allocation3 + $0x30] sm:$0xf] %vm3076, %v3022
  %3090 = vst.msk [vmem:[#allocation3 + $0x34] sm:$0xf] %vm3076, %v3023
  %3091 = vst.msk [vmem:[#allocation3 + $0x38] sm:$0xf] %vm3076, %v3024
  %3092 = vst.msk [vmem:[#allocation3 + $0x3c] sm:$0xf] %vm3076, %v3025
  %3093 = vst.msk [vmem:[#allocation3 + $0x40] sm:$0xf] %vm3076, %v3026
  %3094 = vst.msk [vmem:[#allocation3 + $0x44] sm:$0xf] %vm3076, %v3027
  %3095 = vst.msk [vmem:[#allocation3 + $0x48] sm:$0xf] %vm3076, %v3028
  %3096 = vst.msk [vmem:[#allocation3 + $0x4c] sm:$0xf] %vm3076, %v3029
  %3097 = vst.msk [vmem:[#allocation3 + $0x50] sm:$0xf] %vm3076, %v3030
  %3098 = vst.msk [vmem:[#allocation3 + $0x54] sm:$0xf] %vm3076, %v3031
  %3099 = vst.msk [vmem:[#allocation3 + $0x58] sm:$0xf] %vm3076, %v3032
  %3100 = vst.msk [vmem:[#allocation3 + $0x5c] sm:$0xf] %vm3076, %v3033
  %3101 = vst.msk [vmem:[#allocation3 + $0x60] sm:$0xf] %vm3076, %v3034
  %3102 = vst.msk [vmem:[#allocation3 + $0x64] sm:$0xf] %vm3076, %v3035
  %3103 = vst.msk [vmem:[#allocation3 + $0x68] sm:$0xf] %vm3076, %v3036
  %3104 = vst.msk [vmem:[#allocation3 + $0x6c] sm:$0xf] %vm3076, %v3037
  %3105 = vst.msk [vmem:[#allocation3 + $0x70] sm:$0xf] %vm3076, %v3038
  %3106 = vst.msk [vmem:[#allocation3 + $0x74] sm:$0xf] %vm3076, %v3039
  %3107 = vst.msk [vmem:[#allocation3 + $0x78] sm:$0xf] %vm3076, %v3040
  %3108 = vst.msk [vmem:[#allocation3 + $0x7c] sm:$0xf] %vm3076, %v3041
  %3109 = vst.msk [vmem:[#allocation3 + $0x80] sm:$0xf] %vm3076, %v3042
  %v3110 = vld [vmem:[#allocation2 + $0x2a] sm:$0xff]
  %v3111 = vld [vmem:[#allocation2 + $0x32] sm:$0xff]
  %v3112 = vld [vmem:[#allocation2 + $0x3a] sm:$0xff]
  %v3113 = vld [vmem:[#allocation2 + $0x42] sm:$0xff]
  %v3114 = vld [vmem:[#allocation2 + $0x4a] sm:$0xff]
  %v3115 = vld [vmem:[#allocation2 + $0x52] sm:$0xff]
  %v3116 = vld [vmem:[#allocation2 + $0x5a] sm:$0xff]
  %v3117 = vld [vmem:[#allocation2 + $0x62] sm:$0xff]
  %v3118 = vld [vmem:[#allocation2 + $0x6a] sm:$0xff]
  %v3119 = vld [vmem:[#allocation2 + $0x72] sm:$0xff]
  %v3120 = vld [vmem:[#allocation2 + $0x7a] sm:$0xff]
  %v3121 = vld [vmem:[#allocation2 + $0x82] sm:$0xff]
  %v3122 = vld [vmem:[#allocation2 + $0x8a] sm:$0xff]
  %v3123 = vld [vmem:[#allocation2 + $0x92] sm:$0xff]
  %v3124 = vld [vmem:[#allocation2 + $0x9a] sm:$0xff]
  %v3125 = vld [vmem:[#allocation2 + $0xa2] sm:$0xff]
  %v3126 = vld [vmem:[#allocation2 + $0xaa] sm:$0xff]
  %v3127 = vld [vmem:[#allocation2 + $0xb2] sm:$0xff]
  %v3128 = vld [vmem:[#allocation2 + $0xba] sm:$0xff]
  %v3129 = vld [vmem:[#allocation2 + $0xc2] sm:$0xff]
  %v3130 = vld [vmem:[#allocation2 + $0xca] sm:$0xff]
  %v3131 = vld [vmem:[#allocation2 + $0xd2] sm:$0xff]
  %v3132 = vld [vmem:[#allocation2 + $0xda] sm:$0xff]
  %v3133 = vld [vmem:[#allocation2 + $0xe2] sm:$0xff]
  %v3134 = vld [vmem:[#allocation2 + $0xea] sm:$0xff]
  %v3135 = vld [vmem:[#allocation2 + $0xf2] sm:$0xff]
  %v3136 = vld [vmem:[#allocation2 + $0xfa] sm:$0xff]
  %v3137 = vld [vmem:[#allocation2 + $0x102] sm:$0xff]
  %v3138 = vld [vmem:[#allocation2 + $0x10a] sm:$0xff]
  %v3139 = vld [vmem:[#allocation2 + $0x112] sm:$0xff]
  %v3140 = vld [vmem:[#allocation2 + $0x11a] sm:$0xff]
  %v3141 = vld [vmem:[#allocation2 + $0x122] sm:$0xff]
  %v3142 = vld [vmem:[#allocation2 + $0x12a] sm:$0xff]
  %v3143 = vpack.c.bf16 %v3111, %v3110
  %v3144 = vpack.c.bf16 %v3113, %v3112
  %v3145 = vpack.c.bf16 %v3115, %v3114
  %v3146 = vpack.c.bf16 %v3117, %v3116
  %v3147 = vpack.c.bf16 %v3119, %v3118
  %v3148 = vpack.c.bf16 %v3121, %v3120
  %v3149 = vpack.c.bf16 %v3123, %v3122
  %v3150 = vpack.c.bf16 %v3125, %v3124
  %v3151 = vpack.c.bf16 %v3127, %v3126
  %v3152 = vpack.c.bf16 %v3129, %v3128
  %v3153 = vpack.c.bf16 %v3131, %v3130
  %v3154 = vpack.c.bf16 %v3133, %v3132
  %v3155 = vpack.c.bf16 %v3135, %v3134
  %v3156 = vpack.c.bf16 %v3137, %v3136
  %v3157 = vpack.c.bf16 %v3139, %v3138
  %v3158 = vpack.c.bf16 %v3141, %v3140
  %v3159 = vpack.c.bf16 %v3142, %v3142
  %v3177 = vunpack.c.l.b16 %v3143
  %v3178 = vunpack.c.h.b16 %v3143
  %v3179 = vunpack.c.l.b16 %v3144
  %v3180 = vunpack.c.h.b16 %v3144
  %v3181 = vunpack.c.l.b16 %v3145
  %v3182 = vunpack.c.h.b16 %v3145
  %v3183 = vunpack.c.l.b16 %v3146
  %v3184 = vunpack.c.h.b16 %v3146
  %v3185 = vunpack.c.l.b16 %v3147
  %v3186 = vunpack.c.h.b16 %v3147
  %v3187 = vunpack.c.l.b16 %v3148
  %v3188 = vunpack.c.h.b16 %v3148
  %v3189 = vunpack.c.l.b16 %v3149
  %v3190 = vunpack.c.h.b16 %v3149
  %v3191 = vunpack.c.l.b16 %v3150
  %v3192 = vunpack.c.h.b16 %v3150
  %v3193 = vunpack.c.l.b16 %v3151
  %v3194 = vunpack.c.h.b16 %v3151
  %v3195 = vunpack.c.l.b16 %v3152
  %v3196 = vunpack.c.h.b16 %v3152
  %v3197 = vunpack.c.l.b16 %v3153
  %v3198 = vunpack.c.h.b16 %v3153
  %v3199 = vunpack.c.l.b16 %v3154
  %v3200 = vunpack.c.h.b16 %v3154
  %v3201 = vunpack.c.l.b16 %v3155
  %v3202 = vunpack.c.h.b16 %v3155
  %v3203 = vunpack.c.l.b16 %v3156
  %v3204 = vunpack.c.h.b16 %v3156
  %v3205 = vunpack.c.l.b16 %v3157
  %v3206 = vunpack.c.h.b16 %v3157
  %v3207 = vunpack.c.l.b16 %v3158
  %v3208 = vunpack.c.h.b16 %v3158
  %v3209 = vunpack.c.l.b16 %v3159
  %v3210 = vpack.c.b16 %v3177, %v3177
  %v3211 = vpack.c.b16 %v3178, %v3178
  %v3212 = vpack.c.b16 %v3179, %v3179
  %v3213 = vpack.c.b16 %v3180, %v3180
  %v3214 = vpack.c.b16 %v3181, %v3181
  %v3215 = vpack.c.b16 %v3182, %v3182
  %v3216 = vpack.c.b16 %v3183, %v3183
  %v3217 = vpack.c.b16 %v3184, %v3184
  %v3218 = vpack.c.b16 %v3185, %v3185
  %v3219 = vpack.c.b16 %v3186, %v3186
  %v3220 = vpack.c.b16 %v3187, %v3187
  %v3221 = vpack.c.b16 %v3188, %v3188
  %v3222 = vpack.c.b16 %v3189, %v3189
  %v3223 = vpack.c.b16 %v3190, %v3190
  %v3224 = vpack.c.b16 %v3191, %v3191
  %v3225 = vpack.c.b16 %v3192, %v3192
  %v3226 = vpack.c.b16 %v3193, %v3193
  %v3227 = vpack.c.b16 %v3194, %v3194
  %v3228 = vpack.c.b16 %v3195, %v3195
  %v3229 = vpack.c.b16 %v3196, %v3196
  %v3230 = vpack.c.b16 %v3197, %v3197
  %v3231 = vpack.c.b16 %v3198, %v3198
  %v3232 = vpack.c.b16 %v3199, %v3199
  %v3233 = vpack.c.b16 %v3200, %v3200
  %v3234 = vpack.c.b16 %v3201, %v3201
  %v3235 = vpack.c.b16 %v3202, %v3202
  %v3236 = vpack.c.b16 %v3203, %v3203
  %v3237 = vpack.c.b16 %v3204, %v3204
  %v3238 = vpack.c.b16 %v3205, %v3205
  %v3239 = vpack.c.b16 %v3206, %v3206
  %v3240 = vpack.c.b16 %v3207, %v3207
  %v3241 = vpack.c.b16 %v3208, %v3208
  %v3242 = vpack.c.b16 %v3209, %v3209
  %vm3276 = vcmask 782016
  %3277 = vst.msk [vmem:[#allocation3] sm:$0xf] %vm3276, %v3210
  %3278 = vst.msk [vmem:[#allocation3 + $0x4] sm:$0xf] %vm3276, %v3211
  %3279 = vst.msk [vmem:[#allocation3 + $0x8] sm:$0xf] %vm3276, %v3212
  %3280 = vst.msk [vmem:[#allocation3 + $0xc] sm:$0xf] %vm3276, %v3213
  %3281 = vst.msk [vmem:[#allocation3 + $0x10] sm:$0xf] %vm3276, %v3214
  %3282 = vst.msk [vmem:[#allocation3 + $0x14] sm:$0xf] %vm3276, %v3215
  %3283 = vst.msk [vmem:[#allocation3 + $0x18] sm:$0xf] %vm3276, %v3216
  %3284 = vst.msk [vmem:[#allocation3 + $0x1c] sm:$0xf] %vm3276, %v3217
  %3285 = vst.msk [vmem:[#allocation3 + $0x20] sm:$0xf] %vm3276, %v3218
  %3286 = vst.msk [vmem:[#allocation3 + $0x24] sm:$0xf] %vm3276, %v3219
  %3287 = vst.msk [vmem:[#allocation3 + $0x28] sm:$0xf] %vm3276, %v3220
  %3288 = vst.msk [vmem:[#allocation3 + $0x2c] sm:$0xf] %vm3276, %v3221
  %3289 = vst.msk [vmem:[#allocation3 + $0x30] sm:$0xf] %vm3276, %v3222
  %3290 = vst.msk [vmem:[#allocation3 + $0x34] sm:$0xf] %vm3276, %v3223
  %3291 = vst.msk [vmem:[#allocation3 + $0x38] sm:$0xf] %vm3276, %v3224
  %3292 = vst.msk [vmem:[#allocation3 + $0x3c] sm:$0xf] %vm3276, %v3225
  %3293 = vst.msk [vmem:[#allocation3 + $0x40] sm:$0xf] %vm3276, %v3226
  %3294 = vst.msk [vmem:[#allocation3 + $0x44] sm:$0xf] %vm3276, %v3227
  %3295 = vst.msk [vmem:[#allocation3 + $0x48] sm:$0xf] %vm3276, %v3228
  %3296 = vst.msk [vmem:[#allocation3 + $0x4c] sm:$0xf] %vm3276, %v3229
  %3297 = vst.msk [vmem:[#allocation3 + $0x50] sm:$0xf] %vm3276, %v3230
  %3298 = vst.msk [vmem:[#allocation3 + $0x54] sm:$0xf] %vm3276, %v3231
  %3299 = vst.msk [vmem:[#allocation3 + $0x58] sm:$0xf] %vm3276, %v3232
  %3300 = vst.msk [vmem:[#allocation3 + $0x5c] sm:$0xf] %vm3276, %v3233
  %3301 = vst.msk [vmem:[#allocation3 + $0x60] sm:$0xf] %vm3276, %v3234
  %3302 = vst.msk [vmem:[#allocation3 + $0x64] sm:$0xf] %vm3276, %v3235
  %3303 = vst.msk [vmem:[#allocation3 + $0x68] sm:$0xf] %vm3276, %v3236
  %3304 = vst.msk [vmem:[#allocation3 + $0x6c] sm:$0xf] %vm3276, %v3237
  %3305 = vst.msk [vmem:[#allocation3 + $0x70] sm:$0xf] %vm3276, %v3238
  %3306 = vst.msk [vmem:[#allocation3 + $0x74] sm:$0xf] %vm3276, %v3239
  %3307 = vst.msk [vmem:[#allocation3 + $0x78] sm:$0xf] %vm3276, %v3240
  %3308 = vst.msk [vmem:[#allocation3 + $0x7c] sm:$0xf] %vm3276, %v3241
  %3309 = vst.msk [vmem:[#allocation3 + $0x80] sm:$0xf] %vm3276, %v3242
  %v3310 = vld [vmem:[#allocation2 + $0x37] sm:$0xff]
  %v3311 = vld [vmem:[#allocation2 + $0x3f] sm:$0xff]
  %v3312 = vld [vmem:[#allocation2 + $0x47] sm:$0xff]
  %v3313 = vld [vmem:[#allocation2 + $0x4f] sm:$0xff]
  %v3314 = vld [vmem:[#allocation2 + $0x57] sm:$0xff]
  %v3315 = vld [vmem:[#allocation2 + $0x5f] sm:$0xff]
  %v3316 = vld [vmem:[#allocation2 + $0x67] sm:$0xff]
  %v3317 = vld [vmem:[#allocation2 + $0x6f] sm:$0xff]
  %v3318 = vld [vmem:[#allocation2 + $0x77] sm:$0xff]
  %v3319 = vld [vmem:[#allocation2 + $0x7f] sm:$0xff]
  %v3320 = vld [vmem:[#allocation2 + $0x87] sm:$0xff]
  %v3321 = vld [vmem:[#allocation2 + $0x8f] sm:$0xff]
  %v3322 = vld [vmem:[#allocation2 + $0x97] sm:$0xff]
  %v3323 = vld [vmem:[#allocation2 + $0x9f] sm:$0xff]
  %v3324 = vld [vmem:[#allocation2 + $0xa7] sm:$0xff]
  %v3325 = vld [vmem:[#allocation2 + $0xaf] sm:$0xff]
  %v3326 = vld [vmem:[#allocation2 + $0xb7] sm:$0xff]
  %v3327 = vld [vmem:[#allocation2 + $0xbf] sm:$0xff]
  %v3328 = vld [vmem:[#allocation2 + $0xc7] sm:$0xff]
  %v3329 = vld [vmem:[#allocation2 + $0xcf] sm:$0xff]
  %v3330 = vld [vmem:[#allocation2 + $0xd7] sm:$0xff]
  %v3331 = vld [vmem:[#allocation2 + $0xdf] sm:$0xff]
  %v3332 = vld [vmem:[#allocation2 + $0xe7] sm:$0xff]
  %v3333 = vld [vmem:[#allocation2 + $0xef] sm:$0xff]
  %v3334 = vld [vmem:[#allocation2 + $0xf7] sm:$0xff]
  %v3335 = vld [vmem:[#allocation2 + $0xff] sm:$0xff]
  %v3336 = vld [vmem:[#allocation2 + $0x107] sm:$0xff]
  %v3337 = vld [vmem:[#allocation2 + $0x10f] sm:$0xff]
  %v3338 = vld [vmem:[#allocation2 + $0x117] sm:$0xff]
  %v3339 = vld [vmem:[#allocation2 + $0x11f] sm:$0xff]
  %v3340 = vld [vmem:[#allocation2 + $0x127] sm:$0xff]
  %v3341 = vld [vmem:[#allocation2 + $0x12f] sm:$0xff]
  %v3342 = vld [vmem:[#allocation2 + $0x137] sm:$0xff]
  %v3343 = vpack.c.bf16 %v3311, %v3310
  %v3344 = vpack.c.bf16 %v3313, %v3312
  %v3345 = vpack.c.bf16 %v3315, %v3314
  %v3346 = vpack.c.bf16 %v3317, %v3316
  %v3347 = vpack.c.bf16 %v3319, %v3318
  %v3348 = vpack.c.bf16 %v3321, %v3320
  %v3349 = vpack.c.bf16 %v3323, %v3322
  %v3350 = vpack.c.bf16 %v3325, %v3324
  %v3351 = vpack.c.bf16 %v3327, %v3326
  %v3352 = vpack.c.bf16 %v3329, %v3328
  %v3353 = vpack.c.bf16 %v3331, %v3330
  %v3354 = vpack.c.bf16 %v3333, %v3332
  %v3355 = vpack.c.bf16 %v3335, %v3334
  %v3356 = vpack.c.bf16 %v3337, %v3336
  %v3357 = vpack.c.bf16 %v3339, %v3338
  %v3358 = vpack.c.bf16 %v3341, %v3340
  %v3359 = vpack.c.bf16 %v3342, %v3342
  %v3377 = vunpack.c.l.b16 %v3343
  %v3378 = vunpack.c.h.b16 %v3343
  %v3379 = vunpack.c.l.b16 %v3344
  %v3380 = vunpack.c.h.b16 %v3344
  %v3381 = vunpack.c.l.b16 %v3345
  %v3382 = vunpack.c.h.b16 %v3345
  %v3383 = vunpack.c.l.b16 %v3346
  %v3384 = vunpack.c.h.b16 %v3346
  %v3385 = vunpack.c.l.b16 %v3347
  %v3386 = vunpack.c.h.b16 %v3347
  %v3387 = vunpack.c.l.b16 %v3348
  %v3388 = vunpack.c.h.b16 %v3348
  %v3389 = vunpack.c.l.b16 %v3349
  %v3390 = vunpack.c.h.b16 %v3349
  %v3391 = vunpack.c.l.b16 %v3350
  %v3392 = vunpack.c.h.b16 %v3350
  %v3393 = vunpack.c.l.b16 %v3351
  %v3394 = vunpack.c.h.b16 %v3351
  %v3395 = vunpack.c.l.b16 %v3352
  %v3396 = vunpack.c.h.b16 %v3352
  %v3397 = vunpack.c.l.b16 %v3353
  %v3398 = vunpack.c.h.b16 %v3353
  %v3399 = vunpack.c.l.b16 %v3354
  %v3400 = vunpack.c.h.b16 %v3354
  %v3401 = vunpack.c.l.b16 %v3355
  %v3402 = vunpack.c.h.b16 %v3355
  %v3403 = vunpack.c.l.b16 %v3356
  %v3404 = vunpack.c.h.b16 %v3356
  %v3405 = vunpack.c.l.b16 %v3357
  %v3406 = vunpack.c.h.b16 %v3357
  %v3407 = vunpack.c.l.b16 %v3358
  %v3408 = vunpack.c.h.b16 %v3358
  %v3409 = vunpack.c.l.b16 %v3359
  %v3410 = vpack.c.b16 %v3377, %v3377
  %v3411 = vpack.c.b16 %v3378, %v3378
  %v3412 = vpack.c.b16 %v3379, %v3379
  %v3413 = vpack.c.b16 %v3380, %v3380
  %v3414 = vpack.c.b16 %v3381, %v3381
  %v3415 = vpack.c.b16 %v3382, %v3382
  %v3416 = vpack.c.b16 %v3383, %v3383
  %v3417 = vpack.c.b16 %v3384, %v3384
  %v3418 = vpack.c.b16 %v3385, %v3385
  %v3419 = vpack.c.b16 %v3386, %v3386
  %v3420 = vpack.c.b16 %v3387, %v3387
  %v3421 = vpack.c.b16 %v3388, %v3388
  %v3422 = vpack.c.b16 %v3389, %v3389
  %v3423 = vpack.c.b16 %v3390, %v3390
  %v3424 = vpack.c.b16 %v3391, %v3391
  %v3425 = vpack.c.b16 %v3392, %v3392
  %v3426 = vpack.c.b16 %v3393, %v3393
  %v3427 = vpack.c.b16 %v3394, %v3394
  %v3428 = vpack.c.b16 %v3395, %v3395
  %v3429 = vpack.c.b16 %v3396, %v3396
  %v3430 = vpack.c.b16 %v3397, %v3397
  %v3431 = vpack.c.b16 %v3398, %v3398
  %v3432 = vpack.c.b16 %v3399, %v3399
  %v3433 = vpack.c.b16 %v3400, %v3400
  %v3434 = vpack.c.b16 %v3401, %v3401
  %v3435 = vpack.c.b16 %v3402, %v3402
  %v3436 = vpack.c.b16 %v3403, %v3403
  %v3437 = vpack.c.b16 %v3404, %v3404
  %v3438 = vpack.c.b16 %v3405, %v3405
  %v3439 = vpack.c.b16 %v3406, %v3406
  %v3440 = vpack.c.b16 %v3407, %v3407
  %v3441 = vpack.c.b16 %v3408, %v3408
  %v3442 = vpack.c.b16 %v3409, %v3409
  %vm3476 = vcmask 847616
  %3477 = vst.msk [vmem:[#allocation3] sm:$0xf] %vm3476, %v3410
  %3478 = vst.msk [vmem:[#allocation3 + $0x4] sm:$0xf] %vm3476, %v3411
  %3479 = vst.msk [vmem:[#allocation3 + $0x8] sm:$0xf] %vm3476, %v3412
  %3480 = vst.msk [vmem:[#allocation3 + $0xc] sm:$0xf] %vm3476, %v3413
  %3481 = vst.msk [vmem:[#allocation3 + $0x10] sm:$0xf] %vm3476, %v3414
  %3482 = vst.msk [vmem:[#allocation3 + $0x14] sm:$0xf] %vm3476, %v3415
  %3483 = vst.msk [vmem:[#allocation3 + $0x18] sm:$0xf] %vm3476, %v3416
  %3484 = vst.msk [vmem:[#allocation3 + $0x1c] sm:$0xf] %vm3476, %v3417
  %3485 = vst.msk [vmem:[#allocation3 + $0x20] sm:$0xf] %vm3476, %v3418
  %3486 = vst.msk [vmem:[#allocation3 + $0x24] sm:$0xf] %vm3476, %v3419
  %3487 = vst.msk [vmem:[#allocation3 + $0x28] sm:$0xf] %vm3476, %v3420
  %3488 = vst.msk [vmem:[#allocation3 + $0x2c] sm:$0xf] %vm3476, %v3421
  %3489 = vst.msk [vmem:[#allocation3 + $0x30] sm:$0xf] %vm3476, %v3422
  %3490 = vst.msk [vmem:[#allocation3 + $0x34] sm:$0xf] %vm3476, %v3423
  %3491 = vst.msk [vmem:[#allocation3 + $0x38] sm:$0xf] %vm3476, %v3424
  %3492 = vst.msk [vmem:[#allocation3 + $0x3c] sm:$0xf] %vm3476, %v3425
  %3493 = vst.msk [vmem:[#allocation3 + $0x40] sm:$0xf] %vm3476, %v3426
  %3494 = vst.msk [vmem:[#allocation3 + $0x44] sm:$0xf] %vm3476, %v3427
  %3495 = vst.msk [vmem:[#allocation3 + $0x48] sm:$0xf] %vm3476, %v3428
  %3496 = vst.msk [vmem:[#allocation3 + $0x4c] sm:$0xf] %vm3476, %v3429
  %3497 = vst.msk [vmem:[#allocation3 + $0x50] sm:$0xf] %vm3476, %v3430
  %3498 = vst.msk [vmem:[#allocation3 + $0x54] sm:$0xf] %vm3476, %v3431
  %3499 = vst.msk [vmem:[#allocation3 + $0x58] sm:$0xf] %vm3476, %v3432
  %3500 = vst.msk [vmem:[#allocation3 + $0x5c] sm:$0xf] %vm3476, %v3433
  %3501 = vst.msk [vmem:[#allocation3 + $0x60] sm:$0xf] %vm3476, %v3434
  %3502 = vst.msk [vmem:[#allocation3 + $0x64] sm:$0xf] %vm3476, %v3435
  %3503 = vst.msk [vmem:[#allocation3 + $0x68] sm:$0xf] %vm3476, %v3436
  %3504 = vst.msk [vmem:[#allocation3 + $0x6c] sm:$0xf] %vm3476, %v3437
  %3505 = vst.msk [vmem:[#allocation3 + $0x70] sm:$0xf] %vm3476, %v3438
  %3506 = vst.msk [vmem:[#allocation3 + $0x74] sm:$0xf] %vm3476, %v3439
  %3507 = vst.msk [vmem:[#allocation3 + $0x78] sm:$0xf] %vm3476, %v3440
  %3508 = vst.msk [vmem:[#allocation3 + $0x7c] sm:$0xf] %vm3476, %v3441
  %3509 = vst.msk [vmem:[#allocation3 + $0x80] sm:$0xf] %vm3476, %v3442
  %v3510 = vld [vmem:[#allocation2 + $0x38] sm:$0xff]
  %v3511 = vld [vmem:[#allocation2 + $0x40] sm:$0xff]
  %v3512 = vld [vmem:[#allocation2 + $0x48] sm:$0xff]
  %v3513 = vld [vmem:[#allocation2 + $0x50] sm:$0xff]
  %v3514 = vld [vmem:[#allocation2 + $0x58] sm:$0xff]
  %v3515 = vld [vmem:[#allocation2 + $0x60] sm:$0xff]
  %v3516 = vld [vmem:[#allocation2 + $0x68] sm:$0xff]
  %v3517 = vld [vmem:[#allocation2 + $0x70] sm:$0xff]
  %v3518 = vld [vmem:[#allocation2 + $0x78] sm:$0xff]
  %v3519 = vld [vmem:[#allocation2 + $0x80] sm:$0xff]
  %v3520 = vld [vmem:[#allocation2 + $0x88] sm:$0xff]
  %v3521 = vld [vmem:[#allocation2 + $0x90] sm:$0xff]
  %v3522 = vld [vmem:[#allocation2 + $0x98] sm:$0xff]
  %v3523 = vld [vmem:[#allocation2 + $0xa0] sm:$0xff]
  %v3524 = vld [vmem:[#allocation2 + $0xa8] sm:$0xff]
  %v3525 = vld [vmem:[#allocation2 + $0xb0] sm:$0xff]
  %v3526 = vld [vmem:[#allocation2 + $0xb8] sm:$0xff]
  %v3527 = vld [vmem:[#allocation2 + $0xc0] sm:$0xff]
  %v3528 = vld [vmem:[#allocation2 + $0xc8] sm:$0xff]
  %v3529 = vld [vmem:[#allocation2 + $0xd0] sm:$0xff]
  %v3530 = vld [vmem:[#allocation2 + $0xd8] sm:$0xff]
  %v3531 = vld [vmem:[#allocation2 + $0xe0] sm:$0xff]
  %v3532 = vld [vmem:[#allocation2 + $0xe8] sm:$0xff]
  %v3533 = vld [vmem:[#allocation2 + $0xf0] sm:$0xff]
  %v3534 = vld [vmem:[#allocation2 + $0xf8] sm:$0xff]
  %v3535 = vld [vmem:[#allocation2 + $0x100] sm:$0xff]
  %v3536 = vld [vmem:[#allocation2 + $0x108] sm:$0xff]
  %v3537 = vld [vmem:[#allocation2 + $0x110] sm:$0xff]
  %v3538 = vld [vmem:[#allocation2 + $0x118] sm:$0xff]
  %v3539 = vld [vmem:[#allocation2 + $0x120] sm:$0xff]
  %v3540 = vld [vmem:[#allocation2 + $0x128] sm:$0xff]
  %v3541 = vld [vmem:[#allocation2 + $0x130] sm:$0xff]
  %v3542 = vld [vmem:[#allocation2 + $0x138] sm:$0xff]
  %v3543 = vpack.c.bf16 %v3511, %v3510
  %v3544 = vpack.c.bf16 %v3513, %v3512
  %v3545 = vpack.c.bf16 %v3515, %v3514
  %v3546 = vpack.c.bf16 %v3517, %v3516
  %v3547 = vpack.c.bf16 %v3519, %v3518
  %v3548 = vpack.c.bf16 %v3521, %v3520
  %v3549 = vpack.c.bf16 %v3523, %v3522
  %v3550 = vpack.c.bf16 %v3525, %v3524
  %v3551 = vpack.c.bf16 %v3527, %v3526
  %v3552 = vpack.c.bf16 %v3529, %v3528
  %v3553 = vpack.c.bf16 %v3531, %v3530
  %v3554 = vpack.c.bf16 %v3533, %v3532
  %v3555 = vpack.c.bf16 %v3535, %v3534
  %v3556 = vpack.c.bf16 %v3537, %v3536
  %v3557 = vpack.c.bf16 %v3539, %v3538
  %v3558 = vpack.c.bf16 %v3541, %v3540
  %v3559 = vpack.c.bf16 %v3542, %v3542
  %v3577 = vunpack.c.l.b16 %v3543
  %v3578 = vunpack.c.h.b16 %v3543
  %v3579 = vunpack.c.l.b16 %v3544
  %v3580 = vunpack.c.h.b16 %v3544
  %v3581 = vunpack.c.l.b16 %v3545
  %v3582 = vunpack.c.h.b16 %v3545
  %v3583 = vunpack.c.l.b16 %v3546
  %v3584 = vunpack.c.h.b16 %v3546
  %v3585 = vunpack.c.l.b16 %v3547
  %v3586 = vunpack.c.h.b16 %v3547
  %v3587 = vunpack.c.l.b16 %v3548
  %v3588 = vunpack.c.h.b16 %v3548
  %v3589 = vunpack.c.l.b16 %v3549
  %v3590 = vunpack.c.h.b16 %v3549
  %v3591 = vunpack.c.l.b16 %v3550
  %v3592 = vunpack.c.h.b16 %v3550
  %v3593 = vunpack.c.l.b16 %v3551
  %v3594 = vunpack.c.h.b16 %v3551
  %v3595 = vunpack.c.l.b16 %v3552
  %v3596 = vunpack.c.h.b16 %v3552
  %v3597 = vunpack.c.l.b16 %v3553
  %v3598 = vunpack.c.h.b16 %v3553
  %v3599 = vunpack.c.l.b16 %v3554
  %v3600 = vunpack.c.h.b16 %v3554
  %v3601 = vunpack.c.l.b16 %v3555
  %v3602 = vunpack.c.h.b16 %v3555
  %v3603 = vunpack.c.l.b16 %v3556
  %v3604 = vunpack.c.h.b16 %v3556
  %v3605 = vunpack.c.l.b16 %v3557
  %v3606 = vunpack.c.h.b16 %v3557
  %v3607 = vunpack.c.l.b16 %v3558
  %v3608 = vunpack.c.h.b16 %v3558
  %v3609 = vunpack.c.l.b16 %v3559
  %v3610 = vpack.c.b16 %v3577, %v3577
  %v3611 = vpack.c.b16 %v3578, %v3578
  %v3612 = vpack.c.b16 %v3579, %v3579
  %v3613 = vpack.c.b16 %v3580, %v3580
  %v3614 = vpack.c.b16 %v3581, %v3581
  %v3615 = vpack.c.b16 %v3582, %v3582
  %v3616 = vpack.c.b16 %v3583, %v3583
  %v3617 = vpack.c.b16 %v3584, %v3584
  %v3618 = vpack.c.b16 %v3585, %v3585
  %v3619 = vpack.c.b16 %v3586, %v3586
  %v3620 = vpack.c.b16 %v3587, %v3587
  %v3621 = vpack.c.b16 %v3588, %v3588
  %v3622 = vpack.c.b16 %v3589, %v3589
  %v3623 = vpack.c.b16 %v3590, %v3590
  %v3624 = vpack.c.b16 %v3591, %v3591
  %v3625 = vpack.c.b16 %v3592, %v3592
  %v3626 = vpack.c.b16 %v3593, %v3593
  %v3627 = vpack.c.b16 %v3594, %v3594
  %v3628 = vpack.c.b16 %v3595, %v3595
  %v3629 = vpack.c.b16 %v3596, %v3596
  %v3630 = vpack.c.b16 %v3597, %v3597
  %v3631 = vpack.c.b16 %v3598, %v3598
  %v3632 = vpack.c.b16 %v3599, %v3599
  %v3633 = vpack.c.b16 %v3600, %v3600
  %v3634 = vpack.c.b16 %v3601, %v3601
  %v3635 = vpack.c.b16 %v3602, %v3602
  %v3636 = vpack.c.b16 %v3603, %v3603
  %v3637 = vpack.c.b16 %v3604, %v3604
  %v3638 = vpack.c.b16 %v3605, %v3605
  %v3639 = vpack.c.b16 %v3606, %v3606
  %v3640 = vpack.c.b16 %v3607, %v3607
  %v3641 = vpack.c.b16 %v3608, %v3608
  %v3642 = vpack.c.b16 %v3609, %v3609
  %vm3676 = vcmask 913216
  %3677 = vst.msk [vmem:[#allocation3] sm:$0xf] %vm3676, %v3610
  %3678 = vst.msk [vmem:[#allocation3 + $0x4] sm:$0xf] %vm3676, %v3611
  %3679 = vst.msk [vmem:[#allocation3 + $0x8] sm:$0xf] %vm3676, %v3612
  %3680 = vst.msk [vmem:[#allocation3 + $0xc] sm:$0xf] %vm3676, %v3613
  %3681 = vst.msk [vmem:[#allocation3 + $0x10] sm:$0xf] %vm3676, %v3614
  %3682 = vst.msk [vmem:[#allocation3 + $0x14] sm:$0xf] %vm3676, %v3615
  %3683 = vst.msk [vmem:[#allocation3 + $0x18] sm:$0xf] %vm3676, %v3616
  %3684 = vst.msk [vmem:[#allocation3 + $0x1c] sm:$0xf] %vm3676, %v3617
  %3685 = vst.msk [vmem:[#allocation3 + $0x20] sm:$0xf] %vm3676, %v3618
  %3686 = vst.msk [vmem:[#allocation3 + $0x24] sm:$0xf] %vm3676, %v3619
  %3687 = vst.msk [vmem:[#allocation3 + $0x28] sm:$0xf] %vm3676, %v3620
  %3688 = vst.msk [vmem:[#allocation3 + $0x2c] sm:$0xf] %vm3676, %v3621
  %3689 = vst.msk [vmem:[#allocation3 + $0x30] sm:$0xf] %vm3676, %v3622
  %3690 = vst.msk [vmem:[#allocation3 + $0x34] sm:$0xf] %vm3676, %v3623
  %3691 = vst.msk [vmem:[#allocation3 + $0x38] sm:$0xf] %vm3676, %v3624
  %3692 = vst.msk [vmem:[#allocation3 + $0x3c] sm:$0xf] %vm3676, %v3625
  %3693 = vst.msk [vmem:[#allocation3 + $0x40] sm:$0xf] %vm3676, %v3626
  %3694 = vst.msk [vmem:[#allocation3 + $0x44] sm:$0xf] %vm3676, %v3627
  %3695 = vst.msk [vmem:[#allocation3 + $0x48] sm:$0xf] %vm3676, %v3628
  %3696 = vst.msk [vmem:[#allocation3 + $0x4c] sm:$0xf] %vm3676, %v3629
  %3697 = vst.msk [vmem:[#allocation3 + $0x50] sm:$0xf] %vm3676, %v3630
  %3698 = vst.msk [vmem:[#allocation3 + $0x54] sm:$0xf] %vm3676, %v3631
  %3699 = vst.msk [vmem:[#allocation3 + $0x58] sm:$0xf] %vm3676, %v3632
  %3700 = vst.msk [vmem:[#allocation3 + $0x5c] sm:$0xf] %vm3676, %v3633
  %3701 = vst.msk [vmem:[#allocation3 + $0x60] sm:$0xf] %vm3676, %v3634
  %3702 = vst.msk [vmem:[#allocation3 + $0x64] sm:$0xf] %vm3676, %v3635
  %3703 = vst.msk [vmem:[#allocation3 + $0x68] sm:$0xf] %vm3676, %v3636
  %3704 = vst.msk [vmem:[#allocation3 + $0x6c] sm:$0xf] %vm3676, %v3637
  %3705 = vst.msk [vmem:[#allocation3 + $0x70] sm:$0xf] %vm3676, %v3638
  %3706 = vst.msk [vmem:[#allocation3 + $0x74] sm:$0xf] %vm3676, %v3639
  %3707 = vst.msk [vmem:[#allocation3 + $0x78] sm:$0xf] %vm3676, %v3640
  %3708 = vst.msk [vmem:[#allocation3 + $0x7c] sm:$0xf] %vm3676, %v3641
  %3709 = vst.msk [vmem:[#allocation3 + $0x80] sm:$0xf] %vm3676, %v3642
  %v3710 = vld [vmem:[#allocation2 + $0x39] sm:$0xff]
  %v3711 = vld [vmem:[#allocation2 + $0x41] sm:$0xff]
  %v3712 = vld [vmem:[#allocation2 + $0x49] sm:$0xff]
  %v3713 = vld [vmem:[#allocation2 + $0x51] sm:$0xff]
  %v3714 = vld [vmem:[#allocation2 + $0x59] sm:$0xff]
  %v3715 = vld [vmem:[#allocation2 + $0x61] sm:$0xff]
  %v3716 = vld [vmem:[#allocation2 + $0x69] sm:$0xff]
  %v3717 = vld [vmem:[#allocation2 + $0x71] sm:$0xff]
  %v3718 = vld [vmem:[#allocation2 + $0x79] sm:$0xff]
  %v3719 = vld [vmem:[#allocation2 + $0x81] sm:$0xff]
  %v3720 = vld [vmem:[#allocation2 + $0x89] sm:$0xff]
  %v3721 = vld [vmem:[#allocation2 + $0x91] sm:$0xff]
  %v3722 = vld [vmem:[#allocation2 + $0x99] sm:$0xff]
  %v3723 = vld [vmem:[#allocation2 + $0xa1] sm:$0xff]
  %v3724 = vld [vmem:[#allocation2 + $0xa9] sm:$0xff]
  %v3725 = vld [vmem:[#allocation2 + $0xb1] sm:$0xff]
  %v3726 = vld [vmem:[#allocation2 + $0xb9] sm:$0xff]
  %v3727 = vld [vmem:[#allocation2 + $0xc1] sm:$0xff]
  %v3728 = vld [vmem:[#allocation2 + $0xc9] sm:$0xff]
  %v3729 = vld [vmem:[#allocation2 + $0xd1] sm:$0xff]
  %v3730 = vld [vmem:[#allocation2 + $0xd9] sm:$0xff]
  %v3731 = vld [vmem:[#allocation2 + $0xe1] sm:$0xff]
  %v3732 = vld [vmem:[#allocation2 + $0xe9] sm:$0xff]
  %v3733 = vld [vmem:[#allocation2 + $0xf1] sm:$0xff]
  %v3734 = vld [vmem:[#allocation2 + $0xf9] sm:$0xff]
  %v3735 = vld [vmem:[#allocation2 + $0x101] sm:$0xff]
  %v3736 = vld [vmem:[#allocation2 + $0x109] sm:$0xff]
  %v3737 = vld [vmem:[#allocation2 + $0x111] sm:$0xff]
  %v3738 = vld [vmem:[#allocation2 + $0x119] sm:$0xff]
  %v3739 = vld [vmem:[#allocation2 + $0x121] sm:$0xff]
  %v3740 = vld [vmem:[#allocation2 + $0x129] sm:$0xff]
  %v3741 = vld [vmem:[#allocation2 + $0x131] sm:$0xff]
  %v3742 = vld [vmem:[#allocation2 + $0x139] sm:$0xff]
  %v3743 = vpack.c.bf16 %v3711, %v3710
  %v3744 = vpack.c.bf16 %v3713, %v3712
  %v3745 = vpack.c.bf16 %v3715, %v3714
  %v3746 = vpack.c.bf16 %v3717, %v3716
  %v3747 = vpack.c.bf16 %v3719, %v3718
  %v3748 = vpack.c.bf16 %v3721, %v3720
  %v3749 = vpack.c.bf16 %v3723, %v3722
  %v3750 = vpack.c.bf16 %v3725, %v3724
  %v3751 = vpack.c.bf16 %v3727, %v3726
  %v3752 = vpack.c.bf16 %v3729, %v3728
  %v3753 = vpack.c.bf16 %v3731, %v3730
  %v3754 = vpack.c.bf16 %v3733, %v3732
  %v3755 = vpack.c.bf16 %v3735, %v3734
  %v3756 = vpack.c.bf16 %v3737, %v3736
  %v3757 = vpack.c.bf16 %v3739, %v3738
  %v3758 = vpack.c.bf16 %v3741, %v3740
  %v3759 = vpack.c.bf16 %v3742, %v3742
  %v3777 = vunpack.c.l.b16 %v3743
  %v3778 = vunpack.c.h.b16 %v3743
  %v3779 = vunpack.c.l.b16 %v3744
  %v3780 = vunpack.c.h.b16 %v3744
  %v3781 = vunpack.c.l.b16 %v3745
  %v3782 = vunpack.c.h.b16 %v3745
  %v3783 = vunpack.c.l.b16 %v3746
  %v3784 = vunpack.c.h.b16 %v3746
  %v3785 = vunpack.c.l.b16 %v3747
  %v3786 = vunpack.c.h.b16 %v3747
  %v3787 = vunpack.c.l.b16 %v3748
  %v3788 = vunpack.c.h.b16 %v3748
  %v3789 = vunpack.c.l.b16 %v3749
  %v3790 = vunpack.c.h.b16 %v3749
  %v3791 = vunpack.c.l.b16 %v3750
  %v3792 = vunpack.c.h.b16 %v3750
  %v3793 = vunpack.c.l.b16 %v3751
  %v3794 = vunpack.c.h.b16 %v3751
  %v3795 = vunpack.c.l.b16 %v3752
  %v3796 = vunpack.c.h.b16 %v3752
  %v3797 = vunpack.c.l.b16 %v3753
  %v3798 = vunpack.c.h.b16 %v3753
  %v3799 = vunpack.c.l.b16 %v3754
  %v3800 = vunpack.c.h.b16 %v3754
  %v3801 = vunpack.c.l.b16 %v3755
  %v3802 = vunpack.c.h.b16 %v3755
  %v3803 = vunpack.c.l.b16 %v3756
  %v3804 = vunpack.c.h.b16 %v3756
  %v3805 = vunpack.c.l.b16 %v3757
  %v3806 = vunpack.c.h.b16 %v3757
  %v3807 = vunpack.c.l.b16 %v3758
  %v3808 = vunpack.c.h.b16 %v3758
  %v3809 = vunpack.c.l.b16 %v3759
  %v3810 = vpack.c.b16 %v3777, %v3777
  %v3811 = vpack.c.b16 %v3778, %v3778
  %v3812 = vpack.c.b16 %v3779, %v3779
  %v3813 = vpack.c.b16 %v3780, %v3780
  %v3814 = vpack.c.b16 %v3781, %v3781
  %v3815 = vpack.c.b16 %v3782, %v3782
  %v3816 = vpack.c.b16 %v3783, %v3783
  %v3817 = vpack.c.b16 %v3784, %v3784
  %v3818 = vpack.c.b16 %v3785, %v3785
  %v3819 = vpack.c.b16 %v3786, %v3786
  %v3820 = vpack.c.b16 %v3787, %v3787
  %v3821 = vpack.c.b16 %v3788, %v3788
  %v3822 = vpack.c.b16 %v3789, %v3789
  %v3823 = vpack.c.b16 %v3790, %v3790
  %v3824 = vpack.c.b16 %v3791, %v3791
  %v3825 = vpack.c.b16 %v3792, %v3792
  %v3826 = vpack.c.b16 %v3793, %v3793
  %v3827 = vpack.c.b16 %v3794, %v3794
  %v3828 = vpack.c.b16 %v3795, %v3795
  %v3829 = vpack.c.b16 %v3796, %v3796
  %v3830 = vpack.c.b16 %v3797, %v3797
  %v3831 = vpack.c.b16 %v3798, %v3798
  %v3832 = vpack.c.b16 %v3799, %v3799
  %v3833 = vpack.c.b16 %v3800, %v3800
  %v3834 = vpack.c.b16 %v3801, %v3801
  %v3835 = vpack.c.b16 %v3802, %v3802
  %v3836 = vpack.c.b16 %v3803, %v3803
  %v3837 = vpack.c.b16 %v3804, %v3804
  %v3838 = vpack.c.b16 %v3805, %v3805
  %v3839 = vpack.c.b16 %v3806, %v3806
  %v3840 = vpack.c.b16 %v3807, %v3807
  %v3841 = vpack.c.b16 %v3808, %v3808
  %v3842 = vpack.c.b16 %v3809, %v3809
  %vm3876 = vcmask 978816
  %3877 = vst.msk [vmem:[#allocation3] sm:$0xf] %vm3876, %v3810
  %3878 = vst.msk [vmem:[#allocation3 + $0x4] sm:$0xf] %vm3876, %v3811
  %3879 = vst.msk [vmem:[#allocation3 + $0x8] sm:$0xf] %vm3876, %v3812
  %3880 = vst.msk [vmem:[#allocation3 + $0xc] sm:$0xf] %vm3876, %v3813
  %3881 = vst.msk [vmem:[#allocation3 + $0x10] sm:$0xf] %vm3876, %v3814
  %3882 = vst.msk [vmem:[#allocation3 + $0x14] sm:$0xf] %vm3876, %v3815
  %3883 = vst.msk [vmem:[#allocation3 + $0x18] sm:$0xf] %vm3876, %v3816
  %3884 = vst.msk [vmem:[#allocation3 + $0x1c] sm:$0xf] %vm3876, %v3817
  %3885 = vst.msk [vmem:[#allocation3 + $0x20] sm:$0xf] %vm3876, %v3818
  %3886 = vst.msk [vmem:[#allocation3 + $0x24] sm:$0xf] %vm3876, %v3819
  %3887 = vst.msk [vmem:[#allocation3 + $0x28] sm:$0xf] %vm3876, %v3820
  %3888 = vst.msk [vmem:[#allocation3 + $0x2c] sm:$0xf] %vm3876, %v3821
  %3889 = vst.msk [vmem:[#allocation3 + $0x30] sm:$0xf] %vm3876, %v3822
  %3890 = vst.msk [vmem:[#allocation3 + $0x34] sm:$0xf] %vm3876, %v3823
  %3891 = vst.msk [vmem:[#allocation3 + $0x38] sm:$0xf] %vm3876, %v3824
  %3892 = vst.msk [vmem:[#allocation3 + $0x3c] sm:$0xf] %vm3876, %v3825
  %3893 = vst.msk [vmem:[#allocation3 + $0x40] sm:$0xf] %vm3876, %v3826
  %3894 = vst.msk [vmem:[#allocation3 + $0x44] sm:$0xf] %vm3876, %v3827
  %3895 = vst.msk [vmem:[#allocation3 + $0x48] sm:$0xf] %vm3876, %v3828
  %3896 = vst.msk [vmem:[#allocation3 + $0x4c] sm:$0xf] %vm3876, %v3829
  %3897 = vst.msk [vmem:[#allocation3 + $0x50] sm:$0xf] %vm3876, %v3830
  %3898 = vst.msk [vmem:[#allocation3 + $0x54] sm:$0xf] %vm3876, %v3831
  %3899 = vst.msk [vmem:[#allocation3 + $0x58] sm:$0xf] %vm3876, %v3832
  %3900 = vst.msk [vmem:[#allocation3 + $0x5c] sm:$0xf] %vm3876, %v3833
  %3901 = vst.msk [vmem:[#allocation3 + $0x60] sm:$0xf] %vm3876, %v3834
  %3902 = vst.msk [vmem:[#allocation3 + $0x64] sm:$0xf] %vm3876, %v3835
  %3903 = vst.msk [vmem:[#allocation3 + $0x68] sm:$0xf] %vm3876, %v3836
  %3904 = vst.msk [vmem:[#allocation3 + $0x6c] sm:$0xf] %vm3876, %v3837
  %3905 = vst.msk [vmem:[#allocation3 + $0x70] sm:$0xf] %vm3876, %v3838
  %3906 = vst.msk [vmem:[#allocation3 + $0x74] sm:$0xf] %vm3876, %v3839
  %3907 = vst.msk [vmem:[#allocation3 + $0x78] sm:$0xf] %vm3876, %v3840
  %3908 = vst.msk [vmem:[#allocation3 + $0x7c] sm:$0xf] %vm3876, %v3841
  %3909 = vst.msk [vmem:[#allocation3 + $0x80] sm:$0xf] %vm3876, %v3842
  %v3910 = vld [vmem:[#allocation2 + $0x3a] sm:$0xff]
  %v3911 = vld [vmem:[#allocation2 + $0x42] sm:$0xff]
  %v3912 = vld [vmem:[#allocation2 + $0x4a] sm:$0xff]
  %v3913 = vld [vmem:[#allocation2 + $0x52] sm:$0xff]
  %v3914 = vld [vmem:[#allocation2 + $0x5a] sm:$0xff]
  %v3915 = vld [vmem:[#allocation2 + $0x62] sm:$0xff]
  %v3916 = vld [vmem:[#allocation2 + $0x6a] sm:$0xff]
  %v3917 = vld [vmem:[#allocation2 + $0x72] sm:$0xff]
  %v3918 = vld [vmem:[#allocation2 + $0x7a] sm:$0xff]
  %v3919 = vld [vmem:[#allocation2 + $0x82] sm:$0xff]
  %v3920 = vld [vmem:[#allocation2 + $0x8a] sm:$0xff]
  %v3921 = vld [vmem:[#allocation2 + $0x92] sm:$0xff]
  %v3922 = vld [vmem:[#allocation2 + $0x9a] sm:$0xff]
  %v3923 = vld [vmem:[#allocation2 + $0xa2] sm:$0xff]
  %v3924 = vld [vmem:[#allocation2 + $0xaa] sm:$0xff]
  %v3925 = vld [vmem:[#allocation2 + $0xb2] sm:$0xff]
  %v3926 = vld [vmem:[#allocation2 + $0xba] sm:$0xff]
  %v3927 = vld [vmem:[#allocation2 + $0xc2] sm:$0xff]
  %v3928 = vld [vmem:[#allocation2 + $0xca] sm:$0xff]
  %v3929 = vld [vmem:[#allocation2 + $0xd2] sm:$0xff]
  %v3930 = vld [vmem:[#allocation2 + $0xda] sm:$0xff]
  %v3931 = vld [vmem:[#allocation2 + $0xe2] sm:$0xff]
  %v3932 = vld [vmem:[#allocation2 + $0xea] sm:$0xff]
  %v3933 = vld [vmem:[#allocation2 + $0xf2] sm:$0xff]
  %v3934 = vld [vmem:[#allocation2 + $0xfa] sm:$0xff]
  %v3935 = vld [vmem:[#allocation2 + $0x102] sm:$0xff]
  %v3936 = vld [vmem:[#allocation2 + $0x10a] sm:$0xff]
  %v3937 = vld [vmem:[#allocation2 + $0x112] sm:$0xff]
  %v3938 = vld [vmem:[#allocation2 + $0x11a] sm:$0xff]
  %v3939 = vld [vmem:[#allocation2 + $0x122] sm:$0xff]
  %v3940 = vld [vmem:[#allocation2 + $0x12a] sm:$0xff]
  %v3941 = vld [vmem:[#allocation2 + $0x132] sm:$0xff]
  %v3942 = vld [vmem:[#allocation2 + $0x13a] sm:$0xff]
  %v3943 = vpack.c.bf16 %v3911, %v3910
  %v3944 = vpack.c.bf16 %v3913, %v3912
  %v3945 = vpack.c.bf16 %v3915, %v3914
  %v3946 = vpack.c.bf16 %v3917, %v3916
  %v3947 = vpack.c.bf16 %v3919, %v3918
  %v3948 = vpack.c.bf16 %v3921, %v3920
  %v3949 = vpack.c.bf16 %v3923, %v3922
  %v3950 = vpack.c.bf16 %v3925, %v3924
  %v3951 = vpack.c.bf16 %v3927, %v3926
  %v3952 = vpack.c.bf16 %v3929, %v3928
  %v3953 = vpack.c.bf16 %v3931, %v3930
  %v3954 = vpack.c.bf16 %v3933, %v3932
  %v3955 = vpack.c.bf16 %v3935, %v3934
  %v3956 = vpack.c.bf16 %v3937, %v3936
  %v3957 = vpack.c.bf16 %v3939, %v3938
  %v3958 = vpack.c.bf16 %v3941, %v3940
  %v3959 = vpack.c.bf16 %v3942, %v3942
  %v3977 = vunpack.c.l.b16 %v3943
  %v3978 = vunpack.c.h.b16 %v3943
  %v3979 = vunpack.c.l.b16 %v3944
  %v3980 = vunpack.c.h.b16 %v3944
  %v3981 = vunpack.c.l.b16 %v3945
  %v3982 = vunpack.c.h.b16 %v3945
  %v3983 = vunpack.c.l.b16 %v3946
  %v3984 = vunpack.c.h.b16 %v3946
  %v3985 = vunpack.c.l.b16 %v3947
  %v3986 = vunpack.c.h.b16 %v3947
  %v3987 = vunpack.c.l.b16 %v3948
  %v3988 = vunpack.c.h.b16 %v3948
  %v3989 = vunpack.c.l.b16 %v3949
  %v3990 = vunpack.c.h.b16 %v3949
  %v3991 = vunpack.c.l.b16 %v3950
  %v3992 = vunpack.c.h.b16 %v3950
  %v3993 = vunpack.c.l.b16 %v3951
  %v3994 = vunpack.c.h.b16 %v3951
  %v3995 = vunpack.c.l.b16 %v3952
  %v3996 = vunpack.c.h.b16 %v3952
  %v3997 = vunpack.c.l.b16 %v3953
  %v3998 = vunpack.c.h.b16 %v3953
  %v3999 = vunpack.c.l.b16 %v3954
  %v4000 = vunpack.c.h.b16 %v3954
  %v4001 = vunpack.c.l.b16 %v3955
  %v4002 = vunpack.c.h.b16 %v3955
  %v4003 = vunpack.c.l.b16 %v3956
  %v4004 = vunpack.c.h.b16 %v3956
  %v4005 = vunpack.c.l.b16 %v3957
  %v4006 = vunpack.c.h.b16 %v3957
  %v4007 = vunpack.c.l.b16 %v3958
  %v4008 = vunpack.c.h.b16 %v3958
  %v4009 = vunpack.c.l.b16 %v3959
  %v4010 = vpack.c.b16 %v3977, %v3977
  %v4011 = vpack.c.b16 %v3978, %v3978
  %v4012 = vpack.c.b16 %v3979, %v3979
  %v4013 = vpack.c.b16 %v3980, %v3980
  %v4014 = vpack.c.b16 %v3981, %v3981
  %v4015 = vpack.c.b16 %v3982, %v3982
  %v4016 = vpack.c.b16 %v3983, %v3983
  %v4017 = vpack.c.b16 %v3984, %v3984
  %v4018 = vpack.c.b16 %v3985, %v3985
  %v4019 = vpack.c.b16 %v3986, %v3986
  %v4020 = vpack.c.b16 %v3987, %v3987
  %v4021 = vpack.c.b16 %v3988, %v3988
  %v4022 = vpack.c.b16 %v3989, %v3989
  %v4023 = vpack.c.b16 %v3990, %v3990
  %v4024 = vpack.c.b16 %v3991, %v3991
  %v4025 = vpack.c.b16 %v3992, %v3992
  %v4026 = vpack.c.b16 %v3993, %v3993
  %v4027 = vpack.c.b16 %v3994, %v3994
  %v4028 = vpack.c.b16 %v3995, %v3995
  %v4029 = vpack.c.b16 %v3996, %v3996
  %v4030 = vpack.c.b16 %v3997, %v3997
  %v4031 = vpack.c.b16 %v3998, %v3998
  %v4032 = vpack.c.b16 %v3999, %v3999
  %v4033 = vpack.c.b16 %v4000, %v4000
  %v4034 = vpack.c.b16 %v4001, %v4001
  %v4035 = vpack.c.b16 %v4002, %v4002
  %v4036 = vpack.c.b16 %v4003, %v4003
  %v4037 = vpack.c.b16 %v4004, %v4004
  %v4038 = vpack.c.b16 %v4005, %v4005
  %v4039 = vpack.c.b16 %v4006, %v4006
  %v4040 = vpack.c.b16 %v4007, %v4007
  %v4041 = vpack.c.b16 %v4008, %v4008
  %v4042 = vpack.c.b16 %v4009, %v4009
  %vm4076 = vcmask 1044416
  %4077 = vst.msk [vmem:[#allocation3] sm:$0xf] %vm4076, %v4010
  %4078 = vst.msk [vmem:[#allocation3 + $0x4] sm:$0xf] %vm4076, %v4011
  %4079 = vst.msk [vmem:[#allocation3 + $0x8] sm:$0xf] %vm4076, %v4012
  %4080 = vst.msk [vmem:[#allocation3 + $0xc] sm:$0xf] %vm4076, %v4013
  %4081 = vst.msk [vmem:[#allocation3 + $0x10] sm:$0xf] %vm4076, %v4014
  %4082 = vst.msk [vmem:[#allocation3 + $0x14] sm:$0xf] %vm4076, %v4015
  %4083 = vst.msk [vmem:[#allocation3 + $0x18] sm:$0xf] %vm4076, %v4016
  %4084 = vst.msk [vmem:[#allocation3 + $0x1c] sm:$0xf] %vm4076, %v4017
  %4085 = vst.msk [vmem:[#allocation3 + $0x20] sm:$0xf] %vm4076, %v4018
  %4086 = vst.msk [vmem:[#allocation3 + $0x24] sm:$0xf] %vm4076, %v4019
  %4087 = vst.msk [vmem:[#allocation3 + $0x28] sm:$0xf] %vm4076, %v4020
  %4088 = vst.msk [vmem:[#allocation3 + $0x2c] sm:$0xf] %vm4076, %v4021
  %4089 = vst.msk [vmem:[#allocation3 + $0x30] sm:$0xf] %vm4076, %v4022
  %4090 = vst.msk [vmem:[#allocation3 + $0x34] sm:$0xf] %vm4076, %v4023
  %4091 = vst.msk [vmem:[#allocation3 + $0x38] sm:$0xf] %vm4076, %v4024
  %4092 = vst.msk [vmem:[#allocation3 + $0x3c] sm:$0xf] %vm4076, %v4025
  %4093 = vst.msk [vmem:[#allocation3 + $0x40] sm:$0xf] %vm4076, %v4026
  %4094 = vst.msk [vmem:[#allocation3 + $0x44] sm:$0xf] %vm4076, %v4027
  %4095 = vst.msk [vmem:[#allocation3 + $0x48] sm:$0xf] %vm4076, %v4028
  %4096 = vst.msk [vmem:[#allocation3 + $0x4c] sm:$0xf] %vm4076, %v4029
  %4097 = vst.msk [vmem:[#allocation3 + $0x50] sm:$0xf] %vm4076, %v4030
  %4098 = vst.msk [vmem:[#allocation3 + $0x54] sm:$0xf] %vm4076, %v4031
  %4099 = vst.msk [vmem:[#allocation3 + $0x58] sm:$0xf] %vm4076, %v4032
  %4100 = vst.msk [vmem:[#allocation3 + $0x5c] sm:$0xf] %vm4076, %v4033
  %4101 = vst.msk [vmem:[#allocation3 + $0x60] sm:$0xf] %vm4076, %v4034
  %4102 = vst.msk [vmem:[#allocation3 + $0x64] sm:$0xf] %vm4076, %v4035
  %4103 = vst.msk [vmem:[#allocation3 + $0x68] sm:$0xf] %vm4076, %v4036
  %4104 = vst.msk [vmem:[#allocation3 + $0x6c] sm:$0xf] %vm4076, %v4037
  %4105 = vst.msk [vmem:[#allocation3 + $0x70] sm:$0xf] %vm4076, %v4038
  %4106 = vst.msk [vmem:[#allocation3 + $0x74] sm:$0xf] %vm4076, %v4039
  %4107 = vst.msk [vmem:[#allocation3 + $0x78] sm:$0xf] %vm4076, %v4040
  %4108 = vst.msk [vmem:[#allocation3 + $0x7c] sm:$0xf] %vm4076, %v4041
  %4109 = vst.msk [vmem:[#allocation3 + $0x80] sm:$0xf] %vm4076, %v4042
  %v4110 = vld [vmem:[#allocation3] sm:$0xf]
  %v4111 = vld [vmem:[#allocation3 + $0x4] sm:$0xf]
  %v4112 = vld [vmem:[#allocation3 + $0x8] sm:$0xf]
  %v4113 = vld [vmem:[#allocation3 + $0xc] sm:$0xf]
  %v4114 = vld [vmem:[#allocation3 + $0x10] sm:$0xf]
  %v4115 = vld [vmem:[#allocation3 + $0x14] sm:$0xf]
  %v4116 = vld [vmem:[#allocation3 + $0x18] sm:$0xf]
  %v4117 = vld [vmem:[#allocation3 + $0x1c] sm:$0xf]
  %v4118 = vld [vmem:[#allocation3 + $0x20] sm:$0xf]
  %v4119 = vld [vmem:[#allocation3 + $0x24] sm:$0xf]
  %v4120 = vld [vmem:[#allocation3 + $0x28] sm:$0xf]
  %v4121 = vld [vmem:[#allocation3 + $0x2c] sm:$0xf]
  %v4122 = vld [vmem:[#allocation3 + $0x30] sm:$0xf]
  %v4123 = vld [vmem:[#allocation3 + $0x34] sm:$0xf]
  %v4124 = vld [vmem:[#allocation3 + $0x38] sm:$0xf]
  %v4125 = vld [vmem:[#allocation3 + $0x3c] sm:$0xf]
  %v4126 = vld [vmem:[#allocation3 + $0x40] sm:$0xf]
  %v4127 = vld [vmem:[#allocation3 + $0x44] sm:$0xf]
  %v4128 = vld [vmem:[#allocation3 + $0x48] sm:$0xf]
  %v4129 = vld [vmem:[#allocation3 + $0x4c] sm:$0xf]
  %v4130 = vld [vmem:[#allocation3 + $0x50] sm:$0xf]
  %v4131 = vld [vmem:[#allocation3 + $0x54] sm:$0xf]
  %v4132 = vld [vmem:[#allocation3 + $0x58] sm:$0xf]
  %v4133 = vld [vmem:[#allocation3 + $0x5c] sm:$0xf]
  %v4134 = vld [vmem:[#allocation3 + $0x60] sm:$0xf]
  %v4135 = vld [vmem:[#allocation3 + $0x64] sm:$0xf]
  %v4136 = vld [vmem:[#allocation3 + $0x68] sm:$0xf]
  %v4137 = vld [vmem:[#allocation3 + $0x6c] sm:$0xf]
  %v4138 = vld [vmem:[#allocation3 + $0x70] sm:$0xf]
  %v4139 = vld [vmem:[#allocation3 + $0x74] sm:$0xf]
  %v4140 = vld [vmem:[#allocation3 + $0x78] sm:$0xf]
  %v4141 = vld [vmem:[#allocation3 + $0x7c] sm:$0xf]
  %v4142 = vld [vmem:[#allocation3 + $0x80] sm:$0xf]
  %v4143 = vld [vmem:[%s4] sm:$0xf]
  %v4144 = vld [vmem:[%s4 + $0x4] sm:$0xf]
  %v4145 = vld [vmem:[%s4 + $0x8] sm:$0xf]
  %v4146 = vld [vmem:[%s4 + $0xc] sm:$0xf]
  %v4147 = vld [vmem:[%s4 + $0x10] sm:$0xf]
  %v4148 = vld [vmem:[%s4 + $0x14] sm:$0xf]
  %v4149 = vld [vmem:[%s4 + $0x18] sm:$0xf]
  %v4150 = vld [vmem:[%s4 + $0x1c] sm:$0xf]
  %v4151 = vld [vmem:[%s4 + $0x20] sm:$0xf]
  %v4152 = vld [vmem:[%s4 + $0x24] sm:$0xf]
  %v4153 = vld [vmem:[%s4 + $0x28] sm:$0xf]
  %v4154 = vld [vmem:[%s4 + $0x2c] sm:$0xf]
  %v4155 = vld [vmem:[%s4 + $0x30] sm:$0xf]
  %v4156 = vld [vmem:[%s4 + $0x34] sm:$0xf]
  %v4157 = vld [vmem:[%s4 + $0x38] sm:$0xf]
  %v4158 = vld [vmem:[%s4 + $0x3c] sm:$0xf]
  %v4192 = vunpack.c.l.b16 %v4110
  %v4193 = vunpack.c.l.b16 %v4111
  %v4194 = vunpack.c.l.b16 %v4112
  %v4195 = vunpack.c.l.b16 %v4113
  %v4196 = vunpack.c.l.b16 %v4114
  %v4197 = vunpack.c.l.b16 %v4115
  %v4198 = vunpack.c.l.b16 %v4116
  %v4199 = vunpack.c.l.b16 %v4117
  %v4200 = vunpack.c.l.b16 %v4118
  %v4201 = vunpack.c.l.b16 %v4119
  %v4202 = vunpack.c.l.b16 %v4120
  %v4203 = vunpack.c.l.b16 %v4121
  %v4204 = vunpack.c.l.b16 %v4122
  %v4205 = vunpack.c.l.b16 %v4123
  %v4206 = vunpack.c.l.b16 %v4124
  %v4207 = vunpack.c.l.b16 %v4125
  %v4208 = vunpack.c.l.b16 %v4126
  %v4209 = vunpack.c.l.b16 %v4127
  %v4210 = vunpack.c.l.b16 %v4128
  %v4211 = vunpack.c.l.b16 %v4129
  %v4212 = vunpack.c.l.b16 %v4130
  %v4213 = vunpack.c.l.b16 %v4131
  %v4214 = vunpack.c.l.b16 %v4132
  %v4215 = vunpack.c.l.b16 %v4133
  %v4216 = vunpack.c.l.b16 %v4134
  %v4217 = vunpack.c.l.b16 %v4135
  %v4218 = vunpack.c.l.b16 %v4136
  %v4219 = vunpack.c.l.b16 %v4137
  %v4220 = vunpack.c.l.b16 %v4138
  %v4221 = vunpack.c.l.b16 %v4139
  %v4222 = vunpack.c.l.b16 %v4140
  %v4223 = vunpack.c.l.b16 %v4141
  %v4224 = vunpack.c.l.b16 %v4142
  %v4225 = vpack.c.b16 %v4193, %v4192
  %v4226 = vpack.c.b16 %v4195, %v4194
  %v4227 = vpack.c.b16 %v4197, %v4196
  %v4228 = vpack.c.b16 %v4199, %v4198
  %v4229 = vpack.c.b16 %v4201, %v4200
  %v4230 = vpack.c.b16 %v4203, %v4202
  %v4231 = vpack.c.b16 %v4205, %v4204
  %v4232 = vpack.c.b16 %v4207, %v4206
  %v4233 = vpack.c.b16 %v4209, %v4208
  %v4234 = vpack.c.b16 %v4211, %v4210
  %v4235 = vpack.c.b16 %v4213, %v4212
  %v4236 = vpack.c.b16 %v4215, %v4214
  %v4237 = vpack.c.b16 %v4217, %v4216
  %v4238 = vpack.c.b16 %v4219, %v4218
  %v4239 = vpack.c.b16 %v4221, %v4220
  %v4240 = vpack.c.b16 %v4223, %v4222
  %v4241 = vpack.c.b16 %v4224, %v4224
  %v4275 = vunpack.c.l.b16 %v4143
  %v4276 = vunpack.c.l.b16 %v4144
  %v4277 = vunpack.c.l.b16 %v4145
  %v4278 = vunpack.c.l.b16 %v4146
  %v4279 = vunpack.c.l.b16 %v4147
  %v4280 = vunpack.c.l.b16 %v4148
  %v4281 = vunpack.c.l.b16 %v4149
  %v4282 = vunpack.c.l.b16 %v4150
  %v4283 = vunpack.c.l.b16 %v4151
  %v4284 = vunpack.c.l.b16 %v4152
  %v4285 = vunpack.c.l.b16 %v4153
  %v4286 = vunpack.c.l.b16 %v4154
  %v4287 = vunpack.c.l.b16 %v4155
  %v4288 = vunpack.c.l.b16 %v4156
  %v4289 = vunpack.c.l.b16 %v4157
  %v4290 = vunpack.c.l.b16 %v4158
  %v4291 = vpack.c.b16 %v4276, %v4275
  %v4292 = vpack.c.b16 %v4278, %v4277
  %v4293 = vpack.c.b16 %v4280, %v4279
  %v4294 = vpack.c.b16 %v4282, %v4281
  %v4295 = vpack.c.b16 %v4284, %v4283
  %v4296 = vpack.c.b16 %v4286, %v4285
  %v4297 = vpack.c.b16 %v4288, %v4287
  %v4298 = vpack.c.b16 %v4290, %v4289
  %4307 = vmatprep.subr.bf16.mxu0 0
  %4308 = vmatpush1.bf16.msra.mxu0 %v4291
  %4309 = vmatprep.subr.bf16.mxu0 0
  %4310 = vmatpush1.bf16.msra.mxu0 %v4292
  %4311 = vmatprep.subr.bf16.mxu0 0
  %4312 = vmatpush1.bf16.msra.mxu0 %v4293
  %4313 = vmatprep.subr.bf16.mxu0 0
  %4314 = vmatpush1.bf16.msra.mxu0 %v4294
  %4315 = vmatprep.subr.bf16.mxu0 0
  %4316 = vmatpush1.bf16.msra.mxu0 %v4295
  %4317 = vmatprep.subr.bf16.mxu0 0
  %4318 = vmatpush1.bf16.msra.mxu0 %v4296
  %4319 = vmatprep.subr.bf16.mxu0 0
  %4320 = vmatpush1.bf16.msra.mxu0 %v4297
  %4321 = vmatprep.subr.bf16.mxu0 0
  %4322 = vmatpush1.bf16.msra.mxu0 %v4298
  %4323 = vmatprep.subr.bf16.mxu0 0
  %4324 = vmatpush1.bf16.msra.mxu0 0
  %4325 = vmatprep.subr.bf16.mxu0 0
  %4326 = vmatpush1.bf16.msra.mxu0 0
  %4327 = vmatprep.subr.bf16.mxu0 0
  %4328 = vmatpush1.bf16.msra.mxu0 0
  %4329 = vmatprep.subr.bf16.mxu0 0
  %4330 = vmatpush1.bf16.msra.mxu0 0
  %4331 = vmatprep.subr.bf16.mxu0 0
  %4332 = vmatpush1.bf16.msra.mxu0 0
  %4333 = vmatprep.subr.bf16.mxu0 0
  %4334 = vmatpush1.bf16.msra.mxu0 0
  %4335 = vmatprep.subr.bf16.mxu0 0
  %4336 = vmatpush1.bf16.msra.mxu0 0
  %4337 = vmatprep.subr.bf16.mxu0 0
  %4338 = vmatpush1.bf16.msra.mxu0 0
  %4339 = vmatprep.mubr.bf16.mxu0 0
  %4340 = vmatmul.mubr.bf16.gmra.mrb[0].mxu0 %v4225
  %v4341 = vpop.f32.mrb[0].mxu0
  %v4342 = vadd.f32 0.0, %v4341
  %v4343 = vpop.f32.mrb[0].mxu0
  %v4344 = vpop.f32.mrb[0].mxu0
  %v4345 = vadd.f32 0.0, %v4344
  %v4346 = vpop.f32.mrb[0].mxu0
  %4347 = vmatprep.mubr.bf16.mxu0 0
  %4348 = vmatmul.mubr.bf16.gmra.mrb[0].mxu0 %v4226
  %v4349 = vpop.f32.mrb[0].mxu0
  %v4350 = vadd.f32 0.0, %v4349
  %v4351 = vpop.f32.mrb[0].mxu0
  %v4352 = vpop.f32.mrb[0].mxu0
  %v4353 = vadd.f32 0.0, %v4352
  %v4354 = vpop.f32.mrb[0].mxu0
  %4355 = vmatprep.mubr.bf16.mxu0 0
  %4356 = vmatmul.mubr.bf16.gmra.mrb[0].mxu0 %v4227
  %v4357 = vpop.f32.mrb[0].mxu0
  %v4358 = vadd.f32 0.0, %v4357
  %v4359 = vpop.f32.mrb[0].mxu0
  %v4360 = vpop.f32.mrb[0].mxu0
  %v4361 = vadd.f32 0.0, %v4360
  %v4362 = vpop.f32.mrb[0].mxu0
  %4363 = vmatprep.mubr.bf16.mxu0 0
  %4364 = vmatmul.mubr.bf16.gmra.mrb[0].mxu0 %v4228
  %v4365 = vpop.f32.mrb[0].mxu0
  %v4366 = vadd.f32 0.0, %v4365
  %v4367 = vpop.f32.mrb[0].mxu0
  %v4368 = vpop.f32.mrb[0].mxu0
  %v4369 = vadd.f32 0.0, %v4368
  %v4370 = vpop.f32.mrb[0].mxu0
  %4371 = vmatprep.mubr.bf16.mxu0 0
  %4372 = vmatmul.mubr.bf16.gmra.mrb[0].mxu0 %v4229
  %v4373 = vpop.f32.mrb[0].mxu0
  %v4374 = vadd.f32 0.0, %v4373
  %v4375 = vpop.f32.mrb[0].mxu0
  %v4376 = vpop.f32.mrb[0].mxu0
  %v4377 = vadd.f32 0.0, %v4376
  %v4378 = vpop.f32.mrb[0].mxu0
  %4379 = vmatprep.mubr.bf16.mxu0 0
  %4380 = vmatmul.mubr.bf16.gmra.mrb[0].mxu0 %v4230
  %v4381 = vpop.f32.mrb[0].mxu0
  %v4382 = vadd.f32 0.0, %v4381
  %v4383 = vpop.f32.mrb[0].mxu0
  %v4384 = vpop.f32.mrb[0].mxu0
  %v4385 = vadd.f32 0.0, %v4384
  %v4386 = vpop.f32.mrb[0].mxu0
  %4387 = vmatprep.mubr.bf16.mxu0 0
  %4388 = vmatmul.mubr.bf16.gmra.mrb[0].mxu0 %v4231
  %v4389 = vpop.f32.mrb[0].mxu0
  %v4390 = vadd.f32 0.0, %v4389
  %v4391 = vpop.f32.mrb[0].mxu0
  %v4392 = vpop.f32.mrb[0].mxu0
  %v4393 = vadd.f32 0.0, %v4392
  %v4394 = vpop.f32.mrb[0].mxu0
  %4395 = vmatprep.mubr.bf16.mxu0 0
  %4396 = vmatmul.mubr.bf16.gmra.mrb[0].mxu0 %v4232
  %v4397 = vpop.f32.mrb[0].mxu0
  %v4398 = vadd.f32 0.0, %v4397
  %v4399 = vpop.f32.mrb[0].mxu0
  %v4400 = vpop.f32.mrb[0].mxu0
  %v4401 = vadd.f32 0.0, %v4400
  %v4402 = vpop.f32.mrb[0].mxu0
  %4403 = vmatprep.mubr.bf16.mxu0 0
  %4404 = vmatmul.mubr.bf16.gmra.mrb[0].mxu0 %v4233
  %v4405 = vpop.f32.mrb[0].mxu0
  %v4406 = vadd.f32 0.0, %v4405
  %v4407 = vpop.f32.mrb[0].mxu0
  %v4408 = vpop.f32.mrb[0].mxu0
  %v4409 = vadd.f32 0.0, %v4408
  %v4410 = vpop.f32.mrb[0].mxu0
  %4411 = vmatprep.mubr.bf16.mxu0 0
  %4412 = vmatmul.mubr.bf16.gmra.mrb[0].mxu0 %v4234
  %v4413 = vpop.f32.mrb[0].mxu0
  %v4414 = vadd.f32 0.0, %v4413
  %v4415 = vpop.f32.mrb[0].mxu0
  %v4416 = vpop.f32.mrb[0].mxu0
  %v4417 = vadd.f32 0.0, %v4416
  %v4418 = vpop.f32.mrb[0].mxu0
  %4419 = vmatprep.mubr.bf16.mxu0 0
  %4420 = vmatmul.mubr.bf16.gmra.mrb[0].mxu0 %v4235
  %v4421 = vpop.f32.mrb[0].mxu0
  %v4422 = vadd.f32 0.0, %v4421
  %v4423 = vpop.f32.mrb[0].mxu0
  %v4424 = vpop.f32.mrb[0].mxu0
  %v4425 = vadd.f32 0.0, %v4424
  %v4426 = vpop.f32.mrb[0].mxu0
  %4427 = vmatprep.mubr.bf16.mxu0 0
  %4428 = vmatmul.mubr.bf16.gmra.mrb[0].mxu0 %v4236
  %v4429 = vpop.f32.mrb[0].mxu0
  %v4430 = vadd.f32 0.0, %v4429
  %v4431 = vpop.f32.mrb[0].mxu0
  %v4432 = vpop.f32.mrb[0].mxu0
  %v4433 = vadd.f32 0.0, %v4432
  %v4434 = vpop.f32.mrb[0].mxu0
  %4435 = vmatprep.mubr.bf16.mxu0 0
  %4436 = vmatmul.mubr.bf16.gmra.mrb[0].mxu0 %v4237
  %v4437 = vpop.f32.mrb[0].mxu0
  %v4438 = vadd.f32 0.0, %v4437
  %v4439 = vpop.f32.mrb[0].mxu0
  %v4440 = vpop.f32.mrb[0].mxu0
  %v4441 = vadd.f32 0.0, %v4440
  %v4442 = vpop.f32.mrb[0].mxu0
  %4443 = vmatprep.mubr.bf16.mxu0 0
  %4444 = vmatmul.mubr.bf16.gmra.mrb[0].mxu0 %v4238
  %v4445 = vpop.f32.mrb[0].mxu0
  %v4446 = vadd.f32 0.0, %v4445
  %v4447 = vpop.f32.mrb[0].mxu0
  %v4448 = vpop.f32.mrb[0].mxu0
  %v4449 = vadd.f32 0.0, %v4448
  %v4450 = vpop.f32.mrb[0].mxu0
  %4451 = vmatprep.mubr.bf16.mxu0 0
  %4452 = vmatmul.mubr.bf16.gmra.mrb[0].mxu0 %v4239
  %v4453 = vpop.f32.mrb[0].mxu0
  %v4454 = vadd.f32 0.0, %v4453
  %v4455 = vpop.f32.mrb[0].mxu0
  %v4456 = vpop.f32.mrb[0].mxu0
  %v4457 = vadd.f32 0.0, %v4456
  %v4458 = vpop.f32.mrb[0].mxu0
  %4459 = vmatprep.mubr.bf16.mxu0 0
  %4460 = vmatmul.mubr.bf16.gmra.mrb[0].mxu0 %v4240
  %v4461 = vpop.f32.mrb[0].mxu0
  %v4462 = vadd.f32 0.0, %v4461
  %v4463 = vpop.f32.mrb[0].mxu0
  %v4464 = vpop.f32.mrb[0].mxu0
  %v4465 = vadd.f32 0.0, %v4464
  %v4466 = vpop.f32.mrb[0].mxu0
  %4467 = vmatprep.mubr.bf16.mxu0 0
  %4468 = vmatmul.mubr.bf16.gmra.mrb[0].mxu0 %v4241
  %v4469 = vpop.f32.mrb[0].mxu0
  %v4470 = vadd.f32 0.0, %v4469
  %v4471 = vpop.f32.mrb[0].mxu0
  %v4472 = vpop.f32.mrb[0].mxu0
  %v4473 = vpop.f32.mrb[0].mxu0
  %4474 = vdwg.mxu0
  %v4475 = vld [vmem:[%s7] sm:$0xff]
  %v4476 = vld [vmem:[%s7 + $0x8] sm:$0xff]
  %v4477 = vld [vmem:[%s7 + $0x10] sm:$0xff]
  %v4478 = vld [vmem:[%s7 + $0x18] sm:$0xff]
  %v4479 = vld [vmem:[%s7 + $0x20] sm:$0xff]
  %v4480 = vld [vmem:[%s7 + $0x28] sm:$0xff]
  %v4481 = vld [vmem:[%s7 + $0x30] sm:$0xff]
  %v4482 = vld [vmem:[%s7 + $0x38] sm:$0xff]
  %v4483 = vld [vmem:[%s7 + $0x40] sm:$0xff]
  %v4484 = vld [vmem:[%s7 + $0x48] sm:$0xff]
  %v4485 = vld [vmem:[%s7 + $0x50] sm:$0xff]
  %v4486 = vld [vmem:[%s7 + $0x58] sm:$0xff]
  %v4487 = vld [vmem:[%s7 + $0x60] sm:$0xff]
  %v4488 = vld [vmem:[%s7 + $0x68] sm:$0xff]
  %v4489 = vld [vmem:[%s7 + $0x70] sm:$0xff]
  %v4490 = vld [vmem:[%s7 + $0x78] sm:$0xff]
  %v4491 = vld [vmem:[%s7 + $0x80] sm:$0xff]
  %v4492 = vld [vmem:[%s7 + $0x88] sm:$0xff]
  %v4493 = vld [vmem:[%s7 + $0x90] sm:$0xff]
  %v4494 = vld [vmem:[%s7 + $0x98] sm:$0xff]
  %v4495 = vld [vmem:[%s7 + $0xa0] sm:$0xff]
  %v4496 = vld [vmem:[%s7 + $0xa8] sm:$0xff]
  %v4497 = vld [vmem:[%s7 + $0xb0] sm:$0xff]
  %v4498 = vld [vmem:[%s7 + $0xb8] sm:$0xff]
  %v4499 = vld [vmem:[%s7 + $0xc0] sm:$0xff]
  %v4500 = vld [vmem:[%s7 + $0xc8] sm:$0xff]
  %v4501 = vld [vmem:[%s7 + $0xd0] sm:$0xff]
  %v4502 = vld [vmem:[%s7 + $0xd8] sm:$0xff]
  %v4503 = vld [vmem:[%s7 + $0xe0] sm:$0xff]
  %v4504 = vld [vmem:[%s7 + $0xe8] sm:$0xff]
  %v4505 = vld [vmem:[%s7 + $0xf0] sm:$0xff]
  %v4506 = vld [vmem:[%s7 + $0xf8] sm:$0xff]
  %v4507 = vld [vmem:[%s7 + $0x100] sm:$0xff]
  %4509 = vset.pattern.permute.xlu0 0
  %4510 = vperm.xlu0 %4509, %v4475
  %v4511 = vpop.permute.xlu0 %4510
  %4514 = vset.pattern.permute.xlu0 0
  %4515 = vperm.xlu0 %4514, %v4476
  %v4516 = vpop.permute.xlu0 %4515
  %4519 = vset.pattern.permute.xlu0 0
  %4520 = vperm.xlu0 %4519, %v4477
  %v4521 = vpop.permute.xlu0 %4520
  %4524 = vset.pattern.permute.xlu0 0
  %4525 = vperm.xlu0 %4524, %v4478
  %v4526 = vpop.permute.xlu0 %4525
  %4529 = vset.pattern.permute.xlu0 0
  %4530 = vperm.xlu0 %4529, %v4479
  %v4531 = vpop.permute.xlu0 %4530
  %4534 = vset.pattern.permute.xlu0 0
  %4535 = vperm.xlu0 %4534, %v4480
  %v4536 = vpop.permute.xlu0 %4535
  %4539 = vset.pattern.permute.xlu0 0
  %4540 = vperm.xlu0 %4539, %v4481
  %v4541 = vpop.permute.xlu0 %4540
  %4544 = vset.pattern.permute.xlu0 0
  %4545 = vperm.xlu0 %4544, %v4482
  %v4546 = vpop.permute.xlu0 %4545
  %4549 = vset.pattern.permute.xlu0 0
  %4550 = vperm.xlu0 %4549, %v4483
  %v4551 = vpop.permute.xlu0 %4550
  %4554 = vset.pattern.permute.xlu0 0
  %4555 = vperm.xlu0 %4554, %v4484
  %v4556 = vpop.permute.xlu0 %4555
  %4559 = vset.pattern.permute.xlu0 0
  %4560 = vperm.xlu0 %4559, %v4485
  %v4561 = vpop.permute.xlu0 %4560
  %4564 = vset.pattern.permute.xlu0 0
  %4565 = vperm.xlu0 %4564, %v4486
  %v4566 = vpop.permute.xlu0 %4565
  %4569 = vset.pattern.permute.xlu0 0
  %4570 = vperm.xlu0 %4569, %v4487
  %v4571 = vpop.permute.xlu0 %4570
  %4574 = vset.pattern.permute.xlu0 0
  %4575 = vperm.xlu0 %4574, %v4488
  %v4576 = vpop.permute.xlu0 %4575
  %4579 = vset.pattern.permute.xlu0 0
  %4580 = vperm.xlu0 %4579, %v4489
  %v4581 = vpop.permute.xlu0 %4580
  %4584 = vset.pattern.permute.xlu0 0
  %4585 = vperm.xlu0 %4584, %v4490
  %v4586 = vpop.permute.xlu0 %4585
  %4589 = vset.pattern.permute.xlu0 0
  %4590 = vperm.xlu0 %4589, %v4491
  %v4591 = vpop.permute.xlu0 %4590
  %4594 = vset.pattern.permute.xlu0 0
  %4595 = vperm.xlu0 %4594, %v4492
  %v4596 = vpop.permute.xlu0 %4595
  %4599 = vset.pattern.permute.xlu0 0
  %4600 = vperm.xlu0 %4599, %v4493
  %v4601 = vpop.permute.xlu0 %4600
  %4604 = vset.pattern.permute.xlu0 0
  %4605 = vperm.xlu0 %4604, %v4494
  %v4606 = vpop.permute.xlu0 %4605
  %4609 = vset.pattern.permute.xlu0 0
  %4610 = vperm.xlu0 %4609, %v4495
  %v4611 = vpop.permute.xlu0 %4610
  %4614 = vset.pattern.permute.xlu0 0
  %4615 = vperm.xlu0 %4614, %v4496
  %v4616 = vpop.permute.xlu0 %4615
  %4619 = vset.pattern.permute.xlu0 0
  %4620 = vperm.xlu0 %4619, %v4497
  %v4621 = vpop.permute.xlu0 %4620
  %4624 = vset.pattern.permute.xlu0 0
  %4625 = vperm.xlu0 %4624, %v4498
  %v4626 = vpop.permute.xlu0 %4625
  %4629 = vset.pattern.permute.xlu0 0
  %4630 = vperm.xlu0 %4629, %v4499
  %v4631 = vpop.permute.xlu0 %4630
  %4634 = vset.pattern.permute.xlu0 0
  %4635 = vperm.xlu0 %4634, %v4500
  %v4636 = vpop.permute.xlu0 %4635
  %4639 = vset.pattern.permute.xlu0 0
  %4640 = vperm.xlu0 %4639, %v4501
  %v4641 = vpop.permute.xlu0 %4640
  %4644 = vset.pattern.permute.xlu0 0
  %4645 = vperm.xlu0 %4644, %v4502
  %v4646 = vpop.permute.xlu0 %4645
  %4649 = vset.pattern.permute.xlu0 0
  %4650 = vperm.xlu0 %4649, %v4503
  %v4651 = vpop.permute.xlu0 %4650
  %4654 = vset.pattern.permute.xlu0 0
  %4655 = vperm.xlu0 %4654, %v4504
  %v4656 = vpop.permute.xlu0 %4655
  %4659 = vset.pattern.permute.xlu0 0
  %4660 = vperm.xlu0 %4659, %v4505
  %v4661 = vpop.permute.xlu0 %4660
  %4664 = vset.pattern.permute.xlu0 0
  %4665 = vperm.xlu0 %4664, %v4506
  %v4666 = vpop.permute.xlu0 %4665
  %4669 = vset.pattern.permute.xlu0 0
  %4670 = vperm.xlu0 %4669, %v4507
  %v4671 = vpop.permute.xlu0 %4670
  %v4673 = vmul.f32 %v4342, %v4511
  %v4674 = vmul.f32 %v4345, %v4516
  %v4675 = vmul.f32 %v4350, %v4521
  %v4676 = vmul.f32 %v4353, %v4526
  %v4677 = vmul.f32 %v4358, %v4531
  %v4678 = vmul.f32 %v4361, %v4536
  %v4679 = vmul.f32 %v4366, %v4541
  %v4680 = vmul.f32 %v4369, %v4546
  %v4681 = vmul.f32 %v4374, %v4551
  %v4682 = vmul.f32 %v4377, %v4556
  %v4683 = vmul.f32 %v4382, %v4561
  %v4684 = vmul.f32 %v4385, %v4566
  %v4685 = vmul.f32 %v4390, %v4571
  %v4686 = vmul.f32 %v4393, %v4576
  %v4687 = vmul.f32 %v4398, %v4581
  %v4688 = vmul.f32 %v4401, %v4586
  %v4689 = vmul.f32 %v4406, %v4591
  %v4690 = vmul.f32 %v4409, %v4596
  %v4691 = vmul.f32 %v4414, %v4601
  %v4692 = vmul.f32 %v4417, %v4606
  %v4693 = vmul.f32 %v4422, %v4611
  %v4694 = vmul.f32 %v4425, %v4616
  %v4695 = vmul.f32 %v4430, %v4621
  %v4696 = vmul.f32 %v4433, %v4626
  %v4697 = vmul.f32 %v4438, %v4631
  %v4698 = vmul.f32 %v4441, %v4636
  %v4699 = vmul.f32 %v4446, %v4641
  %v4700 = vmul.f32 %v4449, %v4646
  %v4701 = vmul.f32 %v4454, %v4651
  %v4702 = vmul.f32 %v4457, %v4656
  %v4703 = vmul.f32 %v4462, %v4661
  %v4704 = vmul.f32 %v4465, %v4666
  %v4705 = vmul.f32 %v4470, %v4671
  %v4706 = vadd.f32 %v4673, %v4674
  %v4707 = vadd.f32 %v4706, %v4675
  %v4708 = vadd.f32 %v4707, %v4676
  %v4709 = vadd.f32 %v4708, %v4677
  %v4710 = vadd.f32 %v4709, %v4678
  %v4711 = vadd.f32 %v4710, %v4679
  %v4712 = vadd.f32 %v4711, %v4680
  %v4713 = vadd.f32 %v4712, %v4681
  %v4714 = vadd.f32 %v4713, %v4682
  %v4715 = vadd.f32 %v4714, %v4683
  %v4716 = vadd.f32 %v4715, %v4684
  %v4717 = vadd.f32 %v4716, %v4685
  %v4718 = vadd.f32 %v4717, %v4686
  %v4719 = vadd.f32 %v4718, %v4687
  %v4720 = vadd.f32 %v4719, %v4688
  %v4721 = vadd.f32 %v4720, %v4689
  %v4722 = vadd.f32 %v4721, %v4690
  %v4723 = vadd.f32 %v4722, %v4691
  %v4724 = vadd.f32 %v4723, %v4692
  %v4725 = vadd.f32 %v4724, %v4693
  %v4726 = vadd.f32 %v4725, %v4694
  %v4727 = vadd.f32 %v4726, %v4695
  %v4728 = vadd.f32 %v4727, %v4696
  %v4729 = vadd.f32 %v4728, %v4697
  %v4730 = vadd.f32 %v4729, %v4698
  %v4731 = vadd.f32 %v4730, %v4699
  %v4732 = vadd.f32 %v4731, %v4700
  %v4733 = vadd.f32 %v4732, %v4701
  %v4734 = vadd.f32 %v4733, %v4702
  %v4735 = vadd.f32 %v4734, %v4703
  %v4736 = vadd.f32 %v4735, %v4704
  %v4737 = vadd.f32 %v4736, %v4705
  %v4738 = vrot.slane %v4737, 4
  %v4739 = vadd.f32 %v4737, %v4738
  %v4740 = vrot.slane %v4739, 2
  %v4741 = vadd.f32 %v4739, %v4740
  %v4742 = vrot.slane %v4741, 1
  %v4743 = vadd.f32 %v4741, %v4742
  %v4744 = vrcp.pop 98.0
  %v4745 = vmul.f32 %v4743, %v4744
  %v4746 = vsub.f32 %v4342, %v4745
  %v4747 = vsub.f32 %v4345, %v4745
  %v4748 = vsub.f32 %v4350, %v4745
  %v4749 = vsub.f32 %v4353, %v4745
  %v4750 = vsub.f32 %v4358, %v4745
  %v4751 = vsub.f32 %v4361, %v4745
  %v4752 = vsub.f32 %v4366, %v4745
  %v4753 = vsub.f32 %v4369, %v4745
  %v4754 = vsub.f32 %v4374, %v4745
  %v4755 = vsub.f32 %v4377, %v4745
  %v4756 = vsub.f32 %v4382, %v4745
  %v4757 = vsub.f32 %v4385, %v4745
  %v4758 = vsub.f32 %v4390, %v4745
  %v4759 = vsub.f32 %v4393, %v4745
  %v4760 = vsub.f32 %v4398, %v4745
  %v4761 = vsub.f32 %v4401, %v4745
  %v4762 = vsub.f32 %v4406, %v4745
  %v4763 = vsub.f32 %v4409, %v4745
  %v4764 = vsub.f32 %v4414, %v4745
  %v4765 = vsub.f32 %v4417, %v4745
  %v4766 = vsub.f32 %v4422, %v4745
  %v4767 = vsub.f32 %v4425, %v4745
  %v4768 = vsub.f32 %v4430, %v4745
  %v4769 = vsub.f32 %v4433, %v4745
  %v4770 = vsub.f32 %v4438, %v4745
  %v4771 = vsub.f32 %v4441, %v4745
  %v4772 = vsub.f32 %v4446, %v4745
  %v4773 = vsub.f32 %v4449, %v4745
  %v4774 = vsub.f32 %v4454, %v4745
  %v4775 = vsub.f32 %v4457, %v4745
  %v4776 = vsub.f32 %v4462, %v4745
  %v4777 = vsub.f32 %v4465, %v4745
  %v4778 = vsub.f32 %v4470, %v4745
  %v4779 = vmul.f32 %v4746, %v4746
  %v4780 = vmul.f32 %v4747, %v4747
  %v4781 = vmul.f32 %v4748, %v4748
  %v4782 = vmul.f32 %v4749, %v4749
  %v4783 = vmul.f32 %v4750, %v4750
  %v4784 = vmul.f32 %v4751, %v4751
  %v4785 = vmul.f32 %v4752, %v4752
  %v4786 = vmul.f32 %v4753, %v4753
  %v4787 = vmul.f32 %v4754, %v4754
  %v4788 = vmul.f32 %v4755, %v4755
  %v4789 = vmul.f32 %v4756, %v4756
  %v4790 = vmul.f32 %v4757, %v4757
  %v4791 = vmul.f32 %v4758, %v4758
  %v4792 = vmul.f32 %v4759, %v4759
  %v4793 = vmul.f32 %v4760, %v4760
  %v4794 = vmul.f32 %v4761, %v4761
  %v4795 = vmul.f32 %v4762, %v4762
  %v4796 = vmul.f32 %v4763, %v4763
  %v4797 = vmul.f32 %v4764, %v4764
  %v4798 = vmul.f32 %v4765, %v4765
  %v4799 = vmul.f32 %v4766, %v4766
  %v4800 = vmul.f32 %v4767, %v4767
  %v4801 = vmul.f32 %v4768, %v4768
  %v4802 = vmul.f32 %v4769, %v4769
  %v4803 = vmul.f32 %v4770, %v4770
  %v4804 = vmul.f32 %v4771, %v4771
  %v4805 = vmul.f32 %v4772, %v4772
  %v4806 = vmul.f32 %v4773, %v4773
  %v4807 = vmul.f32 %v4774, %v4774
  %v4808 = vmul.f32 %v4775, %v4775
  %v4809 = vmul.f32 %v4776, %v4776
  %v4810 = vmul.f32 %v4777, %v4777
  %v4811 = vmul.f32 %v4778, %v4778
  %v4812 = vmul.f32 %v4779, %v4511
  %v4813 = vmul.f32 %v4780, %v4516
  %v4814 = vmul.f32 %v4781, %v4521
  %v4815 = vmul.f32 %v4782, %v4526
  %v4816 = vmul.f32 %v4783, %v4531
  %v4817 = vmul.f32 %v4784, %v4536
  %v4818 = vmul.f32 %v4785, %v4541
  %v4819 = vmul.f32 %v4786, %v4546
  %v4820 = vmul.f32 %v4787, %v4551
  %v4821 = vmul.f32 %v4788, %v4556
  %v4822 = vmul.f32 %v4789, %v4561
  %v4823 = vmul.f32 %v4790, %v4566
  %v4824 = vmul.f32 %v4791, %v4571
  %v4825 = vmul.f32 %v4792, %v4576
  %v4826 = vmul.f32 %v4793, %v4581
  %v4827 = vmul.f32 %v4794, %v4586
  %v4828 = vmul.f32 %v4795, %v4591
  %v4829 = vmul.f32 %v4796, %v4596
  %v4830 = vmul.f32 %v4797, %v4601
  %v4831 = vmul.f32 %v4798, %v4606
  %v4832 = vmul.f32 %v4799, %v4611
  %v4833 = vmul.f32 %v4800, %v4616
  %v4834 = vmul.f32 %v4801, %v4621
  %v4835 = vmul.f32 %v4802, %v4626
  %v4836 = vmul.f32 %v4803, %v4631
  %v4837 = vmul.f32 %v4804, %v4636
  %v4838 = vmul.f32 %v4805, %v4641
  %v4839 = vmul.f32 %v4806, %v4646
  %v4840 = vmul.f32 %v4807, %v4651
  %v4841 = vmul.f32 %v4808, %v4656
  %v4842 = vmul.f32 %v4809, %v4661
  %v4843 = vmul.f32 %v4810, %v4666
  %v4844 = vmul.f32 %v4811, %v4671
  %v4845 = vadd.f32 %v4812, %v4813
  %v4846 = vadd.f32 %v4845, %v4814
  %v4847 = vadd.f32 %v4846, %v4815
  %v4848 = vadd.f32 %v4847, %v4816
  %v4849 = vadd.f32 %v4848, %v4817
  %v4850 = vadd.f32 %v4849, %v4818
  %v4851 = vadd.f32 %v4850, %v4819
  %v4852 = vadd.f32 %v4851, %v4820
  %v4853 = vadd.f32 %v4852, %v4821
  %v4854 = vadd.f32 %v4853, %v4822
  %v4855 = vadd.f32 %v4854, %v4823
  %v4856 = vadd.f32 %v4855, %v4824
  %v4857 = vadd.f32 %v4856, %v4825
  %v4858 = vadd.f32 %v4857, %v4826
  %v4859 = vadd.f32 %v4858, %v4827
  %v4860 = vadd.f32 %v4859, %v4828
  %v4861 = vadd.f32 %v4860, %v4829
  %v4862 = vadd.f32 %v4861, %v4830
  %v4863 = vadd.f32 %v4862, %v4831
  %v4864 = vadd.f32 %v4863, %v4832
  %v4865 = vadd.f32 %v4864, %v4833
  %v4866 = vadd.f32 %v4865, %v4834
  %v4867 = vadd.f32 %v4866, %v4835
  %v4868 = vadd.f32 %v4867, %v4836
  %v4869 = vadd.f32 %v4868, %v4837
  %v4870 = vadd.f32 %v4869, %v4838
  %v4871 = vadd.f32 %v4870, %v4839
  %v4872 = vadd.f32 %v4871, %v4840
  %v4873 = vadd.f32 %v4872, %v4841
  %v4874 = vadd.f32 %v4873, %v4842
  %v4875 = vadd.f32 %v4874, %v4843
  %v4876 = vadd.f32 %v4875, %v4844
  %v4877 = vrot.slane %v4876, 4
  %v4878 = vadd.f32 %v4876, %v4877
  %v4879 = vrot.slane %v4878, 2
  %v4880 = vadd.f32 %v4878, %v4879
  %v4881 = vrot.slane %v4880, 1
  %v4882 = vadd.f32 %v4880, %v4881
  %v4883 = vmul.f32 %v4882, %v4744
  %v4884 = vadd.f32 %v4883, 1e-05
  %v4885 = vrsqrt.pop %v4884
  %v4886 = vmul.f32 %v4746, %v4885
  %v4887 = vmul.f32 %v4747, %v4885
  %v4888 = vmul.f32 %v4748, %v4885
  %v4889 = vmul.f32 %v4749, %v4885
  %v4890 = vmul.f32 %v4750, %v4885
  %v4891 = vmul.f32 %v4751, %v4885
  %v4892 = vmul.f32 %v4752, %v4885
  %v4893 = vmul.f32 %v4753, %v4885
  %v4894 = vmul.f32 %v4754, %v4885
  %v4895 = vmul.f32 %v4755, %v4885
  %v4896 = vmul.f32 %v4756, %v4885
  %v4897 = vmul.f32 %v4757, %v4885
  %v4898 = vmul.f32 %v4758, %v4885
  %v4899 = vmul.f32 %v4759, %v4885
  %v4900 = vmul.f32 %v4760, %v4885
  %v4901 = vmul.f32 %v4761, %v4885
  %v4902 = vmul.f32 %v4762, %v4885
  %v4903 = vmul.f32 %v4763, %v4885
  %v4904 = vmul.f32 %v4764, %v4885
  %v4905 = vmul.f32 %v4765, %v4885
  %v4906 = vmul.f32 %v4766, %v4885
  %v4907 = vmul.f32 %v4767, %v4885
  %v4908 = vmul.f32 %v4768, %v4885
  %v4909 = vmul.f32 %v4769, %v4885
  %v4910 = vmul.f32 %v4770, %v4885
  %v4911 = vmul.f32 %v4771, %v4885
  %v4912 = vmul.f32 %v4772, %v4885
  %v4913 = vmul.f32 %v4773, %v4885
  %v4914 = vmul.f32 %v4774, %v4885
  %v4915 = vmul.f32 %v4775, %v4885
  %v4916 = vmul.f32 %v4776, %v4885
  %v4917 = vmul.f32 %v4777, %v4885
  %v4918 = vmul.f32 %v4778, %v4885
  %v4919 = vld [vmem:[%s5] sm:$0x1]
  %v4921 = vlaneseq
  %v4922 = vshrl.u32 %v4921, 7
  %v4923 = vsub.s32 0, %v4922
  %v4924 = vrot.slane %v4919, %v4923
  %v4926 = vmul.f32 %v4886, %v4924
  %v4927 = vmul.f32 %v4887, %v4924
  %v4928 = vmul.f32 %v4888, %v4924
  %v4929 = vmul.f32 %v4889, %v4924
  %v4930 = vmul.f32 %v4890, %v4924
  %v4931 = vmul.f32 %v4891, %v4924
  %v4932 = vmul.f32 %v4892, %v4924
  %v4933 = vmul.f32 %v4893, %v4924
  %v4934 = vmul.f32 %v4894, %v4924
  %v4935 = vmul.f32 %v4895, %v4924
  %v4936 = vmul.f32 %v4896, %v4924
  %v4937 = vmul.f32 %v4897, %v4924
  %v4938 = vmul.f32 %v4898, %v4924
  %v4939 = vmul.f32 %v4899, %v4924
  %v4940 = vmul.f32 %v4900, %v4924
  %v4941 = vmul.f32 %v4901, %v4924
  %v4942 = vmul.f32 %v4902, %v4924
  %v4943 = vmul.f32 %v4903, %v4924
  %v4944 = vmul.f32 %v4904, %v4924
  %v4945 = vmul.f32 %v4905, %v4924
  %v4946 = vmul.f32 %v4906, %v4924
  %v4947 = vmul.f32 %v4907, %v4924
  %v4948 = vmul.f32 %v4908, %v4924
  %v4949 = vmul.f32 %v4909, %v4924
  %v4950 = vmul.f32 %v4910, %v4924
  %v4951 = vmul.f32 %v4911, %v4924
  %v4952 = vmul.f32 %v4912, %v4924
  %v4953 = vmul.f32 %v4913, %v4924
  %v4954 = vmul.f32 %v4914, %v4924
  %v4955 = vmul.f32 %v4915, %v4924
  %v4956 = vmul.f32 %v4916, %v4924
  %v4957 = vmul.f32 %v4917, %v4924
  %v4958 = vmul.f32 %v4918, %v4924
  %v4959 = vld [vmem:[%s6] sm:$0x1]
  %v4961 = vlaneseq
  %v4962 = vshrl.u32 %v4961, 7
  %v4963 = vsub.s32 0, %v4962
  %v4964 = vrot.slane %v4959, %v4963
  %v4966 = vadd.f32 %v4926, %v4964
  %v4967 = vadd.f32 %v4927, %v4964
  %v4968 = vadd.f32 %v4928, %v4964
  %v4969 = vadd.f32 %v4929, %v4964
  %v4970 = vadd.f32 %v4930, %v4964
  %v4971 = vadd.f32 %v4931, %v4964
  %v4972 = vadd.f32 %v4932, %v4964
  %v4973 = vadd.f32 %v4933, %v4964
  %v4974 = vadd.f32 %v4934, %v4964
  %v4975 = vadd.f32 %v4935, %v4964
  %v4976 = vadd.f32 %v4936, %v4964
  %v4977 = vadd.f32 %v4937, %v4964
  %v4978 = vadd.f32 %v4938, %v4964
  %v4979 = vadd.f32 %v4939, %v4964
  %v4980 = vadd.f32 %v4940, %v4964
  %v4981 = vadd.f32 %v4941, %v4964
  %v4982 = vadd.f32 %v4942, %v4964
  %v4983 = vadd.f32 %v4943, %v4964
  %v4984 = vadd.f32 %v4944, %v4964
  %v4985 = vadd.f32 %v4945, %v4964
  %v4986 = vadd.f32 %v4946, %v4964
  %v4987 = vadd.f32 %v4947, %v4964
  %v4988 = vadd.f32 %v4948, %v4964
  %v4989 = vadd.f32 %v4949, %v4964
  %v4990 = vadd.f32 %v4950, %v4964
  %v4991 = vadd.f32 %v4951, %v4964
  %v4992 = vadd.f32 %v4952, %v4964
  %v4993 = vadd.f32 %v4953, %v4964
  %v4994 = vadd.f32 %v4954, %v4964
  %v4995 = vadd.f32 %v4955, %v4964
  %v4996 = vadd.f32 %v4956, %v4964
  %v4997 = vadd.f32 %v4957, %v4964
  %v4998 = vadd.f32 %v4958, %v4964
  %vm4999 = vcmp.gt.f32.partialorder %v4966, 0.0
  %vm5000 = vcmp.gt.f32.partialorder %v4967, 0.0
  %vm5001 = vcmp.gt.f32.partialorder %v4968, 0.0
  %vm5002 = vcmp.gt.f32.partialorder %v4969, 0.0
  %vm5003 = vcmp.gt.f32.partialorder %v4970, 0.0
  %vm5004 = vcmp.gt.f32.partialorder %v4971, 0.0
  %vm5005 = vcmp.gt.f32.partialorder %v4972, 0.0
  %vm5006 = vcmp.gt.f32.partialorder %v4973, 0.0
  %vm5007 = vcmp.gt.f32.partialorder %v4974, 0.0
  %vm5008 = vcmp.gt.f32.partialorder %v4975, 0.0
  %vm5009 = vcmp.gt.f32.partialorder %v4976, 0.0
  %vm5010 = vcmp.gt.f32.partialorder %v4977, 0.0
  %vm5011 = vcmp.gt.f32.partialorder %v4978, 0.0
  %vm5012 = vcmp.gt.f32.partialorder %v4979, 0.0
  %vm5013 = vcmp.gt.f32.partialorder %v4980, 0.0
  %vm5014 = vcmp.gt.f32.partialorder %v4981, 0.0
  %vm5015 = vcmp.gt.f32.partialorder %v4982, 0.0
  %vm5016 = vcmp.gt.f32.partialorder %v4983, 0.0
  %vm5017 = vcmp.gt.f32.partialorder %v4984, 0.0
  %vm5018 = vcmp.gt.f32.partialorder %v4985, 0.0
  %vm5019 = vcmp.gt.f32.partialorder %v4986, 0.0
  %vm5020 = vcmp.gt.f32.partialorder %v4987, 0.0
  %vm5021 = vcmp.gt.f32.partialorder %v4988, 0.0
  %vm5022 = vcmp.gt.f32.partialorder %v4989, 0.0
  %vm5023 = vcmp.gt.f32.partialorder %v4990, 0.0
  %vm5024 = vcmp.gt.f32.partialorder %v4991, 0.0
  %vm5025 = vcmp.gt.f32.partialorder %v4992, 0.0
  %vm5026 = vcmp.gt.f32.partialorder %v4993, 0.0
  %vm5027 = vcmp.gt.f32.partialorder %v4994, 0.0
  %vm5028 = vcmp.gt.f32.partialorder %v4995, 0.0
  %vm5029 = vcmp.gt.f32.partialorder %v4996, 0.0
  %vm5030 = vcmp.gt.f32.partialorder %v4997, 0.0
  %vm5031 = vcmp.gt.f32.partialorder %v4998, 0.0
  %v5032 = vmul.f32 %v4966, 0.2
  %v5033 = vmul.f32 %v4967, 0.2
  %v5034 = vmul.f32 %v4968, 0.2
  %v5035 = vmul.f32 %v4969, 0.2
  %v5036 = vmul.f32 %v4970, 0.2
  %v5037 = vmul.f32 %v4971, 0.2
  %v5038 = vmul.f32 %v4972, 0.2
  %v5039 = vmul.f32 %v4973, 0.2
  %v5040 = vmul.f32 %v4974, 0.2
  %v5041 = vmul.f32 %v4975, 0.2
  %v5042 = vmul.f32 %v4976, 0.2
  %v5043 = vmul.f32 %v4977, 0.2
  %v5044 = vmul.f32 %v4978, 0.2
  %v5045 = vmul.f32 %v4979, 0.2
  %v5046 = vmul.f32 %v4980, 0.2
  %v5047 = vmul.f32 %v4981, 0.2
  %v5048 = vmul.f32 %v4982, 0.2
  %v5049 = vmul.f32 %v4983, 0.2
  %v5050 = vmul.f32 %v4984, 0.2
  %v5051 = vmul.f32 %v4985, 0.2
  %v5052 = vmul.f32 %v4986, 0.2
  %v5053 = vmul.f32 %v4987, 0.2
  %v5054 = vmul.f32 %v4988, 0.2
  %v5055 = vmul.f32 %v4989, 0.2
  %v5056 = vmul.f32 %v4990, 0.2
  %v5057 = vmul.f32 %v4991, 0.2
  %v5058 = vmul.f32 %v4992, 0.2
  %v5059 = vmul.f32 %v4993, 0.2
  %v5060 = vmul.f32 %v4994, 0.2
  %v5061 = vmul.f32 %v4995, 0.2
  %v5062 = vmul.f32 %v4996, 0.2
  %v5063 = vmul.f32 %v4997, 0.2
  %v5064 = vmul.f32 %v4998, 0.2
  %v5065 = vsel %vm4999, %v4966, %v5032
  %v5066 = vsel %vm5000, %v4967, %v5033
  %v5067 = vsel %vm5001, %v4968, %v5034
  %v5068 = vsel %vm5002, %v4969, %v5035
  %v5069 = vsel %vm5003, %v4970, %v5036
  %v5070 = vsel %vm5004, %v4971, %v5037
  %v5071 = vsel %vm5005, %v4972, %v5038
  %v5072 = vsel %vm5006, %v4973, %v5039
  %v5073 = vsel %vm5007, %v4974, %v5040
  %v5074 = vsel %vm5008, %v4975, %v5041
  %v5075 = vsel %vm5009, %v4976, %v5042
  %v5076 = vsel %vm5010, %v4977, %v5043
  %v5077 = vsel %vm5011, %v4978, %v5044
  %v5078 = vsel %vm5012, %v4979, %v5045
  %v5079 = vsel %vm5013, %v4980, %v5046
  %v5080 = vsel %vm5014, %v4981, %v5047
  %v5081 = vsel %vm5015, %v4982, %v5048
  %v5082 = vsel %vm5016, %v4983, %v5049
  %v5083 = vsel %vm5017, %v4984, %v5050
  %v5084 = vsel %vm5018, %v4985, %v5051
  %v5085 = vsel %vm5019, %v4986, %v5052
  %v5086 = vsel %vm5020, %v4987, %v5053
  %v5087 = vsel %vm5021, %v4988, %v5054
  %v5088 = vsel %vm5022, %v4989, %v5055
  %v5089 = vsel %vm5023, %v4990, %v5056
  %v5090 = vsel %vm5024, %v4991, %v5057
  %v5091 = vsel %vm5025, %v4992, %v5058
  %v5092 = vsel %vm5026, %v4993, %v5059
  %v5093 = vsel %vm5027, %v4994, %v5060
  %v5094 = vsel %vm5028, %v4995, %v5061
  %v5095 = vsel %vm5029, %v4996, %v5062
  %v5096 = vsel %vm5030, %v4997, %v5063
  %v5097 = vsel %vm5031, %v4998, %v5064
  %v5098 = vmul.f32 %v5065, %v4511
  %v5099 = vmul.f32 %v5066, %v4516
  %v5100 = vmul.f32 %v5067, %v4521
  %v5101 = vmul.f32 %v5068, %v4526
  %v5102 = vmul.f32 %v5069, %v4531
  %v5103 = vmul.f32 %v5070, %v4536
  %v5104 = vmul.f32 %v5071, %v4541
  %v5105 = vmul.f32 %v5072, %v4546
  %v5106 = vmul.f32 %v5073, %v4551
  %v5107 = vmul.f32 %v5074, %v4556
  %v5108 = vmul.f32 %v5075, %v4561
  %v5109 = vmul.f32 %v5076, %v4566
  %v5110 = vmul.f32 %v5077, %v4571
  %v5111 = vmul.f32 %v5078, %v4576
  %v5112 = vmul.f32 %v5079, %v4581
  %v5113 = vmul.f32 %v5080, %v4586
  %v5114 = vmul.f32 %v5081, %v4591
  %v5115 = vmul.f32 %v5082, %v4596
  %v5116 = vmul.f32 %v5083, %v4601
  %v5117 = vmul.f32 %v5084, %v4606
  %v5118 = vmul.f32 %v5085, %v4611
  %v5119 = vmul.f32 %v5086, %v4616
  %v5120 = vmul.f32 %v5087, %v4621
  %v5121 = vmul.f32 %v5088, %v4626
  %v5122 = vmul.f32 %v5089, %v4631
  %v5123 = vmul.f32 %v5090, %v4636
  %v5124 = vmul.f32 %v5091, %v4641
  %v5125 = vmul.f32 %v5092, %v4646
  %v5126 = vmul.f32 %v5093, %v4651
  %v5127 = vmul.f32 %v5094, %v4656
  %v5128 = vmul.f32 %v5095, %v4661
  %v5129 = vmul.f32 %v5096, %v4666
  %v5130 = vmul.f32 %v5097, %v4671
  %5131 = vst [vmem:[#allocation4] sm:$0xff] 0.0
  %5132 = vst [vmem:[#allocation4 + $0x8] sm:$0xff] 0.0
  %5133 = vst [vmem:[#allocation4 + $0x10] sm:$0xff] 0.0
  %5134 = vst [vmem:[#allocation4 + $0x18] sm:$0xff] %v5098
  %5135 = vst [vmem:[#allocation4 + $0x20] sm:$0xff] %v5099
  %5136 = vst [vmem:[#allocation4 + $0x28] sm:$0xff] %v5100
  %5137 = vst [vmem:[#allocation4 + $0x30] sm:$0xff] %v5101
  %5138 = vst [vmem:[#allocation4 + $0x38] sm:$0xff] %v5102
  %5139 = vst [vmem:[#allocation4 + $0x40] sm:$0xff] %v5103
  %5140 = vst [vmem:[#allocation4 + $0x48] sm:$0xff] %v5104
  %5141 = vst [vmem:[#allocation4 + $0x50] sm:$0xff] %v5105
  %5142 = vst [vmem:[#allocation4 + $0x58] sm:$0xff] %v5106
  %5143 = vst [vmem:[#allocation4 + $0x60] sm:$0xff] %v5107
  %5144 = vst [vmem:[#allocation4 + $0x68] sm:$0xff] %v5108
  %5145 = vst [vmem:[#allocation4 + $0x70] sm:$0xff] %v5109
  %5146 = vst [vmem:[#allocation4 + $0x78] sm:$0xff] %v5110
  %5147 = vst [vmem:[#allocation4 + $0x80] sm:$0xff] %v5111
  %5148 = vst [vmem:[#allocation4 + $0x88] sm:$0xff] %v5112
  %5149 = vst [vmem:[#allocation4 + $0x90] sm:$0xff] %v5113
  %5150 = vst [vmem:[#allocation4 + $0x98] sm:$0xff] %v5114
  %5151 = vst [vmem:[#allocation4 + $0xa0] sm:$0xff] %v5115
  %5152 = vst [vmem:[#allocation4 + $0xa8] sm:$0xff] %v5116
  %5153 = vst [vmem:[#allocation4 + $0xb0] sm:$0xff] %v5117
  %5154 = vst [vmem:[#allocation4 + $0xb8] sm:$0xff] %v5118
  %5155 = vst [vmem:[#allocation4 + $0xc0] sm:$0xff] %v5119
  %5156 = vst [vmem:[#allocation4 + $0xc8] sm:$0xff] %v5120
  %5157 = vst [vmem:[#allocation4 + $0xd0] sm:$0xff] %v5121
  %5158 = vst [vmem:[#allocation4 + $0xd8] sm:$0xff] %v5122
  %5159 = vst [vmem:[#allocation4 + $0xe0] sm:$0xff] %v5123
  %5160 = vst [vmem:[#allocation4 + $0xe8] sm:$0xff] %v5124
  %5161 = vst [vmem:[#allocation4 + $0xf0] sm:$0xff] %v5125
  %5162 = vst [vmem:[#allocation4 + $0xf8] sm:$0xff] %v5126
  %5163 = vst [vmem:[#allocation4 + $0x100] sm:$0xff] %v5127
  %5164 = vst [vmem:[#allocation4 + $0x108] sm:$0xff] %v5128
  %5165 = vst [vmem:[#allocation4 + $0x110] sm:$0xff] %v5129
  %5166 = vst [vmem:[#allocation4 + $0x118] sm:$0xff] %v5130
  %5167 = vst [vmem:[#allocation4 + $0x120] sm:$0xff] 0.0
  %5168 = vst [vmem:[#allocation4 + $0x128] sm:$0xff] 0.0
  %5169 = vst [vmem:[#allocation4 + $0x130] sm:$0xff] 0.0
  %v5170 = vld [vmem:[#allocation4 + $0x7] sm:$0xff]
  %v5171 = vld [vmem:[#allocation4 + $0xf] sm:$0xff]
  %v5172 = vld [vmem:[#allocation4 + $0x17] sm:$0xff]
  %v5173 = vld [vmem:[#allocation4 + $0x1f] sm:$0xff]
  %v5174 = vld [vmem:[#allocation4 + $0x27] sm:$0xff]
  %v5175 = vld [vmem:[#allocation4 + $0x2f] sm:$0xff]
  %v5176 = vld [vmem:[#allocation4 + $0x37] sm:$0xff]
  %v5177 = vld [vmem:[#allocation4 + $0x3f] sm:$0xff]
  %v5178 = vld [vmem:[#allocation4 + $0x47] sm:$0xff]
  %v5179 = vld [vmem:[#allocation4 + $0x4f] sm:$0xff]
  %v5180 = vld [vmem:[#allocation4 + $0x57] sm:$0xff]
  %v5181 = vld [vmem:[#allocation4 + $0x5f] sm:$0xff]
  %v5182 = vld [vmem:[#allocation4 + $0x67] sm:$0xff]
  %v5183 = vld [vmem:[#allocation4 + $0x6f] sm:$0xff]
  %v5184 = vld [vmem:[#allocation4 + $0x77] sm:$0xff]
  %v5185 = vld [vmem:[#allocation4 + $0x7f] sm:$0xff]
  %v5186 = vld [vmem:[#allocation4 + $0x87] sm:$0xff]
  %v5187 = vld [vmem:[#allocation4 + $0x8f] sm:$0xff]
  %v5188 = vld [vmem:[#allocation4 + $0x97] sm:$0xff]
  %v5189 = vld [vmem:[#allocation4 + $0x9f] sm:$0xff]
  %v5190 = vld [vmem:[#allocation4 + $0xa7] sm:$0xff]
  %v5191 = vld [vmem:[#allocation4 + $0xaf] sm:$0xff]
  %v5192 = vld [vmem:[#allocation4 + $0xb7] sm:$0xff]
  %v5193 = vld [vmem:[#allocation4 + $0xbf] sm:$0xff]
  %v5194 = vld [vmem:[#allocation4 + $0xc7] sm:$0xff]
  %v5195 = vld [vmem:[#allocation4 + $0xcf] sm:$0xff]
  %v5196 = vld [vmem:[#allocation4 + $0xd7] sm:$0xff]
  %v5197 = vld [vmem:[#allocation4 + $0xdf] sm:$0xff]
  %v5198 = vld [vmem:[#allocation4 + $0xe7] sm:$0xff]
  %v5199 = vld [vmem:[#allocation4 + $0xef] sm:$0xff]
  %v5200 = vld [vmem:[#allocation4 + $0xf7] sm:$0xff]
  %v5201 = vpack.c.bf16 %v5171, %v5170
  %v5202 = vpack.c.bf16 %v5173, %v5172
  %v5203 = vpack.c.bf16 %v5175, %v5174
  %v5204 = vpack.c.bf16 %v5177, %v5176
  %v5205 = vpack.c.bf16 %v5179, %v5178
  %v5206 = vpack.c.bf16 %v5181, %v5180
  %v5207 = vpack.c.bf16 %v5183, %v5182
  %v5208 = vpack.c.bf16 %v5185, %v5184
  %v5209 = vpack.c.bf16 %v5187, %v5186
  %v5210 = vpack.c.bf16 %v5189, %v5188
  %v5211 = vpack.c.bf16 %v5191, %v5190
  %v5212 = vpack.c.bf16 %v5193, %v5192
  %v5213 = vpack.c.bf16 %v5195, %v5194
  %v5214 = vpack.c.bf16 %v5197, %v5196
  %v5215 = vpack.c.bf16 %v5199, %v5198
  %v5216 = vpack.c.bf16 %v5200, %v5200
  %v5233 = vunpack.c.l.b16 %v5201
  %v5234 = vunpack.c.h.b16 %v5201
  %v5235 = vunpack.c.l.b16 %v5202
  %v5236 = vunpack.c.h.b16 %v5202
  %v5237 = vunpack.c.l.b16 %v5203
  %v5238 = vunpack.c.h.b16 %v5203
  %v5239 = vunpack.c.l.b16 %v5204
  %v5240 = vunpack.c.h.b16 %v5204
  %v5241 = vunpack.c.l.b16 %v5205
  %v5242 = vunpack.c.h.b16 %v5205
  %v5243 = vunpack.c.l.b16 %v5206
  %v5244 = vunpack.c.h.b16 %v5206
  %v5245 = vunpack.c.l.b16 %v5207
  %v5246 = vunpack.c.h.b16 %v5207
  %v5247 = vunpack.c.l.b16 %v5208
  %v5248 = vunpack.c.h.b16 %v5208
  %v5249 = vunpack.c.l.b16 %v5209
  %v5250 = vunpack.c.h.b16 %v5209
  %v5251 = vunpack.c.l.b16 %v5210
  %v5252 = vunpack.c.h.b16 %v5210
  %v5253 = vunpack.c.l.b16 %v5211
  %v5254 = vunpack.c.h.b16 %v5211
  %v5255 = vunpack.c.l.b16 %v5212
  %v5256 = vunpack.c.h.b16 %v5212
  %v5257 = vunpack.c.l.b16 %v5213
  %v5258 = vunpack.c.h.b16 %v5213
  %v5259 = vunpack.c.l.b16 %v5214
  %v5260 = vunpack.c.h.b16 %v5214
  %v5261 = vunpack.c.l.b16 %v5215
  %v5262 = vunpack.c.h.b16 %v5215
  %v5263 = vunpack.c.l.b16 %v5216
  %v5264 = vpack.c.b16 %v5233, %v5233
  %v5265 = vpack.c.b16 %v5234, %v5234
  %v5266 = vpack.c.b16 %v5235, %v5235
  %v5267 = vpack.c.b16 %v5236, %v5236
  %v5268 = vpack.c.b16 %v5237, %v5237
  %v5269 = vpack.c.b16 %v5238, %v5238
  %v5270 = vpack.c.b16 %v5239, %v5239
  %v5271 = vpack.c.b16 %v5240, %v5240
  %v5272 = vpack.c.b16 %v5241, %v5241
  %v5273 = vpack.c.b16 %v5242, %v5242
  %v5274 = vpack.c.b16 %v5243, %v5243
  %v5275 = vpack.c.b16 %v5244, %v5244
  %v5276 = vpack.c.b16 %v5245, %v5245
  %v5277 = vpack.c.b16 %v5246, %v5246
  %v5278 = vpack.c.b16 %v5247, %v5247
  %v5279 = vpack.c.b16 %v5248, %v5248
  %v5280 = vpack.c.b16 %v5249, %v5249
  %v5281 = vpack.c.b16 %v5250, %v5250
  %v5282 = vpack.c.b16 %v5251, %v5251
  %v5283 = vpack.c.b16 %v5252, %v5252
  %v5284 = vpack.c.b16 %v5253, %v5253
  %v5285 = vpack.c.b16 %v5254, %v5254
  %v5286 = vpack.c.b16 %v5255, %v5255
  %v5287 = vpack.c.b16 %v5256, %v5256
  %v5288 = vpack.c.b16 %v5257, %v5257
  %v5289 = vpack.c.b16 %v5258, %v5258
  %v5290 = vpack.c.b16 %v5259, %v5259
  %v5291 = vpack.c.b16 %v5260, %v5260
  %v5292 = vpack.c.b16 %v5261, %v5261
  %v5293 = vpack.c.b16 %v5262, %v5262
  %v5294 = vpack.c.b16 %v5263, %v5263
  %vm5326 = vcmask 125952
  %5327 = vst.msk [vmem:[#allocation5] sm:$0xf] %vm5326, %v5264
  %5328 = vst.msk [vmem:[#allocation5 + $0x8] sm:$0xf] %vm5326, %v5265
  %5329 = vst.msk [vmem:[#allocation5 + $0x10] sm:$0xf] %vm5326, %v5266
  %5330 = vst.msk [vmem:[#allocation5 + $0x18] sm:$0xf] %vm5326, %v5267
  %5331 = vst.msk [vmem:[#allocation5 + $0x20] sm:$0xf] %vm5326, %v5268
  %5332 = vst.msk [vmem:[#allocation5 + $0x28] sm:$0xf] %vm5326, %v5269
  %5333 = vst.msk [vmem:[#allocation5 + $0x30] sm:$0xf] %vm5326, %v5270
  %5334 = vst.msk [vmem:[#allocation5 + $0x38] sm:$0xf] %vm5326, %v5271
  %5335 = vst.msk [vmem:[#allocation5 + $0x40] sm:$0xf] %vm5326, %v5272
  %5336 = vst.msk [vmem:[#allocation5 + $0x48] sm:$0xf] %vm5326, %v5273
  %5337 = vst.msk [vmem:[#allocation5 + $0x50] sm:$0xf] %vm5326, %v5274
  %5338 = vst.msk [vmem:[#allocation5 + $0x58] sm:$0xf] %vm5326, %v5275
  %5339 = vst.msk [vmem:[#allocation5 + $0x60] sm:$0xf] %vm5326, %v5276
  %5340 = vst.msk [vmem:[#allocation5 + $0x68] sm:$0xf] %vm5326, %v5277
  %5341 = vst.msk [vmem:[#allocation5 + $0x70] sm:$0xf] %vm5326, %v5278
  %5342 = vst.msk [vmem:[#allocation5 + $0x78] sm:$0xf] %vm5326, %v5279
  %5343 = vst.msk [vmem:[#allocation5 + $0x80] sm:$0xf] %vm5326, %v5280
  %5344 = vst.msk [vmem:[#allocation5 + $0x88] sm:$0xf] %vm5326, %v5281
  %5345 = vst.msk [vmem:[#allocation5 + $0x90] sm:$0xf] %vm5326, %v5282
  %5346 = vst.msk [vmem:[#allocation5 + $0x98] sm:$0xf] %vm5326, %v5283
  %5347 = vst.msk [vmem:[#allocation5 + $0xa0] sm:$0xf] %vm5326, %v5284
  %5348 = vst.msk [vmem:[#allocation5 + $0xa8] sm:$0xf] %vm5326, %v5285
  %5349 = vst.msk [vmem:[#allocation5 + $0xb0] sm:$0xf] %vm5326, %v5286
  %5350 = vst.msk [vmem:[#allocation5 + $0xb8] sm:$0xf] %vm5326, %v5287
  %5351 = vst.msk [vmem:[#allocation5 + $0xc0] sm:$0xf] %vm5326, %v5288
  %5352 = vst.msk [vmem:[#allocation5 + $0xc8] sm:$0xf] %vm5326, %v5289
  %5353 = vst.msk [vmem:[#allocation5 + $0xd0] sm:$0xf] %vm5326, %v5290
  %5354 = vst.msk [vmem:[#allocation5 + $0xd8] sm:$0xf] %vm5326, %v5291
  %5355 = vst.msk [vmem:[#allocation5 + $0xe0] sm:$0xf] %vm5326, %v5292
  %5356 = vst.msk [vmem:[#allocation5 + $0xe8] sm:$0xf] %vm5326, %v5293
  %5357 = vst.msk [vmem:[#allocation5 + $0xf0] sm:$0xf] %vm5326, %v5294
  %v5358 = vld [vmem:[#allocation4 + $0x8] sm:$0xff]
  %v5359 = vld [vmem:[#allocation4 + $0x10] sm:$0xff]
  %v5360 = vld [vmem:[#allocation4 + $0x18] sm:$0xff]
  %v5361 = vld [vmem:[#allocation4 + $0x20] sm:$0xff]
  %v5362 = vld [vmem:[#allocation4 + $0x28] sm:$0xff]
  %v5363 = vld [vmem:[#allocation4 + $0x30] sm:$0xff]
  %v5364 = vld [vmem:[#allocation4 + $0x38] sm:$0xff]
  %v5365 = vld [vmem:[#allocation4 + $0x40] sm:$0xff]
  %v5366 = vld [vmem:[#allocation4 + $0x48] sm:$0xff]
  %v5367 = vld [vmem:[#allocation4 + $0x50] sm:$0xff]
  %v5368 = vld [vmem:[#allocation4 + $0x58] sm:$0xff]
  %v5369 = vld [vmem:[#allocation4 + $0x60] sm:$0xff]
  %v5370 = vld [vmem:[#allocation4 + $0x68] sm:$0xff]
  %v5371 = vld [vmem:[#allocation4 + $0x70] sm:$0xff]
  %v5372 = vld [vmem:[#allocation4 + $0x78] sm:$0xff]
  %v5373 = vld [vmem:[#allocation4 + $0x80] sm:$0xff]
  %v5374 = vld [vmem:[#allocation4 + $0x88] sm:$0xff]
  %v5375 = vld [vmem:[#allocation4 + $0x90] sm:$0xff]
  %v5376 = vld [vmem:[#allocation4 + $0x98] sm:$0xff]
  %v5377 = vld [vmem:[#allocation4 + $0xa0] sm:$0xff]
  %v5378 = vld [vmem:[#allocation4 + $0xa8] sm:$0xff]
  %v5379 = vld [vmem:[#allocation4 + $0xb0] sm:$0xff]
  %v5380 = vld [vmem:[#allocation4 + $0xb8] sm:$0xff]
  %v5381 = vld [vmem:[#allocation4 + $0xc0] sm:$0xff]
  %v5382 = vld [vmem:[#allocation4 + $0xc8] sm:$0xff]
  %v5383 = vld [vmem:[#allocation4 + $0xd0] sm:$0xff]
  %v5384 = vld [vmem:[#allocation4 + $0xd8] sm:$0xff]
  %v5385 = vld [vmem:[#allocation4 + $0xe0] sm:$0xff]
  %v5386 = vld [vmem:[#allocation4 + $0xe8] sm:$0xff]
  %v5387 = vld [vmem:[#allocation4 + $0xf0] sm:$0xff]
  %v5388 = vld [vmem:[#allocation4 + $0xf8] sm:$0xff]
  %v5389 = vpack.c.bf16 %v5359, %v5358
  %v5390 = vpack.c.bf16 %v5361, %v5360
  %v5391 = vpack.c.bf16 %v5363, %v5362
  %v5392 = vpack.c.bf16 %v5365, %v5364
  %v5393 = vpack.c.bf16 %v5367, %v5366
  %v5394 = vpack.c.bf16 %v5369, %v5368
  %v5395 = vpack.c.bf16 %v5371, %v5370
  %v5396 = vpack.c.bf16 %v5373, %v5372
  %v5397 = vpack.c.bf16 %v5375, %v5374
  %v5398 = vpack.c.bf16 %v5377, %v5376
  %v5399 = vpack.c.bf16 %v5379, %v5378
  %v5400 = vpack.c.bf16 %v5381, %v5380
  %v5401 = vpack.c.bf16 %v5383, %v5382
  %v5402 = vpack.c.bf16 %v5385, %v5384
  %v5403 = vpack.c.bf16 %v5387, %v5386
  %v5404 = vpack.c.bf16 %v5388, %v5388
  %v5421 = vunpack.c.l.b16 %v5389
  %v5422 = vunpack.c.h.b16 %v5389
  %v5423 = vunpack.c.l.b16 %v5390
  %v5424 = vunpack.c.h.b16 %v5390
  %v5425 = vunpack.c.l.b16 %v5391
  %v5426 = vunpack.c.h.b16 %v5391
  %v5427 = vunpack.c.l.b16 %v5392
  %v5428 = vunpack.c.h.b16 %v5392
  %v5429 = vunpack.c.l.b16 %v5393
  %v5430 = vunpack.c.h.b16 %v5393
  %v5431 = vunpack.c.l.b16 %v5394
  %v5432 = vunpack.c.h.b16 %v5394
  %v5433 = vunpack.c.l.b16 %v5395
  %v5434 = vunpack.c.h.b16 %v5395
  %v5435 = vunpack.c.l.b16 %v5396
  %v5436 = vunpack.c.h.b16 %v5396
  %v5437 = vunpack.c.l.b16 %v5397
  %v5438 = vunpack.c.h.b16 %v5397
  %v5439 = vunpack.c.l.b16 %v5398
  %v5440 = vunpack.c.h.b16 %v5398
  %v5441 = vunpack.c.l.b16 %v5399
  %v5442 = vunpack.c.h.b16 %v5399
  %v5443 = vunpack.c.l.b16 %v5400
  %v5444 = vunpack.c.h.b16 %v5400
  %v5445 = vunpack.c.l.b16 %v5401
  %v5446 = vunpack.c.h.b16 %v5401
  %v5447 = vunpack.c.l.b16 %v5402
  %v5448 = vunpack.c.h.b16 %v5402
  %v5449 = vunpack.c.l.b16 %v5403
  %v5450 = vunpack.c.h.b16 %v5403
  %v5451 = vunpack.c.l.b16 %v5404
  %v5452 = vpack.c.b16 %v5421, %v5421
  %v5453 = vpack.c.b16 %v5422, %v5422
  %v5454 = vpack.c.b16 %v5423, %v5423
  %v5455 = vpack.c.b16 %v5424, %v5424
  %v5456 = vpack.c.b16 %v5425, %v5425
  %v5457 = vpack.c.b16 %v5426, %v5426
  %v5458 = vpack.c.b16 %v5427, %v5427
  %v5459 = vpack.c.b16 %v5428, %v5428
  %v5460 = vpack.c.b16 %v5429, %v5429
  %v5461 = vpack.c.b16 %v5430, %v5430
  %v5462 = vpack.c.b16 %v5431, %v5431
  %v5463 = vpack.c.b16 %v5432, %v5432
  %v5464 = vpack.c.b16 %v5433, %v5433
  %v5465 = vpack.c.b16 %v5434, %v5434
  %v5466 = vpack.c.b16 %v5435, %v5435
  %v5467 = vpack.c.b16 %v5436, %v5436
  %v5468 = vpack.c.b16 %v5437, %v5437
  %v5469 = vpack.c.b16 %v5438, %v5438
  %v5470 = vpack.c.b16 %v5439, %v5439
  %v5471 = vpack.c.b16 %v5440, %v5440
  %v5472 = vpack.c.b16 %v5441, %v5441
  %v5473 = vpack.c.b16 %v5442, %v5442
  %v5474 = vpack.c.b16 %v5443, %v5443
  %v5475 = vpack.c.b16 %v5444, %v5444
  %v5476 = vpack.c.b16 %v5445, %v5445
  %v5477 = vpack.c.b16 %v5446, %v5446
  %v5478 = vpack.c.b16 %v5447, %v5447
  %v5479 = vpack.c.b16 %v5448, %v5448
  %v5480 = vpack.c.b16 %v5449, %v5449
  %v5481 = vpack.c.b16 %v5450, %v5450
  %v5482 = vpack.c.b16 %v5451, %v5451
  %vm5514 = vcmask 257152
  %5515 = vst.msk [vmem:[#allocation5] sm:$0xf] %vm5514, %v5452
  %5516 = vst.msk [vmem:[#allocation5 + $0x8] sm:$0xf] %vm5514, %v5453
  %5517 = vst.msk [vmem:[#allocation5 + $0x10] sm:$0xf] %vm5514, %v5454
  %5518 = vst.msk [vmem:[#allocation5 + $0x18] sm:$0xf] %vm5514, %v5455
  %5519 = vst.msk [vmem:[#allocation5 + $0x20] sm:$0xf] %vm5514, %v5456
  %5520 = vst.msk [vmem:[#allocation5 + $0x28] sm:$0xf] %vm5514, %v5457
  %5521 = vst.msk [vmem:[#allocation5 + $0x30] sm:$0xf] %vm5514, %v5458
  %5522 = vst.msk [vmem:[#allocation5 + $0x38] sm:$0xf] %vm5514, %v5459
  %5523 = vst.msk [vmem:[#allocation5 + $0x40] sm:$0xf] %vm5514, %v5460
  %5524 = vst.msk [vmem:[#allocation5 + $0x48] sm:$0xf] %vm5514, %v5461
  %5525 = vst.msk [vmem:[#allocation5 + $0x50] sm:$0xf] %vm5514, %v5462
  %5526 = vst.msk [vmem:[#allocation5 + $0x58] sm:$0xf] %vm5514, %v5463
  %5527 = vst.msk [vmem:[#allocation5 + $0x60] sm:$0xf] %vm5514, %v5464
  %5528 = vst.msk [vmem:[#allocation5 + $0x68] sm:$0xf] %vm5514, %v5465
  %5529 = vst.msk [vmem:[#allocation5 + $0x70] sm:$0xf] %vm5514, %v5466
  %5530 = vst.msk [vmem:[#allocation5 + $0x78] sm:$0xf] %vm5514, %v5467
  %5531 = vst.msk [vmem:[#allocation5 + $0x80] sm:$0xf] %vm5514, %v5468
  %5532 = vst.msk [vmem:[#allocation5 + $0x88] sm:$0xf] %vm5514, %v5469
  %5533 = vst.msk [vmem:[#allocation5 + $0x90] sm:$0xf] %vm5514, %v5470
  %5534 = vst.msk [vmem:[#allocation5 + $0x98] sm:$0xf] %vm5514, %v5471
  %5535 = vst.msk [vmem:[#allocation5 + $0xa0] sm:$0xf] %vm5514, %v5472
  %5536 = vst.msk [vmem:[#allocation5 + $0xa8] sm:$0xf] %vm5514, %v5473
  %5537 = vst.msk [vmem:[#allocation5 + $0xb0] sm:$0xf] %vm5514, %v5474
  %5538 = vst.msk [vmem:[#allocation5 + $0xb8] sm:$0xf] %vm5514, %v5475
  %5539 = vst.msk [vmem:[#allocation5 + $0xc0] sm:$0xf] %vm5514, %v5476
  %5540 = vst.msk [vmem:[#allocation5 + $0xc8] sm:$0xf] %vm5514, %v5477
  %5541 = vst.msk [vmem:[#allocation5 + $0xd0] sm:$0xf] %vm5514, %v5478
  %5542 = vst.msk [vmem:[#allocation5 + $0xd8] sm:$0xf] %vm5514, %v5479
  %5543 = vst.msk [vmem:[#allocation5 + $0xe0] sm:$0xf] %vm5514, %v5480
  %5544 = vst.msk [vmem:[#allocation5 + $0xe8] sm:$0xf] %vm5514, %v5481
  %5545 = vst.msk [vmem:[#allocation5 + $0xf0] sm:$0xf] %vm5514, %v5482
  %v5546 = vld [vmem:[#allocation4 + $0x9] sm:$0xff]
  %v5547 = vld [vmem:[#allocation4 + $0x11] sm:$0xff]
  %v5548 = vld [vmem:[#allocation4 + $0x19] sm:$0xff]
  %v5549 = vld [vmem:[#allocation4 + $0x21] sm:$0xff]
  %v5550 = vld [vmem:[#allocation4 + $0x29] sm:$0xff]
  %v5551 = vld [vmem:[#allocation4 + $0x31] sm:$0xff]
  %v5552 = vld [vmem:[#allocation4 + $0x39] sm:$0xff]
  %v5553 = vld [vmem:[#allocation4 + $0x41] sm:$0xff]
  %v5554 = vld [vmem:[#allocation4 + $0x49] sm:$0xff]
  %v5555 = vld [vmem:[#allocation4 + $0x51] sm:$0xff]
  %v5556 = vld [vmem:[#allocation4 + $0x59] sm:$0xff]
  %v5557 = vld [vmem:[#allocation4 + $0x61] sm:$0xff]
  %v5558 = vld [vmem:[#allocation4 + $0x69] sm:$0xff]
  %v5559 = vld [vmem:[#allocation4 + $0x71] sm:$0xff]
  %v5560 = vld [vmem:[#allocation4 + $0x79] sm:$0xff]
  %v5561 = vld [vmem:[#allocation4 + $0x81] sm:$0xff]
  %v5562 = vld [vmem:[#allocation4 + $0x89] sm:$0xff]
  %v5563 = vld [vmem:[#allocation4 + $0x91] sm:$0xff]
  %v5564 = vld [vmem:[#allocation4 + $0x99] sm:$0xff]
  %v5565 = vld [vmem:[#allocation4 + $0xa1] sm:$0xff]
  %v5566 = vld [vmem:[#allocation4 + $0xa9] sm:$0xff]
  %v5567 = vld [vmem:[#allocation4 + $0xb1] sm:$0xff]
  %v5568 = vld [vmem:[#allocation4 + $0xb9] sm:$0xff]
  %v5569 = vld [vmem:[#allocation4 + $0xc1] sm:$0xff]
  %v5570 = vld [vmem:[#allocation4 + $0xc9] sm:$0xff]
  %v5571 = vld [vmem:[#allocation4 + $0xd1] sm:$0xff]
  %v5572 = vld [vmem:[#allocation4 + $0xd9] sm:$0xff]
  %v5573 = vld [vmem:[#allocation4 + $0xe1] sm:$0xff]
  %v5574 = vld [vmem:[#allocation4 + $0xe9] sm:$0xff]
  %v5575 = vld [vmem:[#allocation4 + $0xf1] sm:$0xff]
  %v5576 = vld [vmem:[#allocation4 + $0xf9] sm:$0xff]
  %v5577 = vpack.c.bf16 %v5547, %v5546
  %v5578 = vpack.c.bf16 %v5549, %v5548
  %v5579 = vpack.c.bf16 %v5551, %v5550
  %v5580 = vpack.c.bf16 %v5553, %v5552
  %v5581 = vpack.c.bf16 %v5555, %v5554
  %v5582 = vpack.c.bf16 %v5557, %v5556
  %v5583 = vpack.c.bf16 %v5559, %v5558
  %v5584 = vpack.c.bf16 %v5561, %v5560
  %v5585 = vpack.c.bf16 %v5563, %v5562
  %v5586 = vpack.c.bf16 %v5565, %v5564
  %v5587 = vpack.c.bf16 %v5567, %v5566
  %v5588 = vpack.c.bf16 %v5569, %v5568
  %v5589 = vpack.c.bf16 %v5571, %v5570
  %v5590 = vpack.c.bf16 %v5573, %v5572
  %v5591 = vpack.c.bf16 %v5575, %v5574
  %v5592 = vpack.c.bf16 %v5576, %v5576
  %v5609 = vunpack.c.l.b16 %v5577
  %v5610 = vunpack.c.h.b16 %v5577
  %v5611 = vunpack.c.l.b16 %v5578
  %v5612 = vunpack.c.h.b16 %v5578
  %v5613 = vunpack.c.l.b16 %v5579
  %v5614 = vunpack.c.h.b16 %v5579
  %v5615 = vunpack.c.l.b16 %v5580
  %v5616 = vunpack.c.h.b16 %v5580
  %v5617 = vunpack.c.l.b16 %v5581
  %v5618 = vunpack.c.h.b16 %v5581
  %v5619 = vunpack.c.l.b16 %v5582
  %v5620 = vunpack.c.h.b16 %v5582
  %v5621 = vunpack.c.l.b16 %v5583
  %v5622 = vunpack.c.h.b16 %v5583
  %v5623 = vunpack.c.l.b16 %v5584
  %v5624 = vunpack.c.h.b16 %v5584
  %v5625 = vunpack.c.l.b16 %v5585
  %v5626 = vunpack.c.h.b16 %v5585
  %v5627 = vunpack.c.l.b16 %v5586
  %v5628 = vunpack.c.h.b16 %v5586
  %v5629 = vunpack.c.l.b16 %v5587
  %v5630 = vunpack.c.h.b16 %v5587
  %v5631 = vunpack.c.l.b16 %v5588
  %v5632 = vunpack.c.h.b16 %v5588
  %v5633 = vunpack.c.l.b16 %v5589
  %v5634 = vunpack.c.h.b16 %v5589
  %v5635 = vunpack.c.l.b16 %v5590
  %v5636 = vunpack.c.h.b16 %v5590
  %v5637 = vunpack.c.l.b16 %v5591
  %v5638 = vunpack.c.h.b16 %v5591
  %v5639 = vunpack.c.l.b16 %v5592
  %v5640 = vpack.c.b16 %v5609, %v5609
  %v5641 = vpack.c.b16 %v5610, %v5610
  %v5642 = vpack.c.b16 %v5611, %v5611
  %v5643 = vpack.c.b16 %v5612, %v5612
  %v5644 = vpack.c.b16 %v5613, %v5613
  %v5645 = vpack.c.b16 %v5614, %v5614
  %v5646 = vpack.c.b16 %v5615, %v5615
  %v5647 = vpack.c.b16 %v5616, %v5616
  %v5648 = vpack.c.b16 %v5617, %v5617
  %v5649 = vpack.c.b16 %v5618, %v5618
  %v5650 = vpack.c.b16 %v5619, %v5619
  %v5651 = vpack.c.b16 %v5620, %v5620
  %v5652 = vpack.c.b16 %v5621, %v5621
  %v5653 = vpack.c.b16 %v5622, %v5622
  %v5654 = vpack.c.b16 %v5623, %v5623
  %v5655 = vpack.c.b16 %v5624, %v5624
  %v5656 = vpack.c.b16 %v5625, %v5625
  %v5657 = vpack.c.b16 %v5626, %v5626
  %v5658 = vpack.c.b16 %v5627, %v5627
  %v5659 = vpack.c.b16 %v5628, %v5628
  %v5660 = vpack.c.b16 %v5629, %v5629
  %v5661 = vpack.c.b16 %v5630, %v5630
  %v5662 = vpack.c.b16 %v5631, %v5631
  %v5663 = vpack.c.b16 %v5632, %v5632
  %v5664 = vpack.c.b16 %v5633, %v5633
  %v5665 = vpack.c.b16 %v5634, %v5634
  %v5666 = vpack.c.b16 %v5635, %v5635
  %v5667 = vpack.c.b16 %v5636, %v5636
  %v5668 = vpack.c.b16 %v5637, %v5637
  %v5669 = vpack.c.b16 %v5638, %v5638
  %v5670 = vpack.c.b16 %v5639, %v5639
  %vm5702 = vcmask 388352
  %5703 = vst.msk [vmem:[#allocation5] sm:$0xf] %vm5702, %v5640
  %5704 = vst.msk [vmem:[#allocation5 + $0x8] sm:$0xf] %vm5702, %v5641
  %5705 = vst.msk [vmem:[#allocation5 + $0x10] sm:$0xf] %vm5702, %v5642
  %5706 = vst.msk [vmem:[#allocation5 + $0x18] sm:$0xf] %vm5702, %v5643
  %5707 = vst.msk [vmem:[#allocation5 + $0x20] sm:$0xf] %vm5702, %v5644
  %5708 = vst.msk [vmem:[#allocation5 + $0x28] sm:$0xf] %vm5702, %v5645
  %5709 = vst.msk [vmem:[#allocation5 + $0x30] sm:$0xf] %vm5702, %v5646
  %5710 = vst.msk [vmem:[#allocation5 + $0x38] sm:$0xf] %vm5702, %v5647
  %5711 = vst.msk [vmem:[#allocation5 + $0x40] sm:$0xf] %vm5702, %v5648
  %5712 = vst.msk [vmem:[#allocation5 + $0x48] sm:$0xf] %vm5702, %v5649
  %5713 = vst.msk [vmem:[#allocation5 + $0x50] sm:$0xf] %vm5702, %v5650
  %5714 = vst.msk [vmem:[#allocation5 + $0x58] sm:$0xf] %vm5702, %v5651
  %5715 = vst.msk [vmem:[#allocation5 + $0x60] sm:$0xf] %vm5702, %v5652
  %5716 = vst.msk [vmem:[#allocation5 + $0x68] sm:$0xf] %vm5702, %v5653
  %5717 = vst.msk [vmem:[#allocation5 + $0x70] sm:$0xf] %vm5702, %v5654
  %5718 = vst.msk [vmem:[#allocation5 + $0x78] sm:$0xf] %vm5702, %v5655
  %5719 = vst.msk [vmem:[#allocation5 + $0x80] sm:$0xf] %vm5702, %v5656
  %5720 = vst.msk [vmem:[#allocation5 + $0x88] sm:$0xf] %vm5702, %v5657
  %5721 = vst.msk [vmem:[#allocation5 + $0x90] sm:$0xf] %vm5702, %v5658
  %5722 = vst.msk [vmem:[#allocation5 + $0x98] sm:$0xf] %vm5702, %v5659
  %5723 = vst.msk [vmem:[#allocation5 + $0xa0] sm:$0xf] %vm5702, %v5660
  %5724 = vst.msk [vmem:[#allocation5 + $0xa8] sm:$0xf] %vm5702, %v5661
  %5725 = vst.msk [vmem:[#allocation5 + $0xb0] sm:$0xf] %vm5702, %v5662
  %5726 = vst.msk [vmem:[#allocation5 + $0xb8] sm:$0xf] %vm5702, %v5663
  %5727 = vst.msk [vmem:[#allocation5 + $0xc0] sm:$0xf] %vm5702, %v5664
  %5728 = vst.msk [vmem:[#allocation5 + $0xc8] sm:$0xf] %vm5702, %v5665
  %5729 = vst.msk [vmem:[#allocation5 + $0xd0] sm:$0xf] %vm5702, %v5666
  %5730 = vst.msk [vmem:[#allocation5 + $0xd8] sm:$0xf] %vm5702, %v5667
  %5731 = vst.msk [vmem:[#allocation5 + $0xe0] sm:$0xf] %vm5702, %v5668
  %5732 = vst.msk [vmem:[#allocation5 + $0xe8] sm:$0xf] %vm5702, %v5669
  %5733 = vst.msk [vmem:[#allocation5 + $0xf0] sm:$0xf] %vm5702, %v5670
  %v5734 = vld [vmem:[#allocation4 + $0xa] sm:$0xff]
  %v5735 = vld [vmem:[#allocation4 + $0x12] sm:$0xff]
  %v5736 = vld [vmem:[#allocation4 + $0x1a] sm:$0xff]
  %v5737 = vld [vmem:[#allocation4 + $0x22] sm:$0xff]
  %v5738 = vld [vmem:[#allocation4 + $0x2a] sm:$0xff]
  %v5739 = vld [vmem:[#allocation4 + $0x32] sm:$0xff]
  %v5740 = vld [vmem:[#allocation4 + $0x3a] sm:$0xff]
  %v5741 = vld [vmem:[#allocation4 + $0x42] sm:$0xff]
  %v5742 = vld [vmem:[#allocation4 + $0x4a] sm:$0xff]
  %v5743 = vld [vmem:[#allocation4 + $0x52] sm:$0xff]
  %v5744 = vld [vmem:[#allocation4 + $0x5a] sm:$0xff]
  %v5745 = vld [vmem:[#allocation4 + $0x62] sm:$0xff]
  %v5746 = vld [vmem:[#allocation4 + $0x6a] sm:$0xff]
  %v5747 = vld [vmem:[#allocation4 + $0x72] sm:$0xff]
  %v5748 = vld [vmem:[#allocation4 + $0x7a] sm:$0xff]
  %v5749 = vld [vmem:[#allocation4 + $0x82] sm:$0xff]
  %v5750 = vld [vmem:[#allocation4 + $0x8a] sm:$0xff]
  %v5751 = vld [vmem:[#allocation4 + $0x92] sm:$0xff]
  %v5752 = vld [vmem:[#allocation4 + $0x9a] sm:$0xff]
  %v5753 = vld [vmem:[#allocation4 + $0xa2] sm:$0xff]
  %v5754 = vld [vmem:[#allocation4 + $0xaa] sm:$0xff]
  %v5755 = vld [vmem:[#allocation4 + $0xb2] sm:$0xff]
  %v5756 = vld [vmem:[#allocation4 + $0xba] sm:$0xff]
  %v5757 = vld [vmem:[#allocation4 + $0xc2] sm:$0xff]
  %v5758 = vld [vmem:[#allocation4 + $0xca] sm:$0xff]
  %v5759 = vld [vmem:[#allocation4 + $0xd2] sm:$0xff]
  %v5760 = vld [vmem:[#allocation4 + $0xda] sm:$0xff]
  %v5761 = vld [vmem:[#allocation4 + $0xe2] sm:$0xff]
  %v5762 = vld [vmem:[#allocation4 + $0xea] sm:$0xff]
  %v5763 = vld [vmem:[#allocation4 + $0xf2] sm:$0xff]
  %v5764 = vld [vmem:[#allocation4 + $0xfa] sm:$0xff]
  %v5765 = vpack.c.bf16 %v5735, %v5734
  %v5766 = vpack.c.bf16 %v5737, %v5736
  %v5767 = vpack.c.bf16 %v5739, %v5738
  %v5768 = vpack.c.bf16 %v5741, %v5740
  %v5769 = vpack.c.bf16 %v5743, %v5742
  %v5770 = vpack.c.bf16 %v5745, %v5744
  %v5771 = vpack.c.bf16 %v5747, %v5746
  %v5772 = vpack.c.bf16 %v5749, %v5748
  %v5773 = vpack.c.bf16 %v5751, %v5750
  %v5774 = vpack.c.bf16 %v5753, %v5752
  %v5775 = vpack.c.bf16 %v5755, %v5754
  %v5776 = vpack.c.bf16 %v5757, %v5756
  %v5777 = vpack.c.bf16 %v5759, %v5758
  %v5778 = vpack.c.bf16 %v5761, %v5760
  %v5779 = vpack.c.bf16 %v5763, %v5762
  %v5780 = vpack.c.bf16 %v5764, %v5764
  %v5797 = vunpack.c.l.b16 %v5765
  %v5798 = vunpack.c.h.b16 %v5765
  %v5799 = vunpack.c.l.b16 %v5766
  %v5800 = vunpack.c.h.b16 %v5766
  %v5801 = vunpack.c.l.b16 %v5767
  %v5802 = vunpack.c.h.b16 %v5767
  %v5803 = vunpack.c.l.b16 %v5768
  %v5804 = vunpack.c.h.b16 %v5768
  %v5805 = vunpack.c.l.b16 %v5769
  %v5806 = vunpack.c.h.b16 %v5769
  %v5807 = vunpack.c.l.b16 %v5770
  %v5808 = vunpack.c.h.b16 %v5770
  %v5809 = vunpack.c.l.b16 %v5771
  %v5810 = vunpack.c.h.b16 %v5771
  %v5811 = vunpack.c.l.b16 %v5772
  %v5812 = vunpack.c.h.b16 %v5772
  %v5813 = vunpack.c.l.b16 %v5773
  %v5814 = vunpack.c.h.b16 %v5773
  %v5815 = vunpack.c.l.b16 %v5774
  %v5816 = vunpack.c.h.b16 %v5774
  %v5817 = vunpack.c.l.b16 %v5775
  %v5818 = vunpack.c.h.b16 %v5775
  %v5819 = vunpack.c.l.b16 %v5776
  %v5820 = vunpack.c.h.b16 %v5776
  %v5821 = vunpack.c.l.b16 %v5777
  %v5822 = vunpack.c.h.b16 %v5777
  %v5823 = vunpack.c.l.b16 %v5778
  %v5824 = vunpack.c.h.b16 %v5778
  %v5825 = vunpack.c.l.b16 %v5779
  %v5826 = vunpack.c.h.b16 %v5779
  %v5827 = vunpack.c.l.b16 %v5780
  %v5828 = vpack.c.b16 %v5797, %v5797
  %v5829 = vpack.c.b16 %v5798, %v5798
  %v5830 = vpack.c.b16 %v5799, %v5799
  %v5831 = vpack.c.b16 %v5800, %v5800
  %v5832 = vpack.c.b16 %v5801, %v5801
  %v5833 = vpack.c.b16 %v5802, %v5802
  %v5834 = vpack.c.b16 %v5803, %v5803
  %v5835 = vpack.c.b16 %v5804, %v5804
  %v5836 = vpack.c.b16 %v5805, %v5805
  %v5837 = vpack.c.b16 %v5806, %v5806
  %v5838 = vpack.c.b16 %v5807, %v5807
  %v5839 = vpack.c.b16 %v5808, %v5808
  %v5840 = vpack.c.b16 %v5809, %v5809
  %v5841 = vpack.c.b16 %v5810, %v5810
  %v5842 = vpack.c.b16 %v5811, %v5811
  %v5843 = vpack.c.b16 %v5812, %v5812
  %v5844 = vpack.c.b16 %v5813, %v5813
  %v5845 = vpack.c.b16 %v5814, %v5814
  %v5846 = vpack.c.b16 %v5815, %v5815
  %v5847 = vpack.c.b16 %v5816, %v5816
  %v5848 = vpack.c.b16 %v5817, %v5817
  %v5849 = vpack.c.b16 %v5818, %v5818
  %v5850 = vpack.c.b16 %v5819, %v5819
  %v5851 = vpack.c.b16 %v5820, %v5820
  %v5852 = vpack.c.b16 %v5821, %v5821
  %v5853 = vpack.c.b16 %v5822, %v5822
  %v5854 = vpack.c.b16 %v5823, %v5823
  %v5855 = vpack.c.b16 %v5824, %v5824
  %v5856 = vpack.c.b16 %v5825, %v5825
  %v5857 = vpack.c.b16 %v5826, %v5826
  %v5858 = vpack.c.b16 %v5827, %v5827
  %vm5890 = vcmask 519552
  %5891 = vst.msk [vmem:[#allocation5] sm:$0xf] %vm5890, %v5828
  %5892 = vst.msk [vmem:[#allocation5 + $0x8] sm:$0xf] %vm5890, %v5829
  %5893 = vst.msk [vmem:[#allocation5 + $0x10] sm:$0xf] %vm5890, %v5830
  %5894 = vst.msk [vmem:[#allocation5 + $0x18] sm:$0xf] %vm5890, %v5831
  %5895 = vst.msk [vmem:[#allocation5 + $0x20] sm:$0xf] %vm5890, %v5832
  %5896 = vst.msk [vmem:[#allocation5 + $0x28] sm:$0xf] %vm5890, %v5833
  %5897 = vst.msk [vmem:[#allocation5 + $0x30] sm:$0xf] %vm5890, %v5834
  %5898 = vst.msk [vmem:[#allocation5 + $0x38] sm:$0xf] %vm5890, %v5835
  %5899 = vst.msk [vmem:[#allocation5 + $0x40] sm:$0xf] %vm5890, %v5836
  %5900 = vst.msk [vmem:[#allocation5 + $0x48] sm:$0xf] %vm5890, %v5837
  %5901 = vst.msk [vmem:[#allocation5 + $0x50] sm:$0xf] %vm5890, %v5838
  %5902 = vst.msk [vmem:[#allocation5 + $0x58] sm:$0xf] %vm5890, %v5839
  %5903 = vst.msk [vmem:[#allocation5 + $0x60] sm:$0xf] %vm5890, %v5840
  %5904 = vst.msk [vmem:[#allocation5 + $0x68] sm:$0xf] %vm5890, %v5841
  %5905 = vst.msk [vmem:[#allocation5 + $0x70] sm:$0xf] %vm5890, %v5842
  %5906 = vst.msk [vmem:[#allocation5 + $0x78] sm:$0xf] %vm5890, %v5843
  %5907 = vst.msk [vmem:[#allocation5 + $0x80] sm:$0xf] %vm5890, %v5844
  %5908 = vst.msk [vmem:[#allocation5 + $0x88] sm:$0xf] %vm5890, %v5845
  %5909 = vst.msk [vmem:[#allocation5 + $0x90] sm:$0xf] %vm5890, %v5846
  %5910 = vst.msk [vmem:[#allocation5 + $0x98] sm:$0xf] %vm5890, %v5847
  %5911 = vst.msk [vmem:[#allocation5 + $0xa0] sm:$0xf] %vm5890, %v5848
  %5912 = vst.msk [vmem:[#allocation5 + $0xa8] sm:$0xf] %vm5890, %v5849
  %5913 = vst.msk [vmem:[#allocation5 + $0xb0] sm:$0xf] %vm5890, %v5850
  %5914 = vst.msk [vmem:[#allocation5 + $0xb8] sm:$0xf] %vm5890, %v5851
  %5915 = vst.msk [vmem:[#allocation5 + $0xc0] sm:$0xf] %vm5890, %v5852
  %5916 = vst.msk [vmem:[#allocation5 + $0xc8] sm:$0xf] %vm5890, %v5853
  %5917 = vst.msk [vmem:[#allocation5 + $0xd0] sm:$0xf] %vm5890, %v5854
  %5918 = vst.msk [vmem:[#allocation5 + $0xd8] sm:$0xf] %vm5890, %v5855
  %5919 = vst.msk [vmem:[#allocation5 + $0xe0] sm:$0xf] %vm5890, %v5856
  %5920 = vst.msk [vmem:[#allocation5 + $0xe8] sm:$0xf] %vm5890, %v5857
  %5921 = vst.msk [vmem:[#allocation5 + $0xf0] sm:$0xf] %vm5890, %v5858
  %v5922 = vld [vmem:[#allocation4 + $0x17] sm:$0xff]
  %v5923 = vld [vmem:[#allocation4 + $0x1f] sm:$0xff]
  %v5924 = vld [vmem:[#allocation4 + $0x27] sm:$0xff]
  %v5925 = vld [vmem:[#allocation4 + $0x2f] sm:$0xff]
  %v5926 = vld [vmem:[#allocation4 + $0x37] sm:$0xff]
  %v5927 = vld [vmem:[#allocation4 + $0x3f] sm:$0xff]
  %v5928 = vld [vmem:[#allocation4 + $0x47] sm:$0xff]
  %v5929 = vld [vmem:[#allocation4 + $0x4f] sm:$0xff]
  %v5930 = vld [vmem:[#allocation4 + $0x57] sm:$0xff]
  %v5931 = vld [vmem:[#allocation4 + $0x5f] sm:$0xff]
  %v5932 = vld [vmem:[#allocation4 + $0x67] sm:$0xff]
  %v5933 = vld [vmem:[#allocation4 + $0x6f] sm:$0xff]
  %v5934 = vld [vmem:[#allocation4 + $0x77] sm:$0xff]
  %v5935 = vld [vmem:[#allocation4 + $0x7f] sm:$0xff]
  %v5936 = vld [vmem:[#allocation4 + $0x87] sm:$0xff]
  %v5937 = vld [vmem:[#allocation4 + $0x8f] sm:$0xff]
  %v5938 = vld [vmem:[#allocation4 + $0x97] sm:$0xff]
  %v5939 = vld [vmem:[#allocation4 + $0x9f] sm:$0xff]
  %v5940 = vld [vmem:[#allocation4 + $0xa7] sm:$0xff]
  %v5941 = vld [vmem:[#allocation4 + $0xaf] sm:$0xff]
  %v5942 = vld [vmem:[#allocation4 + $0xb7] sm:$0xff]
  %v5943 = vld [vmem:[#allocation4 + $0xbf] sm:$0xff]
  %v5944 = vld [vmem:[#allocation4 + $0xc7] sm:$0xff]
  %v5945 = vld [vmem:[#allocation4 + $0xcf] sm:$0xff]
  %v5946 = vld [vmem:[#allocation4 + $0xd7] sm:$0xff]
  %v5947 = vld [vmem:[#allocation4 + $0xdf] sm:$0xff]
  %v5948 = vld [vmem:[#allocation4 + $0xe7] sm:$0xff]
  %v5949 = vld [vmem:[#allocation4 + $0xef] sm:$0xff]
  %v5950 = vld [vmem:[#allocation4 + $0xf7] sm:$0xff]
  %v5951 = vld [vmem:[#allocation4 + $0xff] sm:$0xff]
  %v5952 = vld [vmem:[#allocation4 + $0x107] sm:$0xff]
  %v5953 = vpack.c.bf16 %v5923, %v5922
  %v5954 = vpack.c.bf16 %v5925, %v5924
  %v5955 = vpack.c.bf16 %v5927, %v5926
  %v5956 = vpack.c.bf16 %v5929, %v5928
  %v5957 = vpack.c.bf16 %v5931, %v5930
  %v5958 = vpack.c.bf16 %v5933, %v5932
  %v5959 = vpack.c.bf16 %v5935, %v5934
  %v5960 = vpack.c.bf16 %v5937, %v5936
  %v5961 = vpack.c.bf16 %v5939, %v5938
  %v5962 = vpack.c.bf16 %v5941, %v5940
  %v5963 = vpack.c.bf16 %v5943, %v5942
  %v5964 = vpack.c.bf16 %v5945, %v5944
  %v5965 = vpack.c.bf16 %v5947, %v5946
  %v5966 = vpack.c.bf16 %v5949, %v5948
  %v5967 = vpack.c.bf16 %v5951, %v5950
  %v5968 = vpack.c.bf16 %v5952, %v5952
  %v5985 = vunpack.c.l.b16 %v5953
  %v5986 = vunpack.c.h.b16 %v5953
  %v5987 = vunpack.c.l.b16 %v5954
  %v5988 = vunpack.c.h.b16 %v5954
  %v5989 = vunpack.c.l.b16 %v5955
  %v5990 = vunpack.c.h.b16 %v5955
  %v5991 = vunpack.c.l.b16 %v5956
  %v5992 = vunpack.c.h.b16 %v5956
  %v5993 = vunpack.c.l.b16 %v5957
  %v5994 = vunpack.c.h.b16 %v5957
  %v5995 = vunpack.c.l.b16 %v5958
  %v5996 = vunpack.c.h.b16 %v5958
  %v5997 = vunpack.c.l.b16 %v5959
  %v5998 = vunpack.c.h.b16 %v5959
  %v5999 = vunpack.c.l.b16 %v5960
  %v6000 = vunpack.c.h.b16 %v5960
  %v6001 = vunpack.c.l.b16 %v5961
  %v6002 = vunpack.c.h.b16 %v5961
  %v6003 = vunpack.c.l.b16 %v5962
  %v6004 = vunpack.c.h.b16 %v5962
  %v6005 = vunpack.c.l.b16 %v5963
  %v6006 = vunpack.c.h.b16 %v5963
  %v6007 = vunpack.c.l.b16 %v5964
  %v6008 = vunpack.c.h.b16 %v5964
  %v6009 = vunpack.c.l.b16 %v5965
  %v6010 = vunpack.c.h.b16 %v5965
  %v6011 = vunpack.c.l.b16 %v5966
  %v6012 = vunpack.c.h.b16 %v5966
  %v6013 = vunpack.c.l.b16 %v5967
  %v6014 = vunpack.c.h.b16 %v5967
  %v6015 = vunpack.c.l.b16 %v5968
  %v6016 = vpack.c.b16 %v5985, %v5985
  %v6017 = vpack.c.b16 %v5986, %v5986
  %v6018 = vpack.c.b16 %v5987, %v5987
  %v6019 = vpack.c.b16 %v5988, %v5988
  %v6020 = vpack.c.b16 %v5989, %v5989
  %v6021 = vpack.c.b16 %v5990, %v5990
  %v6022 = vpack.c.b16 %v5991, %v5991
  %v6023 = vpack.c.b16 %v5992, %v5992
  %v6024 = vpack.c.b16 %v5993, %v5993
  %v6025 = vpack.c.b16 %v5994, %v5994
  %v6026 = vpack.c.b16 %v5995, %v5995
  %v6027 = vpack.c.b16 %v5996, %v5996
  %v6028 = vpack.c.b16 %v5997, %v5997
  %v6029 = vpack.c.b16 %v5998, %v5998
  %v6030 = vpack.c.b16 %v5999, %v5999
  %v6031 = vpack.c.b16 %v6000, %v6000
  %v6032 = vpack.c.b16 %v6001, %v6001
  %v6033 = vpack.c.b16 %v6002, %v6002
  %v6034 = vpack.c.b16 %v6003, %v6003
  %v6035 = vpack.c.b16 %v6004, %v6004
  %v6036 = vpack.c.b16 %v6005, %v6005
  %v6037 = vpack.c.b16 %v6006, %v6006
  %v6038 = vpack.c.b16 %v6007, %v6007
  %v6039 = vpack.c.b16 %v6008, %v6008
  %v6040 = vpack.c.b16 %v6009, %v6009
  %v6041 = vpack.c.b16 %v6010, %v6010
  %v6042 = vpack.c.b16 %v6011, %v6011
  %v6043 = vpack.c.b16 %v6012, %v6012
  %v6044 = vpack.c.b16 %v6013, %v6013
  %v6045 = vpack.c.b16 %v6014, %v6014
  %v6046 = vpack.c.b16 %v6015, %v6015
  %vm6078 = vcmask 650752
  %6079 = vst.msk [vmem:[#allocation5] sm:$0xf] %vm6078, %v6016
  %6080 = vst.msk [vmem:[#allocation5 + $0x8] sm:$0xf] %vm6078, %v6017
  %6081 = vst.msk [vmem:[#allocation5 + $0x10] sm:$0xf] %vm6078, %v6018
  %6082 = vst.msk [vmem:[#allocation5 + $0x18] sm:$0xf] %vm6078, %v6019
  %6083 = vst.msk [vmem:[#allocation5 + $0x20] sm:$0xf] %vm6078, %v6020
  %6084 = vst.msk [vmem:[#allocation5 + $0x28] sm:$0xf] %vm6078, %v6021
  %6085 = vst.msk [vmem:[#allocation5 + $0x30] sm:$0xf] %vm6078, %v6022
  %6086 = vst.msk [vmem:[#allocation5 + $0x38] sm:$0xf] %vm6078, %v6023
  %6087 = vst.msk [vmem:[#allocation5 + $0x40] sm:$0xf] %vm6078, %v6024
  %6088 = vst.msk [vmem:[#allocation5 + $0x48] sm:$0xf] %vm6078, %v6025
  %6089 = vst.msk [vmem:[#allocation5 + $0x50] sm:$0xf] %vm6078, %v6026
  %6090 = vst.msk [vmem:[#allocation5 + $0x58] sm:$0xf] %vm6078, %v6027
  %6091 = vst.msk [vmem:[#allocation5 + $0x60] sm:$0xf] %vm6078, %v6028
  %6092 = vst.msk [vmem:[#allocation5 + $0x68] sm:$0xf] %vm6078, %v6029
  %6093 = vst.msk [vmem:[#allocation5 + $0x70] sm:$0xf] %vm6078, %v6030
  %6094 = vst.msk [vmem:[#allocation5 + $0x78] sm:$0xf] %vm6078, %v6031
  %6095 = vst.msk [vmem:[#allocation5 + $0x80] sm:$0xf] %vm6078, %v6032
  %6096 = vst.msk [vmem:[#allocation5 + $0x88] sm:$0xf] %vm6078, %v6033
  %6097 = vst.msk [vmem:[#allocation5 + $0x90] sm:$0xf] %vm6078, %v6034
  %6098 = vst.msk [vmem:[#allocation5 + $0x98] sm:$0xf] %vm6078, %v6035
  %6099 = vst.msk [vmem:[#allocation5 + $0xa0] sm:$0xf] %vm6078, %v6036
  %6100 = vst.msk [vmem:[#allocation5 + $0xa8] sm:$0xf] %vm6078, %v6037
  %6101 = vst.msk [vmem:[#allocation5 + $0xb0] sm:$0xf] %vm6078, %v6038
  %6102 = vst.msk [vmem:[#allocation5 + $0xb8] sm:$0xf] %vm6078, %v6039
  %6103 = vst.msk [vmem:[#allocation5 + $0xc0] sm:$0xf] %vm6078, %v6040
  %6104 = vst.msk [vmem:[#allocation5 + $0xc8] sm:$0xf] %vm6078, %v6041
  %6105 = vst.msk [vmem:[#allocation5 + $0xd0] sm:$0xf] %vm6078, %v6042
  %6106 = vst.msk [vmem:[#allocation5 + $0xd8] sm:$0xf] %vm6078, %v6043
  %6107 = vst.msk [vmem:[#allocation5 + $0xe0] sm:$0xf] %vm6078, %v6044
  %6108 = vst.msk [vmem:[#allocation5 + $0xe8] sm:$0xf] %vm6078, %v6045
  %6109 = vst.msk [vmem:[#allocation5 + $0xf0] sm:$0xf] %vm6078, %v6046
  %v6110 = vld [vmem:[#allocation4 + $0x18] sm:$0xff]
  %v6111 = vld [vmem:[#allocation4 + $0x20] sm:$0xff]
  %v6112 = vld [vmem:[#allocation4 + $0x28] sm:$0xff]
  %v6113 = vld [vmem:[#allocation4 + $0x30] sm:$0xff]
  %v6114 = vld [vmem:[#allocation4 + $0x38] sm:$0xff]
  %v6115 = vld [vmem:[#allocation4 + $0x40] sm:$0xff]
  %v6116 = vld [vmem:[#allocation4 + $0x48] sm:$0xff]
  %v6117 = vld [vmem:[#allocation4 + $0x50] sm:$0xff]
  %v6118 = vld [vmem:[#allocation4 + $0x58] sm:$0xff]
  %v6119 = vld [vmem:[#allocation4 + $0x60] sm:$0xff]
  %v6120 = vld [vmem:[#allocation4 + $0x68] sm:$0xff]
  %v6121 = vld [vmem:[#allocation4 + $0x70] sm:$0xff]
  %v6122 = vld [vmem:[#allocation4 + $0x78] sm:$0xff]
  %v6123 = vld [vmem:[#allocation4 + $0x80] sm:$0xff]
  %v6124 = vld [vmem:[#allocation4 + $0x88] sm:$0xff]
  %v6125 = vld [vmem:[#allocation4 + $0x90] sm:$0xff]
  %v6126 = vld [vmem:[#allocation4 + $0x98] sm:$0xff]
  %v6127 = vld [vmem:[#allocation4 + $0xa0] sm:$0xff]
  %v6128 = vld [vmem:[#allocation4 + $0xa8] sm:$0xff]
  %v6129 = vld [vmem:[#allocation4 + $0xb0] sm:$0xff]
  %v6130 = vld [vmem:[#allocation4 + $0xb8] sm:$0xff]
  %v6131 = vld [vmem:[#allocation4 + $0xc0] sm:$0xff]
  %v6132 = vld [vmem:[#allocation4 + $0xc8] sm:$0xff]
  %v6133 = vld [vmem:[#allocation4 + $0xd0] sm:$0xff]
  %v6134 = vld [vmem:[#allocation4 + $0xd8] sm:$0xff]
  %v6135 = vld [vmem:[#allocation4 + $0xe0] sm:$0xff]
  %v6136 = vld [vmem:[#allocation4 + $0xe8] sm:$0xff]
  %v6137 = vld [vmem:[#allocation4 + $0xf0] sm:$0xff]
  %v6138 = vld [vmem:[#allocation4 + $0xf8] sm:$0xff]
  %v6139 = vld [vmem:[#allocation4 + $0x100] sm:$0xff]
  %v6140 = vld [vmem:[#allocation4 + $0x108] sm:$0xff]
  %v6141 = vpack.c.bf16 %v6111, %v6110
  %v6142 = vpack.c.bf16 %v6113, %v6112
  %v6143 = vpack.c.bf16 %v6115, %v6114
  %v6144 = vpack.c.bf16 %v6117, %v6116
  %v6145 = vpack.c.bf16 %v6119, %v6118
  %v6146 = vpack.c.bf16 %v6121, %v6120
  %v6147 = vpack.c.bf16 %v6123, %v6122
  %v6148 = vpack.c.bf16 %v6125, %v6124
  %v6149 = vpack.c.bf16 %v6127, %v6126
  %v6150 = vpack.c.bf16 %v6129, %v6128
  %v6151 = vpack.c.bf16 %v6131, %v6130
  %v6152 = vpack.c.bf16 %v6133, %v6132
  %v6153 = vpack.c.bf16 %v6135, %v6134
  %v6154 = vpack.c.bf16 %v6137, %v6136
  %v6155 = vpack.c.bf16 %v6139, %v6138
  %v6156 = vpack.c.bf16 %v6140, %v6140
  %v6173 = vunpack.c.l.b16 %v6141
  %v6174 = vunpack.c.h.b16 %v6141
  %v6175 = vunpack.c.l.b16 %v6142
  %v6176 = vunpack.c.h.b16 %v6142
  %v6177 = vunpack.c.l.b16 %v6143
  %v6178 = vunpack.c.h.b16 %v6143
  %v6179 = vunpack.c.l.b16 %v6144
  %v6180 = vunpack.c.h.b16 %v6144
  %v6181 = vunpack.c.l.b16 %v6145
  %v6182 = vunpack.c.h.b16 %v6145
  %v6183 = vunpack.c.l.b16 %v6146
  %v6184 = vunpack.c.h.b16 %v6146
  %v6185 = vunpack.c.l.b16 %v6147
  %v6186 = vunpack.c.h.b16 %v6147
  %v6187 = vunpack.c.l.b16 %v6148
  %v6188 = vunpack.c.h.b16 %v6148
  %v6189 = vunpack.c.l.b16 %v6149
  %v6190 = vunpack.c.h.b16 %v6149
  %v6191 = vunpack.c.l.b16 %v6150
  %v6192 = vunpack.c.h.b16 %v6150
  %v6193 = vunpack.c.l.b16 %v6151
  %v6194 = vunpack.c.h.b16 %v6151
  %v6195 = vunpack.c.l.b16 %v6152
  %v6196 = vunpack.c.h.b16 %v6152
  %v6197 = vunpack.c.l.b16 %v6153
  %v6198 = vunpack.c.h.b16 %v6153
  %v6199 = vunpack.c.l.b16 %v6154
  %v6200 = vunpack.c.h.b16 %v6154
  %v6201 = vunpack.c.l.b16 %v6155
  %v6202 = vunpack.c.h.b16 %v6155
  %v6203 = vunpack.c.l.b16 %v6156
  %v6204 = vpack.c.b16 %v6173, %v6173
  %v6205 = vpack.c.b16 %v6174, %v6174
  %v6206 = vpack.c.b16 %v6175, %v6175
  %v6207 = vpack.c.b16 %v6176, %v6176
  %v6208 = vpack.c.b16 %v6177, %v6177
  %v6209 = vpack.c.b16 %v6178, %v6178
  %v6210 = vpack.c.b16 %v6179, %v6179
  %v6211 = vpack.c.b16 %v6180, %v6180
  %v6212 = vpack.c.b16 %v6181, %v6181
  %v6213 = vpack.c.b16 %v6182, %v6182
  %v6214 = vpack.c.b16 %v6183, %v6183
  %v6215 = vpack.c.b16 %v6184, %v6184
  %v6216 = vpack.c.b16 %v6185, %v6185
  %v6217 = vpack.c.b16 %v6186, %v6186
  %v6218 = vpack.c.b16 %v6187, %v6187
  %v6219 = vpack.c.b16 %v6188, %v6188
  %v6220 = vpack.c.b16 %v6189, %v6189
  %v6221 = vpack.c.b16 %v6190, %v6190
  %v6222 = vpack.c.b16 %v6191, %v6191
  %v6223 = vpack.c.b16 %v6192, %v6192
  %v6224 = vpack.c.b16 %v6193, %v6193
  %v6225 = vpack.c.b16 %v6194, %v6194
  %v6226 = vpack.c.b16 %v6195, %v6195
  %v6227 = vpack.c.b16 %v6196, %v6196
  %v6228 = vpack.c.b16 %v6197, %v6197
  %v6229 = vpack.c.b16 %v6198, %v6198
  %v6230 = vpack.c.b16 %v6199, %v6199
  %v6231 = vpack.c.b16 %v6200, %v6200
  %v6232 = vpack.c.b16 %v6201, %v6201
  %v6233 = vpack.c.b16 %v6202, %v6202
  %v6234 = vpack.c.b16 %v6203, %v6203
  %vm6266 = vcmask 781952
  %6267 = vst.msk [vmem:[#allocation5] sm:$0xf] %vm6266, %v6204
  %6268 = vst.msk [vmem:[#allocation5 + $0x8] sm:$0xf] %vm6266, %v6205
  %6269 = vst.msk [vmem:[#allocation5 + $0x10] sm:$0xf] %vm6266, %v6206
  %6270 = vst.msk [vmem:[#allocation5 + $0x18] sm:$0xf] %vm6266, %v6207
  %6271 = vst.msk [vmem:[#allocation5 + $0x20] sm:$0xf] %vm6266, %v6208
  %6272 = vst.msk [vmem:[#allocation5 + $0x28] sm:$0xf] %vm6266, %v6209
  %6273 = vst.msk [vmem:[#allocation5 + $0x30] sm:$0xf] %vm6266, %v6210
  %6274 = vst.msk [vmem:[#allocation5 + $0x38] sm:$0xf] %vm6266, %v6211
  %6275 = vst.msk [vmem:[#allocation5 + $0x40] sm:$0xf] %vm6266, %v6212
  %6276 = vst.msk [vmem:[#allocation5 + $0x48] sm:$0xf] %vm6266, %v6213
  %6277 = vst.msk [vmem:[#allocation5 + $0x50] sm:$0xf] %vm6266, %v6214
  %6278 = vst.msk [vmem:[#allocation5 + $0x58] sm:$0xf] %vm6266, %v6215
  %6279 = vst.msk [vmem:[#allocation5 + $0x60] sm:$0xf] %vm6266, %v6216
  %6280 = vst.msk [vmem:[#allocation5 + $0x68] sm:$0xf] %vm6266, %v6217
  %6281 = vst.msk [vmem:[#allocation5 + $0x70] sm:$0xf] %vm6266, %v6218
  %6282 = vst.msk [vmem:[#allocation5 + $0x78] sm:$0xf] %vm6266, %v6219
  %6283 = vst.msk [vmem:[#allocation5 + $0x80] sm:$0xf] %vm6266, %v6220
  %6284 = vst.msk [vmem:[#allocation5 + $0x88] sm:$0xf] %vm6266, %v6221
  %6285 = vst.msk [vmem:[#allocation5 + $0x90] sm:$0xf] %vm6266, %v6222
  %6286 = vst.msk [vmem:[#allocation5 + $0x98] sm:$0xf] %vm6266, %v6223
  %6287 = vst.msk [vmem:[#allocation5 + $0xa0] sm:$0xf] %vm6266, %v6224
  %6288 = vst.msk [vmem:[#allocation5 + $0xa8] sm:$0xf] %vm6266, %v6225
  %6289 = vst.msk [vmem:[#allocation5 + $0xb0] sm:$0xf] %vm6266, %v6226
  %6290 = vst.msk [vmem:[#allocation5 + $0xb8] sm:$0xf] %vm6266, %v6227
  %6291 = vst.msk [vmem:[#allocation5 + $0xc0] sm:$0xf] %vm6266, %v6228
  %6292 = vst.msk [vmem:[#allocation5 + $0xc8] sm:$0xf] %vm6266, %v6229
  %6293 = vst.msk [vmem:[#allocation5 + $0xd0] sm:$0xf] %vm6266, %v6230
  %6294 = vst.msk [vmem:[#allocation5 + $0xd8] sm:$0xf] %vm6266, %v6231
  %6295 = vst.msk [vmem:[#allocation5 + $0xe0] sm:$0xf] %vm6266, %v6232
  %6296 = vst.msk [vmem:[#allocation5 + $0xe8] sm:$0xf] %vm6266, %v6233
  %6297 = vst.msk [vmem:[#allocation5 + $0xf0] sm:$0xf] %vm6266, %v6234
  %v6298 = vld [vmem:[#allocation4 + $0x19] sm:$0xff]
  %v6299 = vld [vmem:[#allocation4 + $0x21] sm:$0xff]
  %v6300 = vld [vmem:[#allocation4 + $0x29] sm:$0xff]
  %v6301 = vld [vmem:[#allocation4 + $0x31] sm:$0xff]
  %v6302 = vld [vmem:[#allocation4 + $0x39] sm:$0xff]
  %v6303 = vld [vmem:[#allocation4 + $0x41] sm:$0xff]
  %v6304 = vld [vmem:[#allocation4 + $0x49] sm:$0xff]
  %v6305 = vld [vmem:[#allocation4 + $0x51] sm:$0xff]
  %v6306 = vld [vmem:[#allocation4 + $0x59] sm:$0xff]
  %v6307 = vld [vmem:[#allocation4 + $0x61] sm:$0xff]
  %v6308 = vld [vmem:[#allocation4 + $0x69] sm:$0xff]
  %v6309 = vld [vmem:[#allocation4 + $0x71] sm:$0xff]
  %v6310 = vld [vmem:[#allocation4 + $0x79] sm:$0xff]
  %v6311 = vld [vmem:[#allocation4 + $0x81] sm:$0xff]
  %v6312 = vld [vmem:[#allocation4 + $0x89] sm:$0xff]
  %v6313 = vld [vmem:[#allocation4 + $0x91] sm:$0xff]
  %v6314 = vld [vmem:[#allocation4 + $0x99] sm:$0xff]
  %v6315 = vld [vmem:[#allocation4 + $0xa1] sm:$0xff]
  %v6316 = vld [vmem:[#allocation4 + $0xa9] sm:$0xff]
  %v6317 = vld [vmem:[#allocation4 + $0xb1] sm:$0xff]
  %v6318 = vld [vmem:[#allocation4 + $0xb9] sm:$0xff]
  %v6319 = vld [vmem:[#allocation4 + $0xc1] sm:$0xff]
  %v6320 = vld [vmem:[#allocation4 + $0xc9] sm:$0xff]
  %v6321 = vld [vmem:[#allocation4 + $0xd1] sm:$0xff]
  %v6322 = vld [vmem:[#allocation4 + $0xd9] sm:$0xff]
  %v6323 = vld [vmem:[#allocation4 + $0xe1] sm:$0xff]
  %v6324 = vld [vmem:[#allocation4 + $0xe9] sm:$0xff]
  %v6325 = vld [vmem:[#allocation4 + $0xf1] sm:$0xff]
  %v6326 = vld [vmem:[#allocation4 + $0xf9] sm:$0xff]
  %v6327 = vld [vmem:[#allocation4 + $0x101] sm:$0xff]
  %v6328 = vld [vmem:[#allocation4 + $0x109] sm:$0xff]
  %v6329 = vpack.c.bf16 %v6299, %v6298
  %v6330 = vpack.c.bf16 %v6301, %v6300
  %v6331 = vpack.c.bf16 %v6303, %v6302
  %v6332 = vpack.c.bf16 %v6305, %v6304
  %v6333 = vpack.c.bf16 %v6307, %v6306
  %v6334 = vpack.c.bf16 %v6309, %v6308
  %v6335 = vpack.c.bf16 %v6311, %v6310
  %v6336 = vpack.c.bf16 %v6313, %v6312
  %v6337 = vpack.c.bf16 %v6315, %v6314
  %v6338 = vpack.c.bf16 %v6317, %v6316
  %v6339 = vpack.c.bf16 %v6319, %v6318
  %v6340 = vpack.c.bf16 %v6321, %v6320
  %v6341 = vpack.c.bf16 %v6323, %v6322
  %v6342 = vpack.c.bf16 %v6325, %v6324
  %v6343 = vpack.c.bf16 %v6327, %v6326
  %v6344 = vpack.c.bf16 %v6328, %v6328
  %v6361 = vunpack.c.l.b16 %v6329
  %v6362 = vunpack.c.h.b16 %v6329
  %v6363 = vunpack.c.l.b16 %v6330
  %v6364 = vunpack.c.h.b16 %v6330
  %v6365 = vunpack.c.l.b16 %v6331
  %v6366 = vunpack.c.h.b16 %v6331
  %v6367 = vunpack.c.l.b16 %v6332
  %v6368 = vunpack.c.h.b16 %v6332
  %v6369 = vunpack.c.l.b16 %v6333
  %v6370 = vunpack.c.h.b16 %v6333
  %v6371 = vunpack.c.l.b16 %v6334
  %v6372 = vunpack.c.h.b16 %v6334
  %v6373 = vunpack.c.l.b16 %v6335
  %v6374 = vunpack.c.h.b16 %v6335
  %v6375 = vunpack.c.l.b16 %v6336
  %v6376 = vunpack.c.h.b16 %v6336
  %v6377 = vunpack.c.l.b16 %v6337
  %v6378 = vunpack.c.h.b16 %v6337
  %v6379 = vunpack.c.l.b16 %v6338
  %v6380 = vunpack.c.h.b16 %v6338
  %v6381 = vunpack.c.l.b16 %v6339
  %v6382 = vunpack.c.h.b16 %v6339
  %v6383 = vunpack.c.l.b16 %v6340
  %v6384 = vunpack.c.h.b16 %v6340
  %v6385 = vunpack.c.l.b16 %v6341
  %v6386 = vunpack.c.h.b16 %v6341
  %v6387 = vunpack.c.l.b16 %v6342
  %v6388 = vunpack.c.h.b16 %v6342
  %v6389 = vunpack.c.l.b16 %v6343
  %v6390 = vunpack.c.h.b16 %v6343
  %v6391 = vunpack.c.l.b16 %v6344
  %v6392 = vpack.c.b16 %v6361, %v6361
  %v6393 = vpack.c.b16 %v6362, %v6362
  %v6394 = vpack.c.b16 %v6363, %v6363
  %v6395 = vpack.c.b16 %v6364, %v6364
  %v6396 = vpack.c.b16 %v6365, %v6365
  %v6397 = vpack.c.b16 %v6366, %v6366
  %v6398 = vpack.c.b16 %v6367, %v6367
  %v6399 = vpack.c.b16 %v6368, %v6368
  %v6400 = vpack.c.b16 %v6369, %v6369
  %v6401 = vpack.c.b16 %v6370, %v6370
  %v6402 = vpack.c.b16 %v6371, %v6371
  %v6403 = vpack.c.b16 %v6372, %v6372
  %v6404 = vpack.c.b16 %v6373, %v6373
  %v6405 = vpack.c.b16 %v6374, %v6374
  %v6406 = vpack.c.b16 %v6375, %v6375
  %v6407 = vpack.c.b16 %v6376, %v6376
  %v6408 = vpack.c.b16 %v6377, %v6377
  %v6409 = vpack.c.b16 %v6378, %v6378
  %v6410 = vpack.c.b16 %v6379, %v6379
  %v6411 = vpack.c.b16 %v6380, %v6380
  %v6412 = vpack.c.b16 %v6381, %v6381
  %v6413 = vpack.c.b16 %v6382, %v6382
  %v6414 = vpack.c.b16 %v6383, %v6383
  %v6415 = vpack.c.b16 %v6384, %v6384
  %v6416 = vpack.c.b16 %v6385, %v6385
  %v6417 = vpack.c.b16 %v6386, %v6386
  %v6418 = vpack.c.b16 %v6387, %v6387
  %v6419 = vpack.c.b16 %v6388, %v6388
  %v6420 = vpack.c.b16 %v6389, %v6389
  %v6421 = vpack.c.b16 %v6390, %v6390
  %v6422 = vpack.c.b16 %v6391, %v6391
  %vm6454 = vcmask 913152
  %6455 = vst.msk [vmem:[#allocation5] sm:$0xf] %vm6454, %v6392
  %6456 = vst.msk [vmem:[#allocation5 + $0x8] sm:$0xf] %vm6454, %v6393
  %6457 = vst.msk [vmem:[#allocation5 + $0x10] sm:$0xf] %vm6454, %v6394
  %6458 = vst.msk [vmem:[#allocation5 + $0x18] sm:$0xf] %vm6454, %v6395
  %6459 = vst.msk [vmem:[#allocation5 + $0x20] sm:$0xf] %vm6454, %v6396
  %6460 = vst.msk [vmem:[#allocation5 + $0x28] sm:$0xf] %vm6454, %v6397
  %6461 = vst.msk [vmem:[#allocation5 + $0x30] sm:$0xf] %vm6454, %v6398
  %6462 = vst.msk [vmem:[#allocation5 + $0x38] sm:$0xf] %vm6454, %v6399
  %6463 = vst.msk [vmem:[#allocation5 + $0x40] sm:$0xf] %vm6454, %v6400
  %6464 = vst.msk [vmem:[#allocation5 + $0x48] sm:$0xf] %vm6454, %v6401
  %6465 = vst.msk [vmem:[#allocation5 + $0x50] sm:$0xf] %vm6454, %v6402
  %6466 = vst.msk [vmem:[#allocation5 + $0x58] sm:$0xf] %vm6454, %v6403
  %6467 = vst.msk [vmem:[#allocation5 + $0x60] sm:$0xf] %vm6454, %v6404
  %6468 = vst.msk [vmem:[#allocation5 + $0x68] sm:$0xf] %vm6454, %v6405
  %6469 = vst.msk [vmem:[#allocation5 + $0x70] sm:$0xf] %vm6454, %v6406
  %6470 = vst.msk [vmem:[#allocation5 + $0x78] sm:$0xf] %vm6454, %v6407
  %6471 = vst.msk [vmem:[#allocation5 + $0x80] sm:$0xf] %vm6454, %v6408
  %6472 = vst.msk [vmem:[#allocation5 + $0x88] sm:$0xf] %vm6454, %v6409
  %6473 = vst.msk [vmem:[#allocation5 + $0x90] sm:$0xf] %vm6454, %v6410
  %6474 = vst.msk [vmem:[#allocation5 + $0x98] sm:$0xf] %vm6454, %v6411
  %6475 = vst.msk [vmem:[#allocation5 + $0xa0] sm:$0xf] %vm6454, %v6412
  %6476 = vst.msk [vmem:[#allocation5 + $0xa8] sm:$0xf] %vm6454, %v6413
  %6477 = vst.msk [vmem:[#allocation5 + $0xb0] sm:$0xf] %vm6454, %v6414
  %6478 = vst.msk [vmem:[#allocation5 + $0xb8] sm:$0xf] %vm6454, %v6415
  %6479 = vst.msk [vmem:[#allocation5 + $0xc0] sm:$0xf] %vm6454, %v6416
  %6480 = vst.msk [vmem:[#allocation5 + $0xc8] sm:$0xf] %vm6454, %v6417
  %6481 = vst.msk [vmem:[#allocation5 + $0xd0] sm:$0xf] %vm6454, %v6418
  %6482 = vst.msk [vmem:[#allocation5 + $0xd8] sm:$0xf] %vm6454, %v6419
  %6483 = vst.msk [vmem:[#allocation5 + $0xe0] sm:$0xf] %vm6454, %v6420
  %6484 = vst.msk [vmem:[#allocation5 + $0xe8] sm:$0xf] %vm6454, %v6421
  %6485 = vst.msk [vmem:[#allocation5 + $0xf0] sm:$0xf] %vm6454, %v6422
  %v6486 = vld [vmem:[#allocation4 + $0x1a] sm:$0xff]
  %v6487 = vld [vmem:[#allocation4 + $0x22] sm:$0xff]
  %v6488 = vld [vmem:[#allocation4 + $0x2a] sm:$0xff]
  %v6489 = vld [vmem:[#allocation4 + $0x32] sm:$0xff]
  %v6490 = vld [vmem:[#allocation4 + $0x3a] sm:$0xff]
  %v6491 = vld [vmem:[#allocation4 + $0x42] sm:$0xff]
  %v6492 = vld [vmem:[#allocation4 + $0x4a] sm:$0xff]
  %v6493 = vld [vmem:[#allocation4 + $0x52] sm:$0xff]
  %v6494 = vld [vmem:[#allocation4 + $0x5a] sm:$0xff]
  %v6495 = vld [vmem:[#allocation4 + $0x62] sm:$0xff]
  %v6496 = vld [vmem:[#allocation4 + $0x6a] sm:$0xff]
  %v6497 = vld [vmem:[#allocation4 + $0x72] sm:$0xff]
  %v6498 = vld [vmem:[#allocation4 + $0x7a] sm:$0xff]
  %v6499 = vld [vmem:[#allocation4 + $0x82] sm:$0xff]
  %v6500 = vld [vmem:[#allocation4 + $0x8a] sm:$0xff]
  %v6501 = vld [vmem:[#allocation4 + $0x92] sm:$0xff]
  %v6502 = vld [vmem:[#allocation4 + $0x9a] sm:$0xff]
  %v6503 = vld [vmem:[#allocation4 + $0xa2] sm:$0xff]
  %v6504 = vld [vmem:[#allocation4 + $0xaa] sm:$0xff]
  %v6505 = vld [vmem:[#allocation4 + $0xb2] sm:$0xff]
  %v6506 = vld [vmem:[#allocation4 + $0xba] sm:$0xff]
  %v6507 = vld [vmem:[#allocation4 + $0xc2] sm:$0xff]
  %v6508 = vld [vmem:[#allocation4 + $0xca] sm:$0xff]
  %v6509 = vld [vmem:[#allocation4 + $0xd2] sm:$0xff]
  %v6510 = vld [vmem:[#allocation4 + $0xda] sm:$0xff]
  %v6511 = vld [vmem:[#allocation4 + $0xe2] sm:$0xff]
  %v6512 = vld [vmem:[#allocation4 + $0xea] sm:$0xff]
  %v6513 = vld [vmem:[#allocation4 + $0xf2] sm:$0xff]
  %v6514 = vld [vmem:[#allocation4 + $0xfa] sm:$0xff]
  %v6515 = vld [vmem:[#allocation4 + $0x102] sm:$0xff]
  %v6516 = vld [vmem:[#allocation4 + $0x10a] sm:$0xff]
  %v6517 = vpack.c.bf16 %v6487, %v6486
  %v6518 = vpack.c.bf16 %v6489, %v6488
  %v6519 = vpack.c.bf16 %v6491, %v6490
  %v6520 = vpack.c.bf16 %v6493, %v6492
  %v6521 = vpack.c.bf16 %v6495, %v6494
  %v6522 = vpack.c.bf16 %v6497, %v6496
  %v6523 = vpack.c.bf16 %v6499, %v6498
  %v6524 = vpack.c.bf16 %v6501, %v6500
  %v6525 = vpack.c.bf16 %v6503, %v6502
  %v6526 = vpack.c.bf16 %v6505, %v6504
  %v6527 = vpack.c.bf16 %v6507, %v6506
  %v6528 = vpack.c.bf16 %v6509, %v6508
  %v6529 = vpack.c.bf16 %v6511, %v6510
  %v6530 = vpack.c.bf16 %v6513, %v6512
  %v6531 = vpack.c.bf16 %v6515, %v6514
  %v6532 = vpack.c.bf16 %v6516, %v6516
  %v6549 = vunpack.c.l.b16 %v6517
  %v6550 = vunpack.c.h.b16 %v6517
  %v6551 = vunpack.c.l.b16 %v6518
  %v6552 = vunpack.c.h.b16 %v6518
  %v6553 = vunpack.c.l.b16 %v6519
  %v6554 = vunpack.c.h.b16 %v6519
  %v6555 = vunpack.c.l.b16 %v6520
  %v6556 = vunpack.c.h.b16 %v6520
  %v6557 = vunpack.c.l.b16 %v6521
  %v6558 = vunpack.c.h.b16 %v6521
  %v6559 = vunpack.c.l.b16 %v6522
  %v6560 = vunpack.c.h.b16 %v6522
  %v6561 = vunpack.c.l.b16 %v6523
  %v6562 = vunpack.c.h.b16 %v6523
  %v6563 = vunpack.c.l.b16 %v6524
  %v6564 = vunpack.c.h.b16 %v6524
  %v6565 = vunpack.c.l.b16 %v6525
  %v6566 = vunpack.c.h.b16 %v6525
  %v6567 = vunpack.c.l.b16 %v6526
  %v6568 = vunpack.c.h.b16 %v6526
  %v6569 = vunpack.c.l.b16 %v6527
  %v6570 = vunpack.c.h.b16 %v6527
  %v6571 = vunpack.c.l.b16 %v6528
  %v6572 = vunpack.c.h.b16 %v6528
  %v6573 = vunpack.c.l.b16 %v6529
  %v6574 = vunpack.c.h.b16 %v6529
  %v6575 = vunpack.c.l.b16 %v6530
  %v6576 = vunpack.c.h.b16 %v6530
  %v6577 = vunpack.c.l.b16 %v6531
  %v6578 = vunpack.c.h.b16 %v6531
  %v6579 = vunpack.c.l.b16 %v6532
  %v6580 = vpack.c.b16 %v6549, %v6549
  %v6581 = vpack.c.b16 %v6550, %v6550
  %v6582 = vpack.c.b16 %v6551, %v6551
  %v6583 = vpack.c.b16 %v6552, %v6552
  %v6584 = vpack.c.b16 %v6553, %v6553
  %v6585 = vpack.c.b16 %v6554, %v6554
  %v6586 = vpack.c.b16 %v6555, %v6555
  %v6587 = vpack.c.b16 %v6556, %v6556
  %v6588 = vpack.c.b16 %v6557, %v6557
  %v6589 = vpack.c.b16 %v6558, %v6558
  %v6590 = vpack.c.b16 %v6559, %v6559
  %v6591 = vpack.c.b16 %v6560, %v6560
  %v6592 = vpack.c.b16 %v6561, %v6561
  %v6593 = vpack.c.b16 %v6562, %v6562
  %v6594 = vpack.c.b16 %v6563, %v6563
  %v6595 = vpack.c.b16 %v6564, %v6564
  %v6596 = vpack.c.b16 %v6565, %v6565
  %v6597 = vpack.c.b16 %v6566, %v6566
  %v6598 = vpack.c.b16 %v6567, %v6567
  %v6599 = vpack.c.b16 %v6568, %v6568
  %v6600 = vpack.c.b16 %v6569, %v6569
  %v6601 = vpack.c.b16 %v6570, %v6570
  %v6602 = vpack.c.b16 %v6571, %v6571
  %v6603 = vpack.c.b16 %v6572, %v6572
  %v6604 = vpack.c.b16 %v6573, %v6573
  %v6605 = vpack.c.b16 %v6574, %v6574
  %v6606 = vpack.c.b16 %v6575, %v6575
  %v6607 = vpack.c.b16 %v6576, %v6576
  %v6608 = vpack.c.b16 %v6577, %v6577
  %v6609 = vpack.c.b16 %v6578, %v6578
  %v6610 = vpack.c.b16 %v6579, %v6579
  %vm6642 = vcmask 1044352
  %6643 = vst.msk [vmem:[#allocation5] sm:$0xf] %vm6642, %v6580
  %6644 = vst.msk [vmem:[#allocation5 + $0x8] sm:$0xf] %vm6642, %v6581
  %6645 = vst.msk [vmem:[#allocation5 + $0x10] sm:$0xf] %vm6642, %v6582
  %6646 = vst.msk [vmem:[#allocation5 + $0x18] sm:$0xf] %vm6642, %v6583
  %6647 = vst.msk [vmem:[#allocation5 + $0x20] sm:$0xf] %vm6642, %v6584
  %6648 = vst.msk [vmem:[#allocation5 + $0x28] sm:$0xf] %vm6642, %v6585
  %6649 = vst.msk [vmem:[#allocation5 + $0x30] sm:$0xf] %vm6642, %v6586
  %6650 = vst.msk [vmem:[#allocation5 + $0x38] sm:$0xf] %vm6642, %v6587
  %6651 = vst.msk [vmem:[#allocation5 + $0x40] sm:$0xf] %vm6642, %v6588
  %6652 = vst.msk [vmem:[#allocation5 + $0x48] sm:$0xf] %vm6642, %v6589
  %6653 = vst.msk [vmem:[#allocation5 + $0x50] sm:$0xf] %vm6642, %v6590
  %6654 = vst.msk [vmem:[#allocation5 + $0x58] sm:$0xf] %vm6642, %v6591
  %6655 = vst.msk [vmem:[#allocation5 + $0x60] sm:$0xf] %vm6642, %v6592
  %6656 = vst.msk [vmem:[#allocation5 + $0x68] sm:$0xf] %vm6642, %v6593
  %6657 = vst.msk [vmem:[#allocation5 + $0x70] sm:$0xf] %vm6642, %v6594
  %6658 = vst.msk [vmem:[#allocation5 + $0x78] sm:$0xf] %vm6642, %v6595
  %6659 = vst.msk [vmem:[#allocation5 + $0x80] sm:$0xf] %vm6642, %v6596
  %6660 = vst.msk [vmem:[#allocation5 + $0x88] sm:$0xf] %vm6642, %v6597
  %6661 = vst.msk [vmem:[#allocation5 + $0x90] sm:$0xf] %vm6642, %v6598
  %6662 = vst.msk [vmem:[#allocation5 + $0x98] sm:$0xf] %vm6642, %v6599
  %6663 = vst.msk [vmem:[#allocation5 + $0xa0] sm:$0xf] %vm6642, %v6600
  %6664 = vst.msk [vmem:[#allocation5 + $0xa8] sm:$0xf] %vm6642, %v6601
  %6665 = vst.msk [vmem:[#allocation5 + $0xb0] sm:$0xf] %vm6642, %v6602
  %6666 = vst.msk [vmem:[#allocation5 + $0xb8] sm:$0xf] %vm6642, %v6603
  %6667 = vst.msk [vmem:[#allocation5 + $0xc0] sm:$0xf] %vm6642, %v6604
  %6668 = vst.msk [vmem:[#allocation5 + $0xc8] sm:$0xf] %vm6642, %v6605
  %6669 = vst.msk [vmem:[#allocation5 + $0xd0] sm:$0xf] %vm6642, %v6606
  %6670 = vst.msk [vmem:[#allocation5 + $0xd8] sm:$0xf] %vm6642, %v6607
  %6671 = vst.msk [vmem:[#allocation5 + $0xe0] sm:$0xf] %vm6642, %v6608
  %6672 = vst.msk [vmem:[#allocation5 + $0xe8] sm:$0xf] %vm6642, %v6609
  %6673 = vst.msk [vmem:[#allocation5 + $0xf0] sm:$0xf] %vm6642, %v6610
  %v6674 = vld [vmem:[#allocation4 + $0x27] sm:$0xff]
  %v6675 = vld [vmem:[#allocation4 + $0x2f] sm:$0xff]
  %v6676 = vld [vmem:[#allocation4 + $0x37] sm:$0xff]
  %v6677 = vld [vmem:[#allocation4 + $0x3f] sm:$0xff]
  %v6678 = vld [vmem:[#allocation4 + $0x47] sm:$0xff]
  %v6679 = vld [vmem:[#allocation4 + $0x4f] sm:$0xff]
  %v6680 = vld [vmem:[#allocation4 + $0x57] sm:$0xff]
  %v6681 = vld [vmem:[#allocation4 + $0x5f] sm:$0xff]
  %v6682 = vld [vmem:[#allocation4 + $0x67] sm:$0xff]
  %v6683 = vld [vmem:[#allocation4 + $0x6f] sm:$0xff]
  %v6684 = vld [vmem:[#allocation4 + $0x77] sm:$0xff]
  %v6685 = vld [vmem:[#allocation4 + $0x7f] sm:$0xff]
  %v6686 = vld [vmem:[#allocation4 + $0x87] sm:$0xff]
  %v6687 = vld [vmem:[#allocation4 + $0x8f] sm:$0xff]
  %v6688 = vld [vmem:[#allocation4 + $0x97] sm:$0xff]
  %v6689 = vld [vmem:[#allocation4 + $0x9f] sm:$0xff]
  %v6690 = vld [vmem:[#allocation4 + $0xa7] sm:$0xff]
  %v6691 = vld [vmem:[#allocation4 + $0xaf] sm:$0xff]
  %v6692 = vld [vmem:[#allocation4 + $0xb7] sm:$0xff]
  %v6693 = vld [vmem:[#allocation4 + $0xbf] sm:$0xff]
  %v6694 = vld [vmem:[#allocation4 + $0xc7] sm:$0xff]
  %v6695 = vld [vmem:[#allocation4 + $0xcf] sm:$0xff]
  %v6696 = vld [vmem:[#allocation4 + $0xd7] sm:$0xff]
  %v6697 = vld [vmem:[#allocation4 + $0xdf] sm:$0xff]
  %v6698 = vld [vmem:[#allocation4 + $0xe7] sm:$0xff]
  %v6699 = vld [vmem:[#allocation4 + $0xef] sm:$0xff]
  %v6700 = vld [vmem:[#allocation4 + $0xf7] sm:$0xff]
  %v6701 = vld [vmem:[#allocation4 + $0xff] sm:$0xff]
  %v6702 = vld [vmem:[#allocation4 + $0x107] sm:$0xff]
  %v6703 = vld [vmem:[#allocation4 + $0x10f] sm:$0xff]
  %v6704 = vld [vmem:[#allocation4 + $0x117] sm:$0xff]
  %v6705 = vpack.c.bf16 %v6675, %v6674
  %v6706 = vpack.c.bf16 %v6677, %v6676
  %v6707 = vpack.c.bf16 %v6679, %v6678
  %v6708 = vpack.c.bf16 %v6681, %v6680
  %v6709 = vpack.c.bf16 %v6683, %v6682
  %v6710 = vpack.c.bf16 %v6685, %v6684
  %v6711 = vpack.c.bf16 %v6687, %v6686
  %v6712 = vpack.c.bf16 %v6689, %v6688
  %v6713 = vpack.c.bf16 %v6691, %v6690
  %v6714 = vpack.c.bf16 %v6693, %v6692
  %v6715 = vpack.c.bf16 %v6695, %v6694
  %v6716 = vpack.c.bf16 %v6697, %v6696
  %v6717 = vpack.c.bf16 %v6699, %v6698
  %v6718 = vpack.c.bf16 %v6701, %v6700
  %v6719 = vpack.c.bf16 %v6703, %v6702
  %v6720 = vpack.c.bf16 %v6704, %v6704
  %v6737 = vunpack.c.l.b16 %v6705
  %v6738 = vunpack.c.h.b16 %v6705
  %v6739 = vunpack.c.l.b16 %v6706
  %v6740 = vunpack.c.h.b16 %v6706
  %v6741 = vunpack.c.l.b16 %v6707
  %v6742 = vunpack.c.h.b16 %v6707
  %v6743 = vunpack.c.l.b16 %v6708
  %v6744 = vunpack.c.h.b16 %v6708
  %v6745 = vunpack.c.l.b16 %v6709
  %v6746 = vunpack.c.h.b16 %v6709
  %v6747 = vunpack.c.l.b16 %v6710
  %v6748 = vunpack.c.h.b16 %v6710
  %v6749 = vunpack.c.l.b16 %v6711
  %v6750 = vunpack.c.h.b16 %v6711
  %v6751 = vunpack.c.l.b16 %v6712
  %v6752 = vunpack.c.h.b16 %v6712
  %v6753 = vunpack.c.l.b16 %v6713
  %v6754 = vunpack.c.h.b16 %v6713
  %v6755 = vunpack.c.l.b16 %v6714
  %v6756 = vunpack.c.h.b16 %v6714
  %v6757 = vunpack.c.l.b16 %v6715
  %v6758 = vunpack.c.h.b16 %v6715
  %v6759 = vunpack.c.l.b16 %v6716
  %v6760 = vunpack.c.h.b16 %v6716
  %v6761 = vunpack.c.l.b16 %v6717
  %v6762 = vunpack.c.h.b16 %v6717
  %v6763 = vunpack.c.l.b16 %v6718
  %v6764 = vunpack.c.h.b16 %v6718
  %v6765 = vunpack.c.l.b16 %v6719
  %v6766 = vunpack.c.h.b16 %v6719
  %v6767 = vunpack.c.l.b16 %v6720
  %v6768 = vpack.c.b16 %v6737, %v6737
  %v6769 = vpack.c.b16 %v6738, %v6738
  %v6770 = vpack.c.b16 %v6739, %v6739
  %v6771 = vpack.c.b16 %v6740, %v6740
  %v6772 = vpack.c.b16 %v6741, %v6741
  %v6773 = vpack.c.b16 %v6742, %v6742
  %v6774 = vpack.c.b16 %v6743, %v6743
  %v6775 = vpack.c.b16 %v6744, %v6744
  %v6776 = vpack.c.b16 %v6745, %v6745
  %v6777 = vpack.c.b16 %v6746, %v6746
  %v6778 = vpack.c.b16 %v6747, %v6747
  %v6779 = vpack.c.b16 %v6748, %v6748
  %v6780 = vpack.c.b16 %v6749, %v6749
  %v6781 = vpack.c.b16 %v6750, %v6750
  %v6782 = vpack.c.b16 %v6751, %v6751
  %v6783 = vpack.c.b16 %v6752, %v6752
  %v6784 = vpack.c.b16 %v6753, %v6753
  %v6785 = vpack.c.b16 %v6754, %v6754
  %v6786 = vpack.c.b16 %v6755, %v6755
  %v6787 = vpack.c.b16 %v6756, %v6756
  %v6788 = vpack.c.b16 %v6757, %v6757
  %v6789 = vpack.c.b16 %v6758, %v6758
  %v6790 = vpack.c.b16 %v6759, %v6759
  %v6791 = vpack.c.b16 %v6760, %v6760
  %v6792 = vpack.c.b16 %v6761, %v6761
  %v6793 = vpack.c.b16 %v6762, %v6762
  %v6794 = vpack.c.b16 %v6763, %v6763
  %v6795 = vpack.c.b16 %v6764, %v6764
  %v6796 = vpack.c.b16 %v6765, %v6765
  %v6797 = vpack.c.b16 %v6766, %v6766
  %v6798 = vpack.c.b16 %v6767, %v6767
  %6830 = vst.msk [vmem:[#allocation5 + $0x4] sm:$0xf] %vm5326, %v6768
  %6831 = vst.msk [vmem:[#allocation5 + $0xc] sm:$0xf] %vm5326, %v6769
  %6832 = vst.msk [vmem:[#allocation5 + $0x14] sm:$0xf] %vm5326, %v6770
  %6833 = vst.msk [vmem:[#allocation5 + $0x1c] sm:$0xf] %vm5326, %v6771
  %6834 = vst.msk [vmem:[#allocation5 + $0x24] sm:$0xf] %vm5326, %v6772
  %6835 = vst.msk [vmem:[#allocation5 + $0x2c] sm:$0xf] %vm5326, %v6773
  %6836 = vst.msk [vmem:[#allocation5 + $0x34] sm:$0xf] %vm5326, %v6774
  %6837 = vst.msk [vmem:[#allocation5 + $0x3c] sm:$0xf] %vm5326, %v6775
  %6838 = vst.msk [vmem:[#allocation5 + $0x44] sm:$0xf] %vm5326, %v6776
  %6839 = vst.msk [vmem:[#allocation5 + $0x4c] sm:$0xf] %vm5326, %v6777
  %6840 = vst.msk [vmem:[#allocation5 + $0x54] sm:$0xf] %vm5326, %v6778
  %6841 = vst.msk [vmem:[#allocation5 + $0x5c] sm:$0xf] %vm5326, %v6779
  %6842 = vst.msk [vmem:[#allocation5 + $0x64] sm:$0xf] %vm5326, %v6780
  %6843 = vst.msk [vmem:[#allocation5 + $0x6c] sm:$0xf] %vm5326, %v6781
  %6844 = vst.msk [vmem:[#allocation5 + $0x74] sm:$0xf] %vm5326, %v6782
  %6845 = vst.msk [vmem:[#allocation5 + $0x7c] sm:$0xf] %vm5326, %v6783
  %6846 = vst.msk [vmem:[#allocation5 + $0x84] sm:$0xf] %vm5326, %v6784
  %6847 = vst.msk [vmem:[#allocation5 + $0x8c] sm:$0xf] %vm5326, %v6785
  %6848 = vst.msk [vmem:[#allocation5 + $0x94] sm:$0xf] %vm5326, %v6786
  %6849 = vst.msk [vmem:[#allocation5 + $0x9c] sm:$0xf] %vm5326, %v6787
  %6850 = vst.msk [vmem:[#allocation5 + $0xa4] sm:$0xf] %vm5326, %v6788
  %6851 = vst.msk [vmem:[#allocation5 + $0xac] sm:$0xf] %vm5326, %v6789
  %6852 = vst.msk [vmem:[#allocation5 + $0xb4] sm:$0xf] %vm5326, %v6790
  %6853 = vst.msk [vmem:[#allocation5 + $0xbc] sm:$0xf] %vm5326, %v6791
  %6854 = vst.msk [vmem:[#allocation5 + $0xc4] sm:$0xf] %vm5326, %v6792
  %6855 = vst.msk [vmem:[#allocation5 + $0xcc] sm:$0xf] %vm5326, %v6793
  %6856 = vst.msk [vmem:[#allocation5 + $0xd4] sm:$0xf] %vm5326, %v6794
  %6857 = vst.msk [vmem:[#allocation5 + $0xdc] sm:$0xf] %vm5326, %v6795
  %6858 = vst.msk [vmem:[#allocation5 + $0xe4] sm:$0xf] %vm5326, %v6796
  %6859 = vst.msk [vmem:[#allocation5 + $0xec] sm:$0xf] %vm5326, %v6797
  %6860 = vst.msk [vmem:[#allocation5 + $0xf4] sm:$0xf] %vm5326, %v6798
  %v6861 = vld [vmem:[#allocation4 + $0x28] sm:$0xff]
  %v6862 = vld [vmem:[#allocation4 + $0x30] sm:$0xff]
  %v6863 = vld [vmem:[#allocation4 + $0x38] sm:$0xff]
  %v6864 = vld [vmem:[#allocation4 + $0x40] sm:$0xff]
  %v6865 = vld [vmem:[#allocation4 + $0x48] sm:$0xff]
  %v6866 = vld [vmem:[#allocation4 + $0x50] sm:$0xff]
  %v6867 = vld [vmem:[#allocation4 + $0x58] sm:$0xff]
  %v6868 = vld [vmem:[#allocation4 + $0x60] sm:$0xff]
  %v6869 = vld [vmem:[#allocation4 + $0x68] sm:$0xff]
  %v6870 = vld [vmem:[#allocation4 + $0x70] sm:$0xff]
  %v6871 = vld [vmem:[#allocation4 + $0x78] sm:$0xff]
  %v6872 = vld [vmem:[#allocation4 + $0x80] sm:$0xff]
  %v6873 = vld [vmem:[#allocation4 + $0x88] sm:$0xff]
  %v6874 = vld [vmem:[#allocation4 + $0x90] sm:$0xff]
  %v6875 = vld [vmem:[#allocation4 + $0x98] sm:$0xff]
  %v6876 = vld [vmem:[#allocation4 + $0xa0] sm:$0xff]
  %v6877 = vld [vmem:[#allocation4 + $0xa8] sm:$0xff]
  %v6878 = vld [vmem:[#allocation4 + $0xb0] sm:$0xff]
  %v6879 = vld [vmem:[#allocation4 + $0xb8] sm:$0xff]
  %v6880 = vld [vmem:[#allocation4 + $0xc0] sm:$0xff]
  %v6881 = vld [vmem:[#allocation4 + $0xc8] sm:$0xff]
  %v6882 = vld [vmem:[#allocation4 + $0xd0] sm:$0xff]
  %v6883 = vld [vmem:[#allocation4 + $0xd8] sm:$0xff]
  %v6884 = vld [vmem:[#allocation4 + $0xe0] sm:$0xff]
  %v6885 = vld [vmem:[#allocation4 + $0xe8] sm:$0xff]
  %v6886 = vld [vmem:[#allocation4 + $0xf0] sm:$0xff]
  %v6887 = vld [vmem:[#allocation4 + $0xf8] sm:$0xff]
  %v6888 = vld [vmem:[#allocation4 + $0x100] sm:$0xff]
  %v6889 = vld [vmem:[#allocation4 + $0x108] sm:$0xff]
  %v6890 = vld [vmem:[#allocation4 + $0x110] sm:$0xff]
  %v6891 = vld [vmem:[#allocation4 + $0x118] sm:$0xff]
  %v6892 = vpack.c.bf16 %v6862, %v6861
  %v6893 = vpack.c.bf16 %v6864, %v6863
  %v6894 = vpack.c.bf16 %v6866, %v6865
  %v6895 = vpack.c.bf16 %v6868, %v6867
  %v6896 = vpack.c.bf16 %v6870, %v6869
  %v6897 = vpack.c.bf16 %v6872, %v6871
  %v6898 = vpack.c.bf16 %v6874, %v6873
  %v6899 = vpack.c.bf16 %v6876, %v6875
  %v6900 = vpack.c.bf16 %v6878, %v6877
  %v6901 = vpack.c.bf16 %v6880, %v6879
  %v6902 = vpack.c.bf16 %v6882, %v6881
  %v6903 = vpack.c.bf16 %v6884, %v6883
  %v6904 = vpack.c.bf16 %v6886, %v6885
  %v6905 = vpack.c.bf16 %v6888, %v6887
  %v6906 = vpack.c.bf16 %v6890, %v6889
  %v6907 = vpack.c.bf16 %v6891, %v6891
  %v6924 = vunpack.c.l.b16 %v6892
  %v6925 = vunpack.c.h.b16 %v6892
  %v6926 = vunpack.c.l.b16 %v6893
  %v6927 = vunpack.c.h.b16 %v6893
  %v6928 = vunpack.c.l.b16 %v6894
  %v6929 = vunpack.c.h.b16 %v6894
  %v6930 = vunpack.c.l.b16 %v6895
  %v6931 = vunpack.c.h.b16 %v6895
  %v6932 = vunpack.c.l.b16 %v6896
  %v6933 = vunpack.c.h.b16 %v6896
  %v6934 = vunpack.c.l.b16 %v6897
  %v6935 = vunpack.c.h.b16 %v6897
  %v6936 = vunpack.c.l.b16 %v6898
  %v6937 = vunpack.c.h.b16 %v6898
  %v6938 = vunpack.c.l.b16 %v6899
  %v6939 = vunpack.c.h.b16 %v6899
  %v6940 = vunpack.c.l.b16 %v6900
  %v6941 = vunpack.c.h.b16 %v6900
  %v6942 = vunpack.c.l.b16 %v6901
  %v6943 = vunpack.c.h.b16 %v6901
  %v6944 = vunpack.c.l.b16 %v6902
  %v6945 = vunpack.c.h.b16 %v6902
  %v6946 = vunpack.c.l.b16 %v6903
  %v6947 = vunpack.c.h.b16 %v6903
  %v6948 = vunpack.c.l.b16 %v6904
  %v6949 = vunpack.c.h.b16 %v6904
  %v6950 = vunpack.c.l.b16 %v6905
  %v6951 = vunpack.c.h.b16 %v6905
  %v6952 = vunpack.c.l.b16 %v6906
  %v6953 = vunpack.c.h.b16 %v6906
  %v6954 = vunpack.c.l.b16 %v6907
  %v6955 = vpack.c.b16 %v6924, %v6924
  %v6956 = vpack.c.b16 %v6925, %v6925
  %v6957 = vpack.c.b16 %v6926, %v6926
  %v6958 = vpack.c.b16 %v6927, %v6927
  %v6959 = vpack.c.b16 %v6928, %v6928
  %v6960 = vpack.c.b16 %v6929, %v6929
  %v6961 = vpack.c.b16 %v6930, %v6930
  %v6962 = vpack.c.b16 %v6931, %v6931
  %v6963 = vpack.c.b16 %v6932, %v6932
  %v6964 = vpack.c.b16 %v6933, %v6933
  %v6965 = vpack.c.b16 %v6934, %v6934
  %v6966 = vpack.c.b16 %v6935, %v6935
  %v6967 = vpack.c.b16 %v6936, %v6936
  %v6968 = vpack.c.b16 %v6937, %v6937
  %v6969 = vpack.c.b16 %v6938, %v6938
  %v6970 = vpack.c.b16 %v6939, %v6939
  %v6971 = vpack.c.b16 %v6940, %v6940
  %v6972 = vpack.c.b16 %v6941, %v6941
  %v6973 = vpack.c.b16 %v6942, %v6942
  %v6974 = vpack.c.b16 %v6943, %v6943
  %v6975 = vpack.c.b16 %v6944, %v6944
  %v6976 = vpack.c.b16 %v6945, %v6945
  %v6977 = vpack.c.b16 %v6946, %v6946
  %v6978 = vpack.c.b16 %v6947, %v6947
  %v6979 = vpack.c.b16 %v6948, %v6948
  %v6980 = vpack.c.b16 %v6949, %v6949
  %v6981 = vpack.c.b16 %v6950, %v6950
  %v6982 = vpack.c.b16 %v6951, %v6951
  %v6983 = vpack.c.b16 %v6952, %v6952
  %v6984 = vpack.c.b16 %v6953, %v6953
  %v6985 = vpack.c.b16 %v6954, %v6954
  %7017 = vst.msk [vmem:[#allocation5 + $0x4] sm:$0xf] %vm5514, %v6955
  %7018 = vst.msk [vmem:[#allocation5 + $0xc] sm:$0xf] %vm5514, %v6956
  %7019 = vst.msk [vmem:[#allocation5 + $0x14] sm:$0xf] %vm5514, %v6957
  %7020 = vst.msk [vmem:[#allocation5 + $0x1c] sm:$0xf] %vm5514, %v6958
  %7021 = vst.msk [vmem:[#allocation5 + $0x24] sm:$0xf] %vm5514, %v6959
  %7022 = vst.msk [vmem:[#allocation5 + $0x2c] sm:$0xf] %vm5514, %v6960
  %7023 = vst.msk [vmem:[#allocation5 + $0x34] sm:$0xf] %vm5514, %v6961
  %7024 = vst.msk [vmem:[#allocation5 + $0x3c] sm:$0xf] %vm5514, %v6962
  %7025 = vst.msk [vmem:[#allocation5 + $0x44] sm:$0xf] %vm5514, %v6963
  %7026 = vst.msk [vmem:[#allocation5 + $0x4c] sm:$0xf] %vm5514, %v6964
  %7027 = vst.msk [vmem:[#allocation5 + $0x54] sm:$0xf] %vm5514, %v6965
  %7028 = vst.msk [vmem:[#allocation5 + $0x5c] sm:$0xf] %vm5514, %v6966
  %7029 = vst.msk [vmem:[#allocation5 + $0x64] sm:$0xf] %vm5514, %v6967
  %7030 = vst.msk [vmem:[#allocation5 + $0x6c] sm:$0xf] %vm5514, %v6968
  %7031 = vst.msk [vmem:[#allocation5 + $0x74] sm:$0xf] %vm5514, %v6969
  %7032 = vst.msk [vmem:[#allocation5 + $0x7c] sm:$0xf] %vm5514, %v6970
  %7033 = vst.msk [vmem:[#allocation5 + $0x84] sm:$0xf] %vm5514, %v6971
  %7034 = vst.msk [vmem:[#allocation5 + $0x8c] sm:$0xf] %vm5514, %v6972
  %7035 = vst.msk [vmem:[#allocation5 + $0x94] sm:$0xf] %vm5514, %v6973
  %7036 = vst.msk [vmem:[#allocation5 + $0x9c] sm:$0xf] %vm5514, %v6974
  %7037 = vst.msk [vmem:[#allocation5 + $0xa4] sm:$0xf] %vm5514, %v6975
  %7038 = vst.msk [vmem:[#allocation5 + $0xac] sm:$0xf] %vm5514, %v6976
  %7039 = vst.msk [vmem:[#allocation5 + $0xb4] sm:$0xf] %vm5514, %v6977
  %7040 = vst.msk [vmem:[#allocation5 + $0xbc] sm:$0xf] %vm5514, %v6978
  %7041 = vst.msk [vmem:[#allocation5 + $0xc4] sm:$0xf] %vm5514, %v6979
  %7042 = vst.msk [vmem:[#allocation5 + $0xcc] sm:$0xf] %vm5514, %v6980
  %7043 = vst.msk [vmem:[#allocation5 + $0xd4] sm:$0xf] %vm5514, %v6981
  %7044 = vst.msk [vmem:[#allocation5 + $0xdc] sm:$0xf] %vm5514, %v6982
  %7045 = vst.msk [vmem:[#allocation5 + $0xe4] sm:$0xf] %vm5514, %v6983
  %7046 = vst.msk [vmem:[#allocation5 + $0xec] sm:$0xf] %vm5514, %v6984
  %7047 = vst.msk [vmem:[#allocation5 + $0xf4] sm:$0xf] %vm5514, %v6985
  %v7048 = vld [vmem:[#allocation4 + $0x29] sm:$0xff]
  %v7049 = vld [vmem:[#allocation4 + $0x31] sm:$0xff]
  %v7050 = vld [vmem:[#allocation4 + $0x39] sm:$0xff]
  %v7051 = vld [vmem:[#allocation4 + $0x41] sm:$0xff]
  %v7052 = vld [vmem:[#allocation4 + $0x49] sm:$0xff]
  %v7053 = vld [vmem:[#allocation4 + $0x51] sm:$0xff]
  %v7054 = vld [vmem:[#allocation4 + $0x59] sm:$0xff]
  %v7055 = vld [vmem:[#allocation4 + $0x61] sm:$0xff]
  %v7056 = vld [vmem:[#allocation4 + $0x69] sm:$0xff]
  %v7057 = vld [vmem:[#allocation4 + $0x71] sm:$0xff]
  %v7058 = vld [vmem:[#allocation4 + $0x79] sm:$0xff]
  %v7059 = vld [vmem:[#allocation4 + $0x81] sm:$0xff]
  %v7060 = vld [vmem:[#allocation4 + $0x89] sm:$0xff]
  %v7061 = vld [vmem:[#allocation4 + $0x91] sm:$0xff]
  %v7062 = vld [vmem:[#allocation4 + $0x99] sm:$0xff]
  %v7063 = vld [vmem:[#allocation4 + $0xa1] sm:$0xff]
  %v7064 = vld [vmem:[#allocation4 + $0xa9] sm:$0xff]
  %v7065 = vld [vmem:[#allocation4 + $0xb1] sm:$0xff]
  %v7066 = vld [vmem:[#allocation4 + $0xb9] sm:$0xff]
  %v7067 = vld [vmem:[#allocation4 + $0xc1] sm:$0xff]
  %v7068 = vld [vmem:[#allocation4 + $0xc9] sm:$0xff]
  %v7069 = vld [vmem:[#allocation4 + $0xd1] sm:$0xff]
  %v7070 = vld [vmem:[#allocation4 + $0xd9] sm:$0xff]
  %v7071 = vld [vmem:[#allocation4 + $0xe1] sm:$0xff]
  %v7072 = vld [vmem:[#allocation4 + $0xe9] sm:$0xff]
  %v7073 = vld [vmem:[#allocation4 + $0xf1] sm:$0xff]
  %v7074 = vld [vmem:[#allocation4 + $0xf9] sm:$0xff]
  %v7075 = vld [vmem:[#allocation4 + $0x101] sm:$0xff]
  %v7076 = vld [vmem:[#allocation4 + $0x109] sm:$0xff]
  %v7077 = vld [vmem:[#allocation4 + $0x111] sm:$0xff]
  %v7078 = vld [vmem:[#allocation4 + $0x119] sm:$0xff]
  %v7079 = vpack.c.bf16 %v7049, %v7048
  %v7080 = vpack.c.bf16 %v7051, %v7050
  %v7081 = vpack.c.bf16 %v7053, %v7052
  %v7082 = vpack.c.bf16 %v7055, %v7054
  %v7083 = vpack.c.bf16 %v7057, %v7056
  %v7084 = vpack.c.bf16 %v7059, %v7058
  %v7085 = vpack.c.bf16 %v7061, %v7060
  %v7086 = vpack.c.bf16 %v7063, %v7062
  %v7087 = vpack.c.bf16 %v7065, %v7064
  %v7088 = vpack.c.bf16 %v7067, %v7066
  %v7089 = vpack.c.bf16 %v7069, %v7068
  %v7090 = vpack.c.bf16 %v7071, %v7070
  %v7091 = vpack.c.bf16 %v7073, %v7072
  %v7092 = vpack.c.bf16 %v7075, %v7074
  %v7093 = vpack.c.bf16 %v7077, %v7076
  %v7094 = vpack.c.bf16 %v7078, %v7078
  %v7111 = vunpack.c.l.b16 %v7079
  %v7112 = vunpack.c.h.b16 %v7079
  %v7113 = vunpack.c.l.b16 %v7080
  %v7114 = vunpack.c.h.b16 %v7080
  %v7115 = vunpack.c.l.b16 %v7081
  %v7116 = vunpack.c.h.b16 %v7081
  %v7117 = vunpack.c.l.b16 %v7082
  %v7118 = vunpack.c.h.b16 %v7082
  %v7119 = vunpack.c.l.b16 %v7083
  %v7120 = vunpack.c.h.b16 %v7083
  %v7121 = vunpack.c.l.b16 %v7084
  %v7122 = vunpack.c.h.b16 %v7084
  %v7123 = vunpack.c.l.b16 %v7085
  %v7124 = vunpack.c.h.b16 %v7085
  %v7125 = vunpack.c.l.b16 %v7086
  %v7126 = vunpack.c.h.b16 %v7086
  %v7127 = vunpack.c.l.b16 %v7087
  %v7128 = vunpack.c.h.b16 %v7087
  %v7129 = vunpack.c.l.b16 %v7088
  %v7130 = vunpack.c.h.b16 %v7088
  %v7131 = vunpack.c.l.b16 %v7089
  %v7132 = vunpack.c.h.b16 %v7089
  %v7133 = vunpack.c.l.b16 %v7090
  %v7134 = vunpack.c.h.b16 %v7090
  %v7135 = vunpack.c.l.b16 %v7091
  %v7136 = vunpack.c.h.b16 %v7091
  %v7137 = vunpack.c.l.b16 %v7092
  %v7138 = vunpack.c.h.b16 %v7092
  %v7139 = vunpack.c.l.b16 %v7093
  %v7140 = vunpack.c.h.b16 %v7093
  %v7141 = vunpack.c.l.b16 %v7094
  %v7142 = vpack.c.b16 %v7111, %v7111
  %v7143 = vpack.c.b16 %v7112, %v7112
  %v7144 = vpack.c.b16 %v7113, %v7113
  %v7145 = vpack.c.b16 %v7114, %v7114
  %v7146 = vpack.c.b16 %v7115, %v7115
  %v7147 = vpack.c.b16 %v7116, %v7116
  %v7148 = vpack.c.b16 %v7117, %v7117
  %v7149 = vpack.c.b16 %v7118, %v7118
  %v7150 = vpack.c.b16 %v7119, %v7119
  %v7151 = vpack.c.b16 %v7120, %v7120
  %v7152 = vpack.c.b16 %v7121, %v7121
  %v7153 = vpack.c.b16 %v7122, %v7122
  %v7154 = vpack.c.b16 %v7123, %v7123
  %v7155 = vpack.c.b16 %v7124, %v7124
  %v7156 = vpack.c.b16 %v7125, %v7125
  %v7157 = vpack.c.b16 %v7126, %v7126
  %v7158 = vpack.c.b16 %v7127, %v7127
  %v7159 = vpack.c.b16 %v7128, %v7128
  %v7160 = vpack.c.b16 %v7129, %v7129
  %v7161 = vpack.c.b16 %v7130, %v7130
  %v7162 = vpack.c.b16 %v7131, %v7131
  %v7163 = vpack.c.b16 %v7132, %v7132
  %v7164 = vpack.c.b16 %v7133, %v7133
  %v7165 = vpack.c.b16 %v7134, %v7134
  %v7166 = vpack.c.b16 %v7135, %v7135
  %v7167 = vpack.c.b16 %v7136, %v7136
  %v7168 = vpack.c.b16 %v7137, %v7137
  %v7169 = vpack.c.b16 %v7138, %v7138
  %v7170 = vpack.c.b16 %v7139, %v7139
  %v7171 = vpack.c.b16 %v7140, %v7140
  %v7172 = vpack.c.b16 %v7141, %v7141
  %7204 = vst.msk [vmem:[#allocation5 + $0x4] sm:$0xf] %vm5702, %v7142
  %7205 = vst.msk [vmem:[#allocation5 + $0xc] sm:$0xf] %vm5702, %v7143
  %7206 = vst.msk [vmem:[#allocation5 + $0x14] sm:$0xf] %vm5702, %v7144
  %7207 = vst.msk [vmem:[#allocation5 + $0x1c] sm:$0xf] %vm5702, %v7145
  %7208 = vst.msk [vmem:[#allocation5 + $0x24] sm:$0xf] %vm5702, %v7146
  %7209 = vst.msk [vmem:[#allocation5 + $0x2c] sm:$0xf] %vm5702, %v7147
  %7210 = vst.msk [vmem:[#allocation5 + $0x34] sm:$0xf] %vm5702, %v7148
  %7211 = vst.msk [vmem:[#allocation5 + $0x3c] sm:$0xf] %vm5702, %v7149
  %7212 = vst.msk [vmem:[#allocation5 + $0x44] sm:$0xf] %vm5702, %v7150
  %7213 = vst.msk [vmem:[#allocation5 + $0x4c] sm:$0xf] %vm5702, %v7151
  %7214 = vst.msk [vmem:[#allocation5 + $0x54] sm:$0xf] %vm5702, %v7152
  %7215 = vst.msk [vmem:[#allocation5 + $0x5c] sm:$0xf] %vm5702, %v7153
  %7216 = vst.msk [vmem:[#allocation5 + $0x64] sm:$0xf] %vm5702, %v7154
  %7217 = vst.msk [vmem:[#allocation5 + $0x6c] sm:$0xf] %vm5702, %v7155
  %7218 = vst.msk [vmem:[#allocation5 + $0x74] sm:$0xf] %vm5702, %v7156
  %7219 = vst.msk [vmem:[#allocation5 + $0x7c] sm:$0xf] %vm5702, %v7157
  %7220 = vst.msk [vmem:[#allocation5 + $0x84] sm:$0xf] %vm5702, %v7158
  %7221 = vst.msk [vmem:[#allocation5 + $0x8c] sm:$0xf] %vm5702, %v7159
  %7222 = vst.msk [vmem:[#allocation5 + $0x94] sm:$0xf] %vm5702, %v7160
  %7223 = vst.msk [vmem:[#allocation5 + $0x9c] sm:$0xf] %vm5702, %v7161
  %7224 = vst.msk [vmem:[#allocation5 + $0xa4] sm:$0xf] %vm5702, %v7162
  %7225 = vst.msk [vmem:[#allocation5 + $0xac] sm:$0xf] %vm5702, %v7163
  %7226 = vst.msk [vmem:[#allocation5 + $0xb4] sm:$0xf] %vm5702, %v7164
  %7227 = vst.msk [vmem:[#allocation5 + $0xbc] sm:$0xf] %vm5702, %v7165
  %7228 = vst.msk [vmem:[#allocation5 + $0xc4] sm:$0xf] %vm5702, %v7166
  %7229 = vst.msk [vmem:[#allocation5 + $0xcc] sm:$0xf] %vm5702, %v7167
  %7230 = vst.msk [vmem:[#allocation5 + $0xd4] sm:$0xf] %vm5702, %v7168
  %7231 = vst.msk [vmem:[#allocation5 + $0xdc] sm:$0xf] %vm5702, %v7169
  %7232 = vst.msk [vmem:[#allocation5 + $0xe4] sm:$0xf] %vm5702, %v7170
  %7233 = vst.msk [vmem:[#allocation5 + $0xec] sm:$0xf] %vm5702, %v7171
  %7234 = vst.msk [vmem:[#allocation5 + $0xf4] sm:$0xf] %vm5702, %v7172
  %v7235 = vld [vmem:[#allocation4 + $0x2a] sm:$0xff]
  %v7236 = vld [vmem:[#allocation4 + $0x32] sm:$0xff]
  %v7237 = vld [vmem:[#allocation4 + $0x3a] sm:$0xff]
  %v7238 = vld [vmem:[#allocation4 + $0x42] sm:$0xff]
  %v7239 = vld [vmem:[#allocation4 + $0x4a] sm:$0xff]
  %v7240 = vld [vmem:[#allocation4 + $0x52] sm:$0xff]
  %v7241 = vld [vmem:[#allocation4 + $0x5a] sm:$0xff]
  %v7242 = vld [vmem:[#allocation4 + $0x62] sm:$0xff]
  %v7243 = vld [vmem:[#allocation4 + $0x6a] sm:$0xff]
  %v7244 = vld [vmem:[#allocation4 + $0x72] sm:$0xff]
  %v7245 = vld [vmem:[#allocation4 + $0x7a] sm:$0xff]
  %v7246 = vld [vmem:[#allocation4 + $0x82] sm:$0xff]
  %v7247 = vld [vmem:[#allocation4 + $0x8a] sm:$0xff]
  %v7248 = vld [vmem:[#allocation4 + $0x92] sm:$0xff]
  %v7249 = vld [vmem:[#allocation4 + $0x9a] sm:$0xff]
  %v7250 = vld [vmem:[#allocation4 + $0xa2] sm:$0xff]
  %v7251 = vld [vmem:[#allocation4 + $0xaa] sm:$0xff]
  %v7252 = vld [vmem:[#allocation4 + $0xb2] sm:$0xff]
  %v7253 = vld [vmem:[#allocation4 + $0xba] sm:$0xff]
  %v7254 = vld [vmem:[#allocation4 + $0xc2] sm:$0xff]
  %v7255 = vld [vmem:[#allocation4 + $0xca] sm:$0xff]
  %v7256 = vld [vmem:[#allocation4 + $0xd2] sm:$0xff]
  %v7257 = vld [vmem:[#allocation4 + $0xda] sm:$0xff]
  %v7258 = vld [vmem:[#allocation4 + $0xe2] sm:$0xff]
  %v7259 = vld [vmem:[#allocation4 + $0xea] sm:$0xff]
  %v7260 = vld [vmem:[#allocation4 + $0xf2] sm:$0xff]
  %v7261 = vld [vmem:[#allocation4 + $0xfa] sm:$0xff]
  %v7262 = vld [vmem:[#allocation4 + $0x102] sm:$0xff]
  %v7263 = vld [vmem:[#allocation4 + $0x10a] sm:$0xff]
  %v7264 = vld [vmem:[#allocation4 + $0x112] sm:$0xff]
  %v7265 = vld [vmem:[#allocation4 + $0x11a] sm:$0xff]
  %v7266 = vpack.c.bf16 %v7236, %v7235
  %v7267 = vpack.c.bf16 %v7238, %v7237
  %v7268 = vpack.c.bf16 %v7240, %v7239
  %v7269 = vpack.c.bf16 %v7242, %v7241
  %v7270 = vpack.c.bf16 %v7244, %v7243
  %v7271 = vpack.c.bf16 %v7246, %v7245
  %v7272 = vpack.c.bf16 %v7248, %v7247
  %v7273 = vpack.c.bf16 %v7250, %v7249
  %v7274 = vpack.c.bf16 %v7252, %v7251
  %v7275 = vpack.c.bf16 %v7254, %v7253
  %v7276 = vpack.c.bf16 %v7256, %v7255
  %v7277 = vpack.c.bf16 %v7258, %v7257
  %v7278 = vpack.c.bf16 %v7260, %v7259
  %v7279 = vpack.c.bf16 %v7262, %v7261
  %v7280 = vpack.c.bf16 %v7264, %v7263
  %v7281 = vpack.c.bf16 %v7265, %v7265
  %v7298 = vunpack.c.l.b16 %v7266
  %v7299 = vunpack.c.h.b16 %v7266
  %v7300 = vunpack.c.l.b16 %v7267
  %v7301 = vunpack.c.h.b16 %v7267
  %v7302 = vunpack.c.l.b16 %v7268
  %v7303 = vunpack.c.h.b16 %v7268
  %v7304 = vunpack.c.l.b16 %v7269
  %v7305 = vunpack.c.h.b16 %v7269
  %v7306 = vunpack.c.l.b16 %v7270
  %v7307 = vunpack.c.h.b16 %v7270
  %v7308 = vunpack.c.l.b16 %v7271
  %v7309 = vunpack.c.h.b16 %v7271
  %v7310 = vunpack.c.l.b16 %v7272
  %v7311 = vunpack.c.h.b16 %v7272
  %v7312 = vunpack.c.l.b16 %v7273
  %v7313 = vunpack.c.h.b16 %v7273
  %v7314 = vunpack.c.l.b16 %v7274
  %v7315 = vunpack.c.h.b16 %v7274
  %v7316 = vunpack.c.l.b16 %v7275
  %v7317 = vunpack.c.h.b16 %v7275
  %v7318 = vunpack.c.l.b16 %v7276
  %v7319 = vunpack.c.h.b16 %v7276
  %v7320 = vunpack.c.l.b16 %v7277
  %v7321 = vunpack.c.h.b16 %v7277
  %v7322 = vunpack.c.l.b16 %v7278
  %v7323 = vunpack.c.h.b16 %v7278
  %v7324 = vunpack.c.l.b16 %v7279
  %v7325 = vunpack.c.h.b16 %v7279
  %v7326 = vunpack.c.l.b16 %v7280
  %v7327 = vunpack.c.h.b16 %v7280
  %v7328 = vunpack.c.l.b16 %v7281
  %v7329 = vpack.c.b16 %v7298, %v7298
  %v7330 = vpack.c.b16 %v7299, %v7299
  %v7331 = vpack.c.b16 %v7300, %v7300
  %v7332 = vpack.c.b16 %v7301, %v7301
  %v7333 = vpack.c.b16 %v7302, %v7302
  %v7334 = vpack.c.b16 %v7303, %v7303
  %v7335 = vpack.c.b16 %v7304, %v7304
  %v7336 = vpack.c.b16 %v7305, %v7305
  %v7337 = vpack.c.b16 %v7306, %v7306
  %v7338 = vpack.c.b16 %v7307, %v7307
  %v7339 = vpack.c.b16 %v7308, %v7308
  %v7340 = vpack.c.b16 %v7309, %v7309
  %v7341 = vpack.c.b16 %v7310, %v7310
  %v7342 = vpack.c.b16 %v7311, %v7311
  %v7343 = vpack.c.b16 %v7312, %v7312
  %v7344 = vpack.c.b16 %v7313, %v7313
  %v7345 = vpack.c.b16 %v7314, %v7314
  %v7346 = vpack.c.b16 %v7315, %v7315
  %v7347 = vpack.c.b16 %v7316, %v7316
  %v7348 = vpack.c.b16 %v7317, %v7317
  %v7349 = vpack.c.b16 %v7318, %v7318
  %v7350 = vpack.c.b16 %v7319, %v7319
  %v7351 = vpack.c.b16 %v7320, %v7320
  %v7352 = vpack.c.b16 %v7321, %v7321
  %v7353 = vpack.c.b16 %v7322, %v7322
  %v7354 = vpack.c.b16 %v7323, %v7323
  %v7355 = vpack.c.b16 %v7324, %v7324
  %v7356 = vpack.c.b16 %v7325, %v7325
  %v7357 = vpack.c.b16 %v7326, %v7326
  %v7358 = vpack.c.b16 %v7327, %v7327
  %v7359 = vpack.c.b16 %v7328, %v7328
  %7391 = vst.msk [vmem:[#allocation5 + $0x4] sm:$0xf] %vm5890, %v7329
  %7392 = vst.msk [vmem:[#allocation5 + $0xc] sm:$0xf] %vm5890, %v7330
  %7393 = vst.msk [vmem:[#allocation5 + $0x14] sm:$0xf] %vm5890, %v7331
  %7394 = vst.msk [vmem:[#allocation5 + $0x1c] sm:$0xf] %vm5890, %v7332
  %7395 = vst.msk [vmem:[#allocation5 + $0x24] sm:$0xf] %vm5890, %v7333
  %7396 = vst.msk [vmem:[#allocation5 + $0x2c] sm:$0xf] %vm5890, %v7334
  %7397 = vst.msk [vmem:[#allocation5 + $0x34] sm:$0xf] %vm5890, %v7335
  %7398 = vst.msk [vmem:[#allocation5 + $0x3c] sm:$0xf] %vm5890, %v7336
  %7399 = vst.msk [vmem:[#allocation5 + $0x44] sm:$0xf] %vm5890, %v7337
  %7400 = vst.msk [vmem:[#allocation5 + $0x4c] sm:$0xf] %vm5890, %v7338
  %7401 = vst.msk [vmem:[#allocation5 + $0x54] sm:$0xf] %vm5890, %v7339
  %7402 = vst.msk [vmem:[#allocation5 + $0x5c] sm:$0xf] %vm5890, %v7340
  %7403 = vst.msk [vmem:[#allocation5 + $0x64] sm:$0xf] %vm5890, %v7341
  %7404 = vst.msk [vmem:[#allocation5 + $0x6c] sm:$0xf] %vm5890, %v7342
  %7405 = vst.msk [vmem:[#allocation5 + $0x74] sm:$0xf] %vm5890, %v7343
  %7406 = vst.msk [vmem:[#allocation5 + $0x7c] sm:$0xf] %vm5890, %v7344
  %7407 = vst.msk [vmem:[#allocation5 + $0x84] sm:$0xf] %vm5890, %v7345
  %7408 = vst.msk [vmem:[#allocation5 + $0x8c] sm:$0xf] %vm5890, %v7346
  %7409 = vst.msk [vmem:[#allocation5 + $0x94] sm:$0xf] %vm5890, %v7347
  %7410 = vst.msk [vmem:[#allocation5 + $0x9c] sm:$0xf] %vm5890, %v7348
  %7411 = vst.msk [vmem:[#allocation5 + $0xa4] sm:$0xf] %vm5890, %v7349
  %7412 = vst.msk [vmem:[#allocation5 + $0xac] sm:$0xf] %vm5890, %v7350
  %7413 = vst.msk [vmem:[#allocation5 + $0xb4] sm:$0xf] %vm5890, %v7351
  %7414 = vst.msk [vmem:[#allocation5 + $0xbc] sm:$0xf] %vm5890, %v7352
  %7415 = vst.msk [vmem:[#allocation5 + $0xc4] sm:$0xf] %vm5890, %v7353
  %7416 = vst.msk [vmem:[#allocation5 + $0xcc] sm:$0xf] %vm5890, %v7354
  %7417 = vst.msk [vmem:[#allocation5 + $0xd4] sm:$0xf] %vm5890, %v7355
  %7418 = vst.msk [vmem:[#allocation5 + $0xdc] sm:$0xf] %vm5890, %v7356
  %7419 = vst.msk [vmem:[#allocation5 + $0xe4] sm:$0xf] %vm5890, %v7357
  %7420 = vst.msk [vmem:[#allocation5 + $0xec] sm:$0xf] %vm5890, %v7358
  %7421 = vst.msk [vmem:[#allocation5 + $0xf4] sm:$0xf] %vm5890, %v7359
  %v7422 = vld [vmem:[#allocation4 + $0x37] sm:$0xff]
  %v7423 = vld [vmem:[#allocation4 + $0x3f] sm:$0xff]
  %v7424 = vld [vmem:[#allocation4 + $0x47] sm:$0xff]
  %v7425 = vld [vmem:[#allocation4 + $0x4f] sm:$0xff]
  %v7426 = vld [vmem:[#allocation4 + $0x57] sm:$0xff]
  %v7427 = vld [vmem:[#allocation4 + $0x5f] sm:$0xff]
  %v7428 = vld [vmem:[#allocation4 + $0x67] sm:$0xff]
  %v7429 = vld [vmem:[#allocation4 + $0x6f] sm:$0xff]
  %v7430 = vld [vmem:[#allocation4 + $0x77] sm:$0xff]
  %v7431 = vld [vmem:[#allocation4 + $0x7f] sm:$0xff]
  %v7432 = vld [vmem:[#allocation4 + $0x87] sm:$0xff]
  %v7433 = vld [vmem:[#allocation4 + $0x8f] sm:$0xff]
  %v7434 = vld [vmem:[#allocation4 + $0x97] sm:$0xff]
  %v7435 = vld [vmem:[#allocation4 + $0x9f] sm:$0xff]
  %v7436 = vld [vmem:[#allocation4 + $0xa7] sm:$0xff]
  %v7437 = vld [vmem:[#allocation4 + $0xaf] sm:$0xff]
  %v7438 = vld [vmem:[#allocation4 + $0xb7] sm:$0xff]
  %v7439 = vld [vmem:[#allocation4 + $0xbf] sm:$0xff]
  %v7440 = vld [vmem:[#allocation4 + $0xc7] sm:$0xff]
  %v7441 = vld [vmem:[#allocation4 + $0xcf] sm:$0xff]
  %v7442 = vld [vmem:[#allocation4 + $0xd7] sm:$0xff]
  %v7443 = vld [vmem:[#allocation4 + $0xdf] sm:$0xff]
  %v7444 = vld [vmem:[#allocation4 + $0xe7] sm:$0xff]
  %v7445 = vld [vmem:[#allocation4 + $0xef] sm:$0xff]
  %v7446 = vld [vmem:[#allocation4 + $0xf7] sm:$0xff]
  %v7447 = vld [vmem:[#allocation4 + $0xff] sm:$0xff]
  %v7448 = vld [vmem:[#allocation4 + $0x107] sm:$0xff]
  %v7449 = vld [vmem:[#allocation4 + $0x10f] sm:$0xff]
  %v7450 = vld [vmem:[#allocation4 + $0x117] sm:$0xff]
  %v7451 = vld [vmem:[#allocation4 + $0x11f] sm:$0xff]
  %v7452 = vld [vmem:[#allocation4 + $0x127] sm:$0xff]
  %v7453 = vpack.c.bf16 %v7423, %v7422
  %v7454 = vpack.c.bf16 %v7425, %v7424
  %v7455 = vpack.c.bf16 %v7427, %v7426
  %v7456 = vpack.c.bf16 %v7429, %v7428
  %v7457 = vpack.c.bf16 %v7431, %v7430
  %v7458 = vpack.c.bf16 %v7433, %v7432
  %v7459 = vpack.c.bf16 %v7435, %v7434
  %v7460 = vpack.c.bf16 %v7437, %v7436
  %v7461 = vpack.c.bf16 %v7439, %v7438
  %v7462 = vpack.c.bf16 %v7441, %v7440
  %v7463 = vpack.c.bf16 %v7443, %v7442
  %v7464 = vpack.c.bf16 %v7445, %v7444
  %v7465 = vpack.c.bf16 %v7447, %v7446
  %v7466 = vpack.c.bf16 %v7449, %v7448
  %v7467 = vpack.c.bf16 %v7451, %v7450
  %v7468 = vpack.c.bf16 %v7452, %v7452
  %v7485 = vunpack.c.l.b16 %v7453
  %v7486 = vunpack.c.h.b16 %v7453
  %v7487 = vunpack.c.l.b16 %v7454
  %v7488 = vunpack.c.h.b16 %v7454
  %v7489 = vunpack.c.l.b16 %v7455
  %v7490 = vunpack.c.h.b16 %v7455
  %v7491 = vunpack.c.l.b16 %v7456
  %v7492 = vunpack.c.h.b16 %v7456
  %v7493 = vunpack.c.l.b16 %v7457
  %v7494 = vunpack.c.h.b16 %v7457
  %v7495 = vunpack.c.l.b16 %v7458
  %v7496 = vunpack.c.h.b16 %v7458
  %v7497 = vunpack.c.l.b16 %v7459
  %v7498 = vunpack.c.h.b16 %v7459
  %v7499 = vunpack.c.l.b16 %v7460
  %v7500 = vunpack.c.h.b16 %v7460
  %v7501 = vunpack.c.l.b16 %v7461
  %v7502 = vunpack.c.h.b16 %v7461
  %v7503 = vunpack.c.l.b16 %v7462
  %v7504 = vunpack.c.h.b16 %v7462
  %v7505 = vunpack.c.l.b16 %v7463
  %v7506 = vunpack.c.h.b16 %v7463
  %v7507 = vunpack.c.l.b16 %v7464
  %v7508 = vunpack.c.h.b16 %v7464
  %v7509 = vunpack.c.l.b16 %v7465
  %v7510 = vunpack.c.h.b16 %v7465
  %v7511 = vunpack.c.l.b16 %v7466
  %v7512 = vunpack.c.h.b16 %v7466
  %v7513 = vunpack.c.l.b16 %v7467
  %v7514 = vunpack.c.h.b16 %v7467
  %v7515 = vunpack.c.l.b16 %v7468
  %v7516 = vpack.c.b16 %v7485, %v7485
  %v7517 = vpack.c.b16 %v7486, %v7486
  %v7518 = vpack.c.b16 %v7487, %v7487
  %v7519 = vpack.c.b16 %v7488, %v7488
  %v7520 = vpack.c.b16 %v7489, %v7489
  %v7521 = vpack.c.b16 %v7490, %v7490
  %v7522 = vpack.c.b16 %v7491, %v7491
  %v7523 = vpack.c.b16 %v7492, %v7492
  %v7524 = vpack.c.b16 %v7493, %v7493
  %v7525 = vpack.c.b16 %v7494, %v7494
  %v7526 = vpack.c.b16 %v7495, %v7495
  %v7527 = vpack.c.b16 %v7496, %v7496
  %v7528 = vpack.c.b16 %v7497, %v7497
  %v7529 = vpack.c.b16 %v7498, %v7498
  %v7530 = vpack.c.b16 %v7499, %v7499
  %v7531 = vpack.c.b16 %v7500, %v7500
  %v7532 = vpack.c.b16 %v7501, %v7501
  %v7533 = vpack.c.b16 %v7502, %v7502
  %v7534 = vpack.c.b16 %v7503, %v7503
  %v7535 = vpack.c.b16 %v7504, %v7504
  %v7536 = vpack.c.b16 %v7505, %v7505
  %v7537 = vpack.c.b16 %v7506, %v7506
  %v7538 = vpack.c.b16 %v7507, %v7507
  %v7539 = vpack.c.b16 %v7508, %v7508
  %v7540 = vpack.c.b16 %v7509, %v7509
  %v7541 = vpack.c.b16 %v7510, %v7510
  %v7542 = vpack.c.b16 %v7511, %v7511
  %v7543 = vpack.c.b16 %v7512, %v7512
  %v7544 = vpack.c.b16 %v7513, %v7513
  %v7545 = vpack.c.b16 %v7514, %v7514
  %v7546 = vpack.c.b16 %v7515, %v7515
  %7578 = vst.msk [vmem:[#allocation5 + $0x4] sm:$0xf] %vm6078, %v7516
  %7579 = vst.msk [vmem:[#allocation5 + $0xc] sm:$0xf] %vm6078, %v7517
  %7580 = vst.msk [vmem:[#allocation5 + $0x14] sm:$0xf] %vm6078, %v7518
  %7581 = vst.msk [vmem:[#allocation5 + $0x1c] sm:$0xf] %vm6078, %v7519
  %7582 = vst.msk [vmem:[#allocation5 + $0x24] sm:$0xf] %vm6078, %v7520
  %7583 = vst.msk [vmem:[#allocation5 + $0x2c] sm:$0xf] %vm6078, %v7521
  %7584 = vst.msk [vmem:[#allocation5 + $0x34] sm:$0xf] %vm6078, %v7522
  %7585 = vst.msk [vmem:[#allocation5 + $0x3c] sm:$0xf] %vm6078, %v7523
  %7586 = vst.msk [vmem:[#allocation5 + $0x44] sm:$0xf] %vm6078, %v7524
  %7587 = vst.msk [vmem:[#allocation5 + $0x4c] sm:$0xf] %vm6078, %v7525
  %7588 = vst.msk [vmem:[#allocation5 + $0x54] sm:$0xf] %vm6078, %v7526
  %7589 = vst.msk [vmem:[#allocation5 + $0x5c] sm:$0xf] %vm6078, %v7527
  %7590 = vst.msk [vmem:[#allocation5 + $0x64] sm:$0xf] %vm6078, %v7528
  %7591 = vst.msk [vmem:[#allocation5 + $0x6c] sm:$0xf] %vm6078, %v7529
  %7592 = vst.msk [vmem:[#allocation5 + $0x74] sm:$0xf] %vm6078, %v7530
  %7593 = vst.msk [vmem:[#allocation5 + $0x7c] sm:$0xf] %vm6078, %v7531
  %7594 = vst.msk [vmem:[#allocation5 + $0x84] sm:$0xf] %vm6078, %v7532
  %7595 = vst.msk [vmem:[#allocation5 + $0x8c] sm:$0xf] %vm6078, %v7533
  %7596 = vst.msk [vmem:[#allocation5 + $0x94] sm:$0xf] %vm6078, %v7534
  %7597 = vst.msk [vmem:[#allocation5 + $0x9c] sm:$0xf] %vm6078, %v7535
  %7598 = vst.msk [vmem:[#allocation5 + $0xa4] sm:$0xf] %vm6078, %v7536
  %7599 = vst.msk [vmem:[#allocation5 + $0xac] sm:$0xf] %vm6078, %v7537
  %7600 = vst.msk [vmem:[#allocation5 + $0xb4] sm:$0xf] %vm6078, %v7538
  %7601 = vst.msk [vmem:[#allocation5 + $0xbc] sm:$0xf] %vm6078, %v7539
  %7602 = vst.msk [vmem:[#allocation5 + $0xc4] sm:$0xf] %vm6078, %v7540
  %7603 = vst.msk [vmem:[#allocation5 + $0xcc] sm:$0xf] %vm6078, %v7541
  %7604 = vst.msk [vmem:[#allocation5 + $0xd4] sm:$0xf] %vm6078, %v7542
  %7605 = vst.msk [vmem:[#allocation5 + $0xdc] sm:$0xf] %vm6078, %v7543
  %7606 = vst.msk [vmem:[#allocation5 + $0xe4] sm:$0xf] %vm6078, %v7544
  %7607 = vst.msk [vmem:[#allocation5 + $0xec] sm:$0xf] %vm6078, %v7545
  %7608 = vst.msk [vmem:[#allocation5 + $0xf4] sm:$0xf] %vm6078, %v7546
  %v7609 = vld [vmem:[#allocation4 + $0x38] sm:$0xff]
  %v7610 = vld [vmem:[#allocation4 + $0x40] sm:$0xff]
  %v7611 = vld [vmem:[#allocation4 + $0x48] sm:$0xff]
  %v7612 = vld [vmem:[#allocation4 + $0x50] sm:$0xff]
  %v7613 = vld [vmem:[#allocation4 + $0x58] sm:$0xff]
  %v7614 = vld [vmem:[#allocation4 + $0x60] sm:$0xff]
  %v7615 = vld [vmem:[#allocation4 + $0x68] sm:$0xff]
  %v7616 = vld [vmem:[#allocation4 + $0x70] sm:$0xff]
  %v7617 = vld [vmem:[#allocation4 + $0x78] sm:$0xff]
  %v7618 = vld [vmem:[#allocation4 + $0x80] sm:$0xff]
  %v7619 = vld [vmem:[#allocation4 + $0x88] sm:$0xff]
  %v7620 = vld [vmem:[#allocation4 + $0x90] sm:$0xff]
  %v7621 = vld [vmem:[#allocation4 + $0x98] sm:$0xff]
  %v7622 = vld [vmem:[#allocation4 + $0xa0] sm:$0xff]
  %v7623 = vld [vmem:[#allocation4 + $0xa8] sm:$0xff]
  %v7624 = vld [vmem:[#allocation4 + $0xb0] sm:$0xff]
  %v7625 = vld [vmem:[#allocation4 + $0xb8] sm:$0xff]
  %v7626 = vld [vmem:[#allocation4 + $0xc0] sm:$0xff]
  %v7627 = vld [vmem:[#allocation4 + $0xc8] sm:$0xff]
  %v7628 = vld [vmem:[#allocation4 + $0xd0] sm:$0xff]
  %v7629 = vld [vmem:[#allocation4 + $0xd8] sm:$0xff]
  %v7630 = vld [vmem:[#allocation4 + $0xe0] sm:$0xff]
  %v7631 = vld [vmem:[#allocation4 + $0xe8] sm:$0xff]
  %v7632 = vld [vmem:[#allocation4 + $0xf0] sm:$0xff]
  %v7633 = vld [vmem:[#allocation4 + $0xf8] sm:$0xff]
  %v7634 = vld [vmem:[#allocation4 + $0x100] sm:$0xff]
  %v7635 = vld [vmem:[#allocation4 + $0x108] sm:$0xff]
  %v7636 = vld [vmem:[#allocation4 + $0x110] sm:$0xff]
  %v7637 = vld [vmem:[#allocation4 + $0x118] sm:$0xff]
  %v7638 = vld [vmem:[#allocation4 + $0x120] sm:$0xff]
  %v7639 = vld [vmem:[#allocation4 + $0x128] sm:$0xff]
  %v7640 = vpack.c.bf16 %v7610, %v7609
  %v7641 = vpack.c.bf16 %v7612, %v7611
  %v7642 = vpack.c.bf16 %v7614, %v7613
  %v7643 = vpack.c.bf16 %v7616, %v7615
  %v7644 = vpack.c.bf16 %v7618, %v7617
  %v7645 = vpack.c.bf16 %v7620, %v7619
  %v7646 = vpack.c.bf16 %v7622, %v7621
  %v7647 = vpack.c.bf16 %v7624, %v7623
  %v7648 = vpack.c.bf16 %v7626, %v7625
  %v7649 = vpack.c.bf16 %v7628, %v7627
  %v7650 = vpack.c.bf16 %v7630, %v7629
  %v7651 = vpack.c.bf16 %v7632, %v7631
  %v7652 = vpack.c.bf16 %v7634, %v7633
  %v7653 = vpack.c.bf16 %v7636, %v7635
  %v7654 = vpack.c.bf16 %v7638, %v7637
  %v7655 = vpack.c.bf16 %v7639, %v7639
  %v7672 = vunpack.c.l.b16 %v7640
  %v7673 = vunpack.c.h.b16 %v7640
  %v7674 = vunpack.c.l.b16 %v7641
  %v7675 = vunpack.c.h.b16 %v7641
  %v7676 = vunpack.c.l.b16 %v7642
  %v7677 = vunpack.c.h.b16 %v7642
  %v7678 = vunpack.c.l.b16 %v7643
  %v7679 = vunpack.c.h.b16 %v7643
  %v7680 = vunpack.c.l.b16 %v7644
  %v7681 = vunpack.c.h.b16 %v7644
  %v7682 = vunpack.c.l.b16 %v7645
  %v7683 = vunpack.c.h.b16 %v7645
  %v7684 = vunpack.c.l.b16 %v7646
  %v7685 = vunpack.c.h.b16 %v7646
  %v7686 = vunpack.c.l.b16 %v7647
  %v7687 = vunpack.c.h.b16 %v7647
  %v7688 = vunpack.c.l.b16 %v7648
  %v7689 = vunpack.c.h.b16 %v7648
  %v7690 = vunpack.c.l.b16 %v7649
  %v7691 = vunpack.c.h.b16 %v7649
  %v7692 = vunpack.c.l.b16 %v7650
  %v7693 = vunpack.c.h.b16 %v7650
  %v7694 = vunpack.c.l.b16 %v7651
  %v7695 = vunpack.c.h.b16 %v7651
  %v7696 = vunpack.c.l.b16 %v7652
  %v7697 = vunpack.c.h.b16 %v7652
  %v7698 = vunpack.c.l.b16 %v7653
  %v7699 = vunpack.c.h.b16 %v7653
  %v7700 = vunpack.c.l.b16 %v7654
  %v7701 = vunpack.c.h.b16 %v7654
  %v7702 = vunpack.c.l.b16 %v7655
  %v7703 = vpack.c.b16 %v7672, %v7672
  %v7704 = vpack.c.b16 %v7673, %v7673
  %v7705 = vpack.c.b16 %v7674, %v7674
  %v7706 = vpack.c.b16 %v7675, %v7675
  %v7707 = vpack.c.b16 %v7676, %v7676
  %v7708 = vpack.c.b16 %v7677, %v7677
  %v7709 = vpack.c.b16 %v7678, %v7678
  %v7710 = vpack.c.b16 %v7679, %v7679
  %v7711 = vpack.c.b16 %v7680, %v7680
  %v7712 = vpack.c.b16 %v7681, %v7681
  %v7713 = vpack.c.b16 %v7682, %v7682
  %v7714 = vpack.c.b16 %v7683, %v7683
  %v7715 = vpack.c.b16 %v7684, %v7684
  %v7716 = vpack.c.b16 %v7685, %v7685
  %v7717 = vpack.c.b16 %v7686, %v7686
  %v7718 = vpack.c.b16 %v7687, %v7687
  %v7719 = vpack.c.b16 %v7688, %v7688
  %v7720 = vpack.c.b16 %v7689, %v7689
  %v7721 = vpack.c.b16 %v7690, %v7690
  %v7722 = vpack.c.b16 %v7691, %v7691
  %v7723 = vpack.c.b16 %v7692, %v7692
  %v7724 = vpack.c.b16 %v7693, %v7693
  %v7725 = vpack.c.b16 %v7694, %v7694
  %v7726 = vpack.c.b16 %v7695, %v7695
  %v7727 = vpack.c.b16 %v7696, %v7696
  %v7728 = vpack.c.b16 %v7697, %v7697
  %v7729 = vpack.c.b16 %v7698, %v7698
  %v7730 = vpack.c.b16 %v7699, %v7699
  %v7731 = vpack.c.b16 %v7700, %v7700
  %v7732 = vpack.c.b16 %v7701, %v7701
  %v7733 = vpack.c.b16 %v7702, %v7702
  %7765 = vst.msk [vmem:[#allocation5 + $0x4] sm:$0xf] %vm6266, %v7703
  %7766 = vst.msk [vmem:[#allocation5 + $0xc] sm:$0xf] %vm6266, %v7704
  %7767 = vst.msk [vmem:[#allocation5 + $0x14] sm:$0xf] %vm6266, %v7705
  %7768 = vst.msk [vmem:[#allocation5 + $0x1c] sm:$0xf] %vm6266, %v7706
  %7769 = vst.msk [vmem:[#allocation5 + $0x24] sm:$0xf] %vm6266, %v7707
  %7770 = vst.msk [vmem:[#allocation5 + $0x2c] sm:$0xf] %vm6266, %v7708
  %7771 = vst.msk [vmem:[#allocation5 + $0x34] sm:$0xf] %vm6266, %v7709
  %7772 = vst.msk [vmem:[#allocation5 + $0x3c] sm:$0xf] %vm6266, %v7710
  %7773 = vst.msk [vmem:[#allocation5 + $0x44] sm:$0xf] %vm6266, %v7711
  %7774 = vst.msk [vmem:[#allocation5 + $0x4c] sm:$0xf] %vm6266, %v7712
  %7775 = vst.msk [vmem:[#allocation5 + $0x54] sm:$0xf] %vm6266, %v7713
  %7776 = vst.msk [vmem:[#allocation5 + $0x5c] sm:$0xf] %vm6266, %v7714
  %7777 = vst.msk [vmem:[#allocation5 + $0x64] sm:$0xf] %vm6266, %v7715
  %7778 = vst.msk [vmem:[#allocation5 + $0x6c] sm:$0xf] %vm6266, %v7716
  %7779 = vst.msk [vmem:[#allocation5 + $0x74] sm:$0xf] %vm6266, %v7717
  %7780 = vst.msk [vmem:[#allocation5 + $0x7c] sm:$0xf] %vm6266, %v7718
  %7781 = vst.msk [vmem:[#allocation5 + $0x84] sm:$0xf] %vm6266, %v7719
  %7782 = vst.msk [vmem:[#allocation5 + $0x8c] sm:$0xf] %vm6266, %v7720
  %7783 = vst.msk [vmem:[#allocation5 + $0x94] sm:$0xf] %vm6266, %v7721
  %7784 = vst.msk [vmem:[#allocation5 + $0x9c] sm:$0xf] %vm6266, %v7722
  %7785 = vst.msk [vmem:[#allocation5 + $0xa4] sm:$0xf] %vm6266, %v7723
  %7786 = vst.msk [vmem:[#allocation5 + $0xac] sm:$0xf] %vm6266, %v7724
  %7787 = vst.msk [vmem:[#allocation5 + $0xb4] sm:$0xf] %vm6266, %v7725
  %7788 = vst.msk [vmem:[#allocation5 + $0xbc] sm:$0xf] %vm6266, %v7726
  %7789 = vst.msk [vmem:[#allocation5 + $0xc4] sm:$0xf] %vm6266, %v7727
  %7790 = vst.msk [vmem:[#allocation5 + $0xcc] sm:$0xf] %vm6266, %v7728
  %7791 = vst.msk [vmem:[#allocation5 + $0xd4] sm:$0xf] %vm6266, %v7729
  %7792 = vst.msk [vmem:[#allocation5 + $0xdc] sm:$0xf] %vm6266, %v7730
  %7793 = vst.msk [vmem:[#allocation5 + $0xe4] sm:$0xf] %vm6266, %v7731
  %7794 = vst.msk [vmem:[#allocation5 + $0xec] sm:$0xf] %vm6266, %v7732
  %7795 = vst.msk [vmem:[#allocation5 + $0xf4] sm:$0xf] %vm6266, %v7733
  %v7796 = vld [vmem:[#allocation4 + $0x39] sm:$0xff]
  %v7797 = vld [vmem:[#allocation4 + $0x41] sm:$0xff]
  %v7798 = vld [vmem:[#allocation4 + $0x49] sm:$0xff]
  %v7799 = vld [vmem:[#allocation4 + $0x51] sm:$0xff]
  %v7800 = vld [vmem:[#allocation4 + $0x59] sm:$0xff]
  %v7801 = vld [vmem:[#allocation4 + $0x61] sm:$0xff]
  %v7802 = vld [vmem:[#allocation4 + $0x69] sm:$0xff]
  %v7803 = vld [vmem:[#allocation4 + $0x71] sm:$0xff]
  %v7804 = vld [vmem:[#allocation4 + $0x79] sm:$0xff]
  %v7805 = vld [vmem:[#allocation4 + $0x81] sm:$0xff]
  %v7806 = vld [vmem:[#allocation4 + $0x89] sm:$0xff]
  %v7807 = vld [vmem:[#allocation4 + $0x91] sm:$0xff]
  %v7808 = vld [vmem:[#allocation4 + $0x99] sm:$0xff]
  %v7809 = vld [vmem:[#allocation4 + $0xa1] sm:$0xff]
  %v7810 = vld [vmem:[#allocation4 + $0xa9] sm:$0xff]
  %v7811 = vld [vmem:[#allocation4 + $0xb1] sm:$0xff]
  %v7812 = vld [vmem:[#allocation4 + $0xb9] sm:$0xff]
  %v7813 = vld [vmem:[#allocation4 + $0xc1] sm:$0xff]
  %v7814 = vld [vmem:[#allocation4 + $0xc9] sm:$0xff]
  %v7815 = vld [vmem:[#allocation4 + $0xd1] sm:$0xff]
  %v7816 = vld [vmem:[#allocation4 + $0xd9] sm:$0xff]
  %v7817 = vld [vmem:[#allocation4 + $0xe1] sm:$0xff]
  %v7818 = vld [vmem:[#allocation4 + $0xe9] sm:$0xff]
  %v7819 = vld [vmem:[#allocation4 + $0xf1] sm:$0xff]
  %v7820 = vld [vmem:[#allocation4 + $0xf9] sm:$0xff]
  %v7821 = vld [vmem:[#allocation4 + $0x101] sm:$0xff]
  %v7822 = vld [vmem:[#allocation4 + $0x109] sm:$0xff]
  %v7823 = vld [vmem:[#allocation4 + $0x111] sm:$0xff]
  %v7824 = vld [vmem:[#allocation4 + $0x119] sm:$0xff]
  %v7825 = vld [vmem:[#allocation4 + $0x121] sm:$0xff]
  %v7826 = vld [vmem:[#allocation4 + $0x129] sm:$0xff]
  %v7827 = vpack.c.bf16 %v7797, %v7796
  %v7828 = vpack.c.bf16 %v7799, %v7798
  %v7829 = vpack.c.bf16 %v7801, %v7800
  %v7830 = vpack.c.bf16 %v7803, %v7802
  %v7831 = vpack.c.bf16 %v7805, %v7804
  %v7832 = vpack.c.bf16 %v7807, %v7806
  %v7833 = vpack.c.bf16 %v7809, %v7808
  %v7834 = vpack.c.bf16 %v7811, %v7810
  %v7835 = vpack.c.bf16 %v7813, %v7812
  %v7836 = vpack.c.bf16 %v7815, %v7814
  %v7837 = vpack.c.bf16 %v7817, %v7816
  %v7838 = vpack.c.bf16 %v7819, %v7818
  %v7839 = vpack.c.bf16 %v7821, %v7820
  %v7840 = vpack.c.bf16 %v7823, %v7822
  %v7841 = vpack.c.bf16 %v7825, %v7824
  %v7842 = vpack.c.bf16 %v7826, %v7826
  %v7859 = vunpack.c.l.b16 %v7827
  %v7860 = vunpack.c.h.b16 %v7827
  %v7861 = vunpack.c.l.b16 %v7828
  %v7862 = vunpack.c.h.b16 %v7828
  %v7863 = vunpack.c.l.b16 %v7829
  %v7864 = vunpack.c.h.b16 %v7829
  %v7865 = vunpack.c.l.b16 %v7830
  %v7866 = vunpack.c.h.b16 %v7830
  %v7867 = vunpack.c.l.b16 %v7831
  %v7868 = vunpack.c.h.b16 %v7831
  %v7869 = vunpack.c.l.b16 %v7832
  %v7870 = vunpack.c.h.b16 %v7832
  %v7871 = vunpack.c.l.b16 %v7833
  %v7872 = vunpack.c.h.b16 %v7833
  %v7873 = vunpack.c.l.b16 %v7834
  %v7874 = vunpack.c.h.b16 %v7834
  %v7875 = vunpack.c.l.b16 %v7835
  %v7876 = vunpack.c.h.b16 %v7835
  %v7877 = vunpack.c.l.b16 %v7836
  %v7878 = vunpack.c.h.b16 %v7836
  %v7879 = vunpack.c.l.b16 %v7837
  %v7880 = vunpack.c.h.b16 %v7837
  %v7881 = vunpack.c.l.b16 %v7838
  %v7882 = vunpack.c.h.b16 %v7838
  %v7883 = vunpack.c.l.b16 %v7839
  %v7884 = vunpack.c.h.b16 %v7839
  %v7885 = vunpack.c.l.b16 %v7840
  %v7886 = vunpack.c.h.b16 %v7840
  %v7887 = vunpack.c.l.b16 %v7841
  %v7888 = vunpack.c.h.b16 %v7841
  %v7889 = vunpack.c.l.b16 %v7842
  %v7890 = vpack.c.b16 %v7859, %v7859
  %v7891 = vpack.c.b16 %v7860, %v7860
  %v7892 = vpack.c.b16 %v7861, %v7861
  %v7893 = vpack.c.b16 %v7862, %v7862
  %v7894 = vpack.c.b16 %v7863, %v7863
  %v7895 = vpack.c.b16 %v7864, %v7864
  %v7896 = vpack.c.b16 %v7865, %v7865
  %v7897 = vpack.c.b16 %v7866, %v7866
  %v7898 = vpack.c.b16 %v7867, %v7867
  %v7899 = vpack.c.b16 %v7868, %v7868
  %v7900 = vpack.c.b16 %v7869, %v7869
  %v7901 = vpack.c.b16 %v7870, %v7870
  %v7902 = vpack.c.b16 %v7871, %v7871
  %v7903 = vpack.c.b16 %v7872, %v7872
  %v7904 = vpack.c.b16 %v7873, %v7873
  %v7905 = vpack.c.b16 %v7874, %v7874
  %v7906 = vpack.c.b16 %v7875, %v7875
  %v7907 = vpack.c.b16 %v7876, %v7876
  %v7908 = vpack.c.b16 %v7877, %v7877
  %v7909 = vpack.c.b16 %v7878, %v7878
  %v7910 = vpack.c.b16 %v7879, %v7879
  %v7911 = vpack.c.b16 %v7880, %v7880
  %v7912 = vpack.c.b16 %v7881, %v7881
  %v7913 = vpack.c.b16 %v7882, %v7882
  %v7914 = vpack.c.b16 %v7883, %v7883
  %v7915 = vpack.c.b16 %v7884, %v7884
  %v7916 = vpack.c.b16 %v7885, %v7885
  %v7917 = vpack.c.b16 %v7886, %v7886
  %v7918 = vpack.c.b16 %v7887, %v7887
  %v7919 = vpack.c.b16 %v7888, %v7888
  %v7920 = vpack.c.b16 %v7889, %v7889
  %7952 = vst.msk [vmem:[#allocation5 + $0x4] sm:$0xf] %vm6454, %v7890
  %7953 = vst.msk [vmem:[#allocation5 + $0xc] sm:$0xf] %vm6454, %v7891
  %7954 = vst.msk [vmem:[#allocation5 + $0x14] sm:$0xf] %vm6454, %v7892
  %7955 = vst.msk [vmem:[#allocation5 + $0x1c] sm:$0xf] %vm6454, %v7893
  %7956 = vst.msk [vmem:[#allocation5 + $0x24] sm:$0xf] %vm6454, %v7894
  %7957 = vst.msk [vmem:[#allocation5 + $0x2c] sm:$0xf] %vm6454, %v7895
  %7958 = vst.msk [vmem:[#allocation5 + $0x34] sm:$0xf] %vm6454, %v7896
  %7959 = vst.msk [vmem:[#allocation5 + $0x3c] sm:$0xf] %vm6454, %v7897
  %7960 = vst.msk [vmem:[#allocation5 + $0x44] sm:$0xf] %vm6454, %v7898
  %7961 = vst.msk [vmem:[#allocation5 + $0x4c] sm:$0xf] %vm6454, %v7899
  %7962 = vst.msk [vmem:[#allocation5 + $0x54] sm:$0xf] %vm6454, %v7900
  %7963 = vst.msk [vmem:[#allocation5 + $0x5c] sm:$0xf] %vm6454, %v7901
  %7964 = vst.msk [vmem:[#allocation5 + $0x64] sm:$0xf] %vm6454, %v7902
  %7965 = vst.msk [vmem:[#allocation5 + $0x6c] sm:$0xf] %vm6454, %v7903
  %7966 = vst.msk [vmem:[#allocation5 + $0x74] sm:$0xf] %vm6454, %v7904
  %7967 = vst.msk [vmem:[#allocation5 + $0x7c] sm:$0xf] %vm6454, %v7905
  %7968 = vst.msk [vmem:[#allocation5 + $0x84] sm:$0xf] %vm6454, %v7906
  %7969 = vst.msk [vmem:[#allocation5 + $0x8c] sm:$0xf] %vm6454, %v7907
  %7970 = vst.msk [vmem:[#allocation5 + $0x94] sm:$0xf] %vm6454, %v7908
  %7971 = vst.msk [vmem:[#allocation5 + $0x9c] sm:$0xf] %vm6454, %v7909
  %7972 = vst.msk [vmem:[#allocation5 + $0xa4] sm:$0xf] %vm6454, %v7910
  %7973 = vst.msk [vmem:[#allocation5 + $0xac] sm:$0xf] %vm6454, %v7911
  %7974 = vst.msk [vmem:[#allocation5 + $0xb4] sm:$0xf] %vm6454, %v7912
  %7975 = vst.msk [vmem:[#allocation5 + $0xbc] sm:$0xf] %vm6454, %v7913
  %7976 = vst.msk [vmem:[#allocation5 + $0xc4] sm:$0xf] %vm6454, %v7914
  %7977 = vst.msk [vmem:[#allocation5 + $0xcc] sm:$0xf] %vm6454, %v7915
  %7978 = vst.msk [vmem:[#allocation5 + $0xd4] sm:$0xf] %vm6454, %v7916
  %7979 = vst.msk [vmem:[#allocation5 + $0xdc] sm:$0xf] %vm6454, %v7917
  %7980 = vst.msk [vmem:[#allocation5 + $0xe4] sm:$0xf] %vm6454, %v7918
  %7981 = vst.msk [vmem:[#allocation5 + $0xec] sm:$0xf] %vm6454, %v7919
  %7982 = vst.msk [vmem:[#allocation5 + $0xf4] sm:$0xf] %vm6454, %v7920
  %v7983 = vld [vmem:[#allocation4 + $0x3a] sm:$0xff]
  %v7984 = vld [vmem:[#allocation4 + $0x42] sm:$0xff]
  %v7985 = vld [vmem:[#allocation4 + $0x4a] sm:$0xff]
  %v7986 = vld [vmem:[#allocation4 + $0x52] sm:$0xff]
  %v7987 = vld [vmem:[#allocation4 + $0x5a] sm:$0xff]
  %v7988 = vld [vmem:[#allocation4 + $0x62] sm:$0xff]
  %v7989 = vld [vmem:[#allocation4 + $0x6a] sm:$0xff]
  %v7990 = vld [vmem:[#allocation4 + $0x72] sm:$0xff]
  %v7991 = vld [vmem:[#allocation4 + $0x7a] sm:$0xff]
  %v7992 = vld [vmem:[#allocation4 + $0x82] sm:$0xff]
  %v7993 = vld [vmem:[#allocation4 + $0x8a] sm:$0xff]
  %v7994 = vld [vmem:[#allocation4 + $0x92] sm:$0xff]
  %v7995 = vld [vmem:[#allocation4 + $0x9a] sm:$0xff]
  %v7996 = vld [vmem:[#allocation4 + $0xa2] sm:$0xff]
  %v7997 = vld [vmem:[#allocation4 + $0xaa] sm:$0xff]
  %v7998 = vld [vmem:[#allocation4 + $0xb2] sm:$0xff]
  %v7999 = vld [vmem:[#allocation4 + $0xba] sm:$0xff]
  %v8000 = vld [vmem:[#allocation4 + $0xc2] sm:$0xff]
  %v8001 = vld [vmem:[#allocation4 + $0xca] sm:$0xff]
  %v8002 = vld [vmem:[#allocation4 + $0xd2] sm:$0xff]
  %v8003 = vld [vmem:[#allocation4 + $0xda] sm:$0xff]
  %v8004 = vld [vmem:[#allocation4 + $0xe2] sm:$0xff]
  %v8005 = vld [vmem:[#allocation4 + $0xea] sm:$0xff]
  %v8006 = vld [vmem:[#allocation4 + $0xf2] sm:$0xff]
  %v8007 = vld [vmem:[#allocation4 + $0xfa] sm:$0xff]
  %v8008 = vld [vmem:[#allocation4 + $0x102] sm:$0xff]
  %v8009 = vld [vmem:[#allocation4 + $0x10a] sm:$0xff]
  %v8010 = vld [vmem:[#allocation4 + $0x112] sm:$0xff]
  %v8011 = vld [vmem:[#allocation4 + $0x11a] sm:$0xff]
  %v8012 = vld [vmem:[#allocation4 + $0x122] sm:$0xff]
  %v8013 = vld [vmem:[#allocation4 + $0x12a] sm:$0xff]
  %v8014 = vpack.c.bf16 %v7984, %v7983
  %v8015 = vpack.c.bf16 %v7986, %v7985
  %v8016 = vpack.c.bf16 %v7988, %v7987
  %v8017 = vpack.c.bf16 %v7990, %v7989
  %v8018 = vpack.c.bf16 %v7992, %v7991
  %v8019 = vpack.c.bf16 %v7994, %v7993
  %v8020 = vpack.c.bf16 %v7996, %v7995
  %v8021 = vpack.c.bf16 %v7998, %v7997
  %v8022 = vpack.c.bf16 %v8000, %v7999
  %v8023 = vpack.c.bf16 %v8002, %v8001
  %v8024 = vpack.c.bf16 %v8004, %v8003
  %v8025 = vpack.c.bf16 %v8006, %v8005
  %v8026 = vpack.c.bf16 %v8008, %v8007
  %v8027 = vpack.c.bf16 %v8010, %v8009
  %v8028 = vpack.c.bf16 %v8012, %v8011
  %v8029 = vpack.c.bf16 %v8013, %v8013
  %v8046 = vunpack.c.l.b16 %v8014
  %v8047 = vunpack.c.h.b16 %v8014
  %v8048 = vunpack.c.l.b16 %v8015
  %v8049 = vunpack.c.h.b16 %v8015
  %v8050 = vunpack.c.l.b16 %v8016
  %v8051 = vunpack.c.h.b16 %v8016
  %v8052 = vunpack.c.l.b16 %v8017
  %v8053 = vunpack.c.h.b16 %v8017
  %v8054 = vunpack.c.l.b16 %v8018
  %v8055 = vunpack.c.h.b16 %v8018
  %v8056 = vunpack.c.l.b16 %v8019
  %v8057 = vunpack.c.h.b16 %v8019
  %v8058 = vunpack.c.l.b16 %v8020
  %v8059 = vunpack.c.h.b16 %v8020
  %v8060 = vunpack.c.l.b16 %v8021
  %v8061 = vunpack.c.h.b16 %v8021
  %v8062 = vunpack.c.l.b16 %v8022
  %v8063 = vunpack.c.h.b16 %v8022
  %v8064 = vunpack.c.l.b16 %v8023
  %v8065 = vunpack.c.h.b16 %v8023
  %v8066 = vunpack.c.l.b16 %v8024
  %v8067 = vunpack.c.h.b16 %v8024
  %v8068 = vunpack.c.l.b16 %v8025
  %v8069 = vunpack.c.h.b16 %v8025
  %v8070 = vunpack.c.l.b16 %v8026
  %v8071 = vunpack.c.h.b16 %v8026
  %v8072 = vunpack.c.l.b16 %v8027
  %v8073 = vunpack.c.h.b16 %v8027
  %v8074 = vunpack.c.l.b16 %v8028
  %v8075 = vunpack.c.h.b16 %v8028
  %v8076 = vunpack.c.l.b16 %v8029
  %v8077 = vpack.c.b16 %v8046, %v8046
  %v8078 = vpack.c.b16 %v8047, %v8047
  %v8079 = vpack.c.b16 %v8048, %v8048
  %v8080 = vpack.c.b16 %v8049, %v8049
  %v8081 = vpack.c.b16 %v8050, %v8050
  %v8082 = vpack.c.b16 %v8051, %v8051
  %v8083 = vpack.c.b16 %v8052, %v8052
  %v8084 = vpack.c.b16 %v8053, %v8053
  %v8085 = vpack.c.b16 %v8054, %v8054
  %v8086 = vpack.c.b16 %v8055, %v8055
  %v8087 = vpack.c.b16 %v8056, %v8056
  %v8088 = vpack.c.b16 %v8057, %v8057
  %v8089 = vpack.c.b16 %v8058, %v8058
  %v8090 = vpack.c.b16 %v8059, %v8059
  %v8091 = vpack.c.b16 %v8060, %v8060
  %v8092 = vpack.c.b16 %v8061, %v8061
  %v8093 = vpack.c.b16 %v8062, %v8062
  %v8094 = vpack.c.b16 %v8063, %v8063
  %v8095 = vpack.c.b16 %v8064, %v8064
  %v8096 = vpack.c.b16 %v8065, %v8065
  %v8097 = vpack.c.b16 %v8066, %v8066
  %v8098 = vpack.c.b16 %v8067, %v8067
  %v8099 = vpack.c.b16 %v8068, %v8068
  %v8100 = vpack.c.b16 %v8069, %v8069
  %v8101 = vpack.c.b16 %v8070, %v8070
  %v8102 = vpack.c.b16 %v8071, %v8071
  %v8103 = vpack.c.b16 %v8072, %v8072
  %v8104 = vpack.c.b16 %v8073, %v8073
  %v8105 = vpack.c.b16 %v8074, %v8074
  %v8106 = vpack.c.b16 %v8075, %v8075
  %v8107 = vpack.c.b16 %v8076, %v8076
  %8139 = vst.msk [vmem:[#allocation5 + $0x4] sm:$0xf] %vm6642, %v8077
  %8140 = vst.msk [vmem:[#allocation5 + $0xc] sm:$0xf] %vm6642, %v8078
  %8141 = vst.msk [vmem:[#allocation5 + $0x14] sm:$0xf] %vm6642, %v8079
  %8142 = vst.msk [vmem:[#allocation5 + $0x1c] sm:$0xf] %vm6642, %v8080
  %8143 = vst.msk [vmem:[#allocation5 + $0x24] sm:$0xf] %vm6642, %v8081
  %8144 = vst.msk [vmem:[#allocation5 + $0x2c] sm:$0xf] %vm6642, %v8082
  %8145 = vst.msk [vmem:[#allocation5 + $0x34] sm:$0xf] %vm6642, %v8083
  %8146 = vst.msk [vmem:[#allocation5 + $0x3c] sm:$0xf] %vm6642, %v8084
  %8147 = vst.msk [vmem:[#allocation5 + $0x44] sm:$0xf] %vm6642, %v8085
  %8148 = vst.msk [vmem:[#allocation5 + $0x4c] sm:$0xf] %vm6642, %v8086
  %8149 = vst.msk [vmem:[#allocation5 + $0x54] sm:$0xf] %vm6642, %v8087
  %8150 = vst.msk [vmem:[#allocation5 + $0x5c] sm:$0xf] %vm6642, %v8088
  %8151 = vst.msk [vmem:[#allocation5 + $0x64] sm:$0xf] %vm6642, %v8089
  %8152 = vst.msk [vmem:[#allocation5 + $0x6c] sm:$0xf] %vm6642, %v8090
  %8153 = vst.msk [vmem:[#allocation5 + $0x74] sm:$0xf] %vm6642, %v8091
  %8154 = vst.msk [vmem:[#allocation5 + $0x7c] sm:$0xf] %vm6642, %v8092
  %8155 = vst.msk [vmem:[#allocation5 + $0x84] sm:$0xf] %vm6642, %v8093
  %8156 = vst.msk [vmem:[#allocation5 + $0x8c] sm:$0xf] %vm6642, %v8094
  %8157 = vst.msk [vmem:[#allocation5 + $0x94] sm:$0xf] %vm6642, %v8095
  %8158 = vst.msk [vmem:[#allocation5 + $0x9c] sm:$0xf] %vm6642, %v8096
  %8159 = vst.msk [vmem:[#allocation5 + $0xa4] sm:$0xf] %vm6642, %v8097
  %8160 = vst.msk [vmem:[#allocation5 + $0xac] sm:$0xf] %vm6642, %v8098
  %8161 = vst.msk [vmem:[#allocation5 + $0xb4] sm:$0xf] %vm6642, %v8099
  %8162 = vst.msk [vmem:[#allocation5 + $0xbc] sm:$0xf] %vm6642, %v8100
  %8163 = vst.msk [vmem:[#allocation5 + $0xc4] sm:$0xf] %vm6642, %v8101
  %8164 = vst.msk [vmem:[#allocation5 + $0xcc] sm:$0xf] %vm6642, %v8102
  %8165 = vst.msk [vmem:[#allocation5 + $0xd4] sm:$0xf] %vm6642, %v8103
  %8166 = vst.msk [vmem:[#allocation5 + $0xdc] sm:$0xf] %vm6642, %v8104
  %8167 = vst.msk [vmem:[#allocation5 + $0xe4] sm:$0xf] %vm6642, %v8105
  %8168 = vst.msk [vmem:[#allocation5 + $0xec] sm:$0xf] %vm6642, %v8106
  %8169 = vst.msk [vmem:[#allocation5 + $0xf4] sm:$0xf] %vm6642, %v8107
  %v8170 = vld [vmem:[#allocation5] sm:$0xff]
  %v8171 = vld [vmem:[#allocation5 + $0x8] sm:$0xff]
  %v8172 = vld [vmem:[#allocation5 + $0x10] sm:$0xff]
  %v8173 = vld [vmem:[#allocation5 + $0x18] sm:$0xff]
  %v8174 = vld [vmem:[#allocation5 + $0x20] sm:$0xff]
  %v8175 = vld [vmem:[#allocation5 + $0x28] sm:$0xff]
  %v8176 = vld [vmem:[#allocation5 + $0x30] sm:$0xff]
  %v8177 = vld [vmem:[#allocation5 + $0x38] sm:$0xff]
  %v8178 = vld [vmem:[#allocation5 + $0x40] sm:$0xff]
  %v8179 = vld [vmem:[#allocation5 + $0x48] sm:$0xff]
  %v8180 = vld [vmem:[#allocation5 + $0x50] sm:$0xff]
  %v8181 = vld [vmem:[#allocation5 + $0x58] sm:$0xff]
  %v8182 = vld [vmem:[#allocation5 + $0x60] sm:$0xff]
  %v8183 = vld [vmem:[#allocation5 + $0x68] sm:$0xff]
  %v8184 = vld [vmem:[#allocation5 + $0x70] sm:$0xff]
  %v8185 = vld [vmem:[#allocation5 + $0x78] sm:$0xff]
  %v8186 = vld [vmem:[#allocation5 + $0x80] sm:$0xff]
  %v8187 = vld [vmem:[#allocation5 + $0x88] sm:$0xff]
  %v8188 = vld [vmem:[#allocation5 + $0x90] sm:$0xff]
  %v8189 = vld [vmem:[#allocation5 + $0x98] sm:$0xff]
  %v8190 = vld [vmem:[#allocation5 + $0xa0] sm:$0xff]
  %v8191 = vld [vmem:[#allocation5 + $0xa8] sm:$0xff]
  %v8192 = vld [vmem:[#allocation5 + $0xb0] sm:$0xff]
  %v8193 = vld [vmem:[#allocation5 + $0xb8] sm:$0xff]
  %v8194 = vld [vmem:[#allocation5 + $0xc0] sm:$0xff]
  %v8195 = vld [vmem:[#allocation5 + $0xc8] sm:$0xff]
  %v8196 = vld [vmem:[#allocation5 + $0xd0] sm:$0xff]
  %v8197 = vld [vmem:[#allocation5 + $0xd8] sm:$0xff]
  %v8198 = vld [vmem:[#allocation5 + $0xe0] sm:$0xff]
  %v8199 = vld [vmem:[#allocation5 + $0xe8] sm:$0xff]
  %v8200 = vld [vmem:[#allocation5 + $0xf0] sm:$0xff]
  %v8201 = vld [vmem:[%s8] sm:$0xf]
  %v8202 = vld [vmem:[%s8 + $0x4] sm:$0xf]
  %v8203 = vld [vmem:[%s8 + $0x8] sm:$0xf]
  %v8204 = vld [vmem:[%s8 + $0xc] sm:$0xf]
  %v8205 = vld [vmem:[%s8 + $0x10] sm:$0xf]
  %v8206 = vld [vmem:[%s8 + $0x14] sm:$0xf]
  %v8207 = vld [vmem:[%s8 + $0x18] sm:$0xf]
  %v8208 = vld [vmem:[%s8 + $0x1c] sm:$0xf]
  %v8209 = vld [vmem:[%s8 + $0x20] sm:$0xf]
  %v8210 = vld [vmem:[%s8 + $0x24] sm:$0xf]
  %v8211 = vld [vmem:[%s8 + $0x28] sm:$0xf]
  %v8212 = vld [vmem:[%s8 + $0x2c] sm:$0xf]
  %v8213 = vld [vmem:[%s8 + $0x30] sm:$0xf]
  %v8214 = vld [vmem:[%s8 + $0x34] sm:$0xf]
  %v8215 = vld [vmem:[%s8 + $0x38] sm:$0xf]
  %v8216 = vld [vmem:[%s8 + $0x3c] sm:$0xf]
  %v8217 = vld [vmem:[%s8 + $0x40] sm:$0xf]
  %v8218 = vld [vmem:[%s8 + $0x44] sm:$0xf]
  %v8219 = vld [vmem:[%s8 + $0x48] sm:$0xf]
  %v8220 = vld [vmem:[%s8 + $0x4c] sm:$0xf]
  %v8221 = vld [vmem:[%s8 + $0x50] sm:$0xf]
  %v8222 = vld [vmem:[%s8 + $0x54] sm:$0xf]
  %v8223 = vld [vmem:[%s8 + $0x58] sm:$0xf]
  %v8224 = vld [vmem:[%s8 + $0x5c] sm:$0xf]
  %v8225 = vld [vmem:[%s8 + $0x60] sm:$0xf]
  %v8226 = vld [vmem:[%s8 + $0x64] sm:$0xf]
  %v8227 = vld [vmem:[%s8 + $0x68] sm:$0xf]
  %v8228 = vld [vmem:[%s8 + $0x6c] sm:$0xf]
  %v8229 = vld [vmem:[%s8 + $0x70] sm:$0xf]
  %v8230 = vld [vmem:[%s8 + $0x74] sm:$0xf]
  %v8231 = vld [vmem:[%s8 + $0x78] sm:$0xf]
  %v8232 = vld [vmem:[%s8 + $0x7c] sm:$0xf]
  %v8233 = vld [vmem:[%s9] sm:$0x1]
  %v8235 = vlaneseq
  %v8236 = vshrl.u32 %v8235, 7
  %v8237 = vsub.s32 0, %v8236
  %v8238 = vrot.slane %v8233, %v8237
  %v8271 = vunpack.c.l.b16 %v8170
  %v8272 = vunpack.c.h.b16 %v8170
  %v8273 = vunpack.c.l.b16 %v8171
  %v8274 = vunpack.c.h.b16 %v8171
  %v8275 = vunpack.c.l.b16 %v8172
  %v8276 = vunpack.c.h.b16 %v8172
  %v8277 = vunpack.c.l.b16 %v8173
  %v8278 = vunpack.c.h.b16 %v8173
  %v8279 = vunpack.c.l.b16 %v8174
  %v8280 = vunpack.c.h.b16 %v8174
  %v8281 = vunpack.c.l.b16 %v8175
  %v8282 = vunpack.c.h.b16 %v8175
  %v8283 = vunpack.c.l.b16 %v8176
  %v8284 = vunpack.c.h.b16 %v8176
  %v8285 = vunpack.c.l.b16 %v8177
  %v8286 = vunpack.c.h.b16 %v8177
  %v8287 = vunpack.c.l.b16 %v8178
  %v8288 = vunpack.c.h.b16 %v8178
  %v8289 = vunpack.c.l.b16 %v8179
  %v8290 = vunpack.c.h.b16 %v8179
  %v8291 = vunpack.c.l.b16 %v8180
  %v8292 = vunpack.c.h.b16 %v8180
  %v8293 = vunpack.c.l.b16 %v8181
  %v8294 = vunpack.c.h.b16 %v8181
  %v8295 = vunpack.c.l.b16 %v8182
  %v8296 = vunpack.c.h.b16 %v8182
  %v8297 = vunpack.c.l.b16 %v8183
  %v8298 = vunpack.c.h.b16 %v8183
  %v8299 = vunpack.c.l.b16 %v8184
  %v8300 = vunpack.c.h.b16 %v8184
  %v8301 = vunpack.c.l.b16 %v8185
  %v8302 = vunpack.c.h.b16 %v8185
  %v8303 = vunpack.c.l.b16 %v8186
  %v8304 = vunpack.c.h.b16 %v8186
  %v8305 = vunpack.c.l.b16 %v8187
  %v8306 = vunpack.c.h.b16 %v8187
  %v8307 = vunpack.c.l.b16 %v8188
  %v8308 = vunpack.c.h.b16 %v8188
  %v8309 = vunpack.c.l.b16 %v8189
  %v8310 = vunpack.c.h.b16 %v8189
  %v8311 = vunpack.c.l.b16 %v8190
  %v8312 = vunpack.c.h.b16 %v8190
  %v8313 = vunpack.c.l.b16 %v8191
  %v8314 = vunpack.c.h.b16 %v8191
  %v8315 = vunpack.c.l.b16 %v8192
  %v8316 = vunpack.c.h.b16 %v8192
  %v8317 = vunpack.c.l.b16 %v8193
  %v8318 = vunpack.c.h.b16 %v8193
  %v8319 = vunpack.c.l.b16 %v8194
  %v8320 = vunpack.c.h.b16 %v8194
  %v8321 = vunpack.c.l.b16 %v8195
  %v8322 = vunpack.c.h.b16 %v8195
  %v8323 = vunpack.c.l.b16 %v8196
  %v8324 = vunpack.c.h.b16 %v8196
  %v8325 = vunpack.c.l.b16 %v8197
  %v8326 = vunpack.c.h.b16 %v8197
  %v8327 = vunpack.c.l.b16 %v8198
  %v8328 = vunpack.c.h.b16 %v8198
  %v8329 = vunpack.c.l.b16 %v8199
  %v8330 = vunpack.c.h.b16 %v8199
  %v8331 = vunpack.c.l.b16 %v8200
  %v8332 = vunpack.c.h.b16 %v8200
  %v8333 = vpack.c.b16 %v8273, %v8271
  %v8334 = vpack.c.b16 %v8274, %v8272
  %v8335 = vpack.c.b16 %v8277, %v8275
  %v8336 = vpack.c.b16 %v8278, %v8276
  %v8337 = vpack.c.b16 %v8281, %v8279
  %v8338 = vpack.c.b16 %v8282, %v8280
  %v8339 = vpack.c.b16 %v8285, %v8283
  %v8340 = vpack.c.b16 %v8286, %v8284
  %v8341 = vpack.c.b16 %v8289, %v8287
  %v8342 = vpack.c.b16 %v8290, %v8288
  %v8343 = vpack.c.b16 %v8293, %v8291
  %v8344 = vpack.c.b16 %v8294, %v8292
  %v8345 = vpack.c.b16 %v8297, %v8295
  %v8346 = vpack.c.b16 %v8298, %v8296
  %v8347 = vpack.c.b16 %v8301, %v8299
  %v8348 = vpack.c.b16 %v8302, %v8300
  %v8349 = vpack.c.b16 %v8305, %v8303
  %v8350 = vpack.c.b16 %v8306, %v8304
  %v8351 = vpack.c.b16 %v8309, %v8307
  %v8352 = vpack.c.b16 %v8310, %v8308
  %v8353 = vpack.c.b16 %v8313, %v8311
  %v8354 = vpack.c.b16 %v8314, %v8312
  %v8355 = vpack.c.b16 %v8317, %v8315
  %v8356 = vpack.c.b16 %v8318, %v8316
  %v8357 = vpack.c.b16 %v8321, %v8319
  %v8358 = vpack.c.b16 %v8322, %v8320
  %v8359 = vpack.c.b16 %v8325, %v8323
  %v8360 = vpack.c.b16 %v8326, %v8324
  %v8361 = vpack.c.b16 %v8329, %v8327
  %v8362 = vpack.c.b16 %v8330, %v8328
  %v8363 = vpack.c.b16 %v8331, %v8331
  %v8364 = vpack.c.b16 %v8332, %v8332
  %v8429 = vunpack.c.l.b16 %v8201
  %v8430 = vunpack.c.l.b16 %v8202
  %v8431 = vunpack.c.l.b16 %v8203
  %v8432 = vunpack.c.l.b16 %v8204
  %v8433 = vunpack.c.l.b16 %v8205
  %v8434 = vunpack.c.l.b16 %v8206
  %v8435 = vunpack.c.l.b16 %v8207
  %v8436 = vunpack.c.l.b16 %v8208
  %v8437 = vunpack.c.l.b16 %v8209
  %v8438 = vunpack.c.l.b16 %v8210
  %v8439 = vunpack.c.l.b16 %v8211
  %v8440 = vunpack.c.l.b16 %v8212
  %v8441 = vunpack.c.l.b16 %v8213
  %v8442 = vunpack.c.l.b16 %v8214
  %v8443 = vunpack.c.l.b16 %v8215
  %v8444 = vunpack.c.l.b16 %v8216
  %v8445 = vunpack.c.l.b16 %v8217
  %v8446 = vunpack.c.l.b16 %v8218
  %v8447 = vunpack.c.l.b16 %v8219
  %v8448 = vunpack.c.l.b16 %v8220
  %v8449 = vunpack.c.l.b16 %v8221
  %v8450 = vunpack.c.l.b16 %v8222
  %v8451 = vunpack.c.l.b16 %v8223
  %v8452 = vunpack.c.l.b16 %v8224
  %v8453 = vunpack.c.l.b16 %v8225
  %v8454 = vunpack.c.l.b16 %v8226
  %v8455 = vunpack.c.l.b16 %v8227
  %v8456 = vunpack.c.l.b16 %v8228
  %v8457 = vunpack.c.l.b16 %v8229
  %v8458 = vunpack.c.l.b16 %v8230
  %v8459 = vunpack.c.l.b16 %v8231
  %v8460 = vunpack.c.l.b16 %v8232
  %v8461 = vpack.c.b16 %v8430, %v8429
  %v8462 = vpack.c.b16 %v8432, %v8431
  %v8463 = vpack.c.b16 %v8434, %v8433
  %v8464 = vpack.c.b16 %v8436, %v8435
  %v8465 = vpack.c.b16 %v8438, %v8437
  %v8466 = vpack.c.b16 %v8440, %v8439
  %v8467 = vpack.c.b16 %v8442, %v8441
  %v8468 = vpack.c.b16 %v8444, %v8443
  %v8469 = vpack.c.b16 %v8446, %v8445
  %v8470 = vpack.c.b16 %v8448, %v8447
  %v8471 = vpack.c.b16 %v8450, %v8449
  %v8472 = vpack.c.b16 %v8452, %v8451
  %v8473 = vpack.c.b16 %v8454, %v8453
  %v8474 = vpack.c.b16 %v8456, %v8455
  %v8475 = vpack.c.b16 %v8458, %v8457
  %v8476 = vpack.c.b16 %v8460, %v8459
  %8493 = vmatprep.subr.bf16.mxu0 0
  %8494 = vmatpush1.bf16.msra.mxu0 %v8461
  %8495 = vmatprep.subr.bf16.mxu0 0
  %8496 = vmatpush1.bf16.msra.mxu0 %v8462
  %8497 = vmatprep.subr.bf16.mxu0 0
  %8498 = vmatpush1.bf16.msra.mxu0 %v8463
  %8499 = vmatprep.subr.bf16.mxu0 0
  %8500 = vmatpush1.bf16.msra.mxu0 %v8464
  %8501 = vmatprep.subr.bf16.mxu0 0
  %8502 = vmatpush1.bf16.msra.mxu0 %v8465
  %8503 = vmatprep.subr.bf16.mxu0 0
  %8504 = vmatpush1.bf16.msra.mxu0 %v8466
  %8505 = vmatprep.subr.bf16.mxu0 0
  %8506 = vmatpush1.bf16.msra.mxu0 %v8467
  %8507 = vmatprep.subr.bf16.mxu0 0
  %8508 = vmatpush1.bf16.msra.mxu0 %v8468
  %8509 = vmatprep.subr.bf16.mxu0 0
  %8510 = vmatpush1.bf16.msra.mxu0 %v8469
  %8511 = vmatprep.subr.bf16.mxu0 0
  %8512 = vmatpush1.bf16.msra.mxu0 %v8470
  %8513 = vmatprep.subr.bf16.mxu0 0
  %8514 = vmatpush1.bf16.msra.mxu0 %v8471
  %8515 = vmatprep.subr.bf16.mxu0 0
  %8516 = vmatpush1.bf16.msra.mxu0 %v8472
  %8517 = vmatprep.subr.bf16.mxu0 0
  %8518 = vmatpush1.bf16.msra.mxu0 %v8473
  %8519 = vmatprep.subr.bf16.mxu0 0
  %8520 = vmatpush1.bf16.msra.mxu0 %v8474
  %8521 = vmatprep.subr.bf16.mxu0 0
  %8522 = vmatpush1.bf16.msra.mxu0 %v8475
  %8523 = vmatprep.subr.bf16.mxu0 0
  %8524 = vmatpush1.bf16.msra.mxu0 %v8476
  %8525 = vmatprep.mubr.bf16.mxu0 %v8334
  %8526 = vmatmul.mubr.bf16.gmra.mrb[0].mxu0 %v8333
  %v8527 = vpop.f32.mrb[0].mxu0
  %v8528 = vadd.f32 %v8238, %v8527
  %v8529 = vpop.f32.mrb[0].mxu0
  %v8530 = vpop.f32.mrb[0].mxu0
  %v8531 = vadd.f32 %v8238, %v8530
  %v8532 = vpop.f32.mrb[0].mxu0
  %8533 = vmatprep.mubr.bf16.mxu0 %v8336
  %8534 = vmatmul.mubr.bf16.gmra.mrb[0].mxu0 %v8335
  %v8535 = vpop.f32.mrb[0].mxu0
  %v8536 = vadd.f32 %v8238, %v8535
  %v8537 = vpop.f32.mrb[0].mxu0
  %v8538 = vpop.f32.mrb[0].mxu0
  %v8539 = vadd.f32 %v8238, %v8538
  %v8540 = vpop.f32.mrb[0].mxu0
  %8541 = vmatprep.mubr.bf16.mxu0 %v8338
  %8542 = vmatmul.mubr.bf16.gmra.mrb[0].mxu0 %v8337
  %v8543 = vpop.f32.mrb[0].mxu0
  %v8544 = vadd.f32 %v8238, %v8543
  %v8545 = vpop.f32.mrb[0].mxu0
  %v8546 = vpop.f32.mrb[0].mxu0
  %v8547 = vadd.f32 %v8238, %v8546
  %v8548 = vpop.f32.mrb[0].mxu0
  %8549 = vmatprep.mubr.bf16.mxu0 %v8340
  %8550 = vmatmul.mubr.bf16.gmra.mrb[0].mxu0 %v8339
  %v8551 = vpop.f32.mrb[0].mxu0
  %v8552 = vadd.f32 %v8238, %v8551
  %v8553 = vpop.f32.mrb[0].mxu0
  %v8554 = vpop.f32.mrb[0].mxu0
  %v8555 = vadd.f32 %v8238, %v8554
  %v8556 = vpop.f32.mrb[0].mxu0
  %8557 = vmatprep.mubr.bf16.mxu0 %v8342
  %8558 = vmatmul.mubr.bf16.gmra.mrb[0].mxu0 %v8341
  %v8559 = vpop.f32.mrb[0].mxu0
  %v8560 = vadd.f32 %v8238, %v8559
  %v8561 = vpop.f32.mrb[0].mxu0
  %v8562 = vpop.f32.mrb[0].mxu0
  %v8563 = vadd.f32 %v8238, %v8562
  %v8564 = vpop.f32.mrb[0].mxu0
  %8565 = vmatprep.mubr.bf16.mxu0 %v8344
  %8566 = vmatmul.mubr.bf16.gmra.mrb[0].mxu0 %v8343
  %v8567 = vpop.f32.mrb[0].mxu0
  %v8568 = vadd.f32 %v8238, %v8567
  %v8569 = vpop.f32.mrb[0].mxu0
  %v8570 = vpop.f32.mrb[0].mxu0
  %v8571 = vadd.f32 %v8238, %v8570
  %v8572 = vpop.f32.mrb[0].mxu0
  %8573 = vmatprep.mubr.bf16.mxu0 %v8346
  %8574 = vmatmul.mubr.bf16.gmra.mrb[0].mxu0 %v8345
  %v8575 = vpop.f32.mrb[0].mxu0
  %v8576 = vadd.f32 %v8238, %v8575
  %v8577 = vpop.f32.mrb[0].mxu0
  %v8578 = vpop.f32.mrb[0].mxu0
  %v8579 = vadd.f32 %v8238, %v8578
  %v8580 = vpop.f32.mrb[0].mxu0
  %8581 = vmatprep.mubr.bf16.mxu0 %v8348
  %8582 = vmatmul.mubr.bf16.gmra.mrb[0].mxu0 %v8347
  %v8583 = vpop.f32.mrb[0].mxu0
  %v8584 = vadd.f32 %v8238, %v8583
  %v8585 = vpop.f32.mrb[0].mxu0
  %v8586 = vpop.f32.mrb[0].mxu0
  %v8587 = vadd.f32 %v8238, %v8586
  %v8588 = vpop.f32.mrb[0].mxu0
  %8589 = vmatprep.mubr.bf16.mxu0 %v8350
  %8590 = vmatmul.mubr.bf16.gmra.mrb[0].mxu0 %v8349
  %v8591 = vpop.f32.mrb[0].mxu0
  %v8592 = vadd.f32 %v8238, %v8591
  %v8593 = vpop.f32.mrb[0].mxu0
  %v8594 = vpop.f32.mrb[0].mxu0
  %v8595 = vadd.f32 %v8238, %v8594
  %v8596 = vpop.f32.mrb[0].mxu0
  %8597 = vmatprep.mubr.bf16.mxu0 %v8352
  %8598 = vmatmul.mubr.bf16.gmra.mrb[0].mxu0 %v8351
  %v8599 = vpop.f32.mrb[0].mxu0
  %v8600 = vadd.f32 %v8238, %v8599
  %v8601 = vpop.f32.mrb[0].mxu0
  %v8602 = vpop.f32.mrb[0].mxu0
  %v8603 = vadd.f32 %v8238, %v8602
  %v8604 = vpop.f32.mrb[0].mxu0
  %8605 = vmatprep.mubr.bf16.mxu0 %v8354
  %8606 = vmatmul.mubr.bf16.gmra.mrb[0].mxu0 %v8353
  %v8607 = vpop.f32.mrb[0].mxu0
  %v8608 = vadd.f32 %v8238, %v8607
  %v8609 = vpop.f32.mrb[0].mxu0
  %v8610 = vpop.f32.mrb[0].mxu0
  %v8611 = vadd.f32 %v8238, %v8610
  %v8612 = vpop.f32.mrb[0].mxu0
  %8613 = vmatprep.mubr.bf16.mxu0 %v8356
  %8614 = vmatmul.mubr.bf16.gmra.mrb[0].mxu0 %v8355
  %v8615 = vpop.f32.mrb[0].mxu0
  %v8616 = vadd.f32 %v8238, %v8615
  %v8617 = vpop.f32.mrb[0].mxu0
  %v8618 = vpop.f32.mrb[0].mxu0
  %v8619 = vadd.f32 %v8238, %v8618
  %v8620 = vpop.f32.mrb[0].mxu0
  %8621 = vmatprep.mubr.bf16.mxu0 %v8358
  %8622 = vmatmul.mubr.bf16.gmra.mrb[0].mxu0 %v8357
  %v8623 = vpop.f32.mrb[0].mxu0
  %v8624 = vadd.f32 %v8238, %v8623
  %v8625 = vpop.f32.mrb[0].mxu0
  %v8626 = vpop.f32.mrb[0].mxu0
  %v8627 = vadd.f32 %v8238, %v8626
  %v8628 = vpop.f32.mrb[0].mxu0
  %8629 = vmatprep.mubr.bf16.mxu0 %v8360
  %8630 = vmatmul.mubr.bf16.gmra.mrb[0].mxu0 %v8359
  %v8631 = vpop.f32.mrb[0].mxu0
  %v8632 = vadd.f32 %v8238, %v8631
  %v8633 = vpop.f32.mrb[0].mxu0
  %v8634 = vpop.f32.mrb[0].mxu0
  %v8635 = vadd.f32 %v8238, %v8634
  %v8636 = vpop.f32.mrb[0].mxu0
  %8637 = vmatprep.mubr.bf16.mxu0 %v8362
  %8638 = vmatmul.mubr.bf16.gmra.mrb[0].mxu0 %v8361
  %v8639 = vpop.f32.mrb[0].mxu0
  %v8640 = vadd.f32 %v8238, %v8639
  %v8641 = vpop.f32.mrb[0].mxu0
  %v8642 = vpop.f32.mrb[0].mxu0
  %v8643 = vadd.f32 %v8238, %v8642
  %v8644 = vpop.f32.mrb[0].mxu0
  %8645 = vmatprep.mubr.bf16.mxu0 %v8364
  %8646 = vmatmul.mubr.bf16.gmra.mrb[0].mxu0 %v8363
  %v8647 = vpop.f32.mrb[0].mxu0
  %v8648 = vadd.f32 %v8238, %v8647
  %v8649 = vpop.f32.mrb[0].mxu0
  %v8650 = vpop.f32.mrb[0].mxu0
  %v8651 = vpop.f32.mrb[0].mxu0
  %8652 = vdwg.mxu0
  %8653 = vst [vmem:[%s10] sm:$0xff] %v8528
  %8654 = vst [vmem:[%s10 + $0x8] sm:$0xff] %v8531
  %8655 = vst [vmem:[%s10 + $0x10] sm:$0xff] %v8536
  %8656 = vst [vmem:[%s10 + $0x18] sm:$0xff] %v8539
  %8657 = vst [vmem:[%s10 + $0x20] sm:$0xff] %v8544
  %8658 = vst [vmem:[%s10 + $0x28] sm:$0xff] %v8547
  %8659 = vst [vmem:[%s10 + $0x30] sm:$0xff] %v8552
  %8660 = vst [vmem:[%s10 + $0x38] sm:$0xff] %v8555
  %8661 = vst [vmem:[%s10 + $0x40] sm:$0xff] %v8560
  %8662 = vst [vmem:[%s10 + $0x48] sm:$0xff] %v8563
  %8663 = vst [vmem:[%s10 + $0x50] sm:$0xff] %v8568
  %8664 = vst [vmem:[%s10 + $0x58] sm:$0xff] %v8571
  %8665 = vst [vmem:[%s10 + $0x60] sm:$0xff] %v8576
  %8666 = vst [vmem:[%s10 + $0x68] sm:$0xff] %v8579
  %8667 = vst [vmem:[%s10 + $0x70] sm:$0xff] %v8584
  %8668 = vst [vmem:[%s10 + $0x78] sm:$0xff] %v8587
  %8669 = vst [vmem:[%s10 + $0x80] sm:$0xff] %v8592
  %8670 = vst [vmem:[%s10 + $0x88] sm:$0xff] %v8595
  %8671 = vst [vmem:[%s10 + $0x90] sm:$0xff] %v8600
  %8672 = vst [vmem:[%s10 + $0x98] sm:$0xff] %v8603
  %8673 = vst [vmem:[%s10 + $0xa0] sm:$0xff] %v8608
  %8674 = vst [vmem:[%s10 + $0xa8] sm:$0xff] %v8611
  %8675 = vst [vmem:[%s10 + $0xb0] sm:$0xff] %v8616
  %8676 = vst [vmem:[%s10 + $0xb8] sm:$0xff] %v8619
  %8677 = vst [vmem:[%s10 + $0xc0] sm:$0xff] %v8624
  %8678 = vst [vmem:[%s10 + $0xc8] sm:$0xff] %v8627
  %8679 = vst [vmem:[%s10 + $0xd0] sm:$0xff] %v8632
  %8680 = vst [vmem:[%s10 + $0xd8] sm:$0xff] %v8635
  %8681 = vst [vmem:[%s10 + $0xe0] sm:$0xff] %v8640
  %8682 = vst [vmem:[%s10 + $0xe8] sm:$0xff] %v8643
  %8683 = vst [vmem:[%s10 + $0xf0] sm:$0xff] %v8648
  // Predicated region
  $region42: #{nlayer_discriminator_forward.1} parent=0 // pred_check
    _
  $region43: #{nlayer_discriminator_forward.1} parent=0 // pred_check_branch
    %8685 = sbr.rel (0) target = $region45
  $region44: #{nlayer_discriminator_forward.1} parent=0 // pred_region
    _
  $region45: #{nlayer_discriminator_forward.1} parent=0 // pred_fallthru
    _
  // Predicated region
  $region46: #{nlayer_discriminator_forward.1} parent=0 // pred_check
    _
  $region47: #{nlayer_discriminator_forward.1} parent=0 // pred_check_branch
    %8687 = sbr.rel (0) target = $region49
  $region48: #{nlayer_discriminator_forward.1} parent=0 // pred_region
    _
  $region49: #{nlayer_discriminator_forward.1} parent=0 // pred_fallthru
    _

</llo_original>
